<compile_context>
chip_gen: v7x
topology: tpu7x:2x2x1
jax: 0.10.0
libtpu: 0.0.40
codegen_flags: <defaults>
</compile_context>

<pallas_src>
import functools
import itertools

import numpy as np
import jax
import jax.numpy as jnp
from jax.experimental import pallas as pl
from jax.experimental.pallas import tpu as pltpu


# ------------------------------ Pallas kernel ------------------------------ #

def _cga_kernel(x_ref, wq_ref, wk_ref, wv_ref, bq_ref, bk_ref, bv_ref,
                wdwm_ref, bdw_ref, ab_ref, wproj_ref, bproj_ref, out_ref, *,
                bt, num_heads, key_dim, d, H, W):
    """One batch-block of cascaded group attention (all heads in-kernel)."""
    N = H * W
    M = bt * N            # batch folded into the matmul M dimension
    cin = d               # dim // num_heads == d for this module

    acc = None            # proj accumulator, (M, C) f32
    prev = None           # cascade carry,    (M, cin) f32

    for h in range(num_heads):
        # feat_0 = x_0 ; feat_h = attn_out_{h-1} + x_h  (h > 0)
        x_h = x_ref[:, h, :, :].reshape(M, cin)
        feat = x_h if h == 0 else prev + x_h
        feat_bf = feat.astype(jnp.bfloat16)

        # 1x1 conv + folded BN, split into q/k/v matmuls (no lane slicing).
        q = jnp.dot(feat_bf, wq_ref[h],
                    preferred_element_type=jnp.float32) + bq_ref[h]
        k = jnp.dot(feat_bf, wk_ref[h],
                    preferred_element_type=jnp.float32) + bk_ref[h]
        v = jnp.dot(feat_bf, wv_ref[h],
                    preferred_element_type=jnp.float32) + bv_ref[h]

        # 5x5 depthwise conv + folded BN on q (attention scale pre-folded).
        # 25 shifted multiply-adds: roll the merged (bt*N) axis; the pre-masked
        # per-position weights zero every tap that would cross an image /
        # batch boundary, so the cyclic roll is safe.
        dwq = jnp.zeros((bt, N, key_dim), jnp.float32)
        for t in range(25):
            dy, dx = t // 5 - 2, t % 5 - 2
            s = dy * W + dx
            src = q if s == 0 else pltpu.roll(q, shift=(-s) % M, axis=0)
            dwq = dwq + src.reshape(bt, N, key_dim) * wdwm_ref[h, t]
        dwq = dwq + bdw_ref[h]                                   # (1, key_dim)

        # Attention (batched over the bt images inside the block).
        qb = dwq.astype(jnp.bfloat16)                            # (bt, N, kd)
        kb = k.reshape(bt, N, key_dim).astype(jnp.bfloat16)
        vb = v.reshape(bt, N, d).astype(jnp.bfloat16)

        attn = jnp.einsum('bqc,bkc->bqk', qb, kb,
                          preferred_element_type=jnp.float32)    # (bt, N, N)
        attn = attn + ab_ref[h]                                  # rel-pos bias
        attn = attn - jnp.max(attn, axis=-1, keepdims=True)
        probs = jnp.exp(attn)
        probs = probs * pl.reciprocal(
            jnp.sum(probs, axis=-1, keepdims=True), approx=True)

        o = jnp.einsum('bqk,bkc->bqc', probs.astype(jnp.bfloat16), vb,
                       preferred_element_type=jnp.float32)       # (bt, N, d)
        o_flat = o.reshape(M, d)
        prev = o_flat                                            # cascade carry

        # ReLU + concat + final 1x1 conv (+ folded BN), decomposed per head:
        #   proj(concat_h relu(o_h)) == sum_h relu(o_h) @ Wproj[h] (+ bias once)
        contrib = jnp.dot(jnp.maximum(o_flat, 0.0).astype(jnp.bfloat16),
                          wproj_ref[h], preferred_element_type=jnp.float32)
        acc = contrib if h == 0 else acc + contrib

    out = acc + bproj_ref[...]                                   # (1, C)
    out_ref[...] = out.reshape(out_ref.shape)                    # single store


# --------------------------------- wrapper ---------------------------------- #

def cascaded_group_attention(x_nchw, kp, *, num_heads, key_dim, d):
    """x_nchw: (B, dim, H, W) float32 -> (B, dim, H, W) float32."""
    B, C, H, W = x_nchw.shape
    N = H * W
    cin = C // num_heads
    assert cin == d, "CascadedGroupAttention requires dim // num_heads == d"

    # (B, C, H, W) -> (B, num_heads, N, cin): per-head leading axis so the
    # kernel never lane-slices x.
    x_h = jnp.transpose(x_nchw.reshape(B, num_heads, cin, N), (0, 1, 3, 2))

    # Images per grid step: target M = bt*N ~ 1024 matmul rows, but keep >= 2
    # batch blocks (dual-TC chips) when each block would still have >=256 rows.
    bt = min(B, max(1, 1024 // N))
    while B % bt:
        bt -= 1
    if B // bt == 1 and bt % 2 == 0 and (bt // 2) * N >= 256:
        bt //= 2
    grid_b = B // bt

    kernel = functools.partial(_cga_kernel, bt=bt, num_heads=num_heads,
                               key_dim=key_dim, d=d, H=H, W=W)

    consts = (kp["wq"], kp["wk"], kp["wv"], kp["bq"], kp["bk"], kp["bv"],
              kp["wdwm"], kp["bdw"], kp["ab"], kp["wproj"], kp["bproj"])

    def _resident(a):
        zeros = (0,) * a.ndim
        return pl.BlockSpec(a.shape, lambda b: zeros)

    # VMEM budget from actual block sizes (v7x has only 64 MiB -> cap at 48).
    def _nbytes(a):
        return int(np.prod(a.shape)) * a.dtype.itemsize
    const_bytes = sum(_nbytes(a) for a in consts)
    block_bytes = (bt * num_heads * N * cin + bt * N * C) * 4
    work_bytes = 6 * bt * N * N * 4              # attention intermediates
    vmem_limit = int(min(48 << 20, max(24 << 20,
                                       2 * (const_bytes + block_bytes)
                                       + work_bytes + (4 << 20))))

    out = pl.pallas_call(
        kernel,
        out_shape=jax.ShapeDtypeStruct((B, N, C), jnp.float32),
        grid_spec=pltpu.PrefetchScalarGridSpec(
            num_scalar_prefetch=0,
            grid=(grid_b,),
            in_specs=[pl.BlockSpec((bt, num_heads, N, cin),
                                   lambda b: (b, 0, 0, 0))]
                     + [_resident(a) for a in consts],
            out_specs=pl.BlockSpec((bt, N, C), lambda b: (b, 0, 0)),
        ),
        compiler_params=pltpu.CompilerParams(
            dimension_semantics=("parallel",),
            vmem_limit_bytes=vmem_limit),
    )(x_h, *consts)

    return jnp.transpose(out, (0, 2, 1)).reshape(B, C, H, W)


# --------------------------- parameter construction ------------------------ #

def _fold_bn(w, gamma, beta, mean, var, eps=1e-5):
    """Fold an eval-mode BN into a bias-free conv. w's leading dim = out chans."""
    s = gamma / jnp.sqrt(var + eps)
    w_eff = w * s.reshape((-1,) + (1,) * (w.ndim - 1))
    b_eff = beta - mean * s
    return w_eff, b_eff


def make_params(key, *, dim, key_dim, num_heads, resolution):
    """Reference-layout (BN-folded) parameters for the module."""
    d = dim // num_heads
    cin = dim // num_heads
    cqkv = 2 * key_dim + d
    H = W = resolution
    N = H * W
    keys = iter(jax.random.split(key, 64))

    def bn(n):
        g = 1.0 + 0.1 * jax.random.normal(next(keys), (n,), jnp.float32)
        b = 0.1 * jax.random.normal(next(keys), (n,), jnp.float32)
        m = 0.1 * jax.random.normal(next(keys), (n,), jnp.float32)
        v = jax.random.uniform(next(keys), (n,), jnp.float32, 0.5, 1.5)
        return g, b, m, v

    wqkv_oc, bqkv, wdw_oihw, bdw = [], [], [], []
    for _ in range(num_heads):
        w = 0.1 * jax.random.normal(next(keys), (cqkv, cin), jnp.float32)
        we, be = _fold_bn(w, *bn(cqkv))
        wqkv_oc.append(we); bqkv.append(be)
        w = 0.1 * jax.random.normal(next(keys), (key_dim, 1, 5, 5), jnp.float32)
        we, be = _fold_bn(w, *bn(key_dim))
        wdw_oihw.append(we); bdw.append(be)
    wqkv_oc = jnp.stack(wqkv_oc); bqkv = jnp.stack(bqkv)
    wdw_oihw = jnp.stack(wdw_oihw); bdw = jnp.stack(bdw)

    # proj conv (module uses bn_weight_init=0; synthetic nonzero init here)
    w = 0.1 * jax.random.normal(next(keys), (dim, dim), jnp.float32)
    wproj_oc, bproj = _fold_bn(w, *bn(dim))

    # relative-position attention bias (gathered like `trainingab`)
    points = list(itertools.product(range(H), range(W)))
    offsets, idxs = {}, []
    for p1 in points:
        for p2 in points:
            off = (abs(p1[0] - p2[0]), abs(p1[1] - p2[1]))
            if off not in offsets:
                offsets[off] = len(offsets)
            idxs.append(offsets[off])
    bias_idxs = np.array(idxs, np.int32).reshape(N, N)
    attention_biases = 0.1 * jax.random.normal(
        next(keys), (num_heads, len(offsets)), jnp.float32)
    ab = attention_biases[:, bias_idxs]                      # (heads, N, N)

    return {
        "wqkv_oc": wqkv_oc, "bqkv": bqkv,
        "wdw_oihw": wdw_oihw, "bdw": bdw,
        "wproj_oc": wproj_oc, "bproj": bproj,
        "ab": ab,
    }


def prepare_kernel_params(p, *, dim, key_dim, num_heads, resolution):
    """Reference-layout params -> kernel-layout params: split Wq/Wk/Wv in bf16,
    pre-masked + pre-scaled depthwise weights (heads, 25, N, key_dim),
    per-head proj slices, biases reshaped for in-kernel broadcasting."""
    d = dim // num_heads
    H = W = resolution
    N = H * W
    scale = key_dim ** (-0.5)

    wqkv_ic = jnp.transpose(p["wqkv_oc"], (0, 2, 1))          # (nh, cin, cqkv)
    wq = wqkv_ic[:, :, :key_dim]
    wk = wqkv_ic[:, :, key_dim:2 * key_dim]
    wv = wqkv_ic[:, :, 2 * key_dim:]
    bq = p["bqkv"][:, None, :key_dim]                         # (nh, 1, kd)
    bk = p["bqkv"][:, None, key_dim:2 * key_dim]
    bv = p["bqkv"][:, None, 2 * key_dim:]

    # Pre-masked, pre-scaled 5x5 depthwise weights: (nh, 25, N, key_dim).
    wdw25 = jnp.transpose(
        p["wdw_oihw"].reshape(num_heads, key_dim, 25), (0, 2, 1))
    mask = np.zeros((25, N), np.float32)
    for t in range(25):
        dy, dx = t // 5 - 2, t % 5 - 2
        for y in range(H):
            for x in range(W):
                if 0 <= y + dy < H and 0 <= x + dx < W:
                    mask[t, y * W + x] = 1.0
    wdwm = jnp.asarray(mask)[None, :, :, None] * wdw25[:, :, None, :] * scale

    wproj_ic = p["wproj_oc"].T                                # (dim_in, dim_out)

    return {
        "wq": wq.astype(jnp.bfloat16),
        "wk": wk.astype(jnp.bfloat16),
        "wv": wv.astype(jnp.bfloat16),
        "bq": bq, "bk": bk, "bv": bv,
        "wdwm": wdwm.astype(jnp.float32),
        "bdw": (p["bdw"] * scale)[:, None, :],                # (nh, 1, kd)
        "ab": p["ab"],                                        # (nh, N, N) f32
        "wproj": wproj_ic.reshape(num_heads, d, dim).astype(jnp.bfloat16),
        "bproj": p["bproj"][None, :],                         # (1, dim)
    }


# ------------------------------ pure-JAX reference ------------------------- #

def reference_forward(x, p, *, num_heads, key_dim, d, scale):
    B, C, H, W = x.shape
    N = H * W
    feats_in = jnp.split(x, num_heads, axis=1)
    feat = feats_in[0]
    outs = []
    for i in range(num_heads):
        if i > 0:
            feat = feat + feats_in[i]
        f = jnp.einsum('oc,bchw->bohw', p["wqkv_oc"][i], feat) \
            + p["bqkv"][i][None, :, None, None]
        q = f[:, :key_dim]
        k = f[:, key_dim:2 * key_dim]
        v = f[:, 2 * key_dim:]
        q = jax.lax.conv_general_dilated(
            q, p["wdw_oihw"][i], window_strides=(1, 1),
            padding=((2, 2), (2, 2)), feature_group_count=key_dim,
            dimension_numbers=('NCHW', 'OIHW', 'NCHW')) \
            + p["bdw"][i][None, :, None, None]
        qf = q.reshape(B, key_dim, N)
        kf = k.reshape(B, key_dim, N)
        vf = v.reshape(B, d, N)
        attn = jnp.einsum('bcn,bcm->bnm', qf, kf) * scale + p["ab"][i]
        attn = jax.nn.softmax(attn, axis=-1)
        feat = jnp.einsum('bcm,bnm->bcn', vf, attn).reshape(B, d, H, W)
        outs.append(feat)
    cat = jnp.maximum(jnp.concatenate(outs, axis=1), 0.0)
    return jnp.einsum('oc,bchw->bohw', p["wproj_oc"], cat) \
        + p["bproj"][None, :, None, None]


# ----------------------------------- main ----------------------------------- #

if __name__ == "__main__":
    # small shapes consistent with the module
    B, dim, resolution = 2, 32, 8
    num_heads, key_dim = 4, 8
    d = dim // num_heads
    scale = key_dim ** (-0.5)

    key = jax.random.PRNGKey(0)
    kx, kparam = jax.random.split(key)
    x = jax.random.normal(kx, (B, dim, resolution, resolution), jnp.float32)
    params = make_params(kparam, dim=dim, key_dim=key_dim,
                         num_heads=num_heads, resolution=resolution)
    kparams = prepare_kernel_params(params, dim=dim, key_dim=key_dim,
                                    num_heads=num_heads, resolution=resolution)

    out = cascaded_group_attention(x, kparams, num_heads=num_heads,
                                   key_dim=key_dim, d=d)
    out = jax.block_until_ready(out)

    ref = reference_forward(x, params, num_heads=num_heads,
                            key_dim=key_dim, d=d, scale=scale)
    ref = jax.block_until_ready(ref)

    # bf16 MXU operands with f32 accumulation -> relaxed tolerance vs all-f32.
    np.testing.assert_allclose(np.asarray(out), np.asarray(ref),
                               rtol=2e-2, atol=2e-2)
    print("KERNEL_OK")
</pallas_src>

<mosaic_0001>
module attributes {stable_mosaic.version = 11 : i64} {
  func.func @_cga_kernel(%arg0: i32, %arg1: memref<2x4x64x8xf32, #tpu.memory_space<vmem>>, %arg2: memref<4x8x8xbf16, #tpu.memory_space<vmem>>, %arg3: memref<4x8x8xbf16, #tpu.memory_space<vmem>>, %arg4: memref<4x8x8xbf16, #tpu.memory_space<vmem>>, %arg5: memref<4x1x8xf32, #tpu.memory_space<vmem>>, %arg6: memref<4x1x8xf32, #tpu.memory_space<vmem>>, %arg7: memref<4x1x8xf32, #tpu.memory_space<vmem>>, %arg8: memref<4x25x64x8xf32, #tpu.memory_space<vmem>>, %arg9: memref<4x1x8xf32, #tpu.memory_space<vmem>>, %arg10: memref<4x64x64xf32, #tpu.memory_space<vmem>>, %arg11: memref<4x8x32xbf16, #tpu.memory_space<vmem>>, %arg12: memref<1x32xf32, #tpu.memory_space<vmem>>, %arg13: memref<2x64x32xf32, #tpu.memory_space<vmem>>) attributes {dimension_semantics = [#tpu.dimension_semantics<parallel>], iteration_bounds = array<i64: 1>, scalar_prefetch = 0 : i64, scratch_operands = 0 : i64, tpu.core_type = #tpu.core_type<tc>, window_params = [{transform_indices = @transform_0, window_bounds = array<i64: 2, 4, 64, 8>}, {pipeline_mode = #tpu.pipeline_mode<synchronous>, transform_indices = @transform_1, window_bounds = array<i64: 4, 8, 8>}, {pipeline_mode = #tpu.pipeline_mode<synchronous>, transform_indices = @transform_2, window_bounds = array<i64: 4, 8, 8>}, {pipeline_mode = #tpu.pipeline_mode<synchronous>, transform_indices = @transform_3, window_bounds = array<i64: 4, 8, 8>}, {pipeline_mode = #tpu.pipeline_mode<synchronous>, transform_indices = @transform_4, window_bounds = array<i64: 4, 1, 8>}, {pipeline_mode = #tpu.pipeline_mode<synchronous>, transform_indices = @transform_5, window_bounds = array<i64: 4, 1, 8>}, {pipeline_mode = #tpu.pipeline_mode<synchronous>, transform_indices = @transform_6, window_bounds = array<i64: 4, 1, 8>}, {pipeline_mode = #tpu.pipeline_mode<synchronous>, transform_indices = @transform_7, window_bounds = array<i64: 4, 25, 64, 8>}, {pipeline_mode = #tpu.pipeline_mode<synchronous>, transform_indices = @transform_8, window_bounds = array<i64: 4, 1, 8>}, {pipeline_mode = #tpu.pipeline_mode<synchronous>, transform_indices = @transform_9, window_bounds = array<i64: 4, 64, 64>}, {pipeline_mode = #tpu.pipeline_mode<synchronous>, transform_indices = @transform_10, window_bounds = array<i64: 4, 8, 32>}, {pipeline_mode = #tpu.pipeline_mode<synchronous>, transform_indices = @transform_11, window_bounds = array<i64: 1, 32>}, {transform_indices = @transform_12, window_bounds = array<i64: 2, 64, 32>}]} {
    %c0 = arith.constant 0 : index
    %c0_0 = arith.constant 0 : index
    %c0_1 = arith.constant 0 : index
    %c0_2 = arith.constant 0 : index
    %0 = vector.load %arg1[%c0, %c0_0, %c0_1, %c0_2] : memref<2x4x64x8xf32, #tpu.memory_space<vmem>>, vector<2x1x64x8xf32>
    %1 = vector.shape_cast %0 : vector<2x1x64x8xf32> to vector<2x64x8xf32>
    %2 = vector.shape_cast %1 : vector<2x64x8xf32> to vector<128x8xf32>
    %3 = arith.truncf %2 : vector<128x8xf32> to vector<128x8xbf16>
    %c0_3 = arith.constant 0 : index
    %c0_4 = arith.constant 0 : index
    %c0_5 = arith.constant 0 : index
    %4 = vector.load %arg2[%c0_3, %c0_4, %c0_5] : memref<4x8x8xbf16, #tpu.memory_space<vmem>>, vector<1x8x8xbf16>
    %5 = vector.shape_cast %4 : vector<1x8x8xbf16> to vector<8x8xbf16>
    %cst = arith.constant dense<0.000000e+00> : vector<128x8xf32>
    %6 = tpu.matmul %3, %5, %cst {dimension_numbers = #tpu.dot_dimension_numbers<[1], [0], [0], [1], [0, 0, 1, 1], [], []>} : vector<128x8xbf16>, vector<8x8xbf16>, vector<128x8xf32> -> vector<128x8xf32>
    %c0_6 = arith.constant 0 : index
    %c0_7 = arith.constant 0 : index
    %c0_8 = arith.constant 0 : index
    %7 = vector.load %arg5[%c0_6, %c0_7, %c0_8] : memref<4x1x8xf32, #tpu.memory_space<vmem>>, vector<1x1x8xf32>
    %8 = vector.shape_cast %7 : vector<1x1x8xf32> to vector<1x8xf32>
    %9 = vector.broadcast %8 : vector<1x8xf32> to vector<128x8xf32>
    %10 = arith.addf %6, %9 : vector<128x8xf32>
    %c0_9 = arith.constant 0 : index
    %c0_10 = arith.constant 0 : index
    %c0_11 = arith.constant 0 : index
    %11 = vector.load %arg3[%c0_9, %c0_10, %c0_11] : memref<4x8x8xbf16, #tpu.memory_space<vmem>>, vector<1x8x8xbf16>
    %12 = vector.shape_cast %11 : vector<1x8x8xbf16> to vector<8x8xbf16>
    %cst_12 = arith.constant dense<0.000000e+00> : vector<128x8xf32>
    %13 = tpu.matmul %3, %12, %cst_12 {dimension_numbers = #tpu.dot_dimension_numbers<[1], [0], [0], [1], [0, 0, 1, 1], [], []>} : vector<128x8xbf16>, vector<8x8xbf16>, vector<128x8xf32> -> vector<128x8xf32>
    %c0_13 = arith.constant 0 : index
    %c0_14 = arith.constant 0 : index
    %c0_15 = arith.constant 0 : index
    %14 = vector.load %arg6[%c0_13, %c0_14, %c0_15] : memref<4x1x8xf32, #tpu.memory_space<vmem>>, vector<1x1x8xf32>
    %15 = vector.shape_cast %14 : vector<1x1x8xf32> to vector<1x8xf32>
    %16 = vector.broadcast %15 : vector<1x8xf32> to vector<128x8xf32>
    %17 = arith.addf %13, %16 : vector<128x8xf32>
    %c0_16 = arith.constant 0 : index
    %c0_17 = arith.constant 0 : index
    %c0_18 = arith.constant 0 : index
    %18 = vector.load %arg4[%c0_16, %c0_17, %c0_18] : memref<4x8x8xbf16, #tpu.memory_space<vmem>>, vector<1x8x8xbf16>
    %19 = vector.shape_cast %18 : vector<1x8x8xbf16> to vector<8x8xbf16>
    %cst_19 = arith.constant dense<0.000000e+00> : vector<128x8xf32>
    %20 = tpu.matmul %3, %19, %cst_19 {dimension_numbers = #tpu.dot_dimension_numbers<[1], [0], [0], [1], [0, 0, 1, 1], [], []>} : vector<128x8xbf16>, vector<8x8xbf16>, vector<128x8xf32> -> vector<128x8xf32>
    %c0_20 = arith.constant 0 : index
    %c0_21 = arith.constant 0 : index
    %c0_22 = arith.constant 0 : index
    %21 = vector.load %arg7[%c0_20, %c0_21, %c0_22] : memref<4x1x8xf32, #tpu.memory_space<vmem>>, vector<1x1x8xf32>
    %22 = vector.shape_cast %21 : vector<1x1x8xf32> to vector<1x8xf32>
    %23 = vector.broadcast %22 : vector<1x8xf32> to vector<128x8xf32>
    %24 = arith.addf %20, %23 : vector<128x8xf32>
    %cst_23 = arith.constant 0.000000e+00 : f32
    %25 = vector.broadcast %cst_23 : f32 to vector<2x64x8xf32>
    %c18_i32 = arith.constant 18 : i32
    %26 = tpu.dynamic_rotate %10 by %c18_i32 dim 0 : vector<128x8xf32>, i32 -> vector<128x8xf32>
    %27 = vector.shape_cast %26 : vector<128x8xf32> to vector<2x64x8xf32>
    %c0_24 = arith.constant 0 : index
    %c0_25 = arith.constant 0 : index
    %c0_26 = arith.constant 0 : index
    %c0_27 = arith.constant 0 : index
    %28 = vector.load %arg8[%c0_24, %c0_25, %c0_26, %c0_27] : memref<4x25x64x8xf32, #tpu.memory_space<vmem>>, vector<1x1x64x8xf32>
    %29 = vector.shape_cast %28 : vector<1x1x64x8xf32> to vector<64x8xf32>
    %30 = vector.shape_cast %29 : vector<64x8xf32> to vector<1x64x8xf32>
    %31 = vector.broadcast %30 : vector<1x64x8xf32> to vector<2x64x8xf32>
    %32 = arith.mulf %27, %31 : vector<2x64x8xf32>
    %33 = arith.addf %25, %32 : vector<2x64x8xf32>
    %c17_i32 = arith.constant 17 : i32
    %34 = tpu.dynamic_rotate %10 by %c17_i32 dim 0 : vector<128x8xf32>, i32 -> vector<128x8xf32>
    %35 = vector.shape_cast %34 : vector<128x8xf32> to vector<2x64x8xf32>
    %c0_28 = arith.constant 0 : index
    %c1 = arith.constant 1 : index
    %c0_29 = arith.constant 0 : index
    %c0_30 = arith.constant 0 : index
    %36 = vector.load %arg8[%c0_28, %c1, %c0_29, %c0_30] : memref<4x25x64x8xf32, #tpu.memory_space<vmem>>, vector<1x1x64x8xf32>
    %37 = vector.shape_cast %36 : vector<1x1x64x8xf32> to vector<64x8xf32>
    %38 = vector.shape_cast %37 : vector<64x8xf32> to vector<1x64x8xf32>
    %39 = vector.broadcast %38 : vector<1x64x8xf32> to vector<2x64x8xf32>
    %40 = arith.mulf %35, %39 : vector<2x64x8xf32>
    %41 = arith.addf %33, %40 : vector<2x64x8xf32>
    %c16_i32 = arith.constant 16 : i32
    %42 = tpu.dynamic_rotate %10 by %c16_i32 dim 0 : vector<128x8xf32>, i32 -> vector<128x8xf32>
    %43 = vector.shape_cast %42 : vector<128x8xf32> to vector<2x64x8xf32>
    %c0_31 = arith.constant 0 : index
    %c2 = arith.constant 2 : index
    %c0_32 = arith.constant 0 : index
    %c0_33 = arith.constant 0 : index
    %44 = vector.load %arg8[%c0_31, %c2, %c0_32, %c0_33] : memref<4x25x64x8xf32, #tpu.memory_space<vmem>>, vector<1x1x64x8xf32>
    %45 = vector.shape_cast %44 : vector<1x1x64x8xf32> to vector<64x8xf32>
    %46 = vector.shape_cast %45 : vector<64x8xf32> to vector<1x64x8xf32>
    %47 = vector.broadcast %46 : vector<1x64x8xf32> to vector<2x64x8xf32>
    %48 = arith.mulf %43, %47 : vector<2x64x8xf32>
    %49 = arith.addf %41, %48 : vector<2x64x8xf32>
    %c15_i32 = arith.constant 15 : i32
    %50 = tpu.dynamic_rotate %10 by %c15_i32 dim 0 : vector<128x8xf32>, i32 -> vector<128x8xf32>
    %51 = vector.shape_cast %50 : vector<128x8xf32> to vector<2x64x8xf32>
    %c0_34 = arith.constant 0 : index
    %c3 = arith.constant 3 : index
    %c0_35 = arith.constant 0 : index
    %c0_36 = arith.constant 0 : index
    %52 = vector.load %arg8[%c0_34, %c3, %c0_35, %c0_36] : memref<4x25x64x8xf32, #tpu.memory_space<vmem>>, vector<1x1x64x8xf32>
    %53 = vector.shape_cast %52 : vector<1x1x64x8xf32> to vector<64x8xf32>
    %54 = vector.shape_cast %53 : vector<64x8xf32> to vector<1x64x8xf32>
    %55 = vector.broadcast %54 : vector<1x64x8xf32> to vector<2x64x8xf32>
    %56 = arith.mulf %51, %55 : vector<2x64x8xf32>
    %57 = arith.addf %49, %56 : vector<2x64x8xf32>
    %c14_i32 = arith.constant 14 : i32
    %58 = tpu.dynamic_rotate %10 by %c14_i32 dim 0 : vector<128x8xf32>, i32 -> vector<128x8xf32>
    %59 = vector.shape_cast %58 : vector<128x8xf32> to vector<2x64x8xf32>
    %c0_37 = arith.constant 0 : index
    %c4 = arith.constant 4 : index
    %c0_38 = arith.constant 0 : index
    %c0_39 = arith.constant 0 : index
    %60 = vector.load %arg8[%c0_37, %c4, %c0_38, %c0_39] : memref<4x25x64x8xf32, #tpu.memory_space<vmem>>, vector<1x1x64x8xf32>
    %61 = vector.shape_cast %60 : vector<1x1x64x8xf32> to vector<64x8xf32>
    %62 = vector.shape_cast %61 : vector<64x8xf32> to vector<1x64x8xf32>
    %63 = vector.broadcast %62 : vector<1x64x8xf32> to vector<2x64x8xf32>
    %64 = arith.mulf %59, %63 : vector<2x64x8xf32>
    %65 = arith.addf %57, %64 : vector<2x64x8xf32>
    %c10_i32 = arith.constant 10 : i32
    %66 = tpu.dynamic_rotate %10 by %c10_i32 dim 0 : vector<128x8xf32>, i32 -> vector<128x8xf32>
    %67 = vector.shape_cast %66 : vector<128x8xf32> to vector<2x64x8xf32>
    %c0_40 = arith.constant 0 : index
    %c5 = arith.constant 5 : index
    %c0_41 = arith.constant 0 : index
    %c0_42 = arith.constant 0 : index
    %68 = vector.load %arg8[%c0_40, %c5, %c0_41, %c0_42] : memref<4x25x64x8xf32, #tpu.memory_space<vmem>>, vector<1x1x64x8xf32>
    %69 = vector.shape_cast %68 : vector<1x1x64x8xf32> to vector<64x8xf32>
    %70 = vector.shape_cast %69 : vector<64x8xf32> to vector<1x64x8xf32>
    %71 = vector.broadcast %70 : vector<1x64x8xf32> to vector<2x64x8xf32>
    %72 = arith.mulf %67, %71 : vector<2x64x8xf32>
    %73 = arith.addf %65, %72 : vector<2x64x8xf32>
    %c9_i32 = arith.constant 9 : i32
    %74 = tpu.dynamic_rotate %10 by %c9_i32 dim 0 : vector<128x8xf32>, i32 -> vector<128x8xf32>
    %75 = vector.shape_cast %74 : vector<128x8xf32> to vector<2x64x8xf32>
    %c0_43 = arith.constant 0 : index
    %c6 = arith.constant 6 : index
    %c0_44 = arith.constant 0 : index
    %c0_45 = arith.constant 0 : index
    %76 = vector.load %arg8[%c0_43, %c6, %c0_44, %c0_45] : memref<4x25x64x8xf32, #tpu.memory_space<vmem>>, vector<1x1x64x8xf32>
    %77 = vector.shape_cast %76 : vector<1x1x64x8xf32> to vector<64x8xf32>
    %78 = vector.shape_cast %77 : vector<64x8xf32> to vector<1x64x8xf32>
    %79 = vector.broadcast %78 : vector<1x64x8xf32> to vector<2x64x8xf32>
    %80 = arith.mulf %75, %79 : vector<2x64x8xf32>
    %81 = arith.addf %73, %80 : vector<2x64x8xf32>
    %c8_i32 = arith.constant 8 : i32
    %82 = tpu.dynamic_rotate %10 by %c8_i32 dim 0 : vector<128x8xf32>, i32 -> vector<128x8xf32>
    %83 = vector.shape_cast %82 : vector<128x8xf32> to vector<2x64x8xf32>
    %c0_46 = arith.constant 0 : index
    %c7 = arith.constant 7 : index
    %c0_47 = arith.constant 0 : index
    %c0_48 = arith.constant 0 : index
    %84 = vector.load %arg8[%c0_46, %c7, %c0_47, %c0_48] : memref<4x25x64x8xf32, #tpu.memory_space<vmem>>, vector<1x1x64x8xf32>
    %85 = vector.shape_cast %84 : vector<1x1x64x8xf32> to vector<64x8xf32>
    %86 = vector.shape_cast %85 : vector<64x8xf32> to vector<1x64x8xf32>
    %87 = vector.broadcast %86 : vector<1x64x8xf32> to vector<2x64x8xf32>
    %88 = arith.mulf %83, %87 : vector<2x64x8xf32>
    %89 = arith.addf %81, %88 : vector<2x64x8xf32>
    %c7_i32 = arith.constant 7 : i32
    %90 = tpu.dynamic_rotate %10 by %c7_i32 dim 0 : vector<128x8xf32>, i32 -> vector<128x8xf32>
    %91 = vector.shape_cast %90 : vector<128x8xf32> to vector<2x64x8xf32>
    %c0_49 = arith.constant 0 : index
    %c8 = arith.constant 8 : index
    %c0_50 = arith.constant 0 : index
    %c0_51 = arith.constant 0 : index
    %92 = vector.load %arg8[%c0_49, %c8, %c0_50, %c0_51] : memref<4x25x64x8xf32, #tpu.memory_space<vmem>>, vector<1x1x64x8xf32>
    %93 = vector.shape_cast %92 : vector<1x1x64x8xf32> to vector<64x8xf32>
    %94 = vector.shape_cast %93 : vector<64x8xf32> to vector<1x64x8xf32>
    %95 = vector.broadcast %94 : vector<1x64x8xf32> to vector<2x64x8xf32>
    %96 = arith.mulf %91, %95 : vector<2x64x8xf32>
    %97 = arith.addf %89, %96 : vector<2x64x8xf32>
    %c6_i32 = arith.constant 6 : i32
    %98 = tpu.dynamic_rotate %10 by %c6_i32 dim 0 : vector<128x8xf32>, i32 -> vector<128x8xf32>
    %99 = vector.shape_cast %98 : vector<128x8xf32> to vector<2x64x8xf32>
    %c0_52 = arith.constant 0 : index
    %c9 = arith.constant 9 : index
    %c0_53 = arith.constant 0 : index
    %c0_54 = arith.constant 0 : index
    %100 = vector.load %arg8[%c0_52, %c9, %c0_53, %c0_54] : memref<4x25x64x8xf32, #tpu.memory_space<vmem>>, vector<1x1x64x8xf32>
    %101 = vector.shape_cast %100 : vector<1x1x64x8xf32> to vector<64x8xf32>
    %102 = vector.shape_cast %101 : vector<64x8xf32> to vector<1x64x8xf32>
    %103 = vector.broadcast %102 : vector<1x64x8xf32> to vector<2x64x8xf32>
    %104 = arith.mulf %99, %103 : vector<2x64x8xf32>
    %105 = arith.addf %97, %104 : vector<2x64x8xf32>
    %c2_i32 = arith.constant 2 : i32
    %106 = tpu.dynamic_rotate %10 by %c2_i32 dim 0 : vector<128x8xf32>, i32 -> vector<128x8xf32>
    %107 = vector.shape_cast %106 : vector<128x8xf32> to vector<2x64x8xf32>
    %c0_55 = arith.constant 0 : index
    %c10 = arith.constant 10 : index
    %c0_56 = arith.constant 0 : index
    %c0_57 = arith.constant 0 : index
    %108 = vector.load %arg8[%c0_55, %c10, %c0_56, %c0_57] : memref<4x25x64x8xf32, #tpu.memory_space<vmem>>, vector<1x1x64x8xf32>
    %109 = vector.shape_cast %108 : vector<1x1x64x8xf32> to vector<64x8xf32>
    %110 = vector.shape_cast %109 : vector<64x8xf32> to vector<1x64x8xf32>
    %111 = vector.broadcast %110 : vector<1x64x8xf32> to vector<2x64x8xf32>
    %112 = arith.mulf %107, %111 : vector<2x64x8xf32>
    %113 = arith.addf %105, %112 : vector<2x64x8xf32>
    %c1_i32 = arith.constant 1 : i32
    %114 = tpu.dynamic_rotate %10 by %c1_i32 dim 0 : vector<128x8xf32>, i32 -> vector<128x8xf32>
    %115 = vector.shape_cast %114 : vector<128x8xf32> to vector<2x64x8xf32>
    %c0_58 = arith.constant 0 : index
    %c11 = arith.constant 11 : index
    %c0_59 = arith.constant 0 : index
    %c0_60 = arith.constant 0 : index
    %116 = vector.load %arg8[%c0_58, %c11, %c0_59, %c0_60] : memref<4x25x64x8xf32, #tpu.memory_space<vmem>>, vector<1x1x64x8xf32>
    %117 = vector.shape_cast %116 : vector<1x1x64x8xf32> to vector<64x8xf32>
    %118 = vector.shape_cast %117 : vector<64x8xf32> to vector<1x64x8xf32>
    %119 = vector.broadcast %118 : vector<1x64x8xf32> to vector<2x64x8xf32>
    %120 = arith.mulf %115, %119 : vector<2x64x8xf32>
    %121 = arith.addf %113, %120 : vector<2x64x8xf32>
    %122 = vector.shape_cast %10 : vector<128x8xf32> to vector<2x64x8xf32>
    %c0_61 = arith.constant 0 : index
    %c12 = arith.constant 12 : index
    %c0_62 = arith.constant 0 : index
    %c0_63 = arith.constant 0 : index
    %123 = vector.load %arg8[%c0_61, %c12, %c0_62, %c0_63] : memref<4x25x64x8xf32, #tpu.memory_space<vmem>>, vector<1x1x64x8xf32>
    %124 = vector.shape_cast %123 : vector<1x1x64x8xf32> to vector<64x8xf32>
    %125 = vector.shape_cast %124 : vector<64x8xf32> to vector<1x64x8xf32>
    %126 = vector.broadcast %125 : vector<1x64x8xf32> to vector<2x64x8xf32>
    %127 = arith.mulf %122, %126 : vector<2x64x8xf32>
    %128 = arith.addf %121, %127 : vector<2x64x8xf32>
    %c127_i32 = arith.constant 127 : i32
    %129 = tpu.dynamic_rotate %10 by %c127_i32 dim 0 : vector<128x8xf32>, i32 -> vector<128x8xf32>
    %130 = vector.shape_cast %129 : vector<128x8xf32> to vector<2x64x8xf32>
    %c0_64 = arith.constant 0 : index
    %c13 = arith.constant 13 : index
    %c0_65 = arith.constant 0 : index
    %c0_66 = arith.constant 0 : index
    %131 = vector.load %arg8[%c0_64, %c13, %c0_65, %c0_66] : memref<4x25x64x8xf32, #tpu.memory_space<vmem>>, vector<1x1x64x8xf32>
    %132 = vector.shape_cast %131 : vector<1x1x64x8xf32> to vector<64x8xf32>
    %133 = vector.shape_cast %132 : vector<64x8xf32> to vector<1x64x8xf32>
    %134 = vector.broadcast %133 : vector<1x64x8xf32> to vector<2x64x8xf32>
    %135 = arith.mulf %130, %134 : vector<2x64x8xf32>
    %136 = arith.addf %128, %135 : vector<2x64x8xf32>
    %c126_i32 = arith.constant 126 : i32
    %137 = tpu.dynamic_rotate %10 by %c126_i32 dim 0 : vector<128x8xf32>, i32 -> vector<128x8xf32>
    %138 = vector.shape_cast %137 : vector<128x8xf32> to vector<2x64x8xf32>
    %c0_67 = arith.constant 0 : index
    %c14 = arith.constant 14 : index
    %c0_68 = arith.constant 0 : index
    %c0_69 = arith.constant 0 : index
    %139 = vector.load %arg8[%c0_67, %c14, %c0_68, %c0_69] : memref<4x25x64x8xf32, #tpu.memory_space<vmem>>, vector<1x1x64x8xf32>
    %140 = vector.shape_cast %139 : vector<1x1x64x8xf32> to vector<64x8xf32>
    %141 = vector.shape_cast %140 : vector<64x8xf32> to vector<1x64x8xf32>
    %142 = vector.broadcast %141 : vector<1x64x8xf32> to vector<2x64x8xf32>
    %143 = arith.mulf %138, %142 : vector<2x64x8xf32>
    %144 = arith.addf %136, %143 : vector<2x64x8xf32>
    %c122_i32 = arith.constant 122 : i32
    %145 = tpu.dynamic_rotate %10 by %c122_i32 dim 0 : vector<128x8xf32>, i32 -> vector<128x8xf32>
    %146 = vector.shape_cast %145 : vector<128x8xf32> to vector<2x64x8xf32>
    %c0_70 = arith.constant 0 : index
    %c15 = arith.constant 15 : index
    %c0_71 = arith.constant 0 : index
    %c0_72 = arith.constant 0 : index
    %147 = vector.load %arg8[%c0_70, %c15, %c0_71, %c0_72] : memref<4x25x64x8xf32, #tpu.memory_space<vmem>>, vector<1x1x64x8xf32>
    %148 = vector.shape_cast %147 : vector<1x1x64x8xf32> to vector<64x8xf32>
    %149 = vector.shape_cast %148 : vector<64x8xf32> to vector<1x64x8xf32>
    %150 = vector.broadcast %149 : vector<1x64x8xf32> to vector<2x64x8xf32>
    %151 = arith.mulf %146, %150 : vector<2x64x8xf32>
    %152 = arith.addf %144, %151 : vector<2x64x8xf32>
    %c121_i32 = arith.constant 121 : i32
    %153 = tpu.dynamic_rotate %10 by %c121_i32 dim 0 : vector<128x8xf32>, i32 -> vector<128x8xf32>
    %154 = vector.shape_cast %153 : vector<128x8xf32> to vector<2x64x8xf32>
    %c0_73 = arith.constant 0 : index
    %c16 = arith.constant 16 : index
    %c0_74 = arith.constant 0 : index
    %c0_75 = arith.constant 0 : index
    %155 = vector.load %arg8[%c0_73, %c16, %c0_74, %c0_75] : memref<4x25x64x8xf32, #tpu.memory_space<vmem>>, vector<1x1x64x8xf32>
    %156 = vector.shape_cast %155 : vector<1x1x64x8xf32> to vector<64x8xf32>
    %157 = vector.shape_cast %156 : vector<64x8xf32> to vector<1x64x8xf32>
    %158 = vector.broadcast %157 : vector<1x64x8xf32> to vector<2x64x8xf32>
    %159 = arith.mulf %154, %158 : vector<2x64x8xf32>
    %160 = arith.addf %152, %159 : vector<2x64x8xf32>
    %c120_i32 = arith.constant 120 : i32
    %161 = tpu.dynamic_rotate %10 by %c120_i32 dim 0 : vector<128x8xf32>, i32 -> vector<128x8xf32>
    %162 = vector.shape_cast %161 : vector<128x8xf32> to vector<2x64x8xf32>
    %c0_76 = arith.constant 0 : index
    %c17 = arith.constant 17 : index
    %c0_77 = arith.constant 0 : index
    %c0_78 = arith.constant 0 : index
    %163 = vector.load %arg8[%c0_76, %c17, %c0_77, %c0_78] : memref<4x25x64x8xf32, #tpu.memory_space<vmem>>, vector<1x1x64x8xf32>
    %164 = vector.shape_cast %163 : vector<1x1x64x8xf32> to vector<64x8xf32>
    %165 = vector.shape_cast %164 : vector<64x8xf32> to vector<1x64x8xf32>
    %166 = vector.broadcast %165 : vector<1x64x8xf32> to vector<2x64x8xf32>
    %167 = arith.mulf %162, %166 : vector<2x64x8xf32>
    %168 = arith.addf %160, %167 : vector<2x64x8xf32>
    %c119_i32 = arith.constant 119 : i32
    %169 = tpu.dynamic_rotate %10 by %c119_i32 dim 0 : vector<128x8xf32>, i32 -> vector<128x8xf32>
    %170 = vector.shape_cast %169 : vector<128x8xf32> to vector<2x64x8xf32>
    %c0_79 = arith.constant 0 : index
    %c18 = arith.constant 18 : index
    %c0_80 = arith.constant 0 : index
    %c0_81 = arith.constant 0 : index
    %171 = vector.load %arg8[%c0_79, %c18, %c0_80, %c0_81] : memref<4x25x64x8xf32, #tpu.memory_space<vmem>>, vector<1x1x64x8xf32>
    %172 = vector.shape_cast %171 : vector<1x1x64x8xf32> to vector<64x8xf32>
    %173 = vector.shape_cast %172 : vector<64x8xf32> to vector<1x64x8xf32>
    %174 = vector.broadcast %173 : vector<1x64x8xf32> to vector<2x64x8xf32>
    %175 = arith.mulf %170, %174 : vector<2x64x8xf32>
    %176 = arith.addf %168, %175 : vector<2x64x8xf32>
    %c118_i32 = arith.constant 118 : i32
    %177 = tpu.dynamic_rotate %10 by %c118_i32 dim 0 : vector<128x8xf32>, i32 -> vector<128x8xf32>
    %178 = vector.shape_cast %177 : vector<128x8xf32> to vector<2x64x8xf32>
    %c0_82 = arith.constant 0 : index
    %c19 = arith.constant 19 : index
    %c0_83 = arith.constant 0 : index
    %c0_84 = arith.constant 0 : index
    %179 = vector.load %arg8[%c0_82, %c19, %c0_83, %c0_84] : memref<4x25x64x8xf32, #tpu.memory_space<vmem>>, vector<1x1x64x8xf32>
    %180 = vector.shape_cast %179 : vector<1x1x64x8xf32> to vector<64x8xf32>
    %181 = vector.shape_cast %180 : vector<64x8xf32> to vector<1x64x8xf32>
    %182 = vector.broadcast %181 : vector<1x64x8xf32> to vector<2x64x8xf32>
    %183 = arith.mulf %178, %182 : vector<2x64x8xf32>
    %184 = arith.addf %176, %183 : vector<2x64x8xf32>
    %c114_i32 = arith.constant 114 : i32
    %185 = tpu.dynamic_rotate %10 by %c114_i32 dim 0 : vector<128x8xf32>, i32 -> vector<128x8xf32>
    %186 = vector.shape_cast %185 : vector<128x8xf32> to vector<2x64x8xf32>
    %c0_85 = arith.constant 0 : index
    %c20 = arith.constant 20 : index
    %c0_86 = arith.constant 0 : index
    %c0_87 = arith.constant 0 : index
    %187 = vector.load %arg8[%c0_85, %c20, %c0_86, %c0_87] : memref<4x25x64x8xf32, #tpu.memory_space<vmem>>, vector<1x1x64x8xf32>
    %188 = vector.shape_cast %187 : vector<1x1x64x8xf32> to vector<64x8xf32>
    %189 = vector.shape_cast %188 : vector<64x8xf32> to vector<1x64x8xf32>
    %190 = vector.broadcast %189 : vector<1x64x8xf32> to vector<2x64x8xf32>
    %191 = arith.mulf %186, %190 : vector<2x64x8xf32>
    %192 = arith.addf %184, %191 : vector<2x64x8xf32>
    %c113_i32 = arith.constant 113 : i32
    %193 = tpu.dynamic_rotate %10 by %c113_i32 dim 0 : vector<128x8xf32>, i32 -> vector<128x8xf32>
    %194 = vector.shape_cast %193 : vector<128x8xf32> to vector<2x64x8xf32>
    %c0_88 = arith.constant 0 : index
    %c21 = arith.constant 21 : index
    %c0_89 = arith.constant 0 : index
    %c0_90 = arith.constant 0 : index
    %195 = vector.load %arg8[%c0_88, %c21, %c0_89, %c0_90] : memref<4x25x64x8xf32, #tpu.memory_space<vmem>>, vector<1x1x64x8xf32>
    %196 = vector.shape_cast %195 : vector<1x1x64x8xf32> to vector<64x8xf32>
    %197 = vector.shape_cast %196 : vector<64x8xf32> to vector<1x64x8xf32>
    %198 = vector.broadcast %197 : vector<1x64x8xf32> to vector<2x64x8xf32>
    %199 = arith.mulf %194, %198 : vector<2x64x8xf32>
    %200 = arith.addf %192, %199 : vector<2x64x8xf32>
    %c112_i32 = arith.constant 112 : i32
    %201 = tpu.dynamic_rotate %10 by %c112_i32 dim 0 : vector<128x8xf32>, i32 -> vector<128x8xf32>
    %202 = vector.shape_cast %201 : vector<128x8xf32> to vector<2x64x8xf32>
    %c0_91 = arith.constant 0 : index
    %c22 = arith.constant 22 : index
    %c0_92 = arith.constant 0 : index
    %c0_93 = arith.constant 0 : index
    %203 = vector.load %arg8[%c0_91, %c22, %c0_92, %c0_93] : memref<4x25x64x8xf32, #tpu.memory_space<vmem>>, vector<1x1x64x8xf32>
    %204 = vector.shape_cast %203 : vector<1x1x64x8xf32> to vector<64x8xf32>
    %205 = vector.shape_cast %204 : vector<64x8xf32> to vector<1x64x8xf32>
    %206 = vector.broadcast %205 : vector<1x64x8xf32> to vector<2x64x8xf32>
    %207 = arith.mulf %202, %206 : vector<2x64x8xf32>
    %208 = arith.addf %200, %207 : vector<2x64x8xf32>
    %c111_i32 = arith.constant 111 : i32
    %209 = tpu.dynamic_rotate %10 by %c111_i32 dim 0 : vector<128x8xf32>, i32 -> vector<128x8xf32>
    %210 = vector.shape_cast %209 : vector<128x8xf32> to vector<2x64x8xf32>
    %c0_94 = arith.constant 0 : index
    %c23 = arith.constant 23 : index
    %c0_95 = arith.constant 0 : index
    %c0_96 = arith.constant 0 : index
    %211 = vector.load %arg8[%c0_94, %c23, %c0_95, %c0_96] : memref<4x25x64x8xf32, #tpu.memory_space<vmem>>, vector<1x1x64x8xf32>
    %212 = vector.shape_cast %211 : vector<1x1x64x8xf32> to vector<64x8xf32>
    %213 = vector.shape_cast %212 : vector<64x8xf32> to vector<1x64x8xf32>
    %214 = vector.broadcast %213 : vector<1x64x8xf32> to vector<2x64x8xf32>
    %215 = arith.mulf %210, %214 : vector<2x64x8xf32>
    %216 = arith.addf %208, %215 : vector<2x64x8xf32>
    %c110_i32 = arith.constant 110 : i32
    %217 = tpu.dynamic_rotate %10 by %c110_i32 dim 0 : vector<128x8xf32>, i32 -> vector<128x8xf32>
    %218 = vector.shape_cast %217 : vector<128x8xf32> to vector<2x64x8xf32>
    %c0_97 = arith.constant 0 : index
    %c24 = arith.constant 24 : index
    %c0_98 = arith.constant 0 : index
    %c0_99 = arith.constant 0 : index
    %219 = vector.load %arg8[%c0_97, %c24, %c0_98, %c0_99] : memref<4x25x64x8xf32, #tpu.memory_space<vmem>>, vector<1x1x64x8xf32>
    %220 = vector.shape_cast %219 : vector<1x1x64x8xf32> to vector<64x8xf32>
    %221 = vector.shape_cast %220 : vector<64x8xf32> to vector<1x64x8xf32>
    %222 = vector.broadcast %221 : vector<1x64x8xf32> to vector<2x64x8xf32>
    %223 = arith.mulf %218, %222 : vector<2x64x8xf32>
    %224 = arith.addf %216, %223 : vector<2x64x8xf32>
    %c0_100 = arith.constant 0 : index
    %c0_101 = arith.constant 0 : index
    %c0_102 = arith.constant 0 : index
    %225 = vector.load %arg9[%c0_100, %c0_101, %c0_102] : memref<4x1x8xf32, #tpu.memory_space<vmem>>, vector<1x1x8xf32>
    %226 = vector.shape_cast %225 : vector<1x1x8xf32> to vector<1x8xf32>
    %227 = vector.shape_cast %226 : vector<1x8xf32> to vector<1x1x8xf32>
    %228 = vector.broadcast %227 : vector<1x1x8xf32> to vector<2x64x8xf32>
    %229 = arith.addf %224, %228 : vector<2x64x8xf32>
    %230 = arith.truncf %229 : vector<2x64x8xf32> to vector<2x64x8xbf16>
    %231 = vector.shape_cast %17 : vector<128x8xf32> to vector<2x64x8xf32>
    %232 = arith.truncf %231 : vector<2x64x8xf32> to vector<2x64x8xbf16>
    %233 = vector.shape_cast %24 : vector<128x8xf32> to vector<2x64x8xf32>
    %234 = arith.truncf %233 : vector<2x64x8xf32> to vector<2x64x8xbf16>
    "tpu.trace_start"() <{level = 10 : i32, message = "bqc,bkc->bqk"}> : () -> ()
    %cst_103 = arith.constant dense<0.000000e+00> : vector<2x64x64xf32>
    %235 = tpu.matmul %230, %232, %cst_103 {dimension_numbers = #tpu.dot_dimension_numbers<[2], [2], [1], [1], [0, 0, 0, 1, 1, 1], [0], [0]>} : vector<2x64x8xbf16>, vector<2x64x8xbf16>, vector<2x64x64xf32> -> vector<2x64x64xf32>
    "tpu.trace_stop"() : () -> ()
    %c0_104 = arith.constant 0 : index
    %c0_105 = arith.constant 0 : index
    %c0_106 = arith.constant 0 : index
    %236 = vector.load %arg10[%c0_104, %c0_105, %c0_106] : memref<4x64x64xf32, #tpu.memory_space<vmem>>, vector<1x64x64xf32>
    %237 = vector.shape_cast %236 : vector<1x64x64xf32> to vector<64x64xf32>
    %238 = vector.shape_cast %237 : vector<64x64xf32> to vector<1x64x64xf32>
    %239 = vector.broadcast %238 : vector<1x64x64xf32> to vector<2x64x64xf32>
    %240 = arith.addf %235, %239 : vector<2x64x64xf32>
    %cst_107 = arith.constant dense<0xFF800000> : vector<2x64xf32>
    %241 = vector.multi_reduction <maximumf>, %240, %cst_107 [2] : vector<2x64x64xf32> to vector<2x64xf32>
    %242 = vector.shape_cast %241 : vector<2x64xf32> to vector<2x64x1xf32>
    %243 = vector.broadcast %242 : vector<2x64x1xf32> to vector<2x64x64xf32>
    %244 = arith.subf %240, %243 : vector<2x64x64xf32>
    %245 = math.exp %244 : vector<2x64x64xf32>
    %cst_108 = arith.constant dense<0.000000e+00> : vector<2x64xf32>
    %246 = vector.multi_reduction <add>, %245, %cst_108 [2] : vector<2x64x64xf32> to vector<2x64xf32>
    %247 = vector.shape_cast %246 : vector<2x64xf32> to vector<2x64x1xf32>
    %248 = tpu.reciprocal %247 {approx = true} : vector<2x64x1xf32> -> vector<2x64x1xf32>
    %249 = vector.broadcast %248 : vector<2x64x1xf32> to vector<2x64x64xf32>
    %250 = arith.mulf %245, %249 : vector<2x64x64xf32>
    %251 = arith.truncf %250 : vector<2x64x64xf32> to vector<2x64x64xbf16>
    "tpu.trace_start"() <{level = 10 : i32, message = "bqk,bkc->bqc"}> : () -> ()
    %cst_109 = arith.constant dense<0.000000e+00> : vector<2x64x8xf32>
    %252 = tpu.matmul %251, %234, %cst_109 {dimension_numbers = #tpu.dot_dimension_numbers<[2], [1], [1], [2], [0, 0, 0, 1, 1, 2], [0], [0]>} : vector<2x64x64xbf16>, vector<2x64x8xbf16>, vector<2x64x8xf32> -> vector<2x64x8xf32>
    "tpu.trace_stop"() : () -> ()
    %253 = vector.shape_cast %252 : vector<2x64x8xf32> to vector<128x8xf32>
    %cst_110 = arith.constant 0.000000e+00 : f32
    %254 = vector.broadcast %cst_110 : f32 to vector<128x8xf32>
    %255 = arith.maximumf %253, %254 : vector<128x8xf32>
    %256 = arith.truncf %255 : vector<128x8xf32> to vector<128x8xbf16>
    %c0_111 = arith.constant 0 : index
    %c0_112 = arith.constant 0 : index
    %c0_113 = arith.constant 0 : index
    %257 = vector.load %arg11[%c0_111, %c0_112, %c0_113] : memref<4x8x32xbf16, #tpu.memory_space<vmem>>, vector<1x8x32xbf16>
    %258 = vector.shape_cast %257 : vector<1x8x32xbf16> to vector<8x32xbf16>
    %cst_114 = arith.constant dense<0.000000e+00> : vector<128x32xf32>
    %259 = tpu.matmul %256, %258, %cst_114 {dimension_numbers = #tpu.dot_dimension_numbers<[1], [0], [0], [1], [0, 0, 1, 1], [], []>} : vector<128x8xbf16>, vector<8x32xbf16>, vector<128x32xf32> -> vector<128x32xf32>
    %c0_115 = arith.constant 0 : index
    %c1_116 = arith.constant 1 : index
    %c0_117 = arith.constant 0 : index
    %c0_118 = arith.constant 0 : index
    %260 = vector.load %arg1[%c0_115, %c1_116, %c0_117, %c0_118] : memref<2x4x64x8xf32, #tpu.memory_space<vmem>>, vector<2x1x64x8xf32>
    %261 = vector.shape_cast %260 : vector<2x1x64x8xf32> to vector<2x64x8xf32>
    %262 = vector.shape_cast %261 : vector<2x64x8xf32> to vector<128x8xf32>
    %263 = arith.addf %253, %262 : vector<128x8xf32>
    %264 = arith.truncf %263 : vector<128x8xf32> to vector<128x8xbf16>
    %c1_119 = arith.constant 1 : index
    %c0_120 = arith.constant 0 : index
    %c0_121 = arith.constant 0 : index
    %265 = vector.load %arg2[%c1_119, %c0_120, %c0_121] : memref<4x8x8xbf16, #tpu.memory_space<vmem>>, vector<1x8x8xbf16>
    %266 = vector.shape_cast %265 : vector<1x8x8xbf16> to vector<8x8xbf16>
    %cst_122 = arith.constant dense<0.000000e+00> : vector<128x8xf32>
    %267 = tpu.matmul %264, %266, %cst_122 {dimension_numbers = #tpu.dot_dimension_numbers<[1], [0], [0], [1], [0, 0, 1, 1], [], []>} : vector<128x8xbf16>, vector<8x8xbf16>, vector<128x8xf32> -> vector<128x8xf32>
    %c1_123 = arith.constant 1 : index
    %c0_124 = arith.constant 0 : index
    %c0_125 = arith.constant 0 : index
    %268 = vector.load %arg5[%c1_123, %c0_124, %c0_125] : memref<4x1x8xf32, #tpu.memory_space<vmem>>, vector<1x1x8xf32>
    %269 = vector.shape_cast %268 : vector<1x1x8xf32> to vector<1x8xf32>
    %270 = vector.broadcast %269 : vector<1x8xf32> to vector<128x8xf32>
    %271 = arith.addf %267, %270 : vector<128x8xf32>
    %c1_126 = arith.constant 1 : index
    %c0_127 = arith.constant 0 : index
    %c0_128 = arith.constant 0 : index
    %272 = vector.load %arg3[%c1_126, %c0_127, %c0_128] : memref<4x8x8xbf16, #tpu.memory_space<vmem>>, vector<1x8x8xbf16>
    %273 = vector.shape_cast %272 : vector<1x8x8xbf16> to vector<8x8xbf16>
    %cst_129 = arith.constant dense<0.000000e+00> : vector<128x8xf32>
    %274 = tpu.matmul %264, %273, %cst_129 {dimension_numbers = #tpu.dot_dimension_numbers<[1], [0], [0], [1], [0, 0, 1, 1], [], []>} : vector<128x8xbf16>, vector<8x8xbf16>, vector<128x8xf32> -> vector<128x8xf32>
    %c1_130 = arith.constant 1 : index
    %c0_131 = arith.constant 0 : index
    %c0_132 = arith.constant 0 : index
    %275 = vector.load %arg6[%c1_130, %c0_131, %c0_132] : memref<4x1x8xf32, #tpu.memory_space<vmem>>, vector<1x1x8xf32>
    %276 = vector.shape_cast %275 : vector<1x1x8xf32> to vector<1x8xf32>
    %277 = vector.broadcast %276 : vector<1x8xf32> to vector<128x8xf32>
    %278 = arith.addf %274, %277 : vector<128x8xf32>
    %c1_133 = arith.constant 1 : index
    %c0_134 = arith.constant 0 : index
    %c0_135 = arith.constant 0 : index
    %279 = vector.load %arg4[%c1_133, %c0_134, %c0_135] : memref<4x8x8xbf16, #tpu.memory_space<vmem>>, vector<1x8x8xbf16>
    %280 = vector.shape_cast %279 : vector<1x8x8xbf16> to vector<8x8xbf16>
    %cst_136 = arith.constant dense<0.000000e+00> : vector<128x8xf32>
    %281 = tpu.matmul %264, %280, %cst_136 {dimension_numbers = #tpu.dot_dimension_numbers<[1], [0], [0], [1], [0, 0, 1, 1], [], []>} : vector<128x8xbf16>, vector<8x8xbf16>, vector<128x8xf32> -> vector<128x8xf32>
    %c1_137 = arith.constant 1 : index
    %c0_138 = arith.constant 0 : index
    %c0_139 = arith.constant 0 : index
    %282 = vector.load %arg7[%c1_137, %c0_138, %c0_139] : memref<4x1x8xf32, #tpu.memory_space<vmem>>, vector<1x1x8xf32>
    %283 = vector.shape_cast %282 : vector<1x1x8xf32> to vector<1x8xf32>
    %284 = vector.broadcast %283 : vector<1x8xf32> to vector<128x8xf32>
    %285 = arith.addf %281, %284 : vector<128x8xf32>
    %cst_140 = arith.constant 0.000000e+00 : f32
    %286 = vector.broadcast %cst_140 : f32 to vector<2x64x8xf32>
    %c18_i32_141 = arith.constant 18 : i32
    %287 = tpu.dynamic_rotate %271 by %c18_i32_141 dim 0 : vector<128x8xf32>, i32 -> vector<128x8xf32>
    %288 = vector.shape_cast %287 : vector<128x8xf32> to vector<2x64x8xf32>
    %c1_142 = arith.constant 1 : index
    %c0_143 = arith.constant 0 : index
    %c0_144 = arith.constant 0 : index
    %c0_145 = arith.constant 0 : index
    %289 = vector.load %arg8[%c1_142, %c0_143, %c0_144, %c0_145] : memref<4x25x64x8xf32, #tpu.memory_space<vmem>>, vector<1x1x64x8xf32>
    %290 = vector.shape_cast %289 : vector<1x1x64x8xf32> to vector<64x8xf32>
    %291 = vector.shape_cast %290 : vector<64x8xf32> to vector<1x64x8xf32>
    %292 = vector.broadcast %291 : vector<1x64x8xf32> to vector<2x64x8xf32>
    %293 = arith.mulf %288, %292 : vector<2x64x8xf32>
    %294 = arith.addf %286, %293 : vector<2x64x8xf32>
    %c17_i32_146 = arith.constant 17 : i32
    %295 = tpu.dynamic_rotate %271 by %c17_i32_146 dim 0 : vector<128x8xf32>, i32 -> vector<128x8xf32>
    %296 = vector.shape_cast %295 : vector<128x8xf32> to vector<2x64x8xf32>
    %c1_147 = arith.constant 1 : index
    %c1_148 = arith.constant 1 : index
    %c0_149 = arith.constant 0 : index
    %c0_150 = arith.constant 0 : index
    %297 = vector.load %arg8[%c1_147, %c1_148, %c0_149, %c0_150] : memref<4x25x64x8xf32, #tpu.memory_space<vmem>>, vector<1x1x64x8xf32>
    %298 = vector.shape_cast %297 : vector<1x1x64x8xf32> to vector<64x8xf32>
    %299 = vector.shape_cast %298 : vector<64x8xf32> to vector<1x64x8xf32>
    %300 = vector.broadcast %299 : vector<1x64x8xf32> to vector<2x64x8xf32>
    %301 = arith.mulf %296, %300 : vector<2x64x8xf32>
    %302 = arith.addf %294, %301 : vector<2x64x8xf32>
    %c16_i32_151 = arith.constant 16 : i32
    %303 = tpu.dynamic_rotate %271 by %c16_i32_151 dim 0 : vector<128x8xf32>, i32 -> vector<128x8xf32>
    %304 = vector.shape_cast %303 : vector<128x8xf32> to vector<2x64x8xf32>
    %c1_152 = arith.constant 1 : index
    %c2_153 = arith.constant 2 : index
    %c0_154 = arith.constant 0 : index
    %c0_155 = arith.constant 0 : index
    %305 = vector.load %arg8[%c1_152, %c2_153, %c0_154, %c0_155] : memref<4x25x64x8xf32, #tpu.memory_space<vmem>>, vector<1x1x64x8xf32>
    %306 = vector.shape_cast %305 : vector<1x1x64x8xf32> to vector<64x8xf32>
    %307 = vector.shape_cast %306 : vector<64x8xf32> to vector<1x64x8xf32>
    %308 = vector.broadcast %307 : vector<1x64x8xf32> to vector<2x64x8xf32>
    %309 = arith.mulf %304, %308 : vector<2x64x8xf32>
    %310 = arith.addf %302, %309 : vector<2x64x8xf32>
    %c15_i32_156 = arith.constant 15 : i32
    %311 = tpu.dynamic_rotate %271 by %c15_i32_156 dim 0 : vector<128x8xf32>, i32 -> vector<128x8xf32>
    %312 = vector.shape_cast %311 : vector<128x8xf32> to vector<2x64x8xf32>
    %c1_157 = arith.constant 1 : index
    %c3_158 = arith.constant 3 : index
    %c0_159 = arith.constant 0 : index
    %c0_160 = arith.constant 0 : index
    %313 = vector.load %arg8[%c1_157, %c3_158, %c0_159, %c0_160] : memref<4x25x64x8xf32, #tpu.memory_space<vmem>>, vector<1x1x64x8xf32>
    %314 = vector.shape_cast %313 : vector<1x1x64x8xf32> to vector<64x8xf32>
    %315 = vector.shape_cast %314 : vector<64x8xf32> to vector<1x64x8xf32>
    %316 = vector.broadcast %315 : vector<1x64x8xf32> to vector<2x64x8xf32>
    %317 = arith.mulf %312, %316 : vector<2x64x8xf32>
    %318 = arith.addf %310, %317 : vector<2x64x8xf32>
    %c14_i32_161 = arith.constant 14 : i32
    %319 = tpu.dynamic_rotate %271 by %c14_i32_161 dim 0 : vector<128x8xf32>, i32 -> vector<128x8xf32>
    %320 = vector.shape_cast %319 : vector<128x8xf32> to vector<2x64x8xf32>
    %c1_162 = arith.constant 1 : index
    %c4_163 = arith.constant 4 : index
    %c0_164 = arith.constant 0 : index
    %c0_165 = arith.constant 0 : index
    %321 = vector.load %arg8[%c1_162, %c4_163, %c0_164, %c0_165] : memref<4x25x64x8xf32, #tpu.memory_space<vmem>>, vector<1x1x64x8xf32>
    %322 = vector.shape_cast %321 : vector<1x1x64x8xf32> to vector<64x8xf32>
    %323 = vector.shape_cast %322 : vector<64x8xf32> to vector<1x64x8xf32>
    %324 = vector.broadcast %323 : vector<1x64x8xf32> to vector<2x64x8xf32>
    %325 = arith.mulf %320, %324 : vector<2x64x8xf32>
    %326 = arith.addf %318, %325 : vector<2x64x8xf32>
    %c10_i32_166 = arith.constant 10 : i32
    %327 = tpu.dynamic_rotate %271 by %c10_i32_166 dim 0 : vector<128x8xf32>, i32 -> vector<128x8xf32>
    %328 = vector.shape_cast %327 : vector<128x8xf32> to vector<2x64x8xf32>
    %c1_167 = arith.constant 1 : index
    %c5_168 = arith.constant 5 : index
    %c0_169 = arith.constant 0 : index
    %c0_170 = arith.constant 0 : index
    %329 = vector.load %arg8[%c1_167, %c5_168, %c0_169, %c0_170] : memref<4x25x64x8xf32, #tpu.memory_space<vmem>>, vector<1x1x64x8xf32>
    %330 = vector.shape_cast %329 : vector<1x1x64x8xf32> to vector<64x8xf32>
    %331 = vector.shape_cast %330 : vector<64x8xf32> to vector<1x64x8xf32>
    %332 = vector.broadcast %331 : vector<1x64x8xf32> to vector<2x64x8xf32>
    %333 = arith.mulf %328, %332 : vector<2x64x8xf32>
    %334 = arith.addf %326, %333 : vector<2x64x8xf32>
    %c9_i32_171 = arith.constant 9 : i32
    %335 = tpu.dynamic_rotate %271 by %c9_i32_171 dim 0 : vector<128x8xf32>, i32 -> vector<128x8xf32>
    %336 = vector.shape_cast %335 : vector<128x8xf32> to vector<2x64x8xf32>
    %c1_172 = arith.constant 1 : index
    %c6_173 = arith.constant 6 : index
    %c0_174 = arith.constant 0 : index
    %c0_175 = arith.constant 0 : index
    %337 = vector.load %arg8[%c1_172, %c6_173, %c0_174, %c0_175] : memref<4x25x64x8xf32, #tpu.memory_space<vmem>>, vector<1x1x64x8xf32>
    %338 = vector.shape_cast %337 : vector<1x1x64x8xf32> to vector<64x8xf32>
    %339 = vector.shape_cast %338 : vector<64x8xf32> to vector<1x64x8xf32>
    %340 = vector.broadcast %339 : vector<1x64x8xf32> to vector<2x64x8xf32>
    %341 = arith.mulf %336, %340 : vector<2x64x8xf32>
    %342 = arith.addf %334, %341 : vector<2x64x8xf32>
    %c8_i32_176 = arith.constant 8 : i32
    %343 = tpu.dynamic_rotate %271 by %c8_i32_176 dim 0 : vector<128x8xf32>, i32 -> vector<128x8xf32>
    %344 = vector.shape_cast %343 : vector<128x8xf32> to vector<2x64x8xf32>
    %c1_177 = arith.constant 1 : index
    %c7_178 = arith.constant 7 : index
    %c0_179 = arith.constant 0 : index
    %c0_180 = arith.constant 0 : index
    %345 = vector.load %arg8[%c1_177, %c7_178, %c0_179, %c0_180] : memref<4x25x64x8xf32, #tpu.memory_space<vmem>>, vector<1x1x64x8xf32>
    %346 = vector.shape_cast %345 : vector<1x1x64x8xf32> to vector<64x8xf32>
    %347 = vector.shape_cast %346 : vector<64x8xf32> to vector<1x64x8xf32>
    %348 = vector.broadcast %347 : vector<1x64x8xf32> to vector<2x64x8xf32>
    %349 = arith.mulf %344, %348 : vector<2x64x8xf32>
    %350 = arith.addf %342, %349 : vector<2x64x8xf32>
    %c7_i32_181 = arith.constant 7 : i32
    %351 = tpu.dynamic_rotate %271 by %c7_i32_181 dim 0 : vector<128x8xf32>, i32 -> vector<128x8xf32>
    %352 = vector.shape_cast %351 : vector<128x8xf32> to vector<2x64x8xf32>
    %c1_182 = arith.constant 1 : index
    %c8_183 = arith.constant 8 : index
    %c0_184 = arith.constant 0 : index
    %c0_185 = arith.constant 0 : index
    %353 = vector.load %arg8[%c1_182, %c8_183, %c0_184, %c0_185] : memref<4x25x64x8xf32, #tpu.memory_space<vmem>>, vector<1x1x64x8xf32>
    %354 = vector.shape_cast %353 : vector<1x1x64x8xf32> to vector<64x8xf32>
    %355 = vector.shape_cast %354 : vector<64x8xf32> to vector<1x64x8xf32>
    %356 = vector.broadcast %355 : vector<1x64x8xf32> to vector<2x64x8xf32>
    %357 = arith.mulf %352, %356 : vector<2x64x8xf32>
    %358 = arith.addf %350, %357 : vector<2x64x8xf32>
    %c6_i32_186 = arith.constant 6 : i32
    %359 = tpu.dynamic_rotate %271 by %c6_i32_186 dim 0 : vector<128x8xf32>, i32 -> vector<128x8xf32>
    %360 = vector.shape_cast %359 : vector<128x8xf32> to vector<2x64x8xf32>
    %c1_187 = arith.constant 1 : index
    %c9_188 = arith.constant 9 : index
    %c0_189 = arith.constant 0 : index
    %c0_190 = arith.constant 0 : index
    %361 = vector.load %arg8[%c1_187, %c9_188, %c0_189, %c0_190] : memref<4x25x64x8xf32, #tpu.memory_space<vmem>>, vector<1x1x64x8xf32>
    %362 = vector.shape_cast %361 : vector<1x1x64x8xf32> to vector<64x8xf32>
    %363 = vector.shape_cast %362 : vector<64x8xf32> to vector<1x64x8xf32>
    %364 = vector.broadcast %363 : vector<1x64x8xf32> to vector<2x64x8xf32>
    %365 = arith.mulf %360, %364 : vector<2x64x8xf32>
    %366 = arith.addf %358, %365 : vector<2x64x8xf32>
    %c2_i32_191 = arith.constant 2 : i32
    %367 = tpu.dynamic_rotate %271 by %c2_i32_191 dim 0 : vector<128x8xf32>, i32 -> vector<128x8xf32>
    %368 = vector.shape_cast %367 : vector<128x8xf32> to vector<2x64x8xf32>
    %c1_192 = arith.constant 1 : index
    %c10_193 = arith.constant 10 : index
    %c0_194 = arith.constant 0 : index
    %c0_195 = arith.constant 0 : index
    %369 = vector.load %arg8[%c1_192, %c10_193, %c0_194, %c0_195] : memref<4x25x64x8xf32, #tpu.memory_space<vmem>>, vector<1x1x64x8xf32>
    %370 = vector.shape_cast %369 : vector<1x1x64x8xf32> to vector<64x8xf32>
    %371 = vector.shape_cast %370 : vector<64x8xf32> to vector<1x64x8xf32>
    %372 = vector.broadcast %371 : vector<1x64x8xf32> to vector<2x64x8xf32>
    %373 = arith.mulf %368, %372 : vector<2x64x8xf32>
    %374 = arith.addf %366, %373 : vector<2x64x8xf32>
    %c1_i32_196 = arith.constant 1 : i32
    %375 = tpu.dynamic_rotate %271 by %c1_i32_196 dim 0 : vector<128x8xf32>, i32 -> vector<128x8xf32>
    %376 = vector.shape_cast %375 : vector<128x8xf32> to vector<2x64x8xf32>
    %c1_197 = arith.constant 1 : index
    %c11_198 = arith.constant 11 : index
    %c0_199 = arith.constant 0 : index
    %c0_200 = arith.constant 0 : index
    %377 = vector.load %arg8[%c1_197, %c11_198, %c0_199, %c0_200] : memref<4x25x64x8xf32, #tpu.memory_space<vmem>>, vector<1x1x64x8xf32>
    %378 = vector.shape_cast %377 : vector<1x1x64x8xf32> to vector<64x8xf32>
    %379 = vector.shape_cast %378 : vector<64x8xf32> to vector<1x64x8xf32>
    %380 = vector.broadcast %379 : vector<1x64x8xf32> to vector<2x64x8xf32>
    %381 = arith.mulf %376, %380 : vector<2x64x8xf32>
    %382 = arith.addf %374, %381 : vector<2x64x8xf32>
    %383 = vector.shape_cast %271 : vector<128x8xf32> to vector<2x64x8xf32>
    %c1_201 = arith.constant 1 : index
    %c12_202 = arith.constant 12 : index
    %c0_203 = arith.constant 0 : index
    %c0_204 = arith.constant 0 : index
    %384 = vector.load %arg8[%c1_201, %c12_202, %c0_203, %c0_204] : memref<4x25x64x8xf32, #tpu.memory_space<vmem>>, vector<1x1x64x8xf32>
    %385 = vector.shape_cast %384 : vector<1x1x64x8xf32> to vector<64x8xf32>
    %386 = vector.shape_cast %385 : vector<64x8xf32> to vector<1x64x8xf32>
    %387 = vector.broadcast %386 : vector<1x64x8xf32> to vector<2x64x8xf32>
    %388 = arith.mulf %383, %387 : vector<2x64x8xf32>
    %389 = arith.addf %382, %388 : vector<2x64x8xf32>
    %c127_i32_205 = arith.constant 127 : i32
    %390 = tpu.dynamic_rotate %271 by %c127_i32_205 dim 0 : vector<128x8xf32>, i32 -> vector<128x8xf32>
    %391 = vector.shape_cast %390 : vector<128x8xf32> to vector<2x64x8xf32>
    %c1_206 = arith.constant 1 : index
    %c13_207 = arith.constant 13 : index
    %c0_208 = arith.constant 0 : index
    %c0_209 = arith.constant 0 : index
    %392 = vector.load %arg8[%c1_206, %c13_207, %c0_208, %c0_209] : memref<4x25x64x8xf32, #tpu.memory_space<vmem>>, vector<1x1x64x8xf32>
    %393 = vector.shape_cast %392 : vector<1x1x64x8xf32> to vector<64x8xf32>
    %394 = vector.shape_cast %393 : vector<64x8xf32> to vector<1x64x8xf32>
    %395 = vector.broadcast %394 : vector<1x64x8xf32> to vector<2x64x8xf32>
    %396 = arith.mulf %391, %395 : vector<2x64x8xf32>
    %397 = arith.addf %389, %396 : vector<2x64x8xf32>
    %c126_i32_210 = arith.constant 126 : i32
    %398 = tpu.dynamic_rotate %271 by %c126_i32_210 dim 0 : vector<128x8xf32>, i32 -> vector<128x8xf32>
    %399 = vector.shape_cast %398 : vector<128x8xf32> to vector<2x64x8xf32>
    %c1_211 = arith.constant 1 : index
    %c14_212 = arith.constant 14 : index
    %c0_213 = arith.constant 0 : index
    %c0_214 = arith.constant 0 : index
    %400 = vector.load %arg8[%c1_211, %c14_212, %c0_213, %c0_214] : memref<4x25x64x8xf32, #tpu.memory_space<vmem>>, vector<1x1x64x8xf32>
    %401 = vector.shape_cast %400 : vector<1x1x64x8xf32> to vector<64x8xf32>
    %402 = vector.shape_cast %401 : vector<64x8xf32> to vector<1x64x8xf32>
    %403 = vector.broadcast %402 : vector<1x64x8xf32> to vector<2x64x8xf32>
    %404 = arith.mulf %399, %403 : vector<2x64x8xf32>
    %405 = arith.addf %397, %404 : vector<2x64x8xf32>
    %c122_i32_215 = arith.constant 122 : i32
    %406 = tpu.dynamic_rotate %271 by %c122_i32_215 dim 0 : vector<128x8xf32>, i32 -> vector<128x8xf32>
    %407 = vector.shape_cast %406 : vector<128x8xf32> to vector<2x64x8xf32>
    %c1_216 = arith.constant 1 : index
    %c15_217 = arith.constant 15 : index
    %c0_218 = arith.constant 0 : index
    %c0_219 = arith.constant 0 : index
    %408 = vector.load %arg8[%c1_216, %c15_217, %c0_218, %c0_219] : memref<4x25x64x8xf32, #tpu.memory_space<vmem>>, vector<1x1x64x8xf32>
    %409 = vector.shape_cast %408 : vector<1x1x64x8xf32> to vector<64x8xf32>
    %410 = vector.shape_cast %409 : vector<64x8xf32> to vector<1x64x8xf32>
    %411 = vector.broadcast %410 : vector<1x64x8xf32> to vector<2x64x8xf32>
    %412 = arith.mulf %407, %411 : vector<2x64x8xf32>
    %413 = arith.addf %405, %412 : vector<2x64x8xf32>
    %c121_i32_220 = arith.constant 121 : i32
    %414 = tpu.dynamic_rotate %271 by %c121_i32_220 dim 0 : vector<128x8xf32>, i32 -> vector<128x8xf32>
    %415 = vector.shape_cast %414 : vector<128x8xf32> to vector<2x64x8xf32>
    %c1_221 = arith.constant 1 : index
    %c16_222 = arith.constant 16 : index
    %c0_223 = arith.constant 0 : index
    %c0_224 = arith.constant 0 : index
    %416 = vector.load %arg8[%c1_221, %c16_222, %c0_223, %c0_224] : memref<4x25x64x8xf32, #tpu.memory_space<vmem>>, vector<1x1x64x8xf32>
    %417 = vector.shape_cast %416 : vector<1x1x64x8xf32> to vector<64x8xf32>
    %418 = vector.shape_cast %417 : vector<64x8xf32> to vector<1x64x8xf32>
    %419 = vector.broadcast %418 : vector<1x64x8xf32> to vector<2x64x8xf32>
    %420 = arith.mulf %415, %419 : vector<2x64x8xf32>
    %421 = arith.addf %413, %420 : vector<2x64x8xf32>
    %c120_i32_225 = arith.constant 120 : i32
    %422 = tpu.dynamic_rotate %271 by %c120_i32_225 dim 0 : vector<128x8xf32>, i32 -> vector<128x8xf32>
    %423 = vector.shape_cast %422 : vector<128x8xf32> to vector<2x64x8xf32>
    %c1_226 = arith.constant 1 : index
    %c17_227 = arith.constant 17 : index
    %c0_228 = arith.constant 0 : index
    %c0_229 = arith.constant 0 : index
    %424 = vector.load %arg8[%c1_226, %c17_227, %c0_228, %c0_229] : memref<4x25x64x8xf32, #tpu.memory_space<vmem>>, vector<1x1x64x8xf32>
    %425 = vector.shape_cast %424 : vector<1x1x64x8xf32> to vector<64x8xf32>
    %426 = vector.shape_cast %425 : vector<64x8xf32> to vector<1x64x8xf32>
    %427 = vector.broadcast %426 : vector<1x64x8xf32> to vector<2x64x8xf32>
    %428 = arith.mulf %423, %427 : vector<2x64x8xf32>
    %429 = arith.addf %421, %428 : vector<2x64x8xf32>
    %c119_i32_230 = arith.constant 119 : i32
    %430 = tpu.dynamic_rotate %271 by %c119_i32_230 dim 0 : vector<128x8xf32>, i32 -> vector<128x8xf32>
    %431 = vector.shape_cast %430 : vector<128x8xf32> to vector<2x64x8xf32>
    %c1_231 = arith.constant 1 : index
    %c18_232 = arith.constant 18 : index
    %c0_233 = arith.constant 0 : index
    %c0_234 = arith.constant 0 : index
    %432 = vector.load %arg8[%c1_231, %c18_232, %c0_233, %c0_234] : memref<4x25x64x8xf32, #tpu.memory_space<vmem>>, vector<1x1x64x8xf32>
    %433 = vector.shape_cast %432 : vector<1x1x64x8xf32> to vector<64x8xf32>
    %434 = vector.shape_cast %433 : vector<64x8xf32> to vector<1x64x8xf32>
    %435 = vector.broadcast %434 : vector<1x64x8xf32> to vector<2x64x8xf32>
    %436 = arith.mulf %431, %435 : vector<2x64x8xf32>
    %437 = arith.addf %429, %436 : vector<2x64x8xf32>
    %c118_i32_235 = arith.constant 118 : i32
    %438 = tpu.dynamic_rotate %271 by %c118_i32_235 dim 0 : vector<128x8xf32>, i32 -> vector<128x8xf32>
    %439 = vector.shape_cast %438 : vector<128x8xf32> to vector<2x64x8xf32>
    %c1_236 = arith.constant 1 : index
    %c19_237 = arith.constant 19 : index
    %c0_238 = arith.constant 0 : index
    %c0_239 = arith.constant 0 : index
    %440 = vector.load %arg8[%c1_236, %c19_237, %c0_238, %c0_239] : memref<4x25x64x8xf32, #tpu.memory_space<vmem>>, vector<1x1x64x8xf32>
    %441 = vector.shape_cast %440 : vector<1x1x64x8xf32> to vector<64x8xf32>
    %442 = vector.shape_cast %441 : vector<64x8xf32> to vector<1x64x8xf32>
    %443 = vector.broadcast %442 : vector<1x64x8xf32> to vector<2x64x8xf32>
    %444 = arith.mulf %439, %443 : vector<2x64x8xf32>
    %445 = arith.addf %437, %444 : vector<2x64x8xf32>
    %c114_i32_240 = arith.constant 114 : i32
    %446 = tpu.dynamic_rotate %271 by %c114_i32_240 dim 0 : vector<128x8xf32>, i32 -> vector<128x8xf32>
    %447 = vector.shape_cast %446 : vector<128x8xf32> to vector<2x64x8xf32>
    %c1_241 = arith.constant 1 : index
    %c20_242 = arith.constant 20 : index
    %c0_243 = arith.constant 0 : index
    %c0_244 = arith.constant 0 : index
    %448 = vector.load %arg8[%c1_241, %c20_242, %c0_243, %c0_244] : memref<4x25x64x8xf32, #tpu.memory_space<vmem>>, vector<1x1x64x8xf32>
    %449 = vector.shape_cast %448 : vector<1x1x64x8xf32> to vector<64x8xf32>
    %450 = vector.shape_cast %449 : vector<64x8xf32> to vector<1x64x8xf32>
    %451 = vector.broadcast %450 : vector<1x64x8xf32> to vector<2x64x8xf32>
    %452 = arith.mulf %447, %451 : vector<2x64x8xf32>
    %453 = arith.addf %445, %452 : vector<2x64x8xf32>
    %c113_i32_245 = arith.constant 113 : i32
    %454 = tpu.dynamic_rotate %271 by %c113_i32_245 dim 0 : vector<128x8xf32>, i32 -> vector<128x8xf32>
    %455 = vector.shape_cast %454 : vector<128x8xf32> to vector<2x64x8xf32>
    %c1_246 = arith.constant 1 : index
    %c21_247 = arith.constant 21 : index
    %c0_248 = arith.constant 0 : index
    %c0_249 = arith.constant 0 : index
    %456 = vector.load %arg8[%c1_246, %c21_247, %c0_248, %c0_249] : memref<4x25x64x8xf32, #tpu.memory_space<vmem>>, vector<1x1x64x8xf32>
    %457 = vector.shape_cast %456 : vector<1x1x64x8xf32> to vector<64x8xf32>
    %458 = vector.shape_cast %457 : vector<64x8xf32> to vector<1x64x8xf32>
    %459 = vector.broadcast %458 : vector<1x64x8xf32> to vector<2x64x8xf32>
    %460 = arith.mulf %455, %459 : vector<2x64x8xf32>
    %461 = arith.addf %453, %460 : vector<2x64x8xf32>
    %c112_i32_250 = arith.constant 112 : i32
    %462 = tpu.dynamic_rotate %271 by %c112_i32_250 dim 0 : vector<128x8xf32>, i32 -> vector<128x8xf32>
    %463 = vector.shape_cast %462 : vector<128x8xf32> to vector<2x64x8xf32>
    %c1_251 = arith.constant 1 : index
    %c22_252 = arith.constant 22 : index
    %c0_253 = arith.constant 0 : index
    %c0_254 = arith.constant 0 : index
    %464 = vector.load %arg8[%c1_251, %c22_252, %c0_253, %c0_254] : memref<4x25x64x8xf32, #tpu.memory_space<vmem>>, vector<1x1x64x8xf32>
    %465 = vector.shape_cast %464 : vector<1x1x64x8xf32> to vector<64x8xf32>
    %466 = vector.shape_cast %465 : vector<64x8xf32> to vector<1x64x8xf32>
    %467 = vector.broadcast %466 : vector<1x64x8xf32> to vector<2x64x8xf32>
    %468 = arith.mulf %463, %467 : vector<2x64x8xf32>
    %469 = arith.addf %461, %468 : vector<2x64x8xf32>
    %c111_i32_255 = arith.constant 111 : i32
    %470 = tpu.dynamic_rotate %271 by %c111_i32_255 dim 0 : vector<128x8xf32>, i32 -> vector<128x8xf32>
    %471 = vector.shape_cast %470 : vector<128x8xf32> to vector<2x64x8xf32>
    %c1_256 = arith.constant 1 : index
    %c23_257 = arith.constant 23 : index
    %c0_258 = arith.constant 0 : index
    %c0_259 = arith.constant 0 : index
    %472 = vector.load %arg8[%c1_256, %c23_257, %c0_258, %c0_259] : memref<4x25x64x8xf32, #tpu.memory_space<vmem>>, vector<1x1x64x8xf32>
    %473 = vector.shape_cast %472 : vector<1x1x64x8xf32> to vector<64x8xf32>
    %474 = vector.shape_cast %473 : vector<64x8xf32> to vector<1x64x8xf32>
    %475 = vector.broadcast %474 : vector<1x64x8xf32> to vector<2x64x8xf32>
    %476 = arith.mulf %471, %475 : vector<2x64x8xf32>
    %477 = arith.addf %469, %476 : vector<2x64x8xf32>
    %c110_i32_260 = arith.constant 110 : i32
    %478 = tpu.dynamic_rotate %271 by %c110_i32_260 dim 0 : vector<128x8xf32>, i32 -> vector<128x8xf32>
    %479 = vector.shape_cast %478 : vector<128x8xf32> to vector<2x64x8xf32>
    %c1_261 = arith.constant 1 : index
    %c24_262 = arith.constant 24 : index
    %c0_263 = arith.constant 0 : index
    %c0_264 = arith.constant 0 : index
    %480 = vector.load %arg8[%c1_261, %c24_262, %c0_263, %c0_264] : memref<4x25x64x8xf32, #tpu.memory_space<vmem>>, vector<1x1x64x8xf32>
    %481 = vector.shape_cast %480 : vector<1x1x64x8xf32> to vector<64x8xf32>
    %482 = vector.shape_cast %481 : vector<64x8xf32> to vector<1x64x8xf32>
    %483 = vector.broadcast %482 : vector<1x64x8xf32> to vector<2x64x8xf32>
    %484 = arith.mulf %479, %483 : vector<2x64x8xf32>
    %485 = arith.addf %477, %484 : vector<2x64x8xf32>
    %c1_265 = arith.constant 1 : index
    %c0_266 = arith.constant 0 : index
    %c0_267 = arith.constant 0 : index
    %486 = vector.load %arg9[%c1_265, %c0_266, %c0_267] : memref<4x1x8xf32, #tpu.memory_space<vmem>>, vector<1x1x8xf32>
    %487 = vector.shape_cast %486 : vector<1x1x8xf32> to vector<1x8xf32>
    %488 = vector.shape_cast %487 : vector<1x8xf32> to vector<1x1x8xf32>
    %489 = vector.broadcast %488 : vector<1x1x8xf32> to vector<2x64x8xf32>
    %490 = arith.addf %485, %489 : vector<2x64x8xf32>
    %491 = arith.truncf %490 : vector<2x64x8xf32> to vector<2x64x8xbf16>
    %492 = vector.shape_cast %278 : vector<128x8xf32> to vector<2x64x8xf32>
    %493 = arith.truncf %492 : vector<2x64x8xf32> to vector<2x64x8xbf16>
    %494 = vector.shape_cast %285 : vector<128x8xf32> to vector<2x64x8xf32>
    %495 = arith.truncf %494 : vector<2x64x8xf32> to vector<2x64x8xbf16>
    "tpu.trace_start"() <{level = 10 : i32, message = "bqc,bkc->bqk"}> : () -> ()
    %cst_268 = arith.constant dense<0.000000e+00> : vector<2x64x64xf32>
    %496 = tpu.matmul %491, %493, %cst_268 {dimension_numbers = #tpu.dot_dimension_numbers<[2], [2], [1], [1], [0, 0, 0, 1, 1, 1], [0], [0]>} : vector<2x64x8xbf16>, vector<2x64x8xbf16>, vector<2x64x64xf32> -> vector<2x64x64xf32>
    "tpu.trace_stop"() : () -> ()
    %c1_269 = arith.constant 1 : index
    %c0_270 = arith.constant 0 : index
    %c0_271 = arith.constant 0 : index
    %497 = vector.load %arg10[%c1_269, %c0_270, %c0_271] : memref<4x64x64xf32, #tpu.memory_space<vmem>>, vector<1x64x64xf32>
    %498 = vector.shape_cast %497 : vector<1x64x64xf32> to vector<64x64xf32>
    %499 = vector.shape_cast %498 : vector<64x64xf32> to vector<1x64x64xf32>
    %500 = vector.broadcast %499 : vector<1x64x64xf32> to vector<2x64x64xf32>
    %501 = arith.addf %496, %500 : vector<2x64x64xf32>
    %cst_272 = arith.constant dense<0xFF800000> : vector<2x64xf32>
    %502 = vector.multi_reduction <maximumf>, %501, %cst_272 [2] : vector<2x64x64xf32> to vector<2x64xf32>
    %503 = vector.shape_cast %502 : vector<2x64xf32> to vector<2x64x1xf32>
    %504 = vector.broadcast %503 : vector<2x64x1xf32> to vector<2x64x64xf32>
    %505 = arith.subf %501, %504 : vector<2x64x64xf32>
    %506 = math.exp %505 : vector<2x64x64xf32>
    %cst_273 = arith.constant dense<0.000000e+00> : vector<2x64xf32>
    %507 = vector.multi_reduction <add>, %506, %cst_273 [2] : vector<2x64x64xf32> to vector<2x64xf32>
    %508 = vector.shape_cast %507 : vector<2x64xf32> to vector<2x64x1xf32>
    %509 = tpu.reciprocal %508 {approx = true} : vector<2x64x1xf32> -> vector<2x64x1xf32>
    %510 = vector.broadcast %509 : vector<2x64x1xf32> to vector<2x64x64xf32>
    %511 = arith.mulf %506, %510 : vector<2x64x64xf32>
    %512 = arith.truncf %511 : vector<2x64x64xf32> to vector<2x64x64xbf16>
    "tpu.trace_start"() <{level = 10 : i32, message = "bqk,bkc->bqc"}> : () -> ()
    %cst_274 = arith.constant dense<0.000000e+00> : vector<2x64x8xf32>
    %513 = tpu.matmul %512, %495, %cst_274 {dimension_numbers = #tpu.dot_dimension_numbers<[2], [1], [1], [2], [0, 0, 0, 1, 1, 2], [0], [0]>} : vector<2x64x64xbf16>, vector<2x64x8xbf16>, vector<2x64x8xf32> -> vector<2x64x8xf32>
    "tpu.trace_stop"() : () -> ()
    %514 = vector.shape_cast %513 : vector<2x64x8xf32> to vector<128x8xf32>
    %cst_275 = arith.constant 0.000000e+00 : f32
    %515 = vector.broadcast %cst_275 : f32 to vector<128x8xf32>
    %516 = arith.maximumf %514, %515 : vector<128x8xf32>
    %517 = arith.truncf %516 : vector<128x8xf32> to vector<128x8xbf16>
    %c1_276 = arith.constant 1 : index
    %c0_277 = arith.constant 0 : index
    %c0_278 = arith.constant 0 : index
    %518 = vector.load %arg11[%c1_276, %c0_277, %c0_278] : memref<4x8x32xbf16, #tpu.memory_space<vmem>>, vector<1x8x32xbf16>
    %519 = vector.shape_cast %518 : vector<1x8x32xbf16> to vector<8x32xbf16>
    %cst_279 = arith.constant dense<0.000000e+00> : vector<128x32xf32>
    %520 = tpu.matmul %517, %519, %cst_279 {dimension_numbers = #tpu.dot_dimension_numbers<[1], [0], [0], [1], [0, 0, 1, 1], [], []>} : vector<128x8xbf16>, vector<8x32xbf16>, vector<128x32xf32> -> vector<128x32xf32>
    %521 = arith.addf %259, %520 : vector<128x32xf32>
    %c0_280 = arith.constant 0 : index
    %c2_281 = arith.constant 2 : index
    %c0_282 = arith.constant 0 : index
    %c0_283 = arith.constant 0 : index
    %522 = vector.load %arg1[%c0_280, %c2_281, %c0_282, %c0_283] : memref<2x4x64x8xf32, #tpu.memory_space<vmem>>, vector<2x1x64x8xf32>
    %523 = vector.shape_cast %522 : vector<2x1x64x8xf32> to vector<2x64x8xf32>
    %524 = vector.shape_cast %523 : vector<2x64x8xf32> to vector<128x8xf32>
    %525 = arith.addf %514, %524 : vector<128x8xf32>
    %526 = arith.truncf %525 : vector<128x8xf32> to vector<128x8xbf16>
    %c2_284 = arith.constant 2 : index
    %c0_285 = arith.constant 0 : index
    %c0_286 = arith.constant 0 : index
    %527 = vector.load %arg2[%c2_284, %c0_285, %c0_286] : memref<4x8x8xbf16, #tpu.memory_space<vmem>>, vector<1x8x8xbf16>
    %528 = vector.shape_cast %527 : vector<1x8x8xbf16> to vector<8x8xbf16>
    %cst_287 = arith.constant dense<0.000000e+00> : vector<128x8xf32>
    %529 = tpu.matmul %526, %528, %cst_287 {dimension_numbers = #tpu.dot_dimension_numbers<[1], [0], [0], [1], [0, 0, 1, 1], [], []>} : vector<128x8xbf16>, vector<8x8xbf16>, vector<128x8xf32> -> vector<128x8xf32>
    %c2_288 = arith.constant 2 : index
    %c0_289 = arith.constant 0 : index
    %c0_290 = arith.constant 0 : index
    %530 = vector.load %arg5[%c2_288, %c0_289, %c0_290] : memref<4x1x8xf32, #tpu.memory_space<vmem>>, vector<1x1x8xf32>
    %531 = vector.shape_cast %530 : vector<1x1x8xf32> to vector<1x8xf32>
    %532 = vector.broadcast %531 : vector<1x8xf32> to vector<128x8xf32>
    %533 = arith.addf %529, %532 : vector<128x8xf32>
    %c2_291 = arith.constant 2 : index
    %c0_292 = arith.constant 0 : index
    %c0_293 = arith.constant 0 : index
    %534 = vector.load %arg3[%c2_291, %c0_292, %c0_293] : memref<4x8x8xbf16, #tpu.memory_space<vmem>>, vector<1x8x8xbf16>
    %535 = vector.shape_cast %534 : vector<1x8x8xbf16> to vector<8x8xbf16>
    %cst_294 = arith.constant dense<0.000000e+00> : vector<128x8xf32>
    %536 = tpu.matmul %526, %535, %cst_294 {dimension_numbers = #tpu.dot_dimension_numbers<[1], [0], [0], [1], [0, 0, 1, 1], [], []>} : vector<128x8xbf16>, vector<8x8xbf16>, vector<128x8xf32> -> vector<128x8xf32>
    %c2_295 = arith.constant 2 : index
    %c0_296 = arith.constant 0 : index
    %c0_297 = arith.constant 0 : index
    %537 = vector.load %arg6[%c2_295, %c0_296, %c0_297] : memref<4x1x8xf32, #tpu.memory_space<vmem>>, vector<1x1x8xf32>
    %538 = vector.shape_cast %537 : vector<1x1x8xf32> to vector<1x8xf32>
    %539 = vector.broadcast %538 : vector<1x8xf32> to vector<128x8xf32>
    %540 = arith.addf %536, %539 : vector<128x8xf32>
    %c2_298 = arith.constant 2 : index
    %c0_299 = arith.constant 0 : index
    %c0_300 = arith.constant 0 : index
    %541 = vector.load %arg4[%c2_298, %c0_299, %c0_300] : memref<4x8x8xbf16, #tpu.memory_space<vmem>>, vector<1x8x8xbf16>
    %542 = vector.shape_cast %541 : vector<1x8x8xbf16> to vector<8x8xbf16>
    %cst_301 = arith.constant dense<0.000000e+00> : vector<128x8xf32>
    %543 = tpu.matmul %526, %542, %cst_301 {dimension_numbers = #tpu.dot_dimension_numbers<[1], [0], [0], [1], [0, 0, 1, 1], [], []>} : vector<128x8xbf16>, vector<8x8xbf16>, vector<128x8xf32> -> vector<128x8xf32>
    %c2_302 = arith.constant 2 : index
    %c0_303 = arith.constant 0 : index
    %c0_304 = arith.constant 0 : index
    %544 = vector.load %arg7[%c2_302, %c0_303, %c0_304] : memref<4x1x8xf32, #tpu.memory_space<vmem>>, vector<1x1x8xf32>
    %545 = vector.shape_cast %544 : vector<1x1x8xf32> to vector<1x8xf32>
    %546 = vector.broadcast %545 : vector<1x8xf32> to vector<128x8xf32>
    %547 = arith.addf %543, %546 : vector<128x8xf32>
    %cst_305 = arith.constant 0.000000e+00 : f32
    %548 = vector.broadcast %cst_305 : f32 to vector<2x64x8xf32>
    %c18_i32_306 = arith.constant 18 : i32
    %549 = tpu.dynamic_rotate %533 by %c18_i32_306 dim 0 : vector<128x8xf32>, i32 -> vector<128x8xf32>
    %550 = vector.shape_cast %549 : vector<128x8xf32> to vector<2x64x8xf32>
    %c2_307 = arith.constant 2 : index
    %c0_308 = arith.constant 0 : index
    %c0_309 = arith.constant 0 : index
    %c0_310 = arith.constant 0 : index
    %551 = vector.load %arg8[%c2_307, %c0_308, %c0_309, %c0_310] : memref<4x25x64x8xf32, #tpu.memory_space<vmem>>, vector<1x1x64x8xf32>
    %552 = vector.shape_cast %551 : vector<1x1x64x8xf32> to vector<64x8xf32>
    %553 = vector.shape_cast %552 : vector<64x8xf32> to vector<1x64x8xf32>
    %554 = vector.broadcast %553 : vector<1x64x8xf32> to vector<2x64x8xf32>
    %555 = arith.mulf %550, %554 : vector<2x64x8xf32>
    %556 = arith.addf %548, %555 : vector<2x64x8xf32>
    %c17_i32_311 = arith.constant 17 : i32
    %557 = tpu.dynamic_rotate %533 by %c17_i32_311 dim 0 : vector<128x8xf32>, i32 -> vector<128x8xf32>
    %558 = vector.shape_cast %557 : vector<128x8xf32> to vector<2x64x8xf32>
    %c2_312 = arith.constant 2 : index
    %c1_313 = arith.constant 1 : index
    %c0_314 = arith.constant 0 : index
    %c0_315 = arith.constant 0 : index
    %559 = vector.load %arg8[%c2_312, %c1_313, %c0_314, %c0_315] : memref<4x25x64x8xf32, #tpu.memory_space<vmem>>, vector<1x1x64x8xf32>
    %560 = vector.shape_cast %559 : vector<1x1x64x8xf32> to vector<64x8xf32>
    %561 = vector.shape_cast %560 : vector<64x8xf32> to vector<1x64x8xf32>
    %562 = vector.broadcast %561 : vector<1x64x8xf32> to vector<2x64x8xf32>
    %563 = arith.mulf %558, %562 : vector<2x64x8xf32>
    %564 = arith.addf %556, %563 : vector<2x64x8xf32>
    %c16_i32_316 = arith.constant 16 : i32
    %565 = tpu.dynamic_rotate %533 by %c16_i32_316 dim 0 : vector<128x8xf32>, i32 -> vector<128x8xf32>
    %566 = vector.shape_cast %565 : vector<128x8xf32> to vector<2x64x8xf32>
    %c2_317 = arith.constant 2 : index
    %c2_318 = arith.constant 2 : index
    %c0_319 = arith.constant 0 : index
    %c0_320 = arith.constant 0 : index
    %567 = vector.load %arg8[%c2_317, %c2_318, %c0_319, %c0_320] : memref<4x25x64x8xf32, #tpu.memory_space<vmem>>, vector<1x1x64x8xf32>
    %568 = vector.shape_cast %567 : vector<1x1x64x8xf32> to vector<64x8xf32>
    %569 = vector.shape_cast %568 : vector<64x8xf32> to vector<1x64x8xf32>
    %570 = vector.broadcast %569 : vector<1x64x8xf32> to vector<2x64x8xf32>
    %571 = arith.mulf %566, %570 : vector<2x64x8xf32>
    %572 = arith.addf %564, %571 : vector<2x64x8xf32>
    %c15_i32_321 = arith.constant 15 : i32
    %573 = tpu.dynamic_rotate %533 by %c15_i32_321 dim 0 : vector<128x8xf32>, i32 -> vector<128x8xf32>
    %574 = vector.shape_cast %573 : vector<128x8xf32> to vector<2x64x8xf32>
    %c2_322 = arith.constant 2 : index
    %c3_323 = arith.constant 3 : index
    %c0_324 = arith.constant 0 : index
    %c0_325 = arith.constant 0 : index
    %575 = vector.load %arg8[%c2_322, %c3_323, %c0_324, %c0_325] : memref<4x25x64x8xf32, #tpu.memory_space<vmem>>, vector<1x1x64x8xf32>
    %576 = vector.shape_cast %575 : vector<1x1x64x8xf32> to vector<64x8xf32>
    %577 = vector.shape_cast %576 : vector<64x8xf32> to vector<1x64x8xf32>
    %578 = vector.broadcast %577 : vector<1x64x8xf32> to vector<2x64x8xf32>
    %579 = arith.mulf %574, %578 : vector<2x64x8xf32>
    %580 = arith.addf %572, %579 : vector<2x64x8xf32>
    %c14_i32_326 = arith.constant 14 : i32
    %581 = tpu.dynamic_rotate %533 by %c14_i32_326 dim 0 : vector<128x8xf32>, i32 -> vector<128x8xf32>
    %582 = vector.shape_cast %581 : vector<128x8xf32> to vector<2x64x8xf32>
    %c2_327 = arith.constant 2 : index
    %c4_328 = arith.constant 4 : index
    %c0_329 = arith.constant 0 : index
    %c0_330 = arith.constant 0 : index
    %583 = vector.load %arg8[%c2_327, %c4_328, %c0_329, %c0_330] : memref<4x25x64x8xf32, #tpu.memory_space<vmem>>, vector<1x1x64x8xf32>
    %584 = vector.shape_cast %583 : vector<1x1x64x8xf32> to vector<64x8xf32>
    %585 = vector.shape_cast %584 : vector<64x8xf32> to vector<1x64x8xf32>
    %586 = vector.broadcast %585 : vector<1x64x8xf32> to vector<2x64x8xf32>
    %587 = arith.mulf %582, %586 : vector<2x64x8xf32>
    %588 = arith.addf %580, %587 : vector<2x64x8xf32>
    %c10_i32_331 = arith.constant 10 : i32
    %589 = tpu.dynamic_rotate %533 by %c10_i32_331 dim 0 : vector<128x8xf32>, i32 -> vector<128x8xf32>
    %590 = vector.shape_cast %589 : vector<128x8xf32> to vector<2x64x8xf32>
    %c2_332 = arith.constant 2 : index
    %c5_333 = arith.constant 5 : index
    %c0_334 = arith.constant 0 : index
    %c0_335 = arith.constant 0 : index
    %591 = vector.load %arg8[%c2_332, %c5_333, %c0_334, %c0_335] : memref<4x25x64x8xf32, #tpu.memory_space<vmem>>, vector<1x1x64x8xf32>
    %592 = vector.shape_cast %591 : vector<1x1x64x8xf32> to vector<64x8xf32>
    %593 = vector.shape_cast %592 : vector<64x8xf32> to vector<1x64x8xf32>
    %594 = vector.broadcast %593 : vector<1x64x8xf32> to vector<2x64x8xf32>
    %595 = arith.mulf %590, %594 : vector<2x64x8xf32>
    %596 = arith.addf %588, %595 : vector<2x64x8xf32>
    %c9_i32_336 = arith.constant 9 : i32
    %597 = tpu.dynamic_rotate %533 by %c9_i32_336 dim 0 : vector<128x8xf32>, i32 -> vector<128x8xf32>
    %598 = vector.shape_cast %597 : vector<128x8xf32> to vector<2x64x8xf32>
    %c2_337 = arith.constant 2 : index
    %c6_338 = arith.constant 6 : index
    %c0_339 = arith.constant 0 : index
    %c0_340 = arith.constant 0 : index
    %599 = vector.load %arg8[%c2_337, %c6_338, %c0_339, %c0_340] : memref<4x25x64x8xf32, #tpu.memory_space<vmem>>, vector<1x1x64x8xf32>
    %600 = vector.shape_cast %599 : vector<1x1x64x8xf32> to vector<64x8xf32>
    %601 = vector.shape_cast %600 : vector<64x8xf32> to vector<1x64x8xf32>
    %602 = vector.broadcast %601 : vector<1x64x8xf32> to vector<2x64x8xf32>
    %603 = arith.mulf %598, %602 : vector<2x64x8xf32>
    %604 = arith.addf %596, %603 : vector<2x64x8xf32>
    %c8_i32_341 = arith.constant 8 : i32
    %605 = tpu.dynamic_rotate %533 by %c8_i32_341 dim 0 : vector<128x8xf32>, i32 -> vector<128x8xf32>
    %606 = vector.shape_cast %605 : vector<128x8xf32> to vector<2x64x8xf32>
    %c2_342 = arith.constant 2 : index
    %c7_343 = arith.constant 7 : index
    %c0_344 = arith.constant 0 : index
    %c0_345 = arith.constant 0 : index
    %607 = vector.load %arg8[%c2_342, %c7_343, %c0_344, %c0_345] : memref<4x25x64x8xf32, #tpu.memory_space<vmem>>, vector<1x1x64x8xf32>
    %608 = vector.shape_cast %607 : vector<1x1x64x8xf32> to vector<64x8xf32>
    %609 = vector.shape_cast %608 : vector<64x8xf32> to vector<1x64x8xf32>
    %610 = vector.broadcast %609 : vector<1x64x8xf32> to vector<2x64x8xf32>
    %611 = arith.mulf %606, %610 : vector<2x64x8xf32>
    %612 = arith.addf %604, %611 : vector<2x64x8xf32>
    %c7_i32_346 = arith.constant 7 : i32
    %613 = tpu.dynamic_rotate %533 by %c7_i32_346 dim 0 : vector<128x8xf32>, i32 -> vector<128x8xf32>
    %614 = vector.shape_cast %613 : vector<128x8xf32> to vector<2x64x8xf32>
    %c2_347 = arith.constant 2 : index
    %c8_348 = arith.constant 8 : index
    %c0_349 = arith.constant 0 : index
    %c0_350 = arith.constant 0 : index
    %615 = vector.load %arg8[%c2_347, %c8_348, %c0_349, %c0_350] : memref<4x25x64x8xf32, #tpu.memory_space<vmem>>, vector<1x1x64x8xf32>
    %616 = vector.shape_cast %615 : vector<1x1x64x8xf32> to vector<64x8xf32>
    %617 = vector.shape_cast %616 : vector<64x8xf32> to vector<1x64x8xf32>
    %618 = vector.broadcast %617 : vector<1x64x8xf32> to vector<2x64x8xf32>
    %619 = arith.mulf %614, %618 : vector<2x64x8xf32>
    %620 = arith.addf %612, %619 : vector<2x64x8xf32>
    %c6_i32_351 = arith.constant 6 : i32
    %621 = tpu.dynamic_rotate %533 by %c6_i32_351 dim 0 : vector<128x8xf32>, i32 -> vector<128x8xf32>
    %622 = vector.shape_cast %621 : vector<128x8xf32> to vector<2x64x8xf32>
    %c2_352 = arith.constant 2 : index
    %c9_353 = arith.constant 9 : index
    %c0_354 = arith.constant 0 : index
    %c0_355 = arith.constant 0 : index
    %623 = vector.load %arg8[%c2_352, %c9_353, %c0_354, %c0_355] : memref<4x25x64x8xf32, #tpu.memory_space<vmem>>, vector<1x1x64x8xf32>
    %624 = vector.shape_cast %623 : vector<1x1x64x8xf32> to vector<64x8xf32>
    %625 = vector.shape_cast %624 : vector<64x8xf32> to vector<1x64x8xf32>
    %626 = vector.broadcast %625 : vector<1x64x8xf32> to vector<2x64x8xf32>
    %627 = arith.mulf %622, %626 : vector<2x64x8xf32>
    %628 = arith.addf %620, %627 : vector<2x64x8xf32>
    %c2_i32_356 = arith.constant 2 : i32
    %629 = tpu.dynamic_rotate %533 by %c2_i32_356 dim 0 : vector<128x8xf32>, i32 -> vector<128x8xf32>
    %630 = vector.shape_cast %629 : vector<128x8xf32> to vector<2x64x8xf32>
    %c2_357 = arith.constant 2 : index
    %c10_358 = arith.constant 10 : index
    %c0_359 = arith.constant 0 : index
    %c0_360 = arith.constant 0 : index
    %631 = vector.load %arg8[%c2_357, %c10_358, %c0_359, %c0_360] : memref<4x25x64x8xf32, #tpu.memory_space<vmem>>, vector<1x1x64x8xf32>
    %632 = vector.shape_cast %631 : vector<1x1x64x8xf32> to vector<64x8xf32>
    %633 = vector.shape_cast %632 : vector<64x8xf32> to vector<1x64x8xf32>
    %634 = vector.broadcast %633 : vector<1x64x8xf32> to vector<2x64x8xf32>
    %635 = arith.mulf %630, %634 : vector<2x64x8xf32>
    %636 = arith.addf %628, %635 : vector<2x64x8xf32>
    %c1_i32_361 = arith.constant 1 : i32
    %637 = tpu.dynamic_rotate %533 by %c1_i32_361 dim 0 : vector<128x8xf32>, i32 -> vector<128x8xf32>
    %638 = vector.shape_cast %637 : vector<128x8xf32> to vector<2x64x8xf32>
    %c2_362 = arith.constant 2 : index
    %c11_363 = arith.constant 11 : index
    %c0_364 = arith.constant 0 : index
    %c0_365 = arith.constant 0 : index
    %639 = vector.load %arg8[%c2_362, %c11_363, %c0_364, %c0_365] : memref<4x25x64x8xf32, #tpu.memory_space<vmem>>, vector<1x1x64x8xf32>
    %640 = vector.shape_cast %639 : vector<1x1x64x8xf32> to vector<64x8xf32>
    %641 = vector.shape_cast %640 : vector<64x8xf32> to vector<1x64x8xf32>
    %642 = vector.broadcast %641 : vector<1x64x8xf32> to vector<2x64x8xf32>
    %643 = arith.mulf %638, %642 : vector<2x64x8xf32>
    %644 = arith.addf %636, %643 : vector<2x64x8xf32>
    %645 = vector.shape_cast %533 : vector<128x8xf32> to vector<2x64x8xf32>
    %c2_366 = arith.constant 2 : index
    %c12_367 = arith.constant 12 : index
    %c0_368 = arith.constant 0 : index
    %c0_369 = arith.constant 0 : index
    %646 = vector.load %arg8[%c2_366, %c12_367, %c0_368, %c0_369] : memref<4x25x64x8xf32, #tpu.memory_space<vmem>>, vector<1x1x64x8xf32>
    %647 = vector.shape_cast %646 : vector<1x1x64x8xf32> to vector<64x8xf32>
    %648 = vector.shape_cast %647 : vector<64x8xf32> to vector<1x64x8xf32>
    %649 = vector.broadcast %648 : vector<1x64x8xf32> to vector<2x64x8xf32>
    %650 = arith.mulf %645, %649 : vector<2x64x8xf32>
    %651 = arith.addf %644, %650 : vector<2x64x8xf32>
    %c127_i32_370 = arith.constant 127 : i32
    %652 = tpu.dynamic_rotate %533 by %c127_i32_370 dim 0 : vector<128x8xf32>, i32 -> vector<128x8xf32>
    %653 = vector.shape_cast %652 : vector<128x8xf32> to vector<2x64x8xf32>
    %c2_371 = arith.constant 2 : index
    %c13_372 = arith.constant 13 : index
    %c0_373 = arith.constant 0 : index
    %c0_374 = arith.constant 0 : index
    %654 = vector.load %arg8[%c2_371, %c13_372, %c0_373, %c0_374] : memref<4x25x64x8xf32, #tpu.memory_space<vmem>>, vector<1x1x64x8xf32>
    %655 = vector.shape_cast %654 : vector<1x1x64x8xf32> to vector<64x8xf32>
    %656 = vector.shape_cast %655 : vector<64x8xf32> to vector<1x64x8xf32>
    %657 = vector.broadcast %656 : vector<1x64x8xf32> to vector<2x64x8xf32>
    %658 = arith.mulf %653, %657 : vector<2x64x8xf32>
    %659 = arith.addf %651, %658 : vector<2x64x8xf32>
    %c126_i32_375 = arith.constant 126 : i32
    %660 = tpu.dynamic_rotate %533 by %c126_i32_375 dim 0 : vector<128x8xf32>, i32 -> vector<128x8xf32>
    %661 = vector.shape_cast %660 : vector<128x8xf32> to vector<2x64x8xf32>
    %c2_376 = arith.constant 2 : index
    %c14_377 = arith.constant 14 : index
    %c0_378 = arith.constant 0 : index
    %c0_379 = arith.constant 0 : index
    %662 = vector.load %arg8[%c2_376, %c14_377, %c0_378, %c0_379] : memref<4x25x64x8xf32, #tpu.memory_space<vmem>>, vector<1x1x64x8xf32>
    %663 = vector.shape_cast %662 : vector<1x1x64x8xf32> to vector<64x8xf32>
    %664 = vector.shape_cast %663 : vector<64x8xf32> to vector<1x64x8xf32>
    %665 = vector.broadcast %664 : vector<1x64x8xf32> to vector<2x64x8xf32>
    %666 = arith.mulf %661, %665 : vector<2x64x8xf32>
    %667 = arith.addf %659, %666 : vector<2x64x8xf32>
    %c122_i32_380 = arith.constant 122 : i32
    %668 = tpu.dynamic_rotate %533 by %c122_i32_380 dim 0 : vector<128x8xf32>, i32 -> vector<128x8xf32>
    %669 = vector.shape_cast %668 : vector<128x8xf32> to vector<2x64x8xf32>
    %c2_381 = arith.constant 2 : index
    %c15_382 = arith.constant 15 : index
    %c0_383 = arith.constant 0 : index
    %c0_384 = arith.constant 0 : index
    %670 = vector.load %arg8[%c2_381, %c15_382, %c0_383, %c0_384] : memref<4x25x64x8xf32, #tpu.memory_space<vmem>>, vector<1x1x64x8xf32>
    %671 = vector.shape_cast %670 : vector<1x1x64x8xf32> to vector<64x8xf32>
    %672 = vector.shape_cast %671 : vector<64x8xf32> to vector<1x64x8xf32>
    %673 = vector.broadcast %672 : vector<1x64x8xf32> to vector<2x64x8xf32>
    %674 = arith.mulf %669, %673 : vector<2x64x8xf32>
    %675 = arith.addf %667, %674 : vector<2x64x8xf32>
    %c121_i32_385 = arith.constant 121 : i32
    %676 = tpu.dynamic_rotate %533 by %c121_i32_385 dim 0 : vector<128x8xf32>, i32 -> vector<128x8xf32>
    %677 = vector.shape_cast %676 : vector<128x8xf32> to vector<2x64x8xf32>
    %c2_386 = arith.constant 2 : index
    %c16_387 = arith.constant 16 : index
    %c0_388 = arith.constant 0 : index
    %c0_389 = arith.constant 0 : index
    %678 = vector.load %arg8[%c2_386, %c16_387, %c0_388, %c0_389] : memref<4x25x64x8xf32, #tpu.memory_space<vmem>>, vector<1x1x64x8xf32>
    %679 = vector.shape_cast %678 : vector<1x1x64x8xf32> to vector<64x8xf32>
    %680 = vector.shape_cast %679 : vector<64x8xf32> to vector<1x64x8xf32>
    %681 = vector.broadcast %680 : vector<1x64x8xf32> to vector<2x64x8xf32>
    %682 = arith.mulf %677, %681 : vector<2x64x8xf32>
    %683 = arith.addf %675, %682 : vector<2x64x8xf32>
    %c120_i32_390 = arith.constant 120 : i32
    %684 = tpu.dynamic_rotate %533 by %c120_i32_390 dim 0 : vector<128x8xf32>, i32 -> vector<128x8xf32>
    %685 = vector.shape_cast %684 : vector<128x8xf32> to vector<2x64x8xf32>
    %c2_391 = arith.constant 2 : index
    %c17_392 = arith.constant 17 : index
    %c0_393 = arith.constant 0 : index
    %c0_394 = arith.constant 0 : index
    %686 = vector.load %arg8[%c2_391, %c17_392, %c0_393, %c0_394] : memref<4x25x64x8xf32, #tpu.memory_space<vmem>>, vector<1x1x64x8xf32>
    %687 = vector.shape_cast %686 : vector<1x1x64x8xf32> to vector<64x8xf32>
    %688 = vector.shape_cast %687 : vector<64x8xf32> to vector<1x64x8xf32>
    %689 = vector.broadcast %688 : vector<1x64x8xf32> to vector<2x64x8xf32>
    %690 = arith.mulf %685, %689 : vector<2x64x8xf32>
    %691 = arith.addf %683, %690 : vector<2x64x8xf32>
    %c119_i32_395 = arith.constant 119 : i32
    %692 = tpu.dynamic_rotate %533 by %c119_i32_395 dim 0 : vector<128x8xf32>, i32 -> vector<128x8xf32>
    %693 = vector.shape_cast %692 : vector<128x8xf32> to vector<2x64x8xf32>
    %c2_396 = arith.constant 2 : index
    %c18_397 = arith.constant 18 : index
    %c0_398 = arith.constant 0 : index
    %c0_399 = arith.constant 0 : index
    %694 = vector.load %arg8[%c2_396, %c18_397, %c0_398, %c0_399] : memref<4x25x64x8xf32, #tpu.memory_space<vmem>>, vector<1x1x64x8xf32>
    %695 = vector.shape_cast %694 : vector<1x1x64x8xf32> to vector<64x8xf32>
    %696 = vector.shape_cast %695 : vector<64x8xf32> to vector<1x64x8xf32>
    %697 = vector.broadcast %696 : vector<1x64x8xf32> to vector<2x64x8xf32>
    %698 = arith.mulf %693, %697 : vector<2x64x8xf32>
    %699 = arith.addf %691, %698 : vector<2x64x8xf32>
    %c118_i32_400 = arith.constant 118 : i32
    %700 = tpu.dynamic_rotate %533 by %c118_i32_400 dim 0 : vector<128x8xf32>, i32 -> vector<128x8xf32>
    %701 = vector.shape_cast %700 : vector<128x8xf32> to vector<2x64x8xf32>
    %c2_401 = arith.constant 2 : index
    %c19_402 = arith.constant 19 : index
    %c0_403 = arith.constant 0 : index
    %c0_404 = arith.constant 0 : index
    %702 = vector.load %arg8[%c2_401, %c19_402, %c0_403, %c0_404] : memref<4x25x64x8xf32, #tpu.memory_space<vmem>>, vector<1x1x64x8xf32>
    %703 = vector.shape_cast %702 : vector<1x1x64x8xf32> to vector<64x8xf32>
    %704 = vector.shape_cast %703 : vector<64x8xf32> to vector<1x64x8xf32>
    %705 = vector.broadcast %704 : vector<1x64x8xf32> to vector<2x64x8xf32>
    %706 = arith.mulf %701, %705 : vector<2x64x8xf32>
    %707 = arith.addf %699, %706 : vector<2x64x8xf32>
    %c114_i32_405 = arith.constant 114 : i32
    %708 = tpu.dynamic_rotate %533 by %c114_i32_405 dim 0 : vector<128x8xf32>, i32 -> vector<128x8xf32>
    %709 = vector.shape_cast %708 : vector<128x8xf32> to vector<2x64x8xf32>
    %c2_406 = arith.constant 2 : index
    %c20_407 = arith.constant 20 : index
    %c0_408 = arith.constant 0 : index
    %c0_409 = arith.constant 0 : index
    %710 = vector.load %arg8[%c2_406, %c20_407, %c0_408, %c0_409] : memref<4x25x64x8xf32, #tpu.memory_space<vmem>>, vector<1x1x64x8xf32>
    %711 = vector.shape_cast %710 : vector<1x1x64x8xf32> to vector<64x8xf32>
    %712 = vector.shape_cast %711 : vector<64x8xf32> to vector<1x64x8xf32>
    %713 = vector.broadcast %712 : vector<1x64x8xf32> to vector<2x64x8xf32>
    %714 = arith.mulf %709, %713 : vector<2x64x8xf32>
    %715 = arith.addf %707, %714 : vector<2x64x8xf32>
    %c113_i32_410 = arith.constant 113 : i32
    %716 = tpu.dynamic_rotate %533 by %c113_i32_410 dim 0 : vector<128x8xf32>, i32 -> vector<128x8xf32>
    %717 = vector.shape_cast %716 : vector<128x8xf32> to vector<2x64x8xf32>
    %c2_411 = arith.constant 2 : index
    %c21_412 = arith.constant 21 : index
    %c0_413 = arith.constant 0 : index
    %c0_414 = arith.constant 0 : index
    %718 = vector.load %arg8[%c2_411, %c21_412, %c0_413, %c0_414] : memref<4x25x64x8xf32, #tpu.memory_space<vmem>>, vector<1x1x64x8xf32>
    %719 = vector.shape_cast %718 : vector<1x1x64x8xf32> to vector<64x8xf32>
    %720 = vector.shape_cast %719 : vector<64x8xf32> to vector<1x64x8xf32>
    %721 = vector.broadcast %720 : vector<1x64x8xf32> to vector<2x64x8xf32>
    %722 = arith.mulf %717, %721 : vector<2x64x8xf32>
    %723 = arith.addf %715, %722 : vector<2x64x8xf32>
    %c112_i32_415 = arith.constant 112 : i32
    %724 = tpu.dynamic_rotate %533 by %c112_i32_415 dim 0 : vector<128x8xf32>, i32 -> vector<128x8xf32>
    %725 = vector.shape_cast %724 : vector<128x8xf32> to vector<2x64x8xf32>
    %c2_416 = arith.constant 2 : index
    %c22_417 = arith.constant 22 : index
    %c0_418 = arith.constant 0 : index
    %c0_419 = arith.constant 0 : index
    %726 = vector.load %arg8[%c2_416, %c22_417, %c0_418, %c0_419] : memref<4x25x64x8xf32, #tpu.memory_space<vmem>>, vector<1x1x64x8xf32>
    %727 = vector.shape_cast %726 : vector<1x1x64x8xf32> to vector<64x8xf32>
    %728 = vector.shape_cast %727 : vector<64x8xf32> to vector<1x64x8xf32>
    %729 = vector.broadcast %728 : vector<1x64x8xf32> to vector<2x64x8xf32>
    %730 = arith.mulf %725, %729 : vector<2x64x8xf32>
    %731 = arith.addf %723, %730 : vector<2x64x8xf32>
    %c111_i32_420 = arith.constant 111 : i32
    %732 = tpu.dynamic_rotate %533 by %c111_i32_420 dim 0 : vector<128x8xf32>, i32 -> vector<128x8xf32>
    %733 = vector.shape_cast %732 : vector<128x8xf32> to vector<2x64x8xf32>
    %c2_421 = arith.constant 2 : index
    %c23_422 = arith.constant 23 : index
    %c0_423 = arith.constant 0 : index
    %c0_424 = arith.constant 0 : index
    %734 = vector.load %arg8[%c2_421, %c23_422, %c0_423, %c0_424] : memref<4x25x64x8xf32, #tpu.memory_space<vmem>>, vector<1x1x64x8xf32>
    %735 = vector.shape_cast %734 : vector<1x1x64x8xf32> to vector<64x8xf32>
    %736 = vector.shape_cast %735 : vector<64x8xf32> to vector<1x64x8xf32>
    %737 = vector.broadcast %736 : vector<1x64x8xf32> to vector<2x64x8xf32>
    %738 = arith.mulf %733, %737 : vector<2x64x8xf32>
    %739 = arith.addf %731, %738 : vector<2x64x8xf32>
    %c110_i32_425 = arith.constant 110 : i32
    %740 = tpu.dynamic_rotate %533 by %c110_i32_425 dim 0 : vector<128x8xf32>, i32 -> vector<128x8xf32>
    %741 = vector.shape_cast %740 : vector<128x8xf32> to vector<2x64x8xf32>
    %c2_426 = arith.constant 2 : index
    %c24_427 = arith.constant 24 : index
    %c0_428 = arith.constant 0 : index
    %c0_429 = arith.constant 0 : index
    %742 = vector.load %arg8[%c2_426, %c24_427, %c0_428, %c0_429] : memref<4x25x64x8xf32, #tpu.memory_space<vmem>>, vector<1x1x64x8xf32>
    %743 = vector.shape_cast %742 : vector<1x1x64x8xf32> to vector<64x8xf32>
    %744 = vector.shape_cast %743 : vector<64x8xf32> to vector<1x64x8xf32>
    %745 = vector.broadcast %744 : vector<1x64x8xf32> to vector<2x64x8xf32>
    %746 = arith.mulf %741, %745 : vector<2x64x8xf32>
    %747 = arith.addf %739, %746 : vector<2x64x8xf32>
    %c2_430 = arith.constant 2 : index
    %c0_431 = arith.constant 0 : index
    %c0_432 = arith.constant 0 : index
    %748 = vector.load %arg9[%c2_430, %c0_431, %c0_432] : memref<4x1x8xf32, #tpu.memory_space<vmem>>, vector<1x1x8xf32>
    %749 = vector.shape_cast %748 : vector<1x1x8xf32> to vector<1x8xf32>
    %750 = vector.shape_cast %749 : vector<1x8xf32> to vector<1x1x8xf32>
    %751 = vector.broadcast %750 : vector<1x1x8xf32> to vector<2x64x8xf32>
    %752 = arith.addf %747, %751 : vector<2x64x8xf32>
    %753 = arith.truncf %752 : vector<2x64x8xf32> to vector<2x64x8xbf16>
    %754 = vector.shape_cast %540 : vector<128x8xf32> to vector<2x64x8xf32>
    %755 = arith.truncf %754 : vector<2x64x8xf32> to vector<2x64x8xbf16>
    %756 = vector.shape_cast %547 : vector<128x8xf32> to vector<2x64x8xf32>
    %757 = arith.truncf %756 : vector<2x64x8xf32> to vector<2x64x8xbf16>
    "tpu.trace_start"() <{level = 10 : i32, message = "bqc,bkc->bqk"}> : () -> ()
    %cst_433 = arith.constant dense<0.000000e+00> : vector<2x64x64xf32>
    %758 = tpu.matmul %753, %755, %cst_433 {dimension_numbers = #tpu.dot_dimension_numbers<[2], [2], [1], [1], [0, 0, 0, 1, 1, 1], [0], [0]>} : vector<2x64x8xbf16>, vector<2x64x8xbf16>, vector<2x64x64xf32> -> vector<2x64x64xf32>
    "tpu.trace_stop"() : () -> ()
    %c2_434 = arith.constant 2 : index
    %c0_435 = arith.constant 0 : index
    %c0_436 = arith.constant 0 : index
    %759 = vector.load %arg10[%c2_434, %c0_435, %c0_436] : memref<4x64x64xf32, #tpu.memory_space<vmem>>, vector<1x64x64xf32>
    %760 = vector.shape_cast %759 : vector<1x64x64xf32> to vector<64x64xf32>
    %761 = vector.shape_cast %760 : vector<64x64xf32> to vector<1x64x64xf32>
    %762 = vector.broadcast %761 : vector<1x64x64xf32> to vector<2x64x64xf32>
    %763 = arith.addf %758, %762 : vector<2x64x64xf32>
    %cst_437 = arith.constant dense<0xFF800000> : vector<2x64xf32>
    %764 = vector.multi_reduction <maximumf>, %763, %cst_437 [2] : vector<2x64x64xf32> to vector<2x64xf32>
    %765 = vector.shape_cast %764 : vector<2x64xf32> to vector<2x64x1xf32>
    %766 = vector.broadcast %765 : vector<2x64x1xf32> to vector<2x64x64xf32>
    %767 = arith.subf %763, %766 : vector<2x64x64xf32>
    %768 = math.exp %767 : vector<2x64x64xf32>
    %cst_438 = arith.constant dense<0.000000e+00> : vector<2x64xf32>
    %769 = vector.multi_reduction <add>, %768, %cst_438 [2] : vector<2x64x64xf32> to vector<2x64xf32>
    %770 = vector.shape_cast %769 : vector<2x64xf32> to vector<2x64x1xf32>
    %771 = tpu.reciprocal %770 {approx = true} : vector<2x64x1xf32> -> vector<2x64x1xf32>
    %772 = vector.broadcast %771 : vector<2x64x1xf32> to vector<2x64x64xf32>
    %773 = arith.mulf %768, %772 : vector<2x64x64xf32>
    %774 = arith.truncf %773 : vector<2x64x64xf32> to vector<2x64x64xbf16>
    "tpu.trace_start"() <{level = 10 : i32, message = "bqk,bkc->bqc"}> : () -> ()
    %cst_439 = arith.constant dense<0.000000e+00> : vector<2x64x8xf32>
    %775 = tpu.matmul %774, %757, %cst_439 {dimension_numbers = #tpu.dot_dimension_numbers<[2], [1], [1], [2], [0, 0, 0, 1, 1, 2], [0], [0]>} : vector<2x64x64xbf16>, vector<2x64x8xbf16>, vector<2x64x8xf32> -> vector<2x64x8xf32>
    "tpu.trace_stop"() : () -> ()
    %776 = vector.shape_cast %775 : vector<2x64x8xf32> to vector<128x8xf32>
    %cst_440 = arith.constant 0.000000e+00 : f32
    %777 = vector.broadcast %cst_440 : f32 to vector<128x8xf32>
    %778 = arith.maximumf %776, %777 : vector<128x8xf32>
    %779 = arith.truncf %778 : vector<128x8xf32> to vector<128x8xbf16>
    %c2_441 = arith.constant 2 : index
    %c0_442 = arith.constant 0 : index
    %c0_443 = arith.constant 0 : index
    %780 = vector.load %arg11[%c2_441, %c0_442, %c0_443] : memref<4x8x32xbf16, #tpu.memory_space<vmem>>, vector<1x8x32xbf16>
    %781 = vector.shape_cast %780 : vector<1x8x32xbf16> to vector<8x32xbf16>
    %cst_444 = arith.constant dense<0.000000e+00> : vector<128x32xf32>
    %782 = tpu.matmul %779, %781, %cst_444 {dimension_numbers = #tpu.dot_dimension_numbers<[1], [0], [0], [1], [0, 0, 1, 1], [], []>} : vector<128x8xbf16>, vector<8x32xbf16>, vector<128x32xf32> -> vector<128x32xf32>
    %783 = arith.addf %521, %782 : vector<128x32xf32>
    %c0_445 = arith.constant 0 : index
    %c3_446 = arith.constant 3 : index
    %c0_447 = arith.constant 0 : index
    %c0_448 = arith.constant 0 : index
    %784 = vector.load %arg1[%c0_445, %c3_446, %c0_447, %c0_448] : memref<2x4x64x8xf32, #tpu.memory_space<vmem>>, vector<2x1x64x8xf32>
    %785 = vector.shape_cast %784 : vector<2x1x64x8xf32> to vector<2x64x8xf32>
    %786 = vector.shape_cast %785 : vector<2x64x8xf32> to vector<128x8xf32>
    %787 = arith.addf %776, %786 : vector<128x8xf32>
    %788 = arith.truncf %787 : vector<128x8xf32> to vector<128x8xbf16>
    %c3_449 = arith.constant 3 : index
    %c0_450 = arith.constant 0 : index
    %c0_451 = arith.constant 0 : index
    %789 = vector.load %arg2[%c3_449, %c0_450, %c0_451] : memref<4x8x8xbf16, #tpu.memory_space<vmem>>, vector<1x8x8xbf16>
    %790 = vector.shape_cast %789 : vector<1x8x8xbf16> to vector<8x8xbf16>
    %cst_452 = arith.constant dense<0.000000e+00> : vector<128x8xf32>
    %791 = tpu.matmul %788, %790, %cst_452 {dimension_numbers = #tpu.dot_dimension_numbers<[1], [0], [0], [1], [0, 0, 1, 1], [], []>} : vector<128x8xbf16>, vector<8x8xbf16>, vector<128x8xf32> -> vector<128x8xf32>
    %c3_453 = arith.constant 3 : index
    %c0_454 = arith.constant 0 : index
    %c0_455 = arith.constant 0 : index
    %792 = vector.load %arg5[%c3_453, %c0_454, %c0_455] : memref<4x1x8xf32, #tpu.memory_space<vmem>>, vector<1x1x8xf32>
    %793 = vector.shape_cast %792 : vector<1x1x8xf32> to vector<1x8xf32>
    %794 = vector.broadcast %793 : vector<1x8xf32> to vector<128x8xf32>
    %795 = arith.addf %791, %794 : vector<128x8xf32>
    %c3_456 = arith.constant 3 : index
    %c0_457 = arith.constant 0 : index
    %c0_458 = arith.constant 0 : index
    %796 = vector.load %arg3[%c3_456, %c0_457, %c0_458] : memref<4x8x8xbf16, #tpu.memory_space<vmem>>, vector<1x8x8xbf16>
    %797 = vector.shape_cast %796 : vector<1x8x8xbf16> to vector<8x8xbf16>
    %cst_459 = arith.constant dense<0.000000e+00> : vector<128x8xf32>
    %798 = tpu.matmul %788, %797, %cst_459 {dimension_numbers = #tpu.dot_dimension_numbers<[1], [0], [0], [1], [0, 0, 1, 1], [], []>} : vector<128x8xbf16>, vector<8x8xbf16>, vector<128x8xf32> -> vector<128x8xf32>
    %c3_460 = arith.constant 3 : index
    %c0_461 = arith.constant 0 : index
    %c0_462 = arith.constant 0 : index
    %799 = vector.load %arg6[%c3_460, %c0_461, %c0_462] : memref<4x1x8xf32, #tpu.memory_space<vmem>>, vector<1x1x8xf32>
    %800 = vector.shape_cast %799 : vector<1x1x8xf32> to vector<1x8xf32>
    %801 = vector.broadcast %800 : vector<1x8xf32> to vector<128x8xf32>
    %802 = arith.addf %798, %801 : vector<128x8xf32>
    %c3_463 = arith.constant 3 : index
    %c0_464 = arith.constant 0 : index
    %c0_465 = arith.constant 0 : index
    %803 = vector.load %arg4[%c3_463, %c0_464, %c0_465] : memref<4x8x8xbf16, #tpu.memory_space<vmem>>, vector<1x8x8xbf16>
    %804 = vector.shape_cast %803 : vector<1x8x8xbf16> to vector<8x8xbf16>
    %cst_466 = arith.constant dense<0.000000e+00> : vector<128x8xf32>
    %805 = tpu.matmul %788, %804, %cst_466 {dimension_numbers = #tpu.dot_dimension_numbers<[1], [0], [0], [1], [0, 0, 1, 1], [], []>} : vector<128x8xbf16>, vector<8x8xbf16>, vector<128x8xf32> -> vector<128x8xf32>
    %c3_467 = arith.constant 3 : index
    %c0_468 = arith.constant 0 : index
    %c0_469 = arith.constant 0 : index
    %806 = vector.load %arg7[%c3_467, %c0_468, %c0_469] : memref<4x1x8xf32, #tpu.memory_space<vmem>>, vector<1x1x8xf32>
    %807 = vector.shape_cast %806 : vector<1x1x8xf32> to vector<1x8xf32>
    %808 = vector.broadcast %807 : vector<1x8xf32> to vector<128x8xf32>
    %809 = arith.addf %805, %808 : vector<128x8xf32>
    %cst_470 = arith.constant 0.000000e+00 : f32
    %810 = vector.broadcast %cst_470 : f32 to vector<2x64x8xf32>
    %c18_i32_471 = arith.constant 18 : i32
    %811 = tpu.dynamic_rotate %795 by %c18_i32_471 dim 0 : vector<128x8xf32>, i32 -> vector<128x8xf32>
    %812 = vector.shape_cast %811 : vector<128x8xf32> to vector<2x64x8xf32>
    %c3_472 = arith.constant 3 : index
    %c0_473 = arith.constant 0 : index
    %c0_474 = arith.constant 0 : index
    %c0_475 = arith.constant 0 : index
    %813 = vector.load %arg8[%c3_472, %c0_473, %c0_474, %c0_475] : memref<4x25x64x8xf32, #tpu.memory_space<vmem>>, vector<1x1x64x8xf32>
    %814 = vector.shape_cast %813 : vector<1x1x64x8xf32> to vector<64x8xf32>
    %815 = vector.shape_cast %814 : vector<64x8xf32> to vector<1x64x8xf32>
    %816 = vector.broadcast %815 : vector<1x64x8xf32> to vector<2x64x8xf32>
    %817 = arith.mulf %812, %816 : vector<2x64x8xf32>
    %818 = arith.addf %810, %817 : vector<2x64x8xf32>
    %c17_i32_476 = arith.constant 17 : i32
    %819 = tpu.dynamic_rotate %795 by %c17_i32_476 dim 0 : vector<128x8xf32>, i32 -> vector<128x8xf32>
    %820 = vector.shape_cast %819 : vector<128x8xf32> to vector<2x64x8xf32>
    %c3_477 = arith.constant 3 : index
    %c1_478 = arith.constant 1 : index
    %c0_479 = arith.constant 0 : index
    %c0_480 = arith.constant 0 : index
    %821 = vector.load %arg8[%c3_477, %c1_478, %c0_479, %c0_480] : memref<4x25x64x8xf32, #tpu.memory_space<vmem>>, vector<1x1x64x8xf32>
    %822 = vector.shape_cast %821 : vector<1x1x64x8xf32> to vector<64x8xf32>
    %823 = vector.shape_cast %822 : vector<64x8xf32> to vector<1x64x8xf32>
    %824 = vector.broadcast %823 : vector<1x64x8xf32> to vector<2x64x8xf32>
    %825 = arith.mulf %820, %824 : vector<2x64x8xf32>
    %826 = arith.addf %818, %825 : vector<2x64x8xf32>
    %c16_i32_481 = arith.constant 16 : i32
    %827 = tpu.dynamic_rotate %795 by %c16_i32_481 dim 0 : vector<128x8xf32>, i32 -> vector<128x8xf32>
    %828 = vector.shape_cast %827 : vector<128x8xf32> to vector<2x64x8xf32>
    %c3_482 = arith.constant 3 : index
    %c2_483 = arith.constant 2 : index
    %c0_484 = arith.constant 0 : index
    %c0_485 = arith.constant 0 : index
    %829 = vector.load %arg8[%c3_482, %c2_483, %c0_484, %c0_485] : memref<4x25x64x8xf32, #tpu.memory_space<vmem>>, vector<1x1x64x8xf32>
    %830 = vector.shape_cast %829 : vector<1x1x64x8xf32> to vector<64x8xf32>
    %831 = vector.shape_cast %830 : vector<64x8xf32> to vector<1x64x8xf32>
    %832 = vector.broadcast %831 : vector<1x64x8xf32> to vector<2x64x8xf32>
    %833 = arith.mulf %828, %832 : vector<2x64x8xf32>
    %834 = arith.addf %826, %833 : vector<2x64x8xf32>
    %c15_i32_486 = arith.constant 15 : i32
    %835 = tpu.dynamic_rotate %795 by %c15_i32_486 dim 0 : vector<128x8xf32>, i32 -> vector<128x8xf32>
    %836 = vector.shape_cast %835 : vector<128x8xf32> to vector<2x64x8xf32>
    %c3_487 = arith.constant 3 : index
    %c3_488 = arith.constant 3 : index
    %c0_489 = arith.constant 0 : index
    %c0_490 = arith.constant 0 : index
    %837 = vector.load %arg8[%c3_487, %c3_488, %c0_489, %c0_490] : memref<4x25x64x8xf32, #tpu.memory_space<vmem>>, vector<1x1x64x8xf32>
    %838 = vector.shape_cast %837 : vector<1x1x64x8xf32> to vector<64x8xf32>
    %839 = vector.shape_cast %838 : vector<64x8xf32> to vector<1x64x8xf32>
    %840 = vector.broadcast %839 : vector<1x64x8xf32> to vector<2x64x8xf32>
    %841 = arith.mulf %836, %840 : vector<2x64x8xf32>
    %842 = arith.addf %834, %841 : vector<2x64x8xf32>
    %c14_i32_491 = arith.constant 14 : i32
    %843 = tpu.dynamic_rotate %795 by %c14_i32_491 dim 0 : vector<128x8xf32>, i32 -> vector<128x8xf32>
    %844 = vector.shape_cast %843 : vector<128x8xf32> to vector<2x64x8xf32>
    %c3_492 = arith.constant 3 : index
    %c4_493 = arith.constant 4 : index
    %c0_494 = arith.constant 0 : index
    %c0_495 = arith.constant 0 : index
    %845 = vector.load %arg8[%c3_492, %c4_493, %c0_494, %c0_495] : memref<4x25x64x8xf32, #tpu.memory_space<vmem>>, vector<1x1x64x8xf32>
    %846 = vector.shape_cast %845 : vector<1x1x64x8xf32> to vector<64x8xf32>
    %847 = vector.shape_cast %846 : vector<64x8xf32> to vector<1x64x8xf32>
    %848 = vector.broadcast %847 : vector<1x64x8xf32> to vector<2x64x8xf32>
    %849 = arith.mulf %844, %848 : vector<2x64x8xf32>
    %850 = arith.addf %842, %849 : vector<2x64x8xf32>
    %c10_i32_496 = arith.constant 10 : i32
    %851 = tpu.dynamic_rotate %795 by %c10_i32_496 dim 0 : vector<128x8xf32>, i32 -> vector<128x8xf32>
    %852 = vector.shape_cast %851 : vector<128x8xf32> to vector<2x64x8xf32>
    %c3_497 = arith.constant 3 : index
    %c5_498 = arith.constant 5 : index
    %c0_499 = arith.constant 0 : index
    %c0_500 = arith.constant 0 : index
    %853 = vector.load %arg8[%c3_497, %c5_498, %c0_499, %c0_500] : memref<4x25x64x8xf32, #tpu.memory_space<vmem>>, vector<1x1x64x8xf32>
    %854 = vector.shape_cast %853 : vector<1x1x64x8xf32> to vector<64x8xf32>
    %855 = vector.shape_cast %854 : vector<64x8xf32> to vector<1x64x8xf32>
    %856 = vector.broadcast %855 : vector<1x64x8xf32> to vector<2x64x8xf32>
    %857 = arith.mulf %852, %856 : vector<2x64x8xf32>
    %858 = arith.addf %850, %857 : vector<2x64x8xf32>
    %c9_i32_501 = arith.constant 9 : i32
    %859 = tpu.dynamic_rotate %795 by %c9_i32_501 dim 0 : vector<128x8xf32>, i32 -> vector<128x8xf32>
    %860 = vector.shape_cast %859 : vector<128x8xf32> to vector<2x64x8xf32>
    %c3_502 = arith.constant 3 : index
    %c6_503 = arith.constant 6 : index
    %c0_504 = arith.constant 0 : index
    %c0_505 = arith.constant 0 : index
    %861 = vector.load %arg8[%c3_502, %c6_503, %c0_504, %c0_505] : memref<4x25x64x8xf32, #tpu.memory_space<vmem>>, vector<1x1x64x8xf32>
    %862 = vector.shape_cast %861 : vector<1x1x64x8xf32> to vector<64x8xf32>
    %863 = vector.shape_cast %862 : vector<64x8xf32> to vector<1x64x8xf32>
    %864 = vector.broadcast %863 : vector<1x64x8xf32> to vector<2x64x8xf32>
    %865 = arith.mulf %860, %864 : vector<2x64x8xf32>
    %866 = arith.addf %858, %865 : vector<2x64x8xf32>
    %c8_i32_506 = arith.constant 8 : i32
    %867 = tpu.dynamic_rotate %795 by %c8_i32_506 dim 0 : vector<128x8xf32>, i32 -> vector<128x8xf32>
    %868 = vector.shape_cast %867 : vector<128x8xf32> to vector<2x64x8xf32>
    %c3_507 = arith.constant 3 : index
    %c7_508 = arith.constant 7 : index
    %c0_509 = arith.constant 0 : index
    %c0_510 = arith.constant 0 : index
    %869 = vector.load %arg8[%c3_507, %c7_508, %c0_509, %c0_510] : memref<4x25x64x8xf32, #tpu.memory_space<vmem>>, vector<1x1x64x8xf32>
    %870 = vector.shape_cast %869 : vector<1x1x64x8xf32> to vector<64x8xf32>
    %871 = vector.shape_cast %870 : vector<64x8xf32> to vector<1x64x8xf32>
    %872 = vector.broadcast %871 : vector<1x64x8xf32> to vector<2x64x8xf32>
    %873 = arith.mulf %868, %872 : vector<2x64x8xf32>
    %874 = arith.addf %866, %873 : vector<2x64x8xf32>
    %c7_i32_511 = arith.constant 7 : i32
    %875 = tpu.dynamic_rotate %795 by %c7_i32_511 dim 0 : vector<128x8xf32>, i32 -> vector<128x8xf32>
    %876 = vector.shape_cast %875 : vector<128x8xf32> to vector<2x64x8xf32>
    %c3_512 = arith.constant 3 : index
    %c8_513 = arith.constant 8 : index
    %c0_514 = arith.constant 0 : index
    %c0_515 = arith.constant 0 : index
    %877 = vector.load %arg8[%c3_512, %c8_513, %c0_514, %c0_515] : memref<4x25x64x8xf32, #tpu.memory_space<vmem>>, vector<1x1x64x8xf32>
    %878 = vector.shape_cast %877 : vector<1x1x64x8xf32> to vector<64x8xf32>
    %879 = vector.shape_cast %878 : vector<64x8xf32> to vector<1x64x8xf32>
    %880 = vector.broadcast %879 : vector<1x64x8xf32> to vector<2x64x8xf32>
    %881 = arith.mulf %876, %880 : vector<2x64x8xf32>
    %882 = arith.addf %874, %881 : vector<2x64x8xf32>
    %c6_i32_516 = arith.constant 6 : i32
    %883 = tpu.dynamic_rotate %795 by %c6_i32_516 dim 0 : vector<128x8xf32>, i32 -> vector<128x8xf32>
    %884 = vector.shape_cast %883 : vector<128x8xf32> to vector<2x64x8xf32>
    %c3_517 = arith.constant 3 : index
    %c9_518 = arith.constant 9 : index
    %c0_519 = arith.constant 0 : index
    %c0_520 = arith.constant 0 : index
    %885 = vector.load %arg8[%c3_517, %c9_518, %c0_519, %c0_520] : memref<4x25x64x8xf32, #tpu.memory_space<vmem>>, vector<1x1x64x8xf32>
    %886 = vector.shape_cast %885 : vector<1x1x64x8xf32> to vector<64x8xf32>
    %887 = vector.shape_cast %886 : vector<64x8xf32> to vector<1x64x8xf32>
    %888 = vector.broadcast %887 : vector<1x64x8xf32> to vector<2x64x8xf32>
    %889 = arith.mulf %884, %888 : vector<2x64x8xf32>
    %890 = arith.addf %882, %889 : vector<2x64x8xf32>
    %c2_i32_521 = arith.constant 2 : i32
    %891 = tpu.dynamic_rotate %795 by %c2_i32_521 dim 0 : vector<128x8xf32>, i32 -> vector<128x8xf32>
    %892 = vector.shape_cast %891 : vector<128x8xf32> to vector<2x64x8xf32>
    %c3_522 = arith.constant 3 : index
    %c10_523 = arith.constant 10 : index
    %c0_524 = arith.constant 0 : index
    %c0_525 = arith.constant 0 : index
    %893 = vector.load %arg8[%c3_522, %c10_523, %c0_524, %c0_525] : memref<4x25x64x8xf32, #tpu.memory_space<vmem>>, vector<1x1x64x8xf32>
    %894 = vector.shape_cast %893 : vector<1x1x64x8xf32> to vector<64x8xf32>
    %895 = vector.shape_cast %894 : vector<64x8xf32> to vector<1x64x8xf32>
    %896 = vector.broadcast %895 : vector<1x64x8xf32> to vector<2x64x8xf32>
    %897 = arith.mulf %892, %896 : vector<2x64x8xf32>
    %898 = arith.addf %890, %897 : vector<2x64x8xf32>
    %c1_i32_526 = arith.constant 1 : i32
    %899 = tpu.dynamic_rotate %795 by %c1_i32_526 dim 0 : vector<128x8xf32>, i32 -> vector<128x8xf32>
    %900 = vector.shape_cast %899 : vector<128x8xf32> to vector<2x64x8xf32>
    %c3_527 = arith.constant 3 : index
    %c11_528 = arith.constant 11 : index
    %c0_529 = arith.constant 0 : index
    %c0_530 = arith.constant 0 : index
    %901 = vector.load %arg8[%c3_527, %c11_528, %c0_529, %c0_530] : memref<4x25x64x8xf32, #tpu.memory_space<vmem>>, vector<1x1x64x8xf32>
    %902 = vector.shape_cast %901 : vector<1x1x64x8xf32> to vector<64x8xf32>
    %903 = vector.shape_cast %902 : vector<64x8xf32> to vector<1x64x8xf32>
    %904 = vector.broadcast %903 : vector<1x64x8xf32> to vector<2x64x8xf32>
    %905 = arith.mulf %900, %904 : vector<2x64x8xf32>
    %906 = arith.addf %898, %905 : vector<2x64x8xf32>
    %907 = vector.shape_cast %795 : vector<128x8xf32> to vector<2x64x8xf32>
    %c3_531 = arith.constant 3 : index
    %c12_532 = arith.constant 12 : index
    %c0_533 = arith.constant 0 : index
    %c0_534 = arith.constant 0 : index
    %908 = vector.load %arg8[%c3_531, %c12_532, %c0_533, %c0_534] : memref<4x25x64x8xf32, #tpu.memory_space<vmem>>, vector<1x1x64x8xf32>
    %909 = vector.shape_cast %908 : vector<1x1x64x8xf32> to vector<64x8xf32>
    %910 = vector.shape_cast %909 : vector<64x8xf32> to vector<1x64x8xf32>
    %911 = vector.broadcast %910 : vector<1x64x8xf32> to vector<2x64x8xf32>
    %912 = arith.mulf %907, %911 : vector<2x64x8xf32>
    %913 = arith.addf %906, %912 : vector<2x64x8xf32>
    %c127_i32_535 = arith.constant 127 : i32
    %914 = tpu.dynamic_rotate %795 by %c127_i32_535 dim 0 : vector<128x8xf32>, i32 -> vector<128x8xf32>
    %915 = vector.shape_cast %914 : vector<128x8xf32> to vector<2x64x8xf32>
    %c3_536 = arith.constant 3 : index
    %c13_537 = arith.constant 13 : index
    %c0_538 = arith.constant 0 : index
    %c0_539 = arith.constant 0 : index
    %916 = vector.load %arg8[%c3_536, %c13_537, %c0_538, %c0_539] : memref<4x25x64x8xf32, #tpu.memory_space<vmem>>, vector<1x1x64x8xf32>
    %917 = vector.shape_cast %916 : vector<1x1x64x8xf32> to vector<64x8xf32>
    %918 = vector.shape_cast %917 : vector<64x8xf32> to vector<1x64x8xf32>
    %919 = vector.broadcast %918 : vector<1x64x8xf32> to vector<2x64x8xf32>
    %920 = arith.mulf %915, %919 : vector<2x64x8xf32>
    %921 = arith.addf %913, %920 : vector<2x64x8xf32>
    %c126_i32_540 = arith.constant 126 : i32
    %922 = tpu.dynamic_rotate %795 by %c126_i32_540 dim 0 : vector<128x8xf32>, i32 -> vector<128x8xf32>
    %923 = vector.shape_cast %922 : vector<128x8xf32> to vector<2x64x8xf32>
    %c3_541 = arith.constant 3 : index
    %c14_542 = arith.constant 14 : index
    %c0_543 = arith.constant 0 : index
    %c0_544 = arith.constant 0 : index
    %924 = vector.load %arg8[%c3_541, %c14_542, %c0_543, %c0_544] : memref<4x25x64x8xf32, #tpu.memory_space<vmem>>, vector<1x1x64x8xf32>
    %925 = vector.shape_cast %924 : vector<1x1x64x8xf32> to vector<64x8xf32>
    %926 = vector.shape_cast %925 : vector<64x8xf32> to vector<1x64x8xf32>
    %927 = vector.broadcast %926 : vector<1x64x8xf32> to vector<2x64x8xf32>
    %928 = arith.mulf %923, %927 : vector<2x64x8xf32>
    %929 = arith.addf %921, %928 : vector<2x64x8xf32>
    %c122_i32_545 = arith.constant 122 : i32
    %930 = tpu.dynamic_rotate %795 by %c122_i32_545 dim 0 : vector<128x8xf32>, i32 -> vector<128x8xf32>
    %931 = vector.shape_cast %930 : vector<128x8xf32> to vector<2x64x8xf32>
    %c3_546 = arith.constant 3 : index
    %c15_547 = arith.constant 15 : index
    %c0_548 = arith.constant 0 : index
    %c0_549 = arith.constant 0 : index
    %932 = vector.load %arg8[%c3_546, %c15_547, %c0_548, %c0_549] : memref<4x25x64x8xf32, #tpu.memory_space<vmem>>, vector<1x1x64x8xf32>
    %933 = vector.shape_cast %932 : vector<1x1x64x8xf32> to vector<64x8xf32>
    %934 = vector.shape_cast %933 : vector<64x8xf32> to vector<1x64x8xf32>
    %935 = vector.broadcast %934 : vector<1x64x8xf32> to vector<2x64x8xf32>
    %936 = arith.mulf %931, %935 : vector<2x64x8xf32>
    %937 = arith.addf %929, %936 : vector<2x64x8xf32>
    %c121_i32_550 = arith.constant 121 : i32
    %938 = tpu.dynamic_rotate %795 by %c121_i32_550 dim 0 : vector<128x8xf32>, i32 -> vector<128x8xf32>
    %939 = vector.shape_cast %938 : vector<128x8xf32> to vector<2x64x8xf32>
    %c3_551 = arith.constant 3 : index
    %c16_552 = arith.constant 16 : index
    %c0_553 = arith.constant 0 : index
    %c0_554 = arith.constant 0 : index
    %940 = vector.load %arg8[%c3_551, %c16_552, %c0_553, %c0_554] : memref<4x25x64x8xf32, #tpu.memory_space<vmem>>, vector<1x1x64x8xf32>
    %941 = vector.shape_cast %940 : vector<1x1x64x8xf32> to vector<64x8xf32>
    %942 = vector.shape_cast %941 : vector<64x8xf32> to vector<1x64x8xf32>
    %943 = vector.broadcast %942 : vector<1x64x8xf32> to vector<2x64x8xf32>
    %944 = arith.mulf %939, %943 : vector<2x64x8xf32>
    %945 = arith.addf %937, %944 : vector<2x64x8xf32>
    %c120_i32_555 = arith.constant 120 : i32
    %946 = tpu.dynamic_rotate %795 by %c120_i32_555 dim 0 : vector<128x8xf32>, i32 -> vector<128x8xf32>
    %947 = vector.shape_cast %946 : vector<128x8xf32> to vector<2x64x8xf32>
    %c3_556 = arith.constant 3 : index
    %c17_557 = arith.constant 17 : index
    %c0_558 = arith.constant 0 : index
    %c0_559 = arith.constant 0 : index
    %948 = vector.load %arg8[%c3_556, %c17_557, %c0_558, %c0_559] : memref<4x25x64x8xf32, #tpu.memory_space<vmem>>, vector<1x1x64x8xf32>
    %949 = vector.shape_cast %948 : vector<1x1x64x8xf32> to vector<64x8xf32>
    %950 = vector.shape_cast %949 : vector<64x8xf32> to vector<1x64x8xf32>
    %951 = vector.broadcast %950 : vector<1x64x8xf32> to vector<2x64x8xf32>
    %952 = arith.mulf %947, %951 : vector<2x64x8xf32>
    %953 = arith.addf %945, %952 : vector<2x64x8xf32>
    %c119_i32_560 = arith.constant 119 : i32
    %954 = tpu.dynamic_rotate %795 by %c119_i32_560 dim 0 : vector<128x8xf32>, i32 -> vector<128x8xf32>
    %955 = vector.shape_cast %954 : vector<128x8xf32> to vector<2x64x8xf32>
    %c3_561 = arith.constant 3 : index
    %c18_562 = arith.constant 18 : index
    %c0_563 = arith.constant 0 : index
    %c0_564 = arith.constant 0 : index
    %956 = vector.load %arg8[%c3_561, %c18_562, %c0_563, %c0_564] : memref<4x25x64x8xf32, #tpu.memory_space<vmem>>, vector<1x1x64x8xf32>
    %957 = vector.shape_cast %956 : vector<1x1x64x8xf32> to vector<64x8xf32>
    %958 = vector.shape_cast %957 : vector<64x8xf32> to vector<1x64x8xf32>
    %959 = vector.broadcast %958 : vector<1x64x8xf32> to vector<2x64x8xf32>
    %960 = arith.mulf %955, %959 : vector<2x64x8xf32>
    %961 = arith.addf %953, %960 : vector<2x64x8xf32>
    %c118_i32_565 = arith.constant 118 : i32
    %962 = tpu.dynamic_rotate %795 by %c118_i32_565 dim 0 : vector<128x8xf32>, i32 -> vector<128x8xf32>
    %963 = vector.shape_cast %962 : vector<128x8xf32> to vector<2x64x8xf32>
    %c3_566 = arith.constant 3 : index
    %c19_567 = arith.constant 19 : index
    %c0_568 = arith.constant 0 : index
    %c0_569 = arith.constant 0 : index
    %964 = vector.load %arg8[%c3_566, %c19_567, %c0_568, %c0_569] : memref<4x25x64x8xf32, #tpu.memory_space<vmem>>, vector<1x1x64x8xf32>
    %965 = vector.shape_cast %964 : vector<1x1x64x8xf32> to vector<64x8xf32>
    %966 = vector.shape_cast %965 : vector<64x8xf32> to vector<1x64x8xf32>
    %967 = vector.broadcast %966 : vector<1x64x8xf32> to vector<2x64x8xf32>
    %968 = arith.mulf %963, %967 : vector<2x64x8xf32>
    %969 = arith.addf %961, %968 : vector<2x64x8xf32>
    %c114_i32_570 = arith.constant 114 : i32
    %970 = tpu.dynamic_rotate %795 by %c114_i32_570 dim 0 : vector<128x8xf32>, i32 -> vector<128x8xf32>
    %971 = vector.shape_cast %970 : vector<128x8xf32> to vector<2x64x8xf32>
    %c3_571 = arith.constant 3 : index
    %c20_572 = arith.constant 20 : index
    %c0_573 = arith.constant 0 : index
    %c0_574 = arith.constant 0 : index
    %972 = vector.load %arg8[%c3_571, %c20_572, %c0_573, %c0_574] : memref<4x25x64x8xf32, #tpu.memory_space<vmem>>, vector<1x1x64x8xf32>
    %973 = vector.shape_cast %972 : vector<1x1x64x8xf32> to vector<64x8xf32>
    %974 = vector.shape_cast %973 : vector<64x8xf32> to vector<1x64x8xf32>
    %975 = vector.broadcast %974 : vector<1x64x8xf32> to vector<2x64x8xf32>
    %976 = arith.mulf %971, %975 : vector<2x64x8xf32>
    %977 = arith.addf %969, %976 : vector<2x64x8xf32>
    %c113_i32_575 = arith.constant 113 : i32
    %978 = tpu.dynamic_rotate %795 by %c113_i32_575 dim 0 : vector<128x8xf32>, i32 -> vector<128x8xf32>
    %979 = vector.shape_cast %978 : vector<128x8xf32> to vector<2x64x8xf32>
    %c3_576 = arith.constant 3 : index
    %c21_577 = arith.constant 21 : index
    %c0_578 = arith.constant 0 : index
    %c0_579 = arith.constant 0 : index
    %980 = vector.load %arg8[%c3_576, %c21_577, %c0_578, %c0_579] : memref<4x25x64x8xf32, #tpu.memory_space<vmem>>, vector<1x1x64x8xf32>
    %981 = vector.shape_cast %980 : vector<1x1x64x8xf32> to vector<64x8xf32>
    %982 = vector.shape_cast %981 : vector<64x8xf32> to vector<1x64x8xf32>
    %983 = vector.broadcast %982 : vector<1x64x8xf32> to vector<2x64x8xf32>
    %984 = arith.mulf %979, %983 : vector<2x64x8xf32>
    %985 = arith.addf %977, %984 : vector<2x64x8xf32>
    %c112_i32_580 = arith.constant 112 : i32
    %986 = tpu.dynamic_rotate %795 by %c112_i32_580 dim 0 : vector<128x8xf32>, i32 -> vector<128x8xf32>
    %987 = vector.shape_cast %986 : vector<128x8xf32> to vector<2x64x8xf32>
    %c3_581 = arith.constant 3 : index
    %c22_582 = arith.constant 22 : index
    %c0_583 = arith.constant 0 : index
    %c0_584 = arith.constant 0 : index
    %988 = vector.load %arg8[%c3_581, %c22_582, %c0_583, %c0_584] : memref<4x25x64x8xf32, #tpu.memory_space<vmem>>, vector<1x1x64x8xf32>
    %989 = vector.shape_cast %988 : vector<1x1x64x8xf32> to vector<64x8xf32>
    %990 = vector.shape_cast %989 : vector<64x8xf32> to vector<1x64x8xf32>
    %991 = vector.broadcast %990 : vector<1x64x8xf32> to vector<2x64x8xf32>
    %992 = arith.mulf %987, %991 : vector<2x64x8xf32>
    %993 = arith.addf %985, %992 : vector<2x64x8xf32>
    %c111_i32_585 = arith.constant 111 : i32
    %994 = tpu.dynamic_rotate %795 by %c111_i32_585 dim 0 : vector<128x8xf32>, i32 -> vector<128x8xf32>
    %995 = vector.shape_cast %994 : vector<128x8xf32> to vector<2x64x8xf32>
    %c3_586 = arith.constant 3 : index
    %c23_587 = arith.constant 23 : index
    %c0_588 = arith.constant 0 : index
    %c0_589 = arith.constant 0 : index
    %996 = vector.load %arg8[%c3_586, %c23_587, %c0_588, %c0_589] : memref<4x25x64x8xf32, #tpu.memory_space<vmem>>, vector<1x1x64x8xf32>
    %997 = vector.shape_cast %996 : vector<1x1x64x8xf32> to vector<64x8xf32>
    %998 = vector.shape_cast %997 : vector<64x8xf32> to vector<1x64x8xf32>
    %999 = vector.broadcast %998 : vector<1x64x8xf32> to vector<2x64x8xf32>
    %1000 = arith.mulf %995, %999 : vector<2x64x8xf32>
    %1001 = arith.addf %993, %1000 : vector<2x64x8xf32>
    %c110_i32_590 = arith.constant 110 : i32
    %1002 = tpu.dynamic_rotate %795 by %c110_i32_590 dim 0 : vector<128x8xf32>, i32 -> vector<128x8xf32>
    %1003 = vector.shape_cast %1002 : vector<128x8xf32> to vector<2x64x8xf32>
    %c3_591 = arith.constant 3 : index
    %c24_592 = arith.constant 24 : index
    %c0_593 = arith.constant 0 : index
    %c0_594 = arith.constant 0 : index
    %1004 = vector.load %arg8[%c3_591, %c24_592, %c0_593, %c0_594] : memref<4x25x64x8xf32, #tpu.memory_space<vmem>>, vector<1x1x64x8xf32>
    %1005 = vector.shape_cast %1004 : vector<1x1x64x8xf32> to vector<64x8xf32>
    %1006 = vector.shape_cast %1005 : vector<64x8xf32> to vector<1x64x8xf32>
    %1007 = vector.broadcast %1006 : vector<1x64x8xf32> to vector<2x64x8xf32>
    %1008 = arith.mulf %1003, %1007 : vector<2x64x8xf32>
    %1009 = arith.addf %1001, %1008 : vector<2x64x8xf32>
    %c3_595 = arith.constant 3 : index
    %c0_596 = arith.constant 0 : index
    %c0_597 = arith.constant 0 : index
    %1010 = vector.load %arg9[%c3_595, %c0_596, %c0_597] : memref<4x1x8xf32, #tpu.memory_space<vmem>>, vector<1x1x8xf32>
    %1011 = vector.shape_cast %1010 : vector<1x1x8xf32> to vector<1x8xf32>
    %1012 = vector.shape_cast %1011 : vector<1x8xf32> to vector<1x1x8xf32>
    %1013 = vector.broadcast %1012 : vector<1x1x8xf32> to vector<2x64x8xf32>
    %1014 = arith.addf %1009, %1013 : vector<2x64x8xf32>
    %1015 = arith.truncf %1014 : vector<2x64x8xf32> to vector<2x64x8xbf16>
    %1016 = vector.shape_cast %802 : vector<128x8xf32> to vector<2x64x8xf32>
    %1017 = arith.truncf %1016 : vector<2x64x8xf32> to vector<2x64x8xbf16>
    %1018 = vector.shape_cast %809 : vector<128x8xf32> to vector<2x64x8xf32>
    %1019 = arith.truncf %1018 : vector<2x64x8xf32> to vector<2x64x8xbf16>
    "tpu.trace_start"() <{level = 10 : i32, message = "bqc,bkc->bqk"}> : () -> ()
    %cst_598 = arith.constant dense<0.000000e+00> : vector<2x64x64xf32>
    %1020 = tpu.matmul %1015, %1017, %cst_598 {dimension_numbers = #tpu.dot_dimension_numbers<[2], [2], [1], [1], [0, 0, 0, 1, 1, 1], [0], [0]>} : vector<2x64x8xbf16>, vector<2x64x8xbf16>, vector<2x64x64xf32> -> vector<2x64x64xf32>
    "tpu.trace_stop"() : () -> ()
    %c3_599 = arith.constant 3 : index
    %c0_600 = arith.constant 0 : index
    %c0_601 = arith.constant 0 : index
    %1021 = vector.load %arg10[%c3_599, %c0_600, %c0_601] : memref<4x64x64xf32, #tpu.memory_space<vmem>>, vector<1x64x64xf32>
    %1022 = vector.shape_cast %1021 : vector<1x64x64xf32> to vector<64x64xf32>
    %1023 = vector.shape_cast %1022 : vector<64x64xf32> to vector<1x64x64xf32>
    %1024 = vector.broadcast %1023 : vector<1x64x64xf32> to vector<2x64x64xf32>
    %1025 = arith.addf %1020, %1024 : vector<2x64x64xf32>
    %cst_602 = arith.constant dense<0xFF800000> : vector<2x64xf32>
    %1026 = vector.multi_reduction <maximumf>, %1025, %cst_602 [2] : vector<2x64x64xf32> to vector<2x64xf32>
    %1027 = vector.shape_cast %1026 : vector<2x64xf32> to vector<2x64x1xf32>
    %1028 = vector.broadcast %1027 : vector<2x64x1xf32> to vector<2x64x64xf32>
    %1029 = arith.subf %1025, %1028 : vector<2x64x64xf32>
    %1030 = math.exp %1029 : vector<2x64x64xf32>
    %cst_603 = arith.constant dense<0.000000e+00> : vector<2x64xf32>
    %1031 = vector.multi_reduction <add>, %1030, %cst_603 [2] : vector<2x64x64xf32> to vector<2x64xf32>
    %1032 = vector.shape_cast %1031 : vector<2x64xf32> to vector<2x64x1xf32>
    %1033 = tpu.reciprocal %1032 {approx = true} : vector<2x64x1xf32> -> vector<2x64x1xf32>
    %1034 = vector.broadcast %1033 : vector<2x64x1xf32> to vector<2x64x64xf32>
    %1035 = arith.mulf %1030, %1034 : vector<2x64x64xf32>
    %1036 = arith.truncf %1035 : vector<2x64x64xf32> to vector<2x64x64xbf16>
    "tpu.trace_start"() <{level = 10 : i32, message = "bqk,bkc->bqc"}> : () -> ()
    %cst_604 = arith.constant dense<0.000000e+00> : vector<2x64x8xf32>
    %1037 = tpu.matmul %1036, %1019, %cst_604 {dimension_numbers = #tpu.dot_dimension_numbers<[2], [1], [1], [2], [0, 0, 0, 1, 1, 2], [0], [0]>} : vector<2x64x64xbf16>, vector<2x64x8xbf16>, vector<2x64x8xf32> -> vector<2x64x8xf32>
    "tpu.trace_stop"() : () -> ()
    %1038 = vector.shape_cast %1037 : vector<2x64x8xf32> to vector<128x8xf32>
    %cst_605 = arith.constant 0.000000e+00 : f32
    %1039 = vector.broadcast %cst_605 : f32 to vector<128x8xf32>
    %1040 = arith.maximumf %1038, %1039 : vector<128x8xf32>
    %1041 = arith.truncf %1040 : vector<128x8xf32> to vector<128x8xbf16>
    %c3_606 = arith.constant 3 : index
    %c0_607 = arith.constant 0 : index
    %c0_608 = arith.constant 0 : index
    %1042 = vector.load %arg11[%c3_606, %c0_607, %c0_608] : memref<4x8x32xbf16, #tpu.memory_space<vmem>>, vector<1x8x32xbf16>
    %1043 = vector.shape_cast %1042 : vector<1x8x32xbf16> to vector<8x32xbf16>
    %cst_609 = arith.constant dense<0.000000e+00> : vector<128x32xf32>
    %1044 = tpu.matmul %1041, %1043, %cst_609 {dimension_numbers = #tpu.dot_dimension_numbers<[1], [0], [0], [1], [0, 0, 1, 1], [], []>} : vector<128x8xbf16>, vector<8x32xbf16>, vector<128x32xf32> -> vector<128x32xf32>
    %1045 = arith.addf %783, %1044 : vector<128x32xf32>
    %c0_610 = arith.constant 0 : index
    %c0_611 = arith.constant 0 : index
    %1046 = vector.load %arg12[%c0_610, %c0_611] : memref<1x32xf32, #tpu.memory_space<vmem>>, vector<1x32xf32>
    %1047 = vector.broadcast %1046 : vector<1x32xf32> to vector<128x32xf32>
    %1048 = arith.addf %1045, %1047 : vector<128x32xf32>
    %1049 = vector.shape_cast %1048 : vector<128x32xf32> to vector<2x64x32xf32>
    %c0_612 = arith.constant 0 : index
    %c0_613 = arith.constant 0 : index
    %c0_614 = arith.constant 0 : index
    %1050 = vector.load %arg13[%c0_612, %c0_613, %c0_614] : memref<2x64x32xf32, #tpu.memory_space<vmem>>, vector<2x64x32xf32>
    tpu.vector_store %arg13[%c0_612, %c0_613, %c0_614], %1049 {strides = array<i32>} : memref<2x64x32xf32, #tpu.memory_space<vmem>>, vector<2x64x32xf32>,
    return
  }
  func.func @transform_0(%arg0: i32) -> (i32, i32, i32, i32) {
    %c0_i32 = arith.constant 0 : i32
    %c0_i32_0 = arith.constant 0 : i32
    %c0_i32_1 = arith.constant 0 : i32
    %c0_i32_2 = arith.constant 0 : i32
    return %arg0, %c0_i32, %c0_i32_0, %c0_i32_1 : i32, i32, i32, i32
  }
  func.func @transform_1(%arg0: i32) -> (i32, i32, i32) {
    %c0_i32 = arith.constant 0 : i32
    %c0_i32_0 = arith.constant 0 : i32
    %c0_i32_1 = arith.constant 0 : i32
    %c0_i32_2 = arith.constant 0 : i32
    return %c0_i32, %c0_i32_0, %c0_i32_1 : i32, i32, i32
  }
  func.func @transform_2(%arg0: i32) -> (i32, i32, i32) {
    %c0_i32 = arith.constant 0 : i32
    %c0_i32_0 = arith.constant 0 : i32
    %c0_i32_1 = arith.constant 0 : i32
    %c0_i32_2 = arith.constant 0 : i32
    return %c0_i32, %c0_i32_0, %c0_i32_1 : i32, i32, i32
  }
  func.func @transform_3(%arg0: i32) -> (i32, i32, i32) {
    %c0_i32 = arith.constant 0 : i32
    %c0_i32_0 = arith.constant 0 : i32
    %c0_i32_1 = arith.constant 0 : i32
    %c0_i32_2 = arith.constant 0 : i32
    return %c0_i32, %c0_i32_0, %c0_i32_1 : i32, i32, i32
  }
  func.func @transform_4(%arg0: i32) -> (i32, i32, i32) {
    %c0_i32 = arith.constant 0 : i32
    %c0_i32_0 = arith.constant 0 : i32
    %c0_i32_1 = arith.constant 0 : i32
    %c0_i32_2 = arith.constant 0 : i32
    return %c0_i32, %c0_i32_0, %c0_i32_1 : i32, i32, i32
  }
  func.func @transform_5(%arg0: i32) -> (i32, i32, i32) {
    %c0_i32 = arith.constant 0 : i32
    %c0_i32_0 = arith.constant 0 : i32
    %c0_i32_1 = arith.constant 0 : i32
    %c0_i32_2 = arith.constant 0 : i32
    return %c0_i32, %c0_i32_0, %c0_i32_1 : i32, i32, i32
  }
  func.func @transform_6(%arg0: i32) -> (i32, i32, i32) {
    %c0_i32 = arith.constant 0 : i32
    %c0_i32_0 = arith.constant 0 : i32
    %c0_i32_1 = arith.constant 0 : i32
    %c0_i32_2 = arith.constant 0 : i32
    return %c0_i32, %c0_i32_0, %c0_i32_1 : i32, i32, i32
  }
  func.func @transform_7(%arg0: i32) -> (i32, i32, i32, i32) {
    %c0_i32 = arith.constant 0 : i32
    %c0_i32_0 = arith.constant 0 : i32
    %c0_i32_1 = arith.constant 0 : i32
    %c0_i32_2 = arith.constant 0 : i32
    %c0_i32_3 = arith.constant 0 : i32
    return %c0_i32, %c0_i32_0, %c0_i32_1, %c0_i32_2 : i32, i32, i32, i32
  }
  func.func @transform_8(%arg0: i32) -> (i32, i32, i32) {
    %c0_i32 = arith.constant 0 : i32
    %c0_i32_0 = arith.constant 0 : i32
    %c0_i32_1 = arith.constant 0 : i32
    %c0_i32_2 = arith.constant 0 : i32
    return %c0_i32, %c0_i32_0, %c0_i32_1 : i32, i32, i32
  }
  func.func @transform_9(%arg0: i32) -> (i32, i32, i32) {
    %c0_i32 = arith.constant 0 : i32
    %c0_i32_0 = arith.constant 0 : i32
    %c0_i32_1 = arith.constant 0 : i32
    %c0_i32_2 = arith.constant 0 : i32
    return %c0_i32, %c0_i32_0, %c0_i32_1 : i32, i32, i32
  }
  func.func @transform_10(%arg0: i32) -> (i32, i32, i32) {
    %c0_i32 = arith.constant 0 : i32
    %c0_i32_0 = arith.constant 0 : i32
    %c0_i32_1 = arith.constant 0 : i32
    %c0_i32_2 = arith.constant 0 : i32
    return %c0_i32, %c0_i32_0, %c0_i32_1 : i32, i32, i32
  }
  func.func @transform_11(%arg0: i32) -> (i32, i32) {
    %c0_i32 = arith.constant 0 : i32
    %c0_i32_0 = arith.constant 0 : i32
    %c0_i32_1 = arith.constant 0 : i32
    return %c0_i32, %c0_i32_0 : i32, i32
  }
  func.func @transform_12(%arg0: i32) -> (i32, i32, i32) {
    %c0_i32 = arith.constant 0 : i32
    %c0_i32_0 = arith.constant 0 : i32
    %c0_i32_1 = arith.constant 0 : i32
    return %arg0, %c0_i32, %c0_i32_0 : i32, i32, i32
  }
}

</mosaic_0001>

<llo_original>
// kernel: tpu_custom_call.1
$region0: #{tpu_custom_call.1}
  #allocation0 [shape = 'u32[]', space=smem, size = 0x4, offset = 0x4, fixed_abs, tag = 'smem constant byte address 0x4 - core index']
  #allocation1 [shape = 'u32[144,128]{1,0:T(1,128)}', space=vmem, size = 0x12000, scoped, tag = 'internal scratch']
  %s0 = inlined_call_operand.vmem [shape: f32[2,4,64,8], index: 0, kind: input, shape index: {}]
  %s1 = inlined_call_operand.vmem [shape: bf16[4,8,8], index: 1, kind: input, shape index: {}]
  %s2 = inlined_call_operand.vmem [shape: bf16[4,8,8], index: 2, kind: input, shape index: {}]
  %s3 = inlined_call_operand.vmem [shape: bf16[4,8,8], index: 3, kind: input, shape index: {}]
  %s4 = inlined_call_operand.vmem [shape: f32[4,1,8], index: 4, kind: input, shape index: {}]
  %s5 = inlined_call_operand.vmem [shape: f32[4,1,8], index: 5, kind: input, shape index: {}]
  %s6 = inlined_call_operand.vmem [shape: f32[4,1,8], index: 6, kind: input, shape index: {}]
  %s7 = inlined_call_operand.vmem [shape: f32[4,25,64,8], index: 7, kind: input, shape index: {}]
  %s8 = inlined_call_operand.vmem [shape: f32[4,1,8], index: 8, kind: input, shape index: {}]
  %s9 = inlined_call_operand.vmem [shape: f32[4,64,64], index: 9, kind: input, shape index: {}]
  %s10 = inlined_call_operand.vmem [shape: bf16[4,8,32], index: 10, kind: input, shape index: {}]
  %s11 = inlined_call_operand.vmem [shape: f32[1,32], index: 11, kind: input, shape index: {}]
  %s12 = inlined_call_operand.vmem [shape: f32[2,64,32], index: 12, kind: output, shape index: {}]
  %s13 = sld [smem:[#allocation0]]
  $region58: #{tpu_custom_call.1} parent=0
    _
  %s15 = ssub.s32 1, %s13
  %s16 = scalar_select 0, %s15, %s13
  // Predicated region
  $region2: #{tpu_custom_call.1} parent=0 // pred_check
    _
  $region3: #{tpu_custom_call.1} parent=0 // pred_check_branch
    %18 = sbr.rel (0) target = $region5
  $region4: #{tpu_custom_call.1} parent=0 // pred_region
    _
  $region5: #{tpu_custom_call.1} parent=0 // pred_fallthru
    _
  // Predicated region
  $region6: #{tpu_custom_call.1} parent=0 // pred_check
    _
  $region7: #{tpu_custom_call.1} parent=0 // pred_check_branch
    %20 = sbr.rel (0) target = $region9
  $region8: #{tpu_custom_call.1} parent=0 // pred_region
    _
  $region9: #{tpu_custom_call.1} parent=0 // pred_fallthru
    _
  // Predicated region
  $region10: #{tpu_custom_call.1} parent=0 // pred_check
    _
  $region11: #{tpu_custom_call.1} parent=0 // pred_check_branch
    %22 = sbr.rel (0) target = $region13
  $region12: #{tpu_custom_call.1} parent=0 // pred_region
    _
  $region13: #{tpu_custom_call.1} parent=0 // pred_fallthru
    _
  // Predicated region
  $region14: #{tpu_custom_call.1} parent=0 // pred_check
    _
  $region15: #{tpu_custom_call.1} parent=0 // pred_check_branch
    %24 = sbr.rel (0) target = $region17
  $region16: #{tpu_custom_call.1} parent=0 // pred_region
    _
  $region17: #{tpu_custom_call.1} parent=0 // pred_fallthru
    _
  // Predicated region
  $region18: #{tpu_custom_call.1} parent=0 // pred_check
    _
  $region19: #{tpu_custom_call.1} parent=0 // pred_check_branch
    %26 = sbr.rel (0) target = $region21
  $region20: #{tpu_custom_call.1} parent=0 // pred_region
    _
  $region21: #{tpu_custom_call.1} parent=0 // pred_fallthru
    _
  // Predicated region
  $region22: #{tpu_custom_call.1} parent=0 // pred_check
    _
  $region23: #{tpu_custom_call.1} parent=0 // pred_check_branch
    %28 = sbr.rel (0) target = $region25
  $region24: #{tpu_custom_call.1} parent=0 // pred_region
    _
  $region25: #{tpu_custom_call.1} parent=0 // pred_fallthru
    _
  // Predicated region
  $region26: #{tpu_custom_call.1} parent=0 // pred_check
    _
  $region27: #{tpu_custom_call.1} parent=0 // pred_check_branch
    %30 = sbr.rel (0) target = $region29
  $region28: #{tpu_custom_call.1} parent=0 // pred_region
    _
  $region29: #{tpu_custom_call.1} parent=0 // pred_fallthru
    _
  // Predicated region
  $region30: #{tpu_custom_call.1} parent=0 // pred_check
    _
  $region31: #{tpu_custom_call.1} parent=0 // pred_check_branch
    %32 = sbr.rel (0) target = $region33
  $region32: #{tpu_custom_call.1} parent=0 // pred_region
    _
  $region33: #{tpu_custom_call.1} parent=0 // pred_fallthru
    _
  // Predicated region
  $region34: #{tpu_custom_call.1} parent=0 // pred_check
    _
  $region35: #{tpu_custom_call.1} parent=0 // pred_check_branch
    %34 = sbr.rel (0) target = $region37
  $region36: #{tpu_custom_call.1} parent=0 // pred_region
    _
  $region37: #{tpu_custom_call.1} parent=0 // pred_fallthru
    _
  // Predicated region
  $region38: #{tpu_custom_call.1} parent=0 // pred_check
    _
  $region39: #{tpu_custom_call.1} parent=0 // pred_check_branch
    %36 = sbr.rel (0) target = $region41
  $region40: #{tpu_custom_call.1} parent=0 // pred_region
    _
  $region41: #{tpu_custom_call.1} parent=0 // pred_fallthru
    _
  // Predicated region
  $region42: #{tpu_custom_call.1} parent=0 // pred_check
    _
  $region43: #{tpu_custom_call.1} parent=0 // pred_check_branch
    %38 = sbr.rel (0) target = $region45
  $region44: #{tpu_custom_call.1} parent=0 // pred_region
    _
  $region45: #{tpu_custom_call.1} parent=0 // pred_fallthru
    _
  // Predicated region
  $region46: #{tpu_custom_call.1} parent=0 // pred_check
    _
  $region47: #{tpu_custom_call.1} parent=0 // pred_check_branch
    %40 = sbr.rel (0) target = $region49
  $region48: #{tpu_custom_call.1} parent=0 // pred_region
    _
  $region49: #{tpu_custom_call.1} parent=0 // pred_fallthru
    _
  %v42 = vld [vmem:[%s0] sm:$0xff]
  %v43 = vld [vmem:[%s0 + $0x8] sm:$0xff]
  %v44 = vld [vmem:[%s0 + $0x10] sm:$0xff]
  %v45 = vld [vmem:[%s0 + $0x18] sm:$0xff]
  %v46 = vld [vmem:[%s0 + $0x20] sm:$0xff]
  %v47 = vld [vmem:[%s0 + $0x28] sm:$0xff]
  %v48 = vld [vmem:[%s0 + $0x30] sm:$0xff]
  %v49 = vld [vmem:[%s0 + $0x38] sm:$0xff]
  %v50 = vld [vmem:[%s0 + $0x100] sm:$0xff]
  %v51 = vld [vmem:[%s0 + $0x108] sm:$0xff]
  %v52 = vld [vmem:[%s0 + $0x110] sm:$0xff]
  %v53 = vld [vmem:[%s0 + $0x118] sm:$0xff]
  %v54 = vld [vmem:[%s0 + $0x120] sm:$0xff]
  %v55 = vld [vmem:[%s0 + $0x128] sm:$0xff]
  %v56 = vld [vmem:[%s0 + $0x130] sm:$0xff]
  %v57 = vld [vmem:[%s0 + $0x138] sm:$0xff]
  %v58 = vpack.c.bf16 %v43, %v42
  %v59 = vpack.c.bf16 %v45, %v44
  %v60 = vpack.c.bf16 %v47, %v46
  %v61 = vpack.c.bf16 %v49, %v48
  %v62 = vpack.c.bf16 %v51, %v50
  %v63 = vpack.c.bf16 %v53, %v52
  %v64 = vpack.c.bf16 %v55, %v54
  %v65 = vpack.c.bf16 %v57, %v56
  %v66 = vld [vmem:[%s1] sm:$0xf]
  %v67 = vld [vmem:[%s4] sm:$0x1]
  %v69 = vlaneseq
  %v70 = vshrl.u32 %v69, 7
  %v71 = vsub.s32 0, %v70
  %v72 = vrot.slane %v67, %v71
  %vm74 = vcmask 64512
  %v76 = vsel %vm74, %v58, 0
  %v79 = vsel %vm74, %v59, 0
  %v82 = vsel %vm74, %v60, 0
  %v85 = vsel %vm74, %v61, 0
  %v88 = vsel %vm74, %v62, 0
  %v91 = vsel %vm74, %v63, 0
  %v94 = vsel %vm74, %v64, 0
  %v97 = vsel %vm74, %v65, 0
  %vm99 = vcmask 1043456
  %v101 = vsel %vm99, %v66, 0
  %103 = vmatprep.subr.bf16.mxu0 0
  %104 = vmatpush1.bf16.msra.mxu0 %v101
  %105 = vmatprep.subr.bf16.mxu0 0
  %106 = vmatpush1.bf16.msra.mxu0 0
  %107 = vmatprep.subr.bf16.mxu0 0
  %108 = vmatpush1.bf16.msra.mxu0 0
  %109 = vmatprep.subr.bf16.mxu0 0
  %110 = vmatpush1.bf16.msra.mxu0 0
  %111 = vmatprep.subr.bf16.mxu0 0
  %112 = vmatpush1.bf16.msra.mxu0 0
  %113 = vmatprep.subr.bf16.mxu0 0
  %114 = vmatpush1.bf16.msra.mxu0 0
  %115 = vmatprep.subr.bf16.mxu0 0
  %116 = vmatpush1.bf16.msra.mxu0 0
  %117 = vmatprep.subr.bf16.mxu0 0
  %118 = vmatpush1.bf16.msra.mxu0 0
  %119 = vmatprep.subr.bf16.mxu0 0
  %120 = vmatpush1.bf16.msra.mxu0 0
  %121 = vmatprep.subr.bf16.mxu0 0
  %122 = vmatpush1.bf16.msra.mxu0 0
  %123 = vmatprep.subr.bf16.mxu0 0
  %124 = vmatpush1.bf16.msra.mxu0 0
  %125 = vmatprep.subr.bf16.mxu0 0
  %126 = vmatpush1.bf16.msra.mxu0 0
  %127 = vmatprep.subr.bf16.mxu0 0
  %128 = vmatpush1.bf16.msra.mxu0 0
  %129 = vmatprep.subr.bf16.mxu0 0
  %130 = vmatpush1.bf16.msra.mxu0 0
  %131 = vmatprep.subr.bf16.mxu0 0
  %132 = vmatpush1.bf16.msra.mxu0 0
  %133 = vmatprep.subr.bf16.mxu0 0
  %134 = vmatpush1.bf16.msra.mxu0 0
  %135 = vmatprep.mubr.bf16.mxu0 0
  %136 = vmatmul.mubr.bf16.gmra.mrb[0].mxu0 %v76
  %v137 = vpop.f32.mrb[0].mxu0
  %v138 = vadd.f32 %v72, %v137
  %v139 = vpop.f32.mrb[0].mxu0
  %v140 = vpop.f32.mrb[0].mxu0
  %v141 = vadd.f32 %v72, %v140
  %v142 = vpop.f32.mrb[0].mxu0
  %143 = vmatprep.mubr.bf16.mxu0 0
  %144 = vmatmul.mubr.bf16.gmra.mrb[0].mxu0 %v79
  %v145 = vpop.f32.mrb[0].mxu0
  %v146 = vadd.f32 %v72, %v145
  %v147 = vpop.f32.mrb[0].mxu0
  %v148 = vpop.f32.mrb[0].mxu0
  %v149 = vadd.f32 %v72, %v148
  %v150 = vpop.f32.mrb[0].mxu0
  %151 = vmatprep.mubr.bf16.mxu0 0
  %152 = vmatmul.mubr.bf16.gmra.mrb[0].mxu0 %v82
  %v153 = vpop.f32.mrb[0].mxu0
  %v154 = vadd.f32 %v72, %v153
  %v155 = vpop.f32.mrb[0].mxu0
  %v156 = vpop.f32.mrb[0].mxu0
  %v157 = vadd.f32 %v72, %v156
  %v158 = vpop.f32.mrb[0].mxu0
  %159 = vmatprep.mubr.bf16.mxu0 0
  %160 = vmatmul.mubr.bf16.gmra.mrb[0].mxu0 %v85
  %v161 = vpop.f32.mrb[0].mxu0
  %v162 = vadd.f32 %v72, %v161
  %v163 = vpop.f32.mrb[0].mxu0
  %v164 = vpop.f32.mrb[0].mxu0
  %v165 = vadd.f32 %v72, %v164
  %v166 = vpop.f32.mrb[0].mxu0
  %167 = vmatprep.mubr.bf16.mxu0 0
  %168 = vmatmul.mubr.bf16.gmra.mrb[0].mxu0 %v88
  %v169 = vpop.f32.mrb[0].mxu0
  %v170 = vadd.f32 %v72, %v169
  %v171 = vpop.f32.mrb[0].mxu0
  %v172 = vpop.f32.mrb[0].mxu0
  %v173 = vadd.f32 %v72, %v172
  %v174 = vpop.f32.mrb[0].mxu0
  %175 = vmatprep.mubr.bf16.mxu0 0
  %176 = vmatmul.mubr.bf16.gmra.mrb[0].mxu0 %v91
  %v177 = vpop.f32.mrb[0].mxu0
  %v178 = vadd.f32 %v72, %v177
  %v179 = vpop.f32.mrb[0].mxu0
  %v180 = vpop.f32.mrb[0].mxu0
  %v181 = vadd.f32 %v72, %v180
  %v182 = vpop.f32.mrb[0].mxu0
  %183 = vmatprep.mubr.bf16.mxu0 0
  %184 = vmatmul.mubr.bf16.gmra.mrb[0].mxu0 %v94
  %v185 = vpop.f32.mrb[0].mxu0
  %v186 = vadd.f32 %v72, %v185
  %v187 = vpop.f32.mrb[0].mxu0
  %v188 = vpop.f32.mrb[0].mxu0
  %v189 = vadd.f32 %v72, %v188
  %v190 = vpop.f32.mrb[0].mxu0
  %191 = vmatprep.mubr.bf16.mxu0 0
  %192 = vmatmul.mubr.bf16.gmra.mrb[0].mxu0 %v97
  %v193 = vpop.f32.mrb[0].mxu0
  %v194 = vadd.f32 %v72, %v193
  %v195 = vpop.f32.mrb[0].mxu0
  %v196 = vpop.f32.mrb[0].mxu0
  %v197 = vadd.f32 %v72, %v196
  %v198 = vpop.f32.mrb[0].mxu0
  %199 = vdwg.mxu0
  %v200 = vld [vmem:[%s2] sm:$0xf]
  %v201 = vld [vmem:[%s5] sm:$0x1]
  %v203 = vlaneseq
  %v204 = vshrl.u32 %v203, 7
  %v205 = vsub.s32 0, %v204
  %v206 = vrot.slane %v201, %v205
  %v209 = vsel %vm99, %v200, 0
  %211 = vmatprep.subr.bf16.mxu0 0
  %212 = vmatpush1.bf16.msra.mxu0 %v209
  %213 = vmatprep.subr.bf16.mxu0 0
  %214 = vmatpush1.bf16.msra.mxu0 0
  %215 = vmatprep.subr.bf16.mxu0 0
  %216 = vmatpush1.bf16.msra.mxu0 0
  %217 = vmatprep.subr.bf16.mxu0 0
  %218 = vmatpush1.bf16.msra.mxu0 0
  %219 = vmatprep.subr.bf16.mxu0 0
  %220 = vmatpush1.bf16.msra.mxu0 0
  %221 = vmatprep.subr.bf16.mxu0 0
  %222 = vmatpush1.bf16.msra.mxu0 0
  %223 = vmatprep.subr.bf16.mxu0 0
  %224 = vmatpush1.bf16.msra.mxu0 0
  %225 = vmatprep.subr.bf16.mxu0 0
  %226 = vmatpush1.bf16.msra.mxu0 0
  %227 = vmatprep.subr.bf16.mxu0 0
  %228 = vmatpush1.bf16.msra.mxu0 0
  %229 = vmatprep.subr.bf16.mxu0 0
  %230 = vmatpush1.bf16.msra.mxu0 0
  %231 = vmatprep.subr.bf16.mxu0 0
  %232 = vmatpush1.bf16.msra.mxu0 0
  %233 = vmatprep.subr.bf16.mxu0 0
  %234 = vmatpush1.bf16.msra.mxu0 0
  %235 = vmatprep.subr.bf16.mxu0 0
  %236 = vmatpush1.bf16.msra.mxu0 0
  %237 = vmatprep.subr.bf16.mxu0 0
  %238 = vmatpush1.bf16.msra.mxu0 0
  %239 = vmatprep.subr.bf16.mxu0 0
  %240 = vmatpush1.bf16.msra.mxu0 0
  %241 = vmatprep.subr.bf16.mxu0 0
  %242 = vmatpush1.bf16.msra.mxu0 0
  %243 = vmatprep.mubr.bf16.mxu0 0
  %244 = vmatmul.mubr.bf16.gmra.mrb[0].mxu0 %v76
  %v245 = vpop.f32.mrb[0].mxu0
  %v246 = vadd.f32 %v206, %v245
  %v247 = vpop.f32.mrb[0].mxu0
  %v248 = vpop.f32.mrb[0].mxu0
  %v249 = vadd.f32 %v206, %v248
  %v250 = vpop.f32.mrb[0].mxu0
  %251 = vmatprep.mubr.bf16.mxu0 0
  %252 = vmatmul.mubr.bf16.gmra.mrb[0].mxu0 %v79
  %v253 = vpop.f32.mrb[0].mxu0
  %v254 = vadd.f32 %v206, %v253
  %v255 = vpop.f32.mrb[0].mxu0
  %v256 = vpop.f32.mrb[0].mxu0
  %v257 = vadd.f32 %v206, %v256
  %v258 = vpop.f32.mrb[0].mxu0
  %259 = vmatprep.mubr.bf16.mxu0 0
  %260 = vmatmul.mubr.bf16.gmra.mrb[0].mxu0 %v82
  %v261 = vpop.f32.mrb[0].mxu0
  %v262 = vadd.f32 %v206, %v261
  %v263 = vpop.f32.mrb[0].mxu0
  %v264 = vpop.f32.mrb[0].mxu0
  %v265 = vadd.f32 %v206, %v264
  %v266 = vpop.f32.mrb[0].mxu0
  %267 = vmatprep.mubr.bf16.mxu0 0
  %268 = vmatmul.mubr.bf16.gmra.mrb[0].mxu0 %v85
  %v269 = vpop.f32.mrb[0].mxu0
  %v270 = vadd.f32 %v206, %v269
  %v271 = vpop.f32.mrb[0].mxu0
  %v272 = vpop.f32.mrb[0].mxu0
  %v273 = vadd.f32 %v206, %v272
  %v274 = vpop.f32.mrb[0].mxu0
  %275 = vmatprep.mubr.bf16.mxu0 0
  %276 = vmatmul.mubr.bf16.gmra.mrb[0].mxu0 %v88
  %v277 = vpop.f32.mrb[0].mxu0
  %v278 = vadd.f32 %v206, %v277
  %v279 = vpop.f32.mrb[0].mxu0
  %v280 = vpop.f32.mrb[0].mxu0
  %v281 = vadd.f32 %v206, %v280
  %v282 = vpop.f32.mrb[0].mxu0
  %283 = vmatprep.mubr.bf16.mxu0 0
  %284 = vmatmul.mubr.bf16.gmra.mrb[0].mxu0 %v91
  %v285 = vpop.f32.mrb[0].mxu0
  %v286 = vadd.f32 %v206, %v285
  %v287 = vpop.f32.mrb[0].mxu0
  %v288 = vpop.f32.mrb[0].mxu0
  %v289 = vadd.f32 %v206, %v288
  %v290 = vpop.f32.mrb[0].mxu0
  %291 = vmatprep.mubr.bf16.mxu0 0
  %292 = vmatmul.mubr.bf16.gmra.mrb[0].mxu0 %v94
  %v293 = vpop.f32.mrb[0].mxu0
  %v294 = vadd.f32 %v206, %v293
  %v295 = vpop.f32.mrb[0].mxu0
  %v296 = vpop.f32.mrb[0].mxu0
  %v297 = vadd.f32 %v206, %v296
  %v298 = vpop.f32.mrb[0].mxu0
  %299 = vmatprep.mubr.bf16.mxu0 0
  %300 = vmatmul.mubr.bf16.gmra.mrb[0].mxu0 %v97
  %v301 = vpop.f32.mrb[0].mxu0
  %v302 = vadd.f32 %v206, %v301
  %v303 = vpop.f32.mrb[0].mxu0
  %v304 = vpop.f32.mrb[0].mxu0
  %v305 = vadd.f32 %v206, %v304
  %v306 = vpop.f32.mrb[0].mxu0
  %307 = vdwg.mxu0
  %v308 = vld [vmem:[%s3] sm:$0xf]
  %v309 = vld [vmem:[%s6] sm:$0x1]
  %v311 = vlaneseq
  %v312 = vshrl.u32 %v311, 7
  %v313 = vsub.s32 0, %v312
  %v314 = vrot.slane %v309, %v313
  %v317 = vsel %vm99, %v308, 0
  %319 = vmatprep.subr.bf16.mxu0 0
  %320 = vmatpush1.bf16.msra.mxu0 %v317
  %321 = vmatprep.subr.bf16.mxu0 0
  %322 = vmatpush1.bf16.msra.mxu0 0
  %323 = vmatprep.subr.bf16.mxu0 0
  %324 = vmatpush1.bf16.msra.mxu0 0
  %325 = vmatprep.subr.bf16.mxu0 0
  %326 = vmatpush1.bf16.msra.mxu0 0
  %327 = vmatprep.subr.bf16.mxu0 0
  %328 = vmatpush1.bf16.msra.mxu0 0
  %329 = vmatprep.subr.bf16.mxu0 0
  %330 = vmatpush1.bf16.msra.mxu0 0
  %331 = vmatprep.subr.bf16.mxu0 0
  %332 = vmatpush1.bf16.msra.mxu0 0
  %333 = vmatprep.subr.bf16.mxu0 0
  %334 = vmatpush1.bf16.msra.mxu0 0
  %335 = vmatprep.subr.bf16.mxu0 0
  %336 = vmatpush1.bf16.msra.mxu0 0
  %337 = vmatprep.subr.bf16.mxu0 0
  %338 = vmatpush1.bf16.msra.mxu0 0
  %339 = vmatprep.subr.bf16.mxu0 0
  %340 = vmatpush1.bf16.msra.mxu0 0
  %341 = vmatprep.subr.bf16.mxu0 0
  %342 = vmatpush1.bf16.msra.mxu0 0
  %343 = vmatprep.subr.bf16.mxu0 0
  %344 = vmatpush1.bf16.msra.mxu0 0
  %345 = vmatprep.subr.bf16.mxu0 0
  %346 = vmatpush1.bf16.msra.mxu0 0
  %347 = vmatprep.subr.bf16.mxu0 0
  %348 = vmatpush1.bf16.msra.mxu0 0
  %349 = vmatprep.subr.bf16.mxu0 0
  %350 = vmatpush1.bf16.msra.mxu0 0
  %351 = vmatprep.mubr.bf16.mxu0 0
  %352 = vmatmul.mubr.bf16.gmra.mrb[0].mxu0 %v76
  %v353 = vpop.f32.mrb[0].mxu0
  %v354 = vadd.f32 %v314, %v353
  %v355 = vpop.f32.mrb[0].mxu0
  %v356 = vpop.f32.mrb[0].mxu0
  %v357 = vadd.f32 %v314, %v356
  %v358 = vpop.f32.mrb[0].mxu0
  %359 = vmatprep.mubr.bf16.mxu0 0
  %360 = vmatmul.mubr.bf16.gmra.mrb[0].mxu0 %v79
  %v361 = vpop.f32.mrb[0].mxu0
  %v362 = vadd.f32 %v314, %v361
  %v363 = vpop.f32.mrb[0].mxu0
  %v364 = vpop.f32.mrb[0].mxu0
  %v365 = vadd.f32 %v314, %v364
  %v366 = vpop.f32.mrb[0].mxu0
  %367 = vmatprep.mubr.bf16.mxu0 0
  %368 = vmatmul.mubr.bf16.gmra.mrb[0].mxu0 %v82
  %v369 = vpop.f32.mrb[0].mxu0
  %v370 = vadd.f32 %v314, %v369
  %v371 = vpop.f32.mrb[0].mxu0
  %v372 = vpop.f32.mrb[0].mxu0
  %v373 = vadd.f32 %v314, %v372
  %v374 = vpop.f32.mrb[0].mxu0
  %375 = vmatprep.mubr.bf16.mxu0 0
  %376 = vmatmul.mubr.bf16.gmra.mrb[0].mxu0 %v85
  %v377 = vpop.f32.mrb[0].mxu0
  %v378 = vadd.f32 %v314, %v377
  %v379 = vpop.f32.mrb[0].mxu0
  %v380 = vpop.f32.mrb[0].mxu0
  %v381 = vadd.f32 %v314, %v380
  %v382 = vpop.f32.mrb[0].mxu0
  %383 = vmatprep.mubr.bf16.mxu0 0
  %384 = vmatmul.mubr.bf16.gmra.mrb[0].mxu0 %v88
  %v385 = vpop.f32.mrb[0].mxu0
  %v386 = vadd.f32 %v314, %v385
  %v387 = vpop.f32.mrb[0].mxu0
  %v388 = vpop.f32.mrb[0].mxu0
  %v389 = vadd.f32 %v314, %v388
  %v390 = vpop.f32.mrb[0].mxu0
  %391 = vmatprep.mubr.bf16.mxu0 0
  %392 = vmatmul.mubr.bf16.gmra.mrb[0].mxu0 %v91
  %v393 = vpop.f32.mrb[0].mxu0
  %v394 = vadd.f32 %v314, %v393
  %v395 = vpop.f32.mrb[0].mxu0
  %v396 = vpop.f32.mrb[0].mxu0
  %v397 = vadd.f32 %v314, %v396
  %v398 = vpop.f32.mrb[0].mxu0
  %399 = vmatprep.mubr.bf16.mxu0 0
  %400 = vmatmul.mubr.bf16.gmra.mrb[0].mxu0 %v94
  %v401 = vpop.f32.mrb[0].mxu0
  %v402 = vadd.f32 %v314, %v401
  %v403 = vpop.f32.mrb[0].mxu0
  %v404 = vpop.f32.mrb[0].mxu0
  %v405 = vadd.f32 %v314, %v404
  %v406 = vpop.f32.mrb[0].mxu0
  %407 = vmatprep.mubr.bf16.mxu0 0
  %408 = vmatmul.mubr.bf16.gmra.mrb[0].mxu0 %v97
  %v409 = vpop.f32.mrb[0].mxu0
  %v410 = vadd.f32 %v314, %v409
  %v411 = vpop.f32.mrb[0].mxu0
  %v412 = vpop.f32.mrb[0].mxu0
  %v413 = vadd.f32 %v314, %v412
  %v414 = vpop.f32.mrb[0].mxu0
  %415 = vdwg.mxu0
  %v416 = vrot.slane %v138, 6
  %v417 = vrot.slane %v141, 6
  %v418 = vrot.slane %v146, 6
  %v419 = vrot.slane %v149, 6
  %v420 = vrot.slane %v154, 6
  %v421 = vrot.slane %v157, 6
  %v422 = vrot.slane %v162, 6
  %v423 = vrot.slane %v165, 6
  %v424 = vrot.slane %v170, 6
  %v425 = vrot.slane %v173, 6
  %v426 = vrot.slane %v178, 6
  %v427 = vrot.slane %v181, 6
  %v428 = vrot.slane %v186, 6
  %v429 = vrot.slane %v189, 6
  %v430 = vrot.slane %v194, 6
  %v431 = vrot.slane %v197, 6
  %v432 = vlaneseq
  %v433 = vshrl.u32 %v432, 7
  %vm434 = vcmp.lt.s32.totalorder %v433, 2
  %v435 = vsel %vm434, %v430, %v431
  %v436 = vsel %vm434, %v429, %v430
  %v437 = vsel %vm434, %v428, %v429
  %v438 = vsel %vm434, %v427, %v428
  %v439 = vsel %vm434, %v426, %v427
  %v440 = vsel %vm434, %v425, %v426
  %v441 = vsel %vm434, %v424, %v425
  %v442 = vsel %vm434, %v423, %v424
  %v443 = vsel %vm434, %v422, %v423
  %v444 = vsel %vm434, %v421, %v422
  %v445 = vsel %vm434, %v420, %v421
  %v446 = vsel %vm434, %v419, %v420
  %v447 = vsel %vm434, %v418, %v419
  %v448 = vsel %vm434, %v417, %v418
  %v449 = vsel %vm434, %v416, %v417
  %v450 = vsel %vm434, %v431, %v416
  %v451 = vld [vmem:[%s7] sm:$0xff]
  %v452 = vld [vmem:[%s7 + $0x8] sm:$0xff]
  %v453 = vld [vmem:[%s7 + $0x10] sm:$0xff]
  %v454 = vld [vmem:[%s7 + $0x18] sm:$0xff]
  %v455 = vld [vmem:[%s7 + $0x20] sm:$0xff]
  %v456 = vld [vmem:[%s7 + $0x28] sm:$0xff]
  %v457 = vld [vmem:[%s7 + $0x30] sm:$0xff]
  %v458 = vld [vmem:[%s7 + $0x38] sm:$0xff]
  %v459 = vmul.f32 %v436, %v451
  %v460 = vmul.f32 %v435, %v452
  %v461 = vmul.f32 %v450, %v453
  %v462 = vmul.f32 %v449, %v454
  %v463 = vmul.f32 %v448, %v455
  %v464 = vmul.f32 %v447, %v456
  %v465 = vmul.f32 %v446, %v457
  %v466 = vmul.f32 %v445, %v458
  %v467 = vmul.f32 %v444, %v451
  %v468 = vmul.f32 %v443, %v452
  %v469 = vmul.f32 %v442, %v453
  %v470 = vmul.f32 %v441, %v454
  %v471 = vmul.f32 %v440, %v455
  %v472 = vmul.f32 %v439, %v456
  %v473 = vmul.f32 %v438, %v457
  %v474 = vmul.f32 %v437, %v458
  %v475 = vadd.f32 %v459, 0.0
  %v476 = vadd.f32 %v460, 0.0
  %v477 = vadd.f32 %v461, 0.0
  %v478 = vadd.f32 %v462, 0.0
  %v479 = vadd.f32 %v463, 0.0
  %v480 = vadd.f32 %v464, 0.0
  %v481 = vadd.f32 %v465, 0.0
  %v482 = vadd.f32 %v466, 0.0
  %v483 = vadd.f32 %v467, 0.0
  %v484 = vadd.f32 %v468, 0.0
  %v485 = vadd.f32 %v469, 0.0
  %v486 = vadd.f32 %v470, 0.0
  %v487 = vadd.f32 %v471, 0.0
  %v488 = vadd.f32 %v472, 0.0
  %v489 = vadd.f32 %v473, 0.0
  %v490 = vadd.f32 %v474, 0.0
  %v491 = vrot.slane %v138, 7
  %v492 = vrot.slane %v141, 7
  %v493 = vrot.slane %v146, 7
  %v494 = vrot.slane %v149, 7
  %v495 = vrot.slane %v154, 7
  %v496 = vrot.slane %v157, 7
  %v497 = vrot.slane %v162, 7
  %v498 = vrot.slane %v165, 7
  %v499 = vrot.slane %v170, 7
  %v500 = vrot.slane %v173, 7
  %v501 = vrot.slane %v178, 7
  %v502 = vrot.slane %v181, 7
  %v503 = vrot.slane %v186, 7
  %v504 = vrot.slane %v189, 7
  %v505 = vrot.slane %v194, 7
  %v506 = vrot.slane %v197, 7
  %vm507 = vcmp.lt.s32.totalorder %v433, 1
  %v508 = vsel %vm507, %v505, %v506
  %v509 = vsel %vm507, %v504, %v505
  %v510 = vsel %vm507, %v503, %v504
  %v511 = vsel %vm507, %v502, %v503
  %v512 = vsel %vm507, %v501, %v502
  %v513 = vsel %vm507, %v500, %v501
  %v514 = vsel %vm507, %v499, %v500
  %v515 = vsel %vm507, %v498, %v499
  %v516 = vsel %vm507, %v497, %v498
  %v517 = vsel %vm507, %v496, %v497
  %v518 = vsel %vm507, %v495, %v496
  %v519 = vsel %vm507, %v494, %v495
  %v520 = vsel %vm507, %v493, %v494
  %v521 = vsel %vm507, %v492, %v493
  %v522 = vsel %vm507, %v491, %v492
  %v523 = vsel %vm507, %v506, %v491
  %s524 = scalar_lea.vmem %s7, 64
  %v525 = vld [vmem:[%s524] sm:$0xff]
  %v526 = vld [vmem:[%s524 + $0x8] sm:$0xff]
  %v527 = vld [vmem:[%s524 + $0x10] sm:$0xff]
  %v528 = vld [vmem:[%s524 + $0x18] sm:$0xff]
  %v529 = vld [vmem:[%s524 + $0x20] sm:$0xff]
  %v530 = vld [vmem:[%s524 + $0x28] sm:$0xff]
  %v531 = vld [vmem:[%s524 + $0x30] sm:$0xff]
  %v532 = vld [vmem:[%s524 + $0x38] sm:$0xff]
  %v533 = vmul.f32 %v509, %v525
  %v534 = vmul.f32 %v508, %v526
  %v535 = vmul.f32 %v523, %v527
  %v536 = vmul.f32 %v522, %v528
  %v537 = vmul.f32 %v521, %v529
  %v538 = vmul.f32 %v520, %v530
  %v539 = vmul.f32 %v519, %v531
  %v540 = vmul.f32 %v518, %v532
  %v541 = vmul.f32 %v517, %v525
  %v542 = vmul.f32 %v516, %v526
  %v543 = vmul.f32 %v515, %v527
  %v544 = vmul.f32 %v514, %v528
  %v545 = vmul.f32 %v513, %v529
  %v546 = vmul.f32 %v512, %v530
  %v547 = vmul.f32 %v511, %v531
  %v548 = vmul.f32 %v510, %v532
  %v549 = vadd.f32 %v475, %v533
  %v550 = vadd.f32 %v476, %v534
  %v551 = vadd.f32 %v477, %v535
  %v552 = vadd.f32 %v478, %v536
  %v553 = vadd.f32 %v479, %v537
  %v554 = vadd.f32 %v480, %v538
  %v555 = vadd.f32 %v481, %v539
  %v556 = vadd.f32 %v482, %v540
  %v557 = vadd.f32 %v483, %v541
  %v558 = vadd.f32 %v484, %v542
  %v559 = vadd.f32 %v485, %v543
  %v560 = vadd.f32 %v486, %v544
  %v561 = vadd.f32 %v487, %v545
  %v562 = vadd.f32 %v488, %v546
  %v563 = vadd.f32 %v489, %v547
  %v564 = vadd.f32 %v490, %v548
  %s565 = scalar_lea.vmem %s7, 128
  %v566 = vld [vmem:[%s565] sm:$0xff]
  %v567 = vld [vmem:[%s565 + $0x8] sm:$0xff]
  %v568 = vld [vmem:[%s565 + $0x10] sm:$0xff]
  %v569 = vld [vmem:[%s565 + $0x18] sm:$0xff]
  %v570 = vld [vmem:[%s565 + $0x20] sm:$0xff]
  %v571 = vld [vmem:[%s565 + $0x28] sm:$0xff]
  %v572 = vld [vmem:[%s565 + $0x30] sm:$0xff]
  %v573 = vld [vmem:[%s565 + $0x38] sm:$0xff]
  %v574 = vmul.f32 %v194, %v566
  %v575 = vmul.f32 %v197, %v567
  %v576 = vmul.f32 %v138, %v568
  %v577 = vmul.f32 %v141, %v569
  %v578 = vmul.f32 %v146, %v570
  %v579 = vmul.f32 %v149, %v571
  %v580 = vmul.f32 %v154, %v572
  %v581 = vmul.f32 %v157, %v573
  %v582 = vmul.f32 %v162, %v566
  %v583 = vmul.f32 %v165, %v567
  %v584 = vmul.f32 %v170, %v568
  %v585 = vmul.f32 %v173, %v569
  %v586 = vmul.f32 %v178, %v570
  %v587 = vmul.f32 %v181, %v571
  %v588 = vmul.f32 %v186, %v572
  %v589 = vmul.f32 %v189, %v573
  %v590 = vadd.f32 %v549, %v574
  %v591 = vadd.f32 %v550, %v575
  %v592 = vadd.f32 %v551, %v576
  %v593 = vadd.f32 %v552, %v577
  %v594 = vadd.f32 %v553, %v578
  %v595 = vadd.f32 %v554, %v579
  %v596 = vadd.f32 %v555, %v580
  %v597 = vadd.f32 %v556, %v581
  %v598 = vadd.f32 %v557, %v582
  %v599 = vadd.f32 %v558, %v583
  %v600 = vadd.f32 %v559, %v584
  %v601 = vadd.f32 %v560, %v585
  %v602 = vadd.f32 %v561, %v586
  %v603 = vadd.f32 %v562, %v587
  %v604 = vadd.f32 %v563, %v588
  %v605 = vadd.f32 %v564, %v589
  %v606 = vrot.slane %v138, 1
  %v607 = vrot.slane %v141, 1
  %v608 = vrot.slane %v146, 1
  %v609 = vrot.slane %v149, 1
  %v610 = vrot.slane %v154, 1
  %v611 = vrot.slane %v157, 1
  %v612 = vrot.slane %v162, 1
  %v613 = vrot.slane %v165, 1
  %v614 = vrot.slane %v170, 1
  %v615 = vrot.slane %v173, 1
  %v616 = vrot.slane %v178, 1
  %v617 = vrot.slane %v181, 1
  %v618 = vrot.slane %v186, 1
  %v619 = vrot.slane %v189, 1
  %v620 = vrot.slane %v194, 1
  %v621 = vrot.slane %v197, 1
  %vm622 = vcmp.lt.s32.totalorder %v433, 7
  %v623 = vsel %vm622, %v620, %v621
  %v624 = vsel %vm622, %v619, %v620
  %v625 = vsel %vm622, %v618, %v619
  %v626 = vsel %vm622, %v617, %v618
  %v627 = vsel %vm622, %v616, %v617
  %v628 = vsel %vm622, %v615, %v616
  %v629 = vsel %vm622, %v614, %v615
  %v630 = vsel %vm622, %v613, %v614
  %v631 = vsel %vm622, %v612, %v613
  %v632 = vsel %vm622, %v611, %v612
  %v633 = vsel %vm622, %v610, %v611
  %v634 = vsel %vm622, %v609, %v610
  %v635 = vsel %vm622, %v608, %v609
  %v636 = vsel %vm622, %v607, %v608
  %v637 = vsel %vm622, %v606, %v607
  %v638 = vsel %vm622, %v621, %v606
  %s639 = scalar_lea.vmem %s7, 192
  %v640 = vld [vmem:[%s639] sm:$0xff]
  %v641 = vld [vmem:[%s639 + $0x8] sm:$0xff]
  %v642 = vld [vmem:[%s639 + $0x10] sm:$0xff]
  %v643 = vld [vmem:[%s639 + $0x18] sm:$0xff]
  %v644 = vld [vmem:[%s639 + $0x20] sm:$0xff]
  %v645 = vld [vmem:[%s639 + $0x28] sm:$0xff]
  %v646 = vld [vmem:[%s639 + $0x30] sm:$0xff]
  %v647 = vld [vmem:[%s639 + $0x38] sm:$0xff]
  %v648 = vmul.f32 %v623, %v640
  %v649 = vmul.f32 %v638, %v641
  %v650 = vmul.f32 %v637, %v642
  %v651 = vmul.f32 %v636, %v643
  %v652 = vmul.f32 %v635, %v644
  %v653 = vmul.f32 %v634, %v645
  %v654 = vmul.f32 %v633, %v646
  %v655 = vmul.f32 %v632, %v647
  %v656 = vmul.f32 %v631, %v640
  %v657 = vmul.f32 %v630, %v641
  %v658 = vmul.f32 %v629, %v642
  %v659 = vmul.f32 %v628, %v643
  %v660 = vmul.f32 %v627, %v644
  %v661 = vmul.f32 %v626, %v645
  %v662 = vmul.f32 %v625, %v646
  %v663 = vmul.f32 %v624, %v647
  %v664 = vadd.f32 %v590, %v648
  %v665 = vadd.f32 %v591, %v649
  %v666 = vadd.f32 %v592, %v650
  %v667 = vadd.f32 %v593, %v651
  %v668 = vadd.f32 %v594, %v652
  %v669 = vadd.f32 %v595, %v653
  %v670 = vadd.f32 %v596, %v654
  %v671 = vadd.f32 %v597, %v655
  %v672 = vadd.f32 %v598, %v656
  %v673 = vadd.f32 %v599, %v657
  %v674 = vadd.f32 %v600, %v658
  %v675 = vadd.f32 %v601, %v659
  %v676 = vadd.f32 %v602, %v660
  %v677 = vadd.f32 %v603, %v661
  %v678 = vadd.f32 %v604, %v662
  %v679 = vadd.f32 %v605, %v663
  %v680 = vrot.slane %v138, 2
  %v681 = vrot.slane %v141, 2
  %v682 = vrot.slane %v146, 2
  %v683 = vrot.slane %v149, 2
  %v684 = vrot.slane %v154, 2
  %v685 = vrot.slane %v157, 2
  %v686 = vrot.slane %v162, 2
  %v687 = vrot.slane %v165, 2
  %v688 = vrot.slane %v170, 2
  %v689 = vrot.slane %v173, 2
  %v690 = vrot.slane %v178, 2
  %v691 = vrot.slane %v181, 2
  %v692 = vrot.slane %v186, 2
  %v693 = vrot.slane %v189, 2
  %v694 = vrot.slane %v194, 2
  %v695 = vrot.slane %v197, 2
  %vm696 = vcmp.lt.s32.totalorder %v433, 6
  %v697 = vsel %vm696, %v694, %v695
  %v698 = vsel %vm696, %v693, %v694
  %v699 = vsel %vm696, %v692, %v693
  %v700 = vsel %vm696, %v691, %v692
  %v701 = vsel %vm696, %v690, %v691
  %v702 = vsel %vm696, %v689, %v690
  %v703 = vsel %vm696, %v688, %v689
  %v704 = vsel %vm696, %v687, %v688
  %v705 = vsel %vm696, %v686, %v687
  %v706 = vsel %vm696, %v685, %v686
  %v707 = vsel %vm696, %v684, %v685
  %v708 = vsel %vm696, %v683, %v684
  %v709 = vsel %vm696, %v682, %v683
  %v710 = vsel %vm696, %v681, %v682
  %v711 = vsel %vm696, %v680, %v681
  %v712 = vsel %vm696, %v695, %v680
  %s713 = scalar_lea.vmem %s7, 256
  %v714 = vld [vmem:[%s713] sm:$0xff]
  %v715 = vld [vmem:[%s713 + $0x8] sm:$0xff]
  %v716 = vld [vmem:[%s713 + $0x10] sm:$0xff]
  %v717 = vld [vmem:[%s713 + $0x18] sm:$0xff]
  %v718 = vld [vmem:[%s713 + $0x20] sm:$0xff]
  %v719 = vld [vmem:[%s713 + $0x28] sm:$0xff]
  %v720 = vld [vmem:[%s713 + $0x30] sm:$0xff]
  %v721 = vld [vmem:[%s713 + $0x38] sm:$0xff]
  %v722 = vmul.f32 %v697, %v714
  %v723 = vmul.f32 %v712, %v715
  %v724 = vmul.f32 %v711, %v716
  %v725 = vmul.f32 %v710, %v717
  %v726 = vmul.f32 %v709, %v718
  %v727 = vmul.f32 %v708, %v719
  %v728 = vmul.f32 %v707, %v720
  %v729 = vmul.f32 %v706, %v721
  %v730 = vmul.f32 %v705, %v714
  %v731 = vmul.f32 %v704, %v715
  %v732 = vmul.f32 %v703, %v716
  %v733 = vmul.f32 %v702, %v717
  %v734 = vmul.f32 %v701, %v718
  %v735 = vmul.f32 %v700, %v719
  %v736 = vmul.f32 %v699, %v720
  %v737 = vmul.f32 %v698, %v721
  %v738 = vadd.f32 %v664, %v722
  %v739 = vadd.f32 %v665, %v723
  %v740 = vadd.f32 %v666, %v724
  %v741 = vadd.f32 %v667, %v725
  %v742 = vadd.f32 %v668, %v726
  %v743 = vadd.f32 %v669, %v727
  %v744 = vadd.f32 %v670, %v728
  %v745 = vadd.f32 %v671, %v729
  %v746 = vadd.f32 %v672, %v730
  %v747 = vadd.f32 %v673, %v731
  %v748 = vadd.f32 %v674, %v732
  %v749 = vadd.f32 %v675, %v733
  %v750 = vadd.f32 %v676, %v734
  %v751 = vadd.f32 %v677, %v735
  %v752 = vadd.f32 %v678, %v736
  %v753 = vadd.f32 %v679, %v737
  %s754 = scalar_lea.vmem %s7, 320
  %v755 = vld [vmem:[%s754] sm:$0xff]
  %v756 = vld [vmem:[%s754 + $0x8] sm:$0xff]
  %v757 = vld [vmem:[%s754 + $0x10] sm:$0xff]
  %v758 = vld [vmem:[%s754 + $0x18] sm:$0xff]
  %v759 = vld [vmem:[%s754 + $0x20] sm:$0xff]
  %v760 = vld [vmem:[%s754 + $0x28] sm:$0xff]
  %v761 = vld [vmem:[%s754 + $0x30] sm:$0xff]
  %v762 = vld [vmem:[%s754 + $0x38] sm:$0xff]
  %v763 = vmul.f32 %v435, %v755
  %v764 = vmul.f32 %v450, %v756
  %v765 = vmul.f32 %v449, %v757
  %v766 = vmul.f32 %v448, %v758
  %v767 = vmul.f32 %v447, %v759
  %v768 = vmul.f32 %v446, %v760
  %v769 = vmul.f32 %v445, %v761
  %v770 = vmul.f32 %v444, %v762
  %v771 = vmul.f32 %v443, %v755
  %v772 = vmul.f32 %v442, %v756
  %v773 = vmul.f32 %v441, %v757
  %v774 = vmul.f32 %v440, %v758
  %v775 = vmul.f32 %v439, %v759
  %v776 = vmul.f32 %v438, %v760
  %v777 = vmul.f32 %v437, %v761
  %v778 = vmul.f32 %v436, %v762
  %v779 = vadd.f32 %v738, %v763
  %v780 = vadd.f32 %v739, %v764
  %v781 = vadd.f32 %v740, %v765
  %v782 = vadd.f32 %v741, %v766
  %v783 = vadd.f32 %v742, %v767
  %v784 = vadd.f32 %v743, %v768
  %v785 = vadd.f32 %v744, %v769
  %v786 = vadd.f32 %v745, %v770
  %v787 = vadd.f32 %v746, %v771
  %v788 = vadd.f32 %v747, %v772
  %v789 = vadd.f32 %v748, %v773
  %v790 = vadd.f32 %v749, %v774
  %v791 = vadd.f32 %v750, %v775
  %v792 = vadd.f32 %v751, %v776
  %v793 = vadd.f32 %v752, %v777
  %v794 = vadd.f32 %v753, %v778
  %s795 = scalar_lea.vmem %s7, 384
  %v796 = vld [vmem:[%s795] sm:$0xff]
  %v797 = vld [vmem:[%s795 + $0x8] sm:$0xff]
  %v798 = vld [vmem:[%s795 + $0x10] sm:$0xff]
  %v799 = vld [vmem:[%s795 + $0x18] sm:$0xff]
  %v800 = vld [vmem:[%s795 + $0x20] sm:$0xff]
  %v801 = vld [vmem:[%s795 + $0x28] sm:$0xff]
  %v802 = vld [vmem:[%s795 + $0x30] sm:$0xff]
  %v803 = vld [vmem:[%s795 + $0x38] sm:$0xff]
  %v804 = vmul.f32 %v508, %v796
  %v805 = vmul.f32 %v523, %v797
  %v806 = vmul.f32 %v522, %v798
  %v807 = vmul.f32 %v521, %v799
  %v808 = vmul.f32 %v520, %v800
  %v809 = vmul.f32 %v519, %v801
  %v810 = vmul.f32 %v518, %v802
  %v811 = vmul.f32 %v517, %v803
  %v812 = vmul.f32 %v516, %v796
  %v813 = vmul.f32 %v515, %v797
  %v814 = vmul.f32 %v514, %v798
  %v815 = vmul.f32 %v513, %v799
  %v816 = vmul.f32 %v512, %v800
  %v817 = vmul.f32 %v511, %v801
  %v818 = vmul.f32 %v510, %v802
  %v819 = vmul.f32 %v509, %v803
  %v820 = vadd.f32 %v779, %v804
  %v821 = vadd.f32 %v780, %v805
  %v822 = vadd.f32 %v781, %v806
  %v823 = vadd.f32 %v782, %v807
  %v824 = vadd.f32 %v783, %v808
  %v825 = vadd.f32 %v784, %v809
  %v826 = vadd.f32 %v785, %v810
  %v827 = vadd.f32 %v786, %v811
  %v828 = vadd.f32 %v787, %v812
  %v829 = vadd.f32 %v788, %v813
  %v830 = vadd.f32 %v789, %v814
  %v831 = vadd.f32 %v790, %v815
  %v832 = vadd.f32 %v791, %v816
  %v833 = vadd.f32 %v792, %v817
  %v834 = vadd.f32 %v793, %v818
  %v835 = vadd.f32 %v794, %v819
  %s836 = scalar_lea.vmem %s7, 448
  %v837 = vld [vmem:[%s836] sm:$0xff]
  %v838 = vld [vmem:[%s836 + $0x8] sm:$0xff]
  %v839 = vld [vmem:[%s836 + $0x10] sm:$0xff]
  %v840 = vld [vmem:[%s836 + $0x18] sm:$0xff]
  %v841 = vld [vmem:[%s836 + $0x20] sm:$0xff]
  %v842 = vld [vmem:[%s836 + $0x28] sm:$0xff]
  %v843 = vld [vmem:[%s836 + $0x30] sm:$0xff]
  %v844 = vld [vmem:[%s836 + $0x38] sm:$0xff]
  %v845 = vmul.f32 %v197, %v837
  %v846 = vmul.f32 %v138, %v838
  %v847 = vmul.f32 %v141, %v839
  %v848 = vmul.f32 %v146, %v840
  %v849 = vmul.f32 %v149, %v841
  %v850 = vmul.f32 %v154, %v842
  %v851 = vmul.f32 %v157, %v843
  %v852 = vmul.f32 %v162, %v844
  %v853 = vmul.f32 %v165, %v837
  %v854 = vmul.f32 %v170, %v838
  %v855 = vmul.f32 %v173, %v839
  %v856 = vmul.f32 %v178, %v840
  %v857 = vmul.f32 %v181, %v841
  %v858 = vmul.f32 %v186, %v842
  %v859 = vmul.f32 %v189, %v843
  %v860 = vmul.f32 %v194, %v844
  %v861 = vadd.f32 %v820, %v845
  %v862 = vadd.f32 %v821, %v846
  %v863 = vadd.f32 %v822, %v847
  %v864 = vadd.f32 %v823, %v848
  %v865 = vadd.f32 %v824, %v849
  %v866 = vadd.f32 %v825, %v850
  %v867 = vadd.f32 %v826, %v851
  %v868 = vadd.f32 %v827, %v852
  %v869 = vadd.f32 %v828, %v853
  %v870 = vadd.f32 %v829, %v854
  %v871 = vadd.f32 %v830, %v855
  %v872 = vadd.f32 %v831, %v856
  %v873 = vadd.f32 %v832, %v857
  %v874 = vadd.f32 %v833, %v858
  %v875 = vadd.f32 %v834, %v859
  %v876 = vadd.f32 %v835, %v860
  %s877 = scalar_lea.vmem %s7, 512
  %v878 = vld [vmem:[%s877] sm:$0xff]
  %v879 = vld [vmem:[%s877 + $0x8] sm:$0xff]
  %v880 = vld [vmem:[%s877 + $0x10] sm:$0xff]
  %v881 = vld [vmem:[%s877 + $0x18] sm:$0xff]
  %v882 = vld [vmem:[%s877 + $0x20] sm:$0xff]
  %v883 = vld [vmem:[%s877 + $0x28] sm:$0xff]
  %v884 = vld [vmem:[%s877 + $0x30] sm:$0xff]
  %v885 = vld [vmem:[%s877 + $0x38] sm:$0xff]
  %v886 = vmul.f32 %v638, %v878
  %v887 = vmul.f32 %v637, %v879
  %v888 = vmul.f32 %v636, %v880
  %v889 = vmul.f32 %v635, %v881
  %v890 = vmul.f32 %v634, %v882
  %v891 = vmul.f32 %v633, %v883
  %v892 = vmul.f32 %v632, %v884
  %v893 = vmul.f32 %v631, %v885
  %v894 = vmul.f32 %v630, %v878
  %v895 = vmul.f32 %v629, %v879
  %v896 = vmul.f32 %v628, %v880
  %v897 = vmul.f32 %v627, %v881
  %v898 = vmul.f32 %v626, %v882
  %v899 = vmul.f32 %v625, %v883
  %v900 = vmul.f32 %v624, %v884
  %v901 = vmul.f32 %v623, %v885
  %v902 = vadd.f32 %v861, %v886
  %v903 = vadd.f32 %v862, %v887
  %v904 = vadd.f32 %v863, %v888
  %v905 = vadd.f32 %v864, %v889
  %v906 = vadd.f32 %v865, %v890
  %v907 = vadd.f32 %v866, %v891
  %v908 = vadd.f32 %v867, %v892
  %v909 = vadd.f32 %v868, %v893
  %v910 = vadd.f32 %v869, %v894
  %v911 = vadd.f32 %v870, %v895
  %v912 = vadd.f32 %v871, %v896
  %v913 = vadd.f32 %v872, %v897
  %v914 = vadd.f32 %v873, %v898
  %v915 = vadd.f32 %v874, %v899
  %v916 = vadd.f32 %v875, %v900
  %v917 = vadd.f32 %v876, %v901
  %s918 = scalar_lea.vmem %s7, 576
  %v919 = vld [vmem:[%s918] sm:$0xff]
  %v920 = vld [vmem:[%s918 + $0x8] sm:$0xff]
  %v921 = vld [vmem:[%s918 + $0x10] sm:$0xff]
  %v922 = vld [vmem:[%s918 + $0x18] sm:$0xff]
  %v923 = vld [vmem:[%s918 + $0x20] sm:$0xff]
  %v924 = vld [vmem:[%s918 + $0x28] sm:$0xff]
  %v925 = vld [vmem:[%s918 + $0x30] sm:$0xff]
  %v926 = vld [vmem:[%s918 + $0x38] sm:$0xff]
  %v927 = vmul.f32 %v712, %v919
  %v928 = vmul.f32 %v711, %v920
  %v929 = vmul.f32 %v710, %v921
  %v930 = vmul.f32 %v709, %v922
  %v931 = vmul.f32 %v708, %v923
  %v932 = vmul.f32 %v707, %v924
  %v933 = vmul.f32 %v706, %v925
  %v934 = vmul.f32 %v705, %v926
  %v935 = vmul.f32 %v704, %v919
  %v936 = vmul.f32 %v703, %v920
  %v937 = vmul.f32 %v702, %v921
  %v938 = vmul.f32 %v701, %v922
  %v939 = vmul.f32 %v700, %v923
  %v940 = vmul.f32 %v699, %v924
  %v941 = vmul.f32 %v698, %v925
  %v942 = vmul.f32 %v697, %v926
  %v943 = vadd.f32 %v902, %v927
  %v944 = vadd.f32 %v903, %v928
  %v945 = vadd.f32 %v904, %v929
  %v946 = vadd.f32 %v905, %v930
  %v947 = vadd.f32 %v906, %v931
  %v948 = vadd.f32 %v907, %v932
  %v949 = vadd.f32 %v908, %v933
  %v950 = vadd.f32 %v909, %v934
  %v951 = vadd.f32 %v910, %v935
  %v952 = vadd.f32 %v911, %v936
  %v953 = vadd.f32 %v912, %v937
  %v954 = vadd.f32 %v913, %v938
  %v955 = vadd.f32 %v914, %v939
  %v956 = vadd.f32 %v915, %v940
  %v957 = vadd.f32 %v916, %v941
  %v958 = vadd.f32 %v917, %v942
  %s959 = scalar_lea.vmem %s7, 640
  %v960 = vld [vmem:[%s959] sm:$0xff]
  %v961 = vld [vmem:[%s959 + $0x8] sm:$0xff]
  %v962 = vld [vmem:[%s959 + $0x10] sm:$0xff]
  %v963 = vld [vmem:[%s959 + $0x18] sm:$0xff]
  %v964 = vld [vmem:[%s959 + $0x20] sm:$0xff]
  %v965 = vld [vmem:[%s959 + $0x28] sm:$0xff]
  %v966 = vld [vmem:[%s959 + $0x30] sm:$0xff]
  %v967 = vld [vmem:[%s959 + $0x38] sm:$0xff]
  %v968 = vmul.f32 %v450, %v960
  %v969 = vmul.f32 %v449, %v961
  %v970 = vmul.f32 %v448, %v962
  %v971 = vmul.f32 %v447, %v963
  %v972 = vmul.f32 %v446, %v964
  %v973 = vmul.f32 %v445, %v965
  %v974 = vmul.f32 %v444, %v966
  %v975 = vmul.f32 %v443, %v967
  %v976 = vmul.f32 %v442, %v960
  %v977 = vmul.f32 %v441, %v961
  %v978 = vmul.f32 %v440, %v962
  %v979 = vmul.f32 %v439, %v963
  %v980 = vmul.f32 %v438, %v964
  %v981 = vmul.f32 %v437, %v965
  %v982 = vmul.f32 %v436, %v966
  %v983 = vmul.f32 %v435, %v967
  %v984 = vadd.f32 %v943, %v968
  %v985 = vadd.f32 %v944, %v969
  %v986 = vadd.f32 %v945, %v970
  %v987 = vadd.f32 %v946, %v971
  %v988 = vadd.f32 %v947, %v972
  %v989 = vadd.f32 %v948, %v973
  %v990 = vadd.f32 %v949, %v974
  %v991 = vadd.f32 %v950, %v975
  %v992 = vadd.f32 %v951, %v976
  %v993 = vadd.f32 %v952, %v977
  %v994 = vadd.f32 %v953, %v978
  %v995 = vadd.f32 %v954, %v979
  %v996 = vadd.f32 %v955, %v980
  %v997 = vadd.f32 %v956, %v981
  %v998 = vadd.f32 %v957, %v982
  %v999 = vadd.f32 %v958, %v983
  %s1000 = scalar_lea.vmem %s7, 704
  %v1001 = vld [vmem:[%s1000] sm:$0xff]
  %v1002 = vld [vmem:[%s1000 + $0x8] sm:$0xff]
  %v1003 = vld [vmem:[%s1000 + $0x10] sm:$0xff]
  %v1004 = vld [vmem:[%s1000 + $0x18] sm:$0xff]
  %v1005 = vld [vmem:[%s1000 + $0x20] sm:$0xff]
  %v1006 = vld [vmem:[%s1000 + $0x28] sm:$0xff]
  %v1007 = vld [vmem:[%s1000 + $0x30] sm:$0xff]
  %v1008 = vld [vmem:[%s1000 + $0x38] sm:$0xff]
  %v1009 = vmul.f32 %v523, %v1001
  %v1010 = vmul.f32 %v522, %v1002
  %v1011 = vmul.f32 %v521, %v1003
  %v1012 = vmul.f32 %v520, %v1004
  %v1013 = vmul.f32 %v519, %v1005
  %v1014 = vmul.f32 %v518, %v1006
  %v1015 = vmul.f32 %v517, %v1007
  %v1016 = vmul.f32 %v516, %v1008
  %v1017 = vmul.f32 %v515, %v1001
  %v1018 = vmul.f32 %v514, %v1002
  %v1019 = vmul.f32 %v513, %v1003
  %v1020 = vmul.f32 %v512, %v1004
  %v1021 = vmul.f32 %v511, %v1005
  %v1022 = vmul.f32 %v510, %v1006
  %v1023 = vmul.f32 %v509, %v1007
  %v1024 = vmul.f32 %v508, %v1008
  %v1025 = vadd.f32 %v984, %v1009
  %v1026 = vadd.f32 %v985, %v1010
  %v1027 = vadd.f32 %v986, %v1011
  %v1028 = vadd.f32 %v987, %v1012
  %v1029 = vadd.f32 %v988, %v1013
  %v1030 = vadd.f32 %v989, %v1014
  %v1031 = vadd.f32 %v990, %v1015
  %v1032 = vadd.f32 %v991, %v1016
  %v1033 = vadd.f32 %v992, %v1017
  %v1034 = vadd.f32 %v993, %v1018
  %v1035 = vadd.f32 %v994, %v1019
  %v1036 = vadd.f32 %v995, %v1020
  %v1037 = vadd.f32 %v996, %v1021
  %v1038 = vadd.f32 %v997, %v1022
  %v1039 = vadd.f32 %v998, %v1023
  %v1040 = vadd.f32 %v999, %v1024
  %s1041 = scalar_lea.vmem %s7, 768
  %v1042 = vld [vmem:[%s1041] sm:$0xff]
  %v1043 = vld [vmem:[%s1041 + $0x8] sm:$0xff]
  %v1044 = vld [vmem:[%s1041 + $0x10] sm:$0xff]
  %v1045 = vld [vmem:[%s1041 + $0x18] sm:$0xff]
  %v1046 = vld [vmem:[%s1041 + $0x20] sm:$0xff]
  %v1047 = vld [vmem:[%s1041 + $0x28] sm:$0xff]
  %v1048 = vld [vmem:[%s1041 + $0x30] sm:$0xff]
  %v1049 = vld [vmem:[%s1041 + $0x38] sm:$0xff]
  %v1050 = vmul.f32 %v138, %v1042
  %v1051 = vmul.f32 %v141, %v1043
  %v1052 = vmul.f32 %v146, %v1044
  %v1053 = vmul.f32 %v149, %v1045
  %v1054 = vmul.f32 %v154, %v1046
  %v1055 = vmul.f32 %v157, %v1047
  %v1056 = vmul.f32 %v162, %v1048
  %v1057 = vmul.f32 %v165, %v1049
  %v1058 = vmul.f32 %v170, %v1042
  %v1059 = vmul.f32 %v173, %v1043
  %v1060 = vmul.f32 %v178, %v1044
  %v1061 = vmul.f32 %v181, %v1045
  %v1062 = vmul.f32 %v186, %v1046
  %v1063 = vmul.f32 %v189, %v1047
  %v1064 = vmul.f32 %v194, %v1048
  %v1065 = vmul.f32 %v197, %v1049
  %v1066 = vadd.f32 %v1025, %v1050
  %v1067 = vadd.f32 %v1026, %v1051
  %v1068 = vadd.f32 %v1027, %v1052
  %v1069 = vadd.f32 %v1028, %v1053
  %v1070 = vadd.f32 %v1029, %v1054
  %v1071 = vadd.f32 %v1030, %v1055
  %v1072 = vadd.f32 %v1031, %v1056
  %v1073 = vadd.f32 %v1032, %v1057
  %v1074 = vadd.f32 %v1033, %v1058
  %v1075 = vadd.f32 %v1034, %v1059
  %v1076 = vadd.f32 %v1035, %v1060
  %v1077 = vadd.f32 %v1036, %v1061
  %v1078 = vadd.f32 %v1037, %v1062
  %v1079 = vadd.f32 %v1038, %v1063
  %v1080 = vadd.f32 %v1039, %v1064
  %v1081 = vadd.f32 %v1040, %v1065
  %s1082 = scalar_lea.vmem %s7, 832
  %v1083 = vld [vmem:[%s1082] sm:$0xff]
  %v1084 = vld [vmem:[%s1082 + $0x8] sm:$0xff]
  %v1085 = vld [vmem:[%s1082 + $0x10] sm:$0xff]
  %v1086 = vld [vmem:[%s1082 + $0x18] sm:$0xff]
  %v1087 = vld [vmem:[%s1082 + $0x20] sm:$0xff]
  %v1088 = vld [vmem:[%s1082 + $0x28] sm:$0xff]
  %v1089 = vld [vmem:[%s1082 + $0x30] sm:$0xff]
  %v1090 = vld [vmem:[%s1082 + $0x38] sm:$0xff]
  %v1091 = vmul.f32 %v637, %v1083
  %v1092 = vmul.f32 %v636, %v1084
  %v1093 = vmul.f32 %v635, %v1085
  %v1094 = vmul.f32 %v634, %v1086
  %v1095 = vmul.f32 %v633, %v1087
  %v1096 = vmul.f32 %v632, %v1088
  %v1097 = vmul.f32 %v631, %v1089
  %v1098 = vmul.f32 %v630, %v1090
  %v1099 = vmul.f32 %v629, %v1083
  %v1100 = vmul.f32 %v628, %v1084
  %v1101 = vmul.f32 %v627, %v1085
  %v1102 = vmul.f32 %v626, %v1086
  %v1103 = vmul.f32 %v625, %v1087
  %v1104 = vmul.f32 %v624, %v1088
  %v1105 = vmul.f32 %v623, %v1089
  %v1106 = vmul.f32 %v638, %v1090
  %v1107 = vadd.f32 %v1066, %v1091
  %v1108 = vadd.f32 %v1067, %v1092
  %v1109 = vadd.f32 %v1068, %v1093
  %v1110 = vadd.f32 %v1069, %v1094
  %v1111 = vadd.f32 %v1070, %v1095
  %v1112 = vadd.f32 %v1071, %v1096
  %v1113 = vadd.f32 %v1072, %v1097
  %v1114 = vadd.f32 %v1073, %v1098
  %v1115 = vadd.f32 %v1074, %v1099
  %v1116 = vadd.f32 %v1075, %v1100
  %v1117 = vadd.f32 %v1076, %v1101
  %v1118 = vadd.f32 %v1077, %v1102
  %v1119 = vadd.f32 %v1078, %v1103
  %v1120 = vadd.f32 %v1079, %v1104
  %v1121 = vadd.f32 %v1080, %v1105
  %v1122 = vadd.f32 %v1081, %v1106
  %s1123 = scalar_lea.vmem %s7, 896
  %v1124 = vld [vmem:[%s1123] sm:$0xff]
  %v1125 = vld [vmem:[%s1123 + $0x8] sm:$0xff]
  %v1126 = vld [vmem:[%s1123 + $0x10] sm:$0xff]
  %v1127 = vld [vmem:[%s1123 + $0x18] sm:$0xff]
  %v1128 = vld [vmem:[%s1123 + $0x20] sm:$0xff]
  %v1129 = vld [vmem:[%s1123 + $0x28] sm:$0xff]
  %v1130 = vld [vmem:[%s1123 + $0x30] sm:$0xff]
  %v1131 = vld [vmem:[%s1123 + $0x38] sm:$0xff]
  %v1132 = vmul.f32 %v711, %v1124
  %v1133 = vmul.f32 %v710, %v1125
  %v1134 = vmul.f32 %v709, %v1126
  %v1135 = vmul.f32 %v708, %v1127
  %v1136 = vmul.f32 %v707, %v1128
  %v1137 = vmul.f32 %v706, %v1129
  %v1138 = vmul.f32 %v705, %v1130
  %v1139 = vmul.f32 %v704, %v1131
  %v1140 = vmul.f32 %v703, %v1124
  %v1141 = vmul.f32 %v702, %v1125
  %v1142 = vmul.f32 %v701, %v1126
  %v1143 = vmul.f32 %v700, %v1127
  %v1144 = vmul.f32 %v699, %v1128
  %v1145 = vmul.f32 %v698, %v1129
  %v1146 = vmul.f32 %v697, %v1130
  %v1147 = vmul.f32 %v712, %v1131
  %v1148 = vadd.f32 %v1107, %v1132
  %v1149 = vadd.f32 %v1108, %v1133
  %v1150 = vadd.f32 %v1109, %v1134
  %v1151 = vadd.f32 %v1110, %v1135
  %v1152 = vadd.f32 %v1111, %v1136
  %v1153 = vadd.f32 %v1112, %v1137
  %v1154 = vadd.f32 %v1113, %v1138
  %v1155 = vadd.f32 %v1114, %v1139
  %v1156 = vadd.f32 %v1115, %v1140
  %v1157 = vadd.f32 %v1116, %v1141
  %v1158 = vadd.f32 %v1117, %v1142
  %v1159 = vadd.f32 %v1118, %v1143
  %v1160 = vadd.f32 %v1119, %v1144
  %v1161 = vadd.f32 %v1120, %v1145
  %v1162 = vadd.f32 %v1121, %v1146
  %v1163 = vadd.f32 %v1122, %v1147
  %s1164 = scalar_lea.vmem %s7, 960
  %v1165 = vld [vmem:[%s1164] sm:$0xff]
  %v1166 = vld [vmem:[%s1164 + $0x8] sm:$0xff]
  %v1167 = vld [vmem:[%s1164 + $0x10] sm:$0xff]
  %v1168 = vld [vmem:[%s1164 + $0x18] sm:$0xff]
  %v1169 = vld [vmem:[%s1164 + $0x20] sm:$0xff]
  %v1170 = vld [vmem:[%s1164 + $0x28] sm:$0xff]
  %v1171 = vld [vmem:[%s1164 + $0x30] sm:$0xff]
  %v1172 = vld [vmem:[%s1164 + $0x38] sm:$0xff]
  %v1173 = vmul.f32 %v449, %v1165
  %v1174 = vmul.f32 %v448, %v1166
  %v1175 = vmul.f32 %v447, %v1167
  %v1176 = vmul.f32 %v446, %v1168
  %v1177 = vmul.f32 %v445, %v1169
  %v1178 = vmul.f32 %v444, %v1170
  %v1179 = vmul.f32 %v443, %v1171
  %v1180 = vmul.f32 %v442, %v1172
  %v1181 = vmul.f32 %v441, %v1165
  %v1182 = vmul.f32 %v440, %v1166
  %v1183 = vmul.f32 %v439, %v1167
  %v1184 = vmul.f32 %v438, %v1168
  %v1185 = vmul.f32 %v437, %v1169
  %v1186 = vmul.f32 %v436, %v1170
  %v1187 = vmul.f32 %v435, %v1171
  %v1188 = vmul.f32 %v450, %v1172
  %v1189 = vadd.f32 %v1148, %v1173
  %v1190 = vadd.f32 %v1149, %v1174
  %v1191 = vadd.f32 %v1150, %v1175
  %v1192 = vadd.f32 %v1151, %v1176
  %v1193 = vadd.f32 %v1152, %v1177
  %v1194 = vadd.f32 %v1153, %v1178
  %v1195 = vadd.f32 %v1154, %v1179
  %v1196 = vadd.f32 %v1155, %v1180
  %v1197 = vadd.f32 %v1156, %v1181
  %v1198 = vadd.f32 %v1157, %v1182
  %v1199 = vadd.f32 %v1158, %v1183
  %v1200 = vadd.f32 %v1159, %v1184
  %v1201 = vadd.f32 %v1160, %v1185
  %v1202 = vadd.f32 %v1161, %v1186
  %v1203 = vadd.f32 %v1162, %v1187
  %v1204 = vadd.f32 %v1163, %v1188
  %s1205 = scalar_lea.vmem %s7, 1024
  %v1206 = vld [vmem:[%s1205] sm:$0xff]
  %v1207 = vld [vmem:[%s1205 + $0x8] sm:$0xff]
  %v1208 = vld [vmem:[%s1205 + $0x10] sm:$0xff]
  %v1209 = vld [vmem:[%s1205 + $0x18] sm:$0xff]
  %v1210 = vld [vmem:[%s1205 + $0x20] sm:$0xff]
  %v1211 = vld [vmem:[%s1205 + $0x28] sm:$0xff]
  %v1212 = vld [vmem:[%s1205 + $0x30] sm:$0xff]
  %v1213 = vld [vmem:[%s1205 + $0x38] sm:$0xff]
  %v1214 = vmul.f32 %v522, %v1206
  %v1215 = vmul.f32 %v521, %v1207
  %v1216 = vmul.f32 %v520, %v1208
  %v1217 = vmul.f32 %v519, %v1209
  %v1218 = vmul.f32 %v518, %v1210
  %v1219 = vmul.f32 %v517, %v1211
  %v1220 = vmul.f32 %v516, %v1212
  %v1221 = vmul.f32 %v515, %v1213
  %v1222 = vmul.f32 %v514, %v1206
  %v1223 = vmul.f32 %v513, %v1207
  %v1224 = vmul.f32 %v512, %v1208
  %v1225 = vmul.f32 %v511, %v1209
  %v1226 = vmul.f32 %v510, %v1210
  %v1227 = vmul.f32 %v509, %v1211
  %v1228 = vmul.f32 %v508, %v1212
  %v1229 = vmul.f32 %v523, %v1213
  %v1230 = vadd.f32 %v1189, %v1214
  %v1231 = vadd.f32 %v1190, %v1215
  %v1232 = vadd.f32 %v1191, %v1216
  %v1233 = vadd.f32 %v1192, %v1217
  %v1234 = vadd.f32 %v1193, %v1218
  %v1235 = vadd.f32 %v1194, %v1219
  %v1236 = vadd.f32 %v1195, %v1220
  %v1237 = vadd.f32 %v1196, %v1221
  %v1238 = vadd.f32 %v1197, %v1222
  %v1239 = vadd.f32 %v1198, %v1223
  %v1240 = vadd.f32 %v1199, %v1224
  %v1241 = vadd.f32 %v1200, %v1225
  %v1242 = vadd.f32 %v1201, %v1226
  %v1243 = vadd.f32 %v1202, %v1227
  %v1244 = vadd.f32 %v1203, %v1228
  %v1245 = vadd.f32 %v1204, %v1229
  %s1246 = scalar_lea.vmem %s7, 1088
  %v1247 = vld [vmem:[%s1246] sm:$0xff]
  %v1248 = vld [vmem:[%s1246 + $0x8] sm:$0xff]
  %v1249 = vld [vmem:[%s1246 + $0x10] sm:$0xff]
  %v1250 = vld [vmem:[%s1246 + $0x18] sm:$0xff]
  %v1251 = vld [vmem:[%s1246 + $0x20] sm:$0xff]
  %v1252 = vld [vmem:[%s1246 + $0x28] sm:$0xff]
  %v1253 = vld [vmem:[%s1246 + $0x30] sm:$0xff]
  %v1254 = vld [vmem:[%s1246 + $0x38] sm:$0xff]
  %v1255 = vmul.f32 %v141, %v1247
  %v1256 = vmul.f32 %v146, %v1248
  %v1257 = vmul.f32 %v149, %v1249
  %v1258 = vmul.f32 %v154, %v1250
  %v1259 = vmul.f32 %v157, %v1251
  %v1260 = vmul.f32 %v162, %v1252
  %v1261 = vmul.f32 %v165, %v1253
  %v1262 = vmul.f32 %v170, %v1254
  %v1263 = vmul.f32 %v173, %v1247
  %v1264 = vmul.f32 %v178, %v1248
  %v1265 = vmul.f32 %v181, %v1249
  %v1266 = vmul.f32 %v186, %v1250
  %v1267 = vmul.f32 %v189, %v1251
  %v1268 = vmul.f32 %v194, %v1252
  %v1269 = vmul.f32 %v197, %v1253
  %v1270 = vmul.f32 %v138, %v1254
  %v1271 = vadd.f32 %v1230, %v1255
  %v1272 = vadd.f32 %v1231, %v1256
  %v1273 = vadd.f32 %v1232, %v1257
  %v1274 = vadd.f32 %v1233, %v1258
  %v1275 = vadd.f32 %v1234, %v1259
  %v1276 = vadd.f32 %v1235, %v1260
  %v1277 = vadd.f32 %v1236, %v1261
  %v1278 = vadd.f32 %v1237, %v1262
  %v1279 = vadd.f32 %v1238, %v1263
  %v1280 = vadd.f32 %v1239, %v1264
  %v1281 = vadd.f32 %v1240, %v1265
  %v1282 = vadd.f32 %v1241, %v1266
  %v1283 = vadd.f32 %v1242, %v1267
  %v1284 = vadd.f32 %v1243, %v1268
  %v1285 = vadd.f32 %v1244, %v1269
  %v1286 = vadd.f32 %v1245, %v1270
  %s1287 = scalar_lea.vmem %s7, 1152
  %v1288 = vld [vmem:[%s1287] sm:$0xff]
  %v1289 = vld [vmem:[%s1287 + $0x8] sm:$0xff]
  %v1290 = vld [vmem:[%s1287 + $0x10] sm:$0xff]
  %v1291 = vld [vmem:[%s1287 + $0x18] sm:$0xff]
  %v1292 = vld [vmem:[%s1287 + $0x20] sm:$0xff]
  %v1293 = vld [vmem:[%s1287 + $0x28] sm:$0xff]
  %v1294 = vld [vmem:[%s1287 + $0x30] sm:$0xff]
  %v1295 = vld [vmem:[%s1287 + $0x38] sm:$0xff]
  %v1296 = vmul.f32 %v636, %v1288
  %v1297 = vmul.f32 %v635, %v1289
  %v1298 = vmul.f32 %v634, %v1290
  %v1299 = vmul.f32 %v633, %v1291
  %v1300 = vmul.f32 %v632, %v1292
  %v1301 = vmul.f32 %v631, %v1293
  %v1302 = vmul.f32 %v630, %v1294
  %v1303 = vmul.f32 %v629, %v1295
  %v1304 = vmul.f32 %v628, %v1288
  %v1305 = vmul.f32 %v627, %v1289
  %v1306 = vmul.f32 %v626, %v1290
  %v1307 = vmul.f32 %v625, %v1291
  %v1308 = vmul.f32 %v624, %v1292
  %v1309 = vmul.f32 %v623, %v1293
  %v1310 = vmul.f32 %v638, %v1294
  %v1311 = vmul.f32 %v637, %v1295
  %v1312 = vadd.f32 %v1271, %v1296
  %v1313 = vadd.f32 %v1272, %v1297
  %v1314 = vadd.f32 %v1273, %v1298
  %v1315 = vadd.f32 %v1274, %v1299
  %v1316 = vadd.f32 %v1275, %v1300
  %v1317 = vadd.f32 %v1276, %v1301
  %v1318 = vadd.f32 %v1277, %v1302
  %v1319 = vadd.f32 %v1278, %v1303
  %v1320 = vadd.f32 %v1279, %v1304
  %v1321 = vadd.f32 %v1280, %v1305
  %v1322 = vadd.f32 %v1281, %v1306
  %v1323 = vadd.f32 %v1282, %v1307
  %v1324 = vadd.f32 %v1283, %v1308
  %v1325 = vadd.f32 %v1284, %v1309
  %v1326 = vadd.f32 %v1285, %v1310
  %v1327 = vadd.f32 %v1286, %v1311
  %s1328 = scalar_lea.vmem %s7, 1216
  %v1329 = vld [vmem:[%s1328] sm:$0xff]
  %v1330 = vld [vmem:[%s1328 + $0x8] sm:$0xff]
  %v1331 = vld [vmem:[%s1328 + $0x10] sm:$0xff]
  %v1332 = vld [vmem:[%s1328 + $0x18] sm:$0xff]
  %v1333 = vld [vmem:[%s1328 + $0x20] sm:$0xff]
  %v1334 = vld [vmem:[%s1328 + $0x28] sm:$0xff]
  %v1335 = vld [vmem:[%s1328 + $0x30] sm:$0xff]
  %v1336 = vld [vmem:[%s1328 + $0x38] sm:$0xff]
  %v1337 = vmul.f32 %v710, %v1329
  %v1338 = vmul.f32 %v709, %v1330
  %v1339 = vmul.f32 %v708, %v1331
  %v1340 = vmul.f32 %v707, %v1332
  %v1341 = vmul.f32 %v706, %v1333
  %v1342 = vmul.f32 %v705, %v1334
  %v1343 = vmul.f32 %v704, %v1335
  %v1344 = vmul.f32 %v703, %v1336
  %v1345 = vmul.f32 %v702, %v1329
  %v1346 = vmul.f32 %v701, %v1330
  %v1347 = vmul.f32 %v700, %v1331
  %v1348 = vmul.f32 %v699, %v1332
  %v1349 = vmul.f32 %v698, %v1333
  %v1350 = vmul.f32 %v697, %v1334
  %v1351 = vmul.f32 %v712, %v1335
  %v1352 = vmul.f32 %v711, %v1336
  %v1353 = vadd.f32 %v1312, %v1337
  %v1354 = vadd.f32 %v1313, %v1338
  %v1355 = vadd.f32 %v1314, %v1339
  %v1356 = vadd.f32 %v1315, %v1340
  %v1357 = vadd.f32 %v1316, %v1341
  %v1358 = vadd.f32 %v1317, %v1342
  %v1359 = vadd.f32 %v1318, %v1343
  %v1360 = vadd.f32 %v1319, %v1344
  %v1361 = vadd.f32 %v1320, %v1345
  %v1362 = vadd.f32 %v1321, %v1346
  %v1363 = vadd.f32 %v1322, %v1347
  %v1364 = vadd.f32 %v1323, %v1348
  %v1365 = vadd.f32 %v1324, %v1349
  %v1366 = vadd.f32 %v1325, %v1350
  %v1367 = vadd.f32 %v1326, %v1351
  %v1368 = vadd.f32 %v1327, %v1352
  %s1369 = scalar_lea.vmem %s7, 1280
  %v1370 = vld [vmem:[%s1369] sm:$0xff]
  %v1371 = vld [vmem:[%s1369 + $0x8] sm:$0xff]
  %v1372 = vld [vmem:[%s1369 + $0x10] sm:$0xff]
  %v1373 = vld [vmem:[%s1369 + $0x18] sm:$0xff]
  %v1374 = vld [vmem:[%s1369 + $0x20] sm:$0xff]
  %v1375 = vld [vmem:[%s1369 + $0x28] sm:$0xff]
  %v1376 = vld [vmem:[%s1369 + $0x30] sm:$0xff]
  %v1377 = vld [vmem:[%s1369 + $0x38] sm:$0xff]
  %v1378 = vmul.f32 %v448, %v1370
  %v1379 = vmul.f32 %v447, %v1371
  %v1380 = vmul.f32 %v446, %v1372
  %v1381 = vmul.f32 %v445, %v1373
  %v1382 = vmul.f32 %v444, %v1374
  %v1383 = vmul.f32 %v443, %v1375
  %v1384 = vmul.f32 %v442, %v1376
  %v1385 = vmul.f32 %v441, %v1377
  %v1386 = vmul.f32 %v440, %v1370
  %v1387 = vmul.f32 %v439, %v1371
  %v1388 = vmul.f32 %v438, %v1372
  %v1389 = vmul.f32 %v437, %v1373
  %v1390 = vmul.f32 %v436, %v1374
  %v1391 = vmul.f32 %v435, %v1375
  %v1392 = vmul.f32 %v450, %v1376
  %v1393 = vmul.f32 %v449, %v1377
  %v1394 = vadd.f32 %v1353, %v1378
  %v1395 = vadd.f32 %v1354, %v1379
  %v1396 = vadd.f32 %v1355, %v1380
  %v1397 = vadd.f32 %v1356, %v1381
  %v1398 = vadd.f32 %v1357, %v1382
  %v1399 = vadd.f32 %v1358, %v1383
  %v1400 = vadd.f32 %v1359, %v1384
  %v1401 = vadd.f32 %v1360, %v1385
  %v1402 = vadd.f32 %v1361, %v1386
  %v1403 = vadd.f32 %v1362, %v1387
  %v1404 = vadd.f32 %v1363, %v1388
  %v1405 = vadd.f32 %v1364, %v1389
  %v1406 = vadd.f32 %v1365, %v1390
  %v1407 = vadd.f32 %v1366, %v1391
  %v1408 = vadd.f32 %v1367, %v1392
  %v1409 = vadd.f32 %v1368, %v1393
  %s1410 = scalar_lea.vmem %s7, 1344
  %v1411 = vld [vmem:[%s1410] sm:$0xff]
  %v1412 = vld [vmem:[%s1410 + $0x8] sm:$0xff]
  %v1413 = vld [vmem:[%s1410 + $0x10] sm:$0xff]
  %v1414 = vld [vmem:[%s1410 + $0x18] sm:$0xff]
  %v1415 = vld [vmem:[%s1410 + $0x20] sm:$0xff]
  %v1416 = vld [vmem:[%s1410 + $0x28] sm:$0xff]
  %v1417 = vld [vmem:[%s1410 + $0x30] sm:$0xff]
  %v1418 = vld [vmem:[%s1410 + $0x38] sm:$0xff]
  %v1419 = vmul.f32 %v521, %v1411
  %v1420 = vmul.f32 %v520, %v1412
  %v1421 = vmul.f32 %v519, %v1413
  %v1422 = vmul.f32 %v518, %v1414
  %v1423 = vmul.f32 %v517, %v1415
  %v1424 = vmul.f32 %v516, %v1416
  %v1425 = vmul.f32 %v515, %v1417
  %v1426 = vmul.f32 %v514, %v1418
  %v1427 = vmul.f32 %v513, %v1411
  %v1428 = vmul.f32 %v512, %v1412
  %v1429 = vmul.f32 %v511, %v1413
  %v1430 = vmul.f32 %v510, %v1414
  %v1431 = vmul.f32 %v509, %v1415
  %v1432 = vmul.f32 %v508, %v1416
  %v1433 = vmul.f32 %v523, %v1417
  %v1434 = vmul.f32 %v522, %v1418
  %v1435 = vadd.f32 %v1394, %v1419
  %v1436 = vadd.f32 %v1395, %v1420
  %v1437 = vadd.f32 %v1396, %v1421
  %v1438 = vadd.f32 %v1397, %v1422
  %v1439 = vadd.f32 %v1398, %v1423
  %v1440 = vadd.f32 %v1399, %v1424
  %v1441 = vadd.f32 %v1400, %v1425
  %v1442 = vadd.f32 %v1401, %v1426
  %v1443 = vadd.f32 %v1402, %v1427
  %v1444 = vadd.f32 %v1403, %v1428
  %v1445 = vadd.f32 %v1404, %v1429
  %v1446 = vadd.f32 %v1405, %v1430
  %v1447 = vadd.f32 %v1406, %v1431
  %v1448 = vadd.f32 %v1407, %v1432
  %v1449 = vadd.f32 %v1408, %v1433
  %v1450 = vadd.f32 %v1409, %v1434
  %s1451 = scalar_lea.vmem %s7, 1408
  %v1452 = vld [vmem:[%s1451] sm:$0xff]
  %v1453 = vld [vmem:[%s1451 + $0x8] sm:$0xff]
  %v1454 = vld [vmem:[%s1451 + $0x10] sm:$0xff]
  %v1455 = vld [vmem:[%s1451 + $0x18] sm:$0xff]
  %v1456 = vld [vmem:[%s1451 + $0x20] sm:$0xff]
  %v1457 = vld [vmem:[%s1451 + $0x28] sm:$0xff]
  %v1458 = vld [vmem:[%s1451 + $0x30] sm:$0xff]
  %v1459 = vld [vmem:[%s1451 + $0x38] sm:$0xff]
  %v1460 = vmul.f32 %v146, %v1452
  %v1461 = vmul.f32 %v149, %v1453
  %v1462 = vmul.f32 %v154, %v1454
  %v1463 = vmul.f32 %v157, %v1455
  %v1464 = vmul.f32 %v162, %v1456
  %v1465 = vmul.f32 %v165, %v1457
  %v1466 = vmul.f32 %v170, %v1458
  %v1467 = vmul.f32 %v173, %v1459
  %v1468 = vmul.f32 %v178, %v1452
  %v1469 = vmul.f32 %v181, %v1453
  %v1470 = vmul.f32 %v186, %v1454
  %v1471 = vmul.f32 %v189, %v1455
  %v1472 = vmul.f32 %v194, %v1456
  %v1473 = vmul.f32 %v197, %v1457
  %v1474 = vmul.f32 %v138, %v1458
  %v1475 = vmul.f32 %v141, %v1459
  %v1476 = vadd.f32 %v1435, %v1460
  %v1477 = vadd.f32 %v1436, %v1461
  %v1478 = vadd.f32 %v1437, %v1462
  %v1479 = vadd.f32 %v1438, %v1463
  %v1480 = vadd.f32 %v1439, %v1464
  %v1481 = vadd.f32 %v1440, %v1465
  %v1482 = vadd.f32 %v1441, %v1466
  %v1483 = vadd.f32 %v1442, %v1467
  %v1484 = vadd.f32 %v1443, %v1468
  %v1485 = vadd.f32 %v1444, %v1469
  %v1486 = vadd.f32 %v1445, %v1470
  %v1487 = vadd.f32 %v1446, %v1471
  %v1488 = vadd.f32 %v1447, %v1472
  %v1489 = vadd.f32 %v1448, %v1473
  %v1490 = vadd.f32 %v1449, %v1474
  %v1491 = vadd.f32 %v1450, %v1475
  %s1492 = scalar_lea.vmem %s7, 1472
  %v1493 = vld [vmem:[%s1492] sm:$0xff]
  %v1494 = vld [vmem:[%s1492 + $0x8] sm:$0xff]
  %v1495 = vld [vmem:[%s1492 + $0x10] sm:$0xff]
  %v1496 = vld [vmem:[%s1492 + $0x18] sm:$0xff]
  %v1497 = vld [vmem:[%s1492 + $0x20] sm:$0xff]
  %v1498 = vld [vmem:[%s1492 + $0x28] sm:$0xff]
  %v1499 = vld [vmem:[%s1492 + $0x30] sm:$0xff]
  %v1500 = vld [vmem:[%s1492 + $0x38] sm:$0xff]
  %v1501 = vmul.f32 %v635, %v1493
  %v1502 = vmul.f32 %v634, %v1494
  %v1503 = vmul.f32 %v633, %v1495
  %v1504 = vmul.f32 %v632, %v1496
  %v1505 = vmul.f32 %v631, %v1497
  %v1506 = vmul.f32 %v630, %v1498
  %v1507 = vmul.f32 %v629, %v1499
  %v1508 = vmul.f32 %v628, %v1500
  %v1509 = vmul.f32 %v627, %v1493
  %v1510 = vmul.f32 %v626, %v1494
  %v1511 = vmul.f32 %v625, %v1495
  %v1512 = vmul.f32 %v624, %v1496
  %v1513 = vmul.f32 %v623, %v1497
  %v1514 = vmul.f32 %v638, %v1498
  %v1515 = vmul.f32 %v637, %v1499
  %v1516 = vmul.f32 %v636, %v1500
  %v1517 = vadd.f32 %v1476, %v1501
  %v1518 = vadd.f32 %v1477, %v1502
  %v1519 = vadd.f32 %v1478, %v1503
  %v1520 = vadd.f32 %v1479, %v1504
  %v1521 = vadd.f32 %v1480, %v1505
  %v1522 = vadd.f32 %v1481, %v1506
  %v1523 = vadd.f32 %v1482, %v1507
  %v1524 = vadd.f32 %v1483, %v1508
  %v1525 = vadd.f32 %v1484, %v1509
  %v1526 = vadd.f32 %v1485, %v1510
  %v1527 = vadd.f32 %v1486, %v1511
  %v1528 = vadd.f32 %v1487, %v1512
  %v1529 = vadd.f32 %v1488, %v1513
  %v1530 = vadd.f32 %v1489, %v1514
  %v1531 = vadd.f32 %v1490, %v1515
  %v1532 = vadd.f32 %v1491, %v1516
  %s1533 = scalar_lea.vmem %s7, 1536
  %v1534 = vld [vmem:[%s1533] sm:$0xff]
  %v1535 = vld [vmem:[%s1533 + $0x8] sm:$0xff]
  %v1536 = vld [vmem:[%s1533 + $0x10] sm:$0xff]
  %v1537 = vld [vmem:[%s1533 + $0x18] sm:$0xff]
  %v1538 = vld [vmem:[%s1533 + $0x20] sm:$0xff]
  %v1539 = vld [vmem:[%s1533 + $0x28] sm:$0xff]
  %v1540 = vld [vmem:[%s1533 + $0x30] sm:$0xff]
  %v1541 = vld [vmem:[%s1533 + $0x38] sm:$0xff]
  %v1542 = vmul.f32 %v709, %v1534
  %v1543 = vmul.f32 %v708, %v1535
  %v1544 = vmul.f32 %v707, %v1536
  %v1545 = vmul.f32 %v706, %v1537
  %v1546 = vmul.f32 %v705, %v1538
  %v1547 = vmul.f32 %v704, %v1539
  %v1548 = vmul.f32 %v703, %v1540
  %v1549 = vmul.f32 %v702, %v1541
  %v1550 = vmul.f32 %v701, %v1534
  %v1551 = vmul.f32 %v700, %v1535
  %v1552 = vmul.f32 %v699, %v1536
  %v1553 = vmul.f32 %v698, %v1537
  %v1554 = vmul.f32 %v697, %v1538
  %v1555 = vmul.f32 %v712, %v1539
  %v1556 = vmul.f32 %v711, %v1540
  %v1557 = vmul.f32 %v710, %v1541
  %v1558 = vadd.f32 %v1517, %v1542
  %v1559 = vadd.f32 %v1518, %v1543
  %v1560 = vadd.f32 %v1519, %v1544
  %v1561 = vadd.f32 %v1520, %v1545
  %v1562 = vadd.f32 %v1521, %v1546
  %v1563 = vadd.f32 %v1522, %v1547
  %v1564 = vadd.f32 %v1523, %v1548
  %v1565 = vadd.f32 %v1524, %v1549
  %v1566 = vadd.f32 %v1525, %v1550
  %v1567 = vadd.f32 %v1526, %v1551
  %v1568 = vadd.f32 %v1527, %v1552
  %v1569 = vadd.f32 %v1528, %v1553
  %v1570 = vadd.f32 %v1529, %v1554
  %v1571 = vadd.f32 %v1530, %v1555
  %v1572 = vadd.f32 %v1531, %v1556
  %v1573 = vadd.f32 %v1532, %v1557
  %v1574 = vld [vmem:[%s8] sm:$0x1]
  %v1576 = vlaneseq
  %v1577 = vshrl.u32 %v1576, 7
  %v1578 = vsub.s32 0, %v1577
  %v1579 = vrot.slane %v1574, %v1578
  %v1581 = vadd.f32 %v1558, %v1579
  %v1582 = vadd.f32 %v1559, %v1579
  %v1583 = vadd.f32 %v1560, %v1579
  %v1584 = vadd.f32 %v1561, %v1579
  %v1585 = vadd.f32 %v1562, %v1579
  %v1586 = vadd.f32 %v1563, %v1579
  %v1587 = vadd.f32 %v1564, %v1579
  %v1588 = vadd.f32 %v1565, %v1579
  %v1589 = vadd.f32 %v1566, %v1579
  %v1590 = vadd.f32 %v1567, %v1579
  %v1591 = vadd.f32 %v1568, %v1579
  %v1592 = vadd.f32 %v1569, %v1579
  %v1593 = vadd.f32 %v1570, %v1579
  %v1594 = vadd.f32 %v1571, %v1579
  %v1595 = vadd.f32 %v1572, %v1579
  %v1596 = vadd.f32 %v1573, %v1579
  %v1597 = vpack.c.bf16 %v1582, %v1581
  %v1598 = vpack.c.bf16 %v1584, %v1583
  %v1599 = vpack.c.bf16 %v1586, %v1585
  %v1600 = vpack.c.bf16 %v1588, %v1587
  %v1601 = vpack.c.bf16 %v1590, %v1589
  %v1602 = vpack.c.bf16 %v1592, %v1591
  %v1603 = vpack.c.bf16 %v1594, %v1593
  %v1604 = vpack.c.bf16 %v1596, %v1595
  %v1605 = vpack.c.bf16 %v249, %v246
  %v1606 = vpack.c.bf16 %v257, %v254
  %v1607 = vpack.c.bf16 %v265, %v262
  %v1608 = vpack.c.bf16 %v273, %v270
  %v1609 = vpack.c.bf16 %v281, %v278
  %v1610 = vpack.c.bf16 %v289, %v286
  %v1611 = vpack.c.bf16 %v297, %v294
  %v1612 = vpack.c.bf16 %v305, %v302
  %v1613 = vpack.c.bf16 %v357, %v354
  %v1614 = vpack.c.bf16 %v365, %v362
  %v1615 = vpack.c.bf16 %v373, %v370
  %v1616 = vpack.c.bf16 %v381, %v378
  %v1617 = vpack.c.bf16 %v389, %v386
  %v1618 = vpack.c.bf16 %v397, %v394
  %v1619 = vpack.c.bf16 %v405, %v402
  %v1620 = vpack.c.bf16 %v413, %v410
  %v1621 = vld [vmem:[%s9] sm:$0xff]
  %v1622 = vld [vmem:[%s9 + $0x8] sm:$0xff]
  %v1623 = vld [vmem:[%s9 + $0x10] sm:$0xff]
  %v1624 = vld [vmem:[%s9 + $0x18] sm:$0xff]
  %v1625 = vld [vmem:[%s9 + $0x20] sm:$0xff]
  %v1626 = vld [vmem:[%s9 + $0x28] sm:$0xff]
  %v1627 = vld [vmem:[%s9 + $0x30] sm:$0xff]
  %v1628 = vld [vmem:[%s9 + $0x38] sm:$0xff]
  %v1630 = vsel %vm74, %v1597, 0
  %v1633 = vsel %vm74, %v1598, 0
  %v1636 = vsel %vm74, %v1599, 0
  %v1639 = vsel %vm74, %v1600, 0
  %v1642 = vsel %vm74, %v1605, 0
  %v1645 = vsel %vm74, %v1606, 0
  %v1648 = vsel %vm74, %v1607, 0
  %v1651 = vsel %vm74, %v1608, 0
  %1653 = vmatprep.subr.bf16.mxu0 0
  %1654 = vmatpush1.bf16.xpose.msra.mxu0 %v1642
  %1655 = vmatprep.subr.bf16.mxu0 0
  %1656 = vmatpush1.bf16.xpose.msra.mxu0 %v1645
  %1657 = vmatprep.subr.bf16.mxu0 0
  %1658 = vmatpush1.bf16.xpose.msra.mxu0 %v1648
  %1659 = vmatprep.subr.bf16.mxu0 0
  %1660 = vmatpush1.bf16.xpose.msra.mxu0 %v1651
  %1661 = vmatprep.subr.bf16.mxu0 0
  %1662 = vmatpush1.bf16.xpose.msra.mxu0 0
  %1663 = vmatprep.subr.bf16.mxu0 0
  %1664 = vmatpush1.bf16.xpose.msra.mxu0 0
  %1665 = vmatprep.subr.bf16.mxu0 0
  %1666 = vmatpush1.bf16.xpose.msra.mxu0 0
  %1667 = vmatprep.subr.bf16.mxu0 0
  %1668 = vmatpush1.bf16.xpose.msra.mxu0 0
  %1669 = vmatprep.subr.bf16.mxu0 0
  %1670 = vmatpush1.bf16.xpose.msra.mxu0 0
  %1671 = vmatprep.subr.bf16.mxu0 0
  %1672 = vmatpush1.bf16.xpose.msra.mxu0 0
  %1673 = vmatprep.subr.bf16.mxu0 0
  %1674 = vmatpush1.bf16.xpose.msra.mxu0 0
  %1675 = vmatprep.subr.bf16.mxu0 0
  %1676 = vmatpush1.bf16.xpose.msra.mxu0 0
  %1677 = vmatprep.subr.bf16.mxu0 0
  %1678 = vmatpush1.bf16.xpose.msra.mxu0 0
  %1679 = vmatprep.subr.bf16.mxu0 0
  %1680 = vmatpush1.bf16.xpose.msra.mxu0 0
  %1681 = vmatprep.subr.bf16.mxu0 0
  %1682 = vmatpush1.bf16.xpose.msra.mxu0 0
  %1683 = vmatprep.subr.bf16.mxu0 0
  %1684 = vmatpush1.bf16.xpose.msra.mxu0 0
  %1685 = vmatprep.mubr.bf16.mxu0 0
  %1686 = vmatmul.mubr.bf16.gmra.mrb[0].mxu0 %v1630
  %v1687 = vpop.f32.mrb[0].mxu0
  %v1688 = vadd.f32 %v1621, %v1687
  %v1689 = vpop.f32.mrb[0].mxu0
  %v1690 = vpop.f32.mrb[0].mxu0
  %v1691 = vadd.f32 %v1622, %v1690
  %v1692 = vpop.f32.mrb[0].mxu0
  %1693 = vmatprep.mubr.bf16.mxu0 0
  %1694 = vmatmul.mubr.bf16.gmra.mrb[0].mxu0 %v1633
  %v1695 = vpop.f32.mrb[0].mxu0
  %v1696 = vadd.f32 %v1623, %v1695
  %v1697 = vpop.f32.mrb[0].mxu0
  %v1698 = vpop.f32.mrb[0].mxu0
  %v1699 = vadd.f32 %v1624, %v1698
  %v1700 = vpop.f32.mrb[0].mxu0
  %1701 = vmatprep.mubr.bf16.mxu0 0
  %1702 = vmatmul.mubr.bf16.gmra.mrb[0].mxu0 %v1636
  %v1703 = vpop.f32.mrb[0].mxu0
  %v1704 = vadd.f32 %v1625, %v1703
  %v1705 = vpop.f32.mrb[0].mxu0
  %v1706 = vpop.f32.mrb[0].mxu0
  %v1707 = vadd.f32 %v1626, %v1706
  %v1708 = vpop.f32.mrb[0].mxu0
  %1709 = vmatprep.mubr.bf16.mxu0 0
  %1710 = vmatmul.mubr.bf16.gmra.mrb[0].mxu0 %v1639
  %v1711 = vpop.f32.mrb[0].mxu0
  %v1712 = vadd.f32 %v1627, %v1711
  %v1713 = vpop.f32.mrb[0].mxu0
  %v1714 = vpop.f32.mrb[0].mxu0
  %v1715 = vadd.f32 %v1628, %v1714
  %v1716 = vpop.f32.mrb[0].mxu0
  %1717 = vdwg.mxu0
  %v1719 = vsel %vm74, %v1601, 0
  %v1722 = vsel %vm74, %v1602, 0
  %v1725 = vsel %vm74, %v1603, 0
  %v1728 = vsel %vm74, %v1604, 0
  %v1731 = vsel %vm74, %v1609, 0
  %v1734 = vsel %vm74, %v1610, 0
  %v1737 = vsel %vm74, %v1611, 0
  %v1740 = vsel %vm74, %v1612, 0
  %1742 = vmatprep.subr.bf16.mxu0 0
  %1743 = vmatpush1.bf16.xpose.msra.mxu0 %v1731
  %1744 = vmatprep.subr.bf16.mxu0 0
  %1745 = vmatpush1.bf16.xpose.msra.mxu0 %v1734
  %1746 = vmatprep.subr.bf16.mxu0 0
  %1747 = vmatpush1.bf16.xpose.msra.mxu0 %v1737
  %1748 = vmatprep.subr.bf16.mxu0 0
  %1749 = vmatpush1.bf16.xpose.msra.mxu0 %v1740
  %1750 = vmatprep.subr.bf16.mxu0 0
  %1751 = vmatpush1.bf16.xpose.msra.mxu0 0
  %1752 = vmatprep.subr.bf16.mxu0 0
  %1753 = vmatpush1.bf16.xpose.msra.mxu0 0
  %1754 = vmatprep.subr.bf16.mxu0 0
  %1755 = vmatpush1.bf16.xpose.msra.mxu0 0
  %1756 = vmatprep.subr.bf16.mxu0 0
  %1757 = vmatpush1.bf16.xpose.msra.mxu0 0
  %1758 = vmatprep.subr.bf16.mxu0 0
  %1759 = vmatpush1.bf16.xpose.msra.mxu0 0
  %1760 = vmatprep.subr.bf16.mxu0 0
  %1761 = vmatpush1.bf16.xpose.msra.mxu0 0
  %1762 = vmatprep.subr.bf16.mxu0 0
  %1763 = vmatpush1.bf16.xpose.msra.mxu0 0
  %1764 = vmatprep.subr.bf16.mxu0 0
  %1765 = vmatpush1.bf16.xpose.msra.mxu0 0
  %1766 = vmatprep.subr.bf16.mxu0 0
  %1767 = vmatpush1.bf16.xpose.msra.mxu0 0
  %1768 = vmatprep.subr.bf16.mxu0 0
  %1769 = vmatpush1.bf16.xpose.msra.mxu0 0
  %1770 = vmatprep.subr.bf16.mxu0 0
  %1771 = vmatpush1.bf16.xpose.msra.mxu0 0
  %1772 = vmatprep.subr.bf16.mxu0 0
  %1773 = vmatpush1.bf16.xpose.msra.mxu0 0
  %1774 = vmatprep.mubr.bf16.mxu0 0
  %1775 = vmatmul.mubr.bf16.gmra.mrb[0].mxu0 %v1719
  %v1776 = vpop.f32.mrb[0].mxu0
  %v1777 = vadd.f32 %v1621, %v1776
  %v1778 = vpop.f32.mrb[0].mxu0
  %v1779 = vpop.f32.mrb[0].mxu0
  %v1780 = vadd.f32 %v1622, %v1779
  %v1781 = vpop.f32.mrb[0].mxu0
  %1782 = vmatprep.mubr.bf16.mxu0 0
  %1783 = vmatmul.mubr.bf16.gmra.mrb[0].mxu0 %v1722
  %v1784 = vpop.f32.mrb[0].mxu0
  %v1785 = vadd.f32 %v1623, %v1784
  %v1786 = vpop.f32.mrb[0].mxu0
  %v1787 = vpop.f32.mrb[0].mxu0
  %v1788 = vadd.f32 %v1624, %v1787
  %v1789 = vpop.f32.mrb[0].mxu0
  %1790 = vmatprep.mubr.bf16.mxu0 0
  %1791 = vmatmul.mubr.bf16.gmra.mrb[0].mxu0 %v1725
  %v1792 = vpop.f32.mrb[0].mxu0
  %v1793 = vadd.f32 %v1625, %v1792
  %v1794 = vpop.f32.mrb[0].mxu0
  %v1795 = vpop.f32.mrb[0].mxu0
  %v1796 = vadd.f32 %v1626, %v1795
  %v1797 = vpop.f32.mrb[0].mxu0
  %1798 = vmatprep.mubr.bf16.mxu0 0
  %1799 = vmatmul.mubr.bf16.gmra.mrb[0].mxu0 %v1728
  %v1800 = vpop.f32.mrb[0].mxu0
  %v1801 = vadd.f32 %v1627, %v1800
  %v1802 = vpop.f32.mrb[0].mxu0
  %v1803 = vpop.f32.mrb[0].mxu0
  %v1804 = vadd.f32 %v1628, %v1803
  %v1805 = vpop.f32.mrb[0].mxu0
  %1806 = vdwg.mxu0
  %vm1807 = vcmask 523264
  %v1808 = vsel %vm1807, %v1688, -inf
  %1809 = vmax.xlane.f32.xlu0 %v1808
  %v1810 = vpop.xlane.xlu0 %1809
  %v1811 = vsel %vm1807, %v1691, -inf
  %1812 = vmax.xlane.f32.xlu0 %v1811
  %v1813 = vpop.xlane.xlu0 %1812
  %v1814 = vsel %vm1807, %v1696, -inf
  %1815 = vmax.xlane.f32.xlu0 %v1814
  %v1816 = vpop.xlane.xlu0 %1815
  %v1817 = vsel %vm1807, %v1699, -inf
  %1818 = vmax.xlane.f32.xlu0 %v1817
  %v1819 = vpop.xlane.xlu0 %1818
  %v1820 = vsel %vm1807, %v1704, -inf
  %1821 = vmax.xlane.f32.xlu0 %v1820
  %v1822 = vpop.xlane.xlu0 %1821
  %v1823 = vsel %vm1807, %v1707, -inf
  %1824 = vmax.xlane.f32.xlu0 %v1823
  %v1825 = vpop.xlane.xlu0 %1824
  %v1826 = vsel %vm1807, %v1712, -inf
  %1827 = vmax.xlane.f32.xlu0 %v1826
  %v1828 = vpop.xlane.xlu0 %1827
  %v1829 = vsel %vm1807, %v1715, -inf
  %1830 = vmax.xlane.f32.xlu0 %v1829
  %v1831 = vpop.xlane.xlu0 %1830
  %v1832 = vsel %vm1807, %v1777, -inf
  %1833 = vmax.xlane.f32.xlu0 %v1832
  %v1834 = vpop.xlane.xlu0 %1833
  %v1835 = vsel %vm1807, %v1780, -inf
  %1836 = vmax.xlane.f32.xlu0 %v1835
  %v1837 = vpop.xlane.xlu0 %1836
  %v1838 = vsel %vm1807, %v1785, -inf
  %1839 = vmax.xlane.f32.xlu0 %v1838
  %v1840 = vpop.xlane.xlu0 %1839
  %v1841 = vsel %vm1807, %v1788, -inf
  %1842 = vmax.xlane.f32.xlu0 %v1841
  %v1843 = vpop.xlane.xlu0 %1842
  %v1844 = vsel %vm1807, %v1793, -inf
  %1845 = vmax.xlane.f32.xlu0 %v1844
  %v1846 = vpop.xlane.xlu0 %1845
  %v1847 = vsel %vm1807, %v1796, -inf
  %1848 = vmax.xlane.f32.xlu0 %v1847
  %v1849 = vpop.xlane.xlu0 %1848
  %v1850 = vsel %vm1807, %v1801, -inf
  %1851 = vmax.xlane.f32.xlu0 %v1850
  %v1852 = vpop.xlane.xlu0 %1851
  %v1853 = vsel %vm1807, %v1804, -inf
  %1854 = vmax.xlane.f32.xlu0 %v1853
  %v1855 = vpop.xlane.xlu0 %1854
  %v1856 = vsub.f32 %v1688, %v1810
  %v1857 = vsub.f32 %v1691, %v1813
  %v1858 = vsub.f32 %v1696, %v1816
  %v1859 = vsub.f32 %v1699, %v1819
  %v1860 = vsub.f32 %v1704, %v1822
  %v1861 = vsub.f32 %v1707, %v1825
  %v1862 = vsub.f32 %v1712, %v1828
  %v1863 = vsub.f32 %v1715, %v1831
  %v1864 = vsub.f32 %v1777, %v1834
  %v1865 = vsub.f32 %v1780, %v1837
  %v1866 = vsub.f32 %v1785, %v1840
  %v1867 = vsub.f32 %v1788, %v1843
  %v1868 = vsub.f32 %v1793, %v1846
  %v1869 = vsub.f32 %v1796, %v1849
  %v1870 = vsub.f32 %v1801, %v1852
  %v1871 = vsub.f32 %v1804, %v1855
  %v1872 = vmul.f32 %v1856, 1.442695
  %v1873 = vpow.pop %v1872
  %v1874 = vmul.f32 %v1857, 1.442695
  %v1875 = vpow.pop %v1874
  %v1876 = vmul.f32 %v1858, 1.442695
  %v1877 = vpow.pop %v1876
  %v1878 = vmul.f32 %v1859, 1.442695
  %v1879 = vpow.pop %v1878
  %v1880 = vmul.f32 %v1860, 1.442695
  %v1881 = vpow.pop %v1880
  %v1882 = vmul.f32 %v1861, 1.442695
  %v1883 = vpow.pop %v1882
  %v1884 = vmul.f32 %v1862, 1.442695
  %v1885 = vpow.pop %v1884
  %v1886 = vmul.f32 %v1863, 1.442695
  %v1887 = vpow.pop %v1886
  %v1888 = vmul.f32 %v1864, 1.442695
  %v1889 = vpow.pop %v1888
  %v1890 = vmul.f32 %v1865, 1.442695
  %v1891 = vpow.pop %v1890
  %v1892 = vmul.f32 %v1866, 1.442695
  %v1893 = vpow.pop %v1892
  %v1894 = vmul.f32 %v1867, 1.442695
  %v1895 = vpow.pop %v1894
  %v1896 = vmul.f32 %v1868, 1.442695
  %v1897 = vpow.pop %v1896
  %v1898 = vmul.f32 %v1869, 1.442695
  %v1899 = vpow.pop %v1898
  %v1900 = vmul.f32 %v1870, 1.442695
  %v1901 = vpow.pop %v1900
  %v1902 = vmul.f32 %v1871, 1.442695
  %v1903 = vpow.pop %v1902
  %v1904 = vsel %vm1807, %v1873, 0.0
  %1905 = vadd.xlane.f32.xlu0 %v1904
  %v1906 = vpop.xlane.xlu0 %1905
  %v1907 = vsel %vm1807, %v1875, 0.0
  %1908 = vadd.xlane.f32.xlu0 %v1907
  %v1909 = vpop.xlane.xlu0 %1908
  %v1910 = vsel %vm1807, %v1877, 0.0
  %1911 = vadd.xlane.f32.xlu0 %v1910
  %v1912 = vpop.xlane.xlu0 %1911
  %v1913 = vsel %vm1807, %v1879, 0.0
  %1914 = vadd.xlane.f32.xlu0 %v1913
  %v1915 = vpop.xlane.xlu0 %1914
  %v1916 = vsel %vm1807, %v1881, 0.0
  %1917 = vadd.xlane.f32.xlu0 %v1916
  %v1918 = vpop.xlane.xlu0 %1917
  %v1919 = vsel %vm1807, %v1883, 0.0
  %1920 = vadd.xlane.f32.xlu0 %v1919
  %v1921 = vpop.xlane.xlu0 %1920
  %v1922 = vsel %vm1807, %v1885, 0.0
  %1923 = vadd.xlane.f32.xlu0 %v1922
  %v1924 = vpop.xlane.xlu0 %1923
  %v1925 = vsel %vm1807, %v1887, 0.0
  %1926 = vadd.xlane.f32.xlu0 %v1925
  %v1927 = vpop.xlane.xlu0 %1926
  %v1928 = vsel %vm1807, %v1889, 0.0
  %1929 = vadd.xlane.f32.xlu0 %v1928
  %v1930 = vpop.xlane.xlu0 %1929
  %v1931 = vsel %vm1807, %v1891, 0.0
  %1932 = vadd.xlane.f32.xlu0 %v1931
  %v1933 = vpop.xlane.xlu0 %1932
  %v1934 = vsel %vm1807, %v1893, 0.0
  %1935 = vadd.xlane.f32.xlu0 %v1934
  %v1936 = vpop.xlane.xlu0 %1935
  %v1937 = vsel %vm1807, %v1895, 0.0
  %1938 = vadd.xlane.f32.xlu0 %v1937
  %v1939 = vpop.xlane.xlu0 %1938
  %v1940 = vsel %vm1807, %v1897, 0.0
  %1941 = vadd.xlane.f32.xlu0 %v1940
  %v1942 = vpop.xlane.xlu0 %1941
  %v1943 = vsel %vm1807, %v1899, 0.0
  %1944 = vadd.xlane.f32.xlu0 %v1943
  %v1945 = vpop.xlane.xlu0 %1944
  %v1946 = vsel %vm1807, %v1901, 0.0
  %1947 = vadd.xlane.f32.xlu0 %v1946
  %v1948 = vpop.xlane.xlu0 %1947
  %v1949 = vsel %vm1807, %v1903, 0.0
  %1950 = vadd.xlane.f32.xlu0 %v1949
  %v1951 = vpop.xlane.xlu0 %1950
  %v1952 = vrcp.pop %v1906
  %v1953 = vrcp.pop %v1909
  %v1954 = vrcp.pop %v1912
  %v1955 = vrcp.pop %v1915
  %v1956 = vrcp.pop %v1918
  %v1957 = vrcp.pop %v1921
  %v1958 = vrcp.pop %v1924
  %v1959 = vrcp.pop %v1927
  %v1960 = vrcp.pop %v1930
  %v1961 = vrcp.pop %v1933
  %v1962 = vrcp.pop %v1936
  %v1963 = vrcp.pop %v1939
  %v1964 = vrcp.pop %v1942
  %v1965 = vrcp.pop %v1945
  %v1966 = vrcp.pop %v1948
  %v1967 = vrcp.pop %v1951
  %v1968 = vmul.f32 %v1873, %v1952
  %v1969 = vmul.f32 %v1875, %v1953
  %v1970 = vmul.f32 %v1877, %v1954
  %v1971 = vmul.f32 %v1879, %v1955
  %v1972 = vmul.f32 %v1881, %v1956
  %v1973 = vmul.f32 %v1883, %v1957
  %v1974 = vmul.f32 %v1885, %v1958
  %v1975 = vmul.f32 %v1887, %v1959
  %v1976 = vmul.f32 %v1889, %v1960
  %v1977 = vmul.f32 %v1891, %v1961
  %v1978 = vmul.f32 %v1893, %v1962
  %v1979 = vmul.f32 %v1895, %v1963
  %v1980 = vmul.f32 %v1897, %v1964
  %v1981 = vmul.f32 %v1899, %v1965
  %v1982 = vmul.f32 %v1901, %v1966
  %v1983 = vmul.f32 %v1903, %v1967
  %v1984 = vpack.c.bf16 %v1969, %v1968
  %v1985 = vpack.c.bf16 %v1971, %v1970
  %v1986 = vpack.c.bf16 %v1973, %v1972
  %v1987 = vpack.c.bf16 %v1975, %v1974
  %v1988 = vpack.c.bf16 %v1977, %v1976
  %v1989 = vpack.c.bf16 %v1979, %v1978
  %v1990 = vpack.c.bf16 %v1981, %v1980
  %v1991 = vpack.c.bf16 %v1983, %v1982
  %v1993 = vsel %vm1807, %v1984, 0
  %v1996 = vsel %vm1807, %v1985, 0
  %v1999 = vsel %vm1807, %v1986, 0
  %v2002 = vsel %vm1807, %v1987, 0
  %2004 = vmatprep.subr.bf16.mxu0 0
  %2005 = vmatpush1.bf16.msra.mxu0 %v1613
  %2006 = vmatprep.subr.bf16.mxu0 0
  %2007 = vmatpush1.bf16.msra.mxu0 %v1614
  %2008 = vmatprep.subr.bf16.mxu0 0
  %2009 = vmatpush1.bf16.msra.mxu0 %v1615
  %2010 = vmatprep.subr.bf16.mxu0 0
  %2011 = vmatpush1.bf16.msra.mxu0 %v1616
  %2012 = vmatprep.subr.bf16.mxu0 0
  %2013 = vmatpush1.bf16.msra.mxu0 0
  %2014 = vmatprep.subr.bf16.mxu0 0
  %2015 = vmatpush1.bf16.msra.mxu0 0
  %2016 = vmatprep.subr.bf16.mxu0 0
  %2017 = vmatpush1.bf16.msra.mxu0 0
  %2018 = vmatprep.subr.bf16.mxu0 0
  %2019 = vmatpush1.bf16.msra.mxu0 0
  %2020 = vmatprep.subr.bf16.mxu0 0
  %2021 = vmatpush1.bf16.msra.mxu0 0
  %2022 = vmatprep.subr.bf16.mxu0 0
  %2023 = vmatpush1.bf16.msra.mxu0 0
  %2024 = vmatprep.subr.bf16.mxu0 0
  %2025 = vmatpush1.bf16.msra.mxu0 0
  %2026 = vmatprep.subr.bf16.mxu0 0
  %2027 = vmatpush1.bf16.msra.mxu0 0
  %2028 = vmatprep.subr.bf16.mxu0 0
  %2029 = vmatpush1.bf16.msra.mxu0 0
  %2030 = vmatprep.subr.bf16.mxu0 0
  %2031 = vmatpush1.bf16.msra.mxu0 0
  %2032 = vmatprep.subr.bf16.mxu0 0
  %2033 = vmatpush1.bf16.msra.mxu0 0
  %2034 = vmatprep.subr.bf16.mxu0 0
  %2035 = vmatpush1.bf16.msra.mxu0 0
  %2036 = vmatprep.mubr.bf16.mxu0 0
  %2037 = vmatmul.mubr.bf16.gmra.mrb[0].mxu0 %v1993
  %v2038 = vpop.f32.mrb[0].mxu0
  %v2039 = vadd.f32 0.0, %v2038
  %v2040 = vpop.f32.mrb[0].mxu0
  %v2041 = vpop.f32.mrb[0].mxu0
  %v2042 = vadd.f32 0.0, %v2041
  %v2043 = vpop.f32.mrb[0].mxu0
  %2044 = vmatprep.mubr.bf16.mxu0 0
  %2045 = vmatmul.mubr.bf16.gmra.mrb[0].mxu0 %v1996
  %v2046 = vpop.f32.mrb[0].mxu0
  %v2047 = vadd.f32 0.0, %v2046
  %v2048 = vpop.f32.mrb[0].mxu0
  %v2049 = vpop.f32.mrb[0].mxu0
  %v2050 = vadd.f32 0.0, %v2049
  %v2051 = vpop.f32.mrb[0].mxu0
  %2052 = vmatprep.mubr.bf16.mxu0 0
  %2053 = vmatmul.mubr.bf16.gmra.mrb[0].mxu0 %v1999
  %v2054 = vpop.f32.mrb[0].mxu0
  %v2055 = vadd.f32 0.0, %v2054
  %v2056 = vpop.f32.mrb[0].mxu0
  %v2057 = vpop.f32.mrb[0].mxu0
  %v2058 = vadd.f32 0.0, %v2057
  %v2059 = vpop.f32.mrb[0].mxu0
  %2060 = vmatprep.mubr.bf16.mxu0 0
  %2061 = vmatmul.mubr.bf16.gmra.mrb[0].mxu0 %v2002
  %v2062 = vpop.f32.mrb[0].mxu0
  %v2063 = vadd.f32 0.0, %v2062
  %v2064 = vpop.f32.mrb[0].mxu0
  %v2065 = vpop.f32.mrb[0].mxu0
  %v2066 = vadd.f32 0.0, %v2065
  %v2067 = vpop.f32.mrb[0].mxu0
  %2068 = vdwg.mxu0
  %v2070 = vsel %vm1807, %v1988, 0
  %v2073 = vsel %vm1807, %v1989, 0
  %v2076 = vsel %vm1807, %v1990, 0
  %v2079 = vsel %vm1807, %v1991, 0
  %2081 = vmatprep.subr.bf16.mxu0 0
  %2082 = vmatpush1.bf16.msra.mxu0 %v1617
  %2083 = vmatprep.subr.bf16.mxu0 0
  %2084 = vmatpush1.bf16.msra.mxu0 %v1618
  %2085 = vmatprep.subr.bf16.mxu0 0
  %2086 = vmatpush1.bf16.msra.mxu0 %v1619
  %2087 = vmatprep.subr.bf16.mxu0 0
  %2088 = vmatpush1.bf16.msra.mxu0 %v1620
  %2089 = vmatprep.subr.bf16.mxu0 0
  %2090 = vmatpush1.bf16.msra.mxu0 0
  %2091 = vmatprep.subr.bf16.mxu0 0
  %2092 = vmatpush1.bf16.msra.mxu0 0
  %2093 = vmatprep.subr.bf16.mxu0 0
  %2094 = vmatpush1.bf16.msra.mxu0 0
  %2095 = vmatprep.subr.bf16.mxu0 0
  %2096 = vmatpush1.bf16.msra.mxu0 0
  %2097 = vmatprep.subr.bf16.mxu0 0
  %2098 = vmatpush1.bf16.msra.mxu0 0
  %2099 = vmatprep.subr.bf16.mxu0 0
  %2100 = vmatpush1.bf16.msra.mxu0 0
  %2101 = vmatprep.subr.bf16.mxu0 0
  %2102 = vmatpush1.bf16.msra.mxu0 0
  %2103 = vmatprep.subr.bf16.mxu0 0
  %2104 = vmatpush1.bf16.msra.mxu0 0
  %2105 = vmatprep.subr.bf16.mxu0 0
  %2106 = vmatpush1.bf16.msra.mxu0 0
  %2107 = vmatprep.subr.bf16.mxu0 0
  %2108 = vmatpush1.bf16.msra.mxu0 0
  %2109 = vmatprep.subr.bf16.mxu0 0
  %2110 = vmatpush1.bf16.msra.mxu0 0
  %2111 = vmatprep.subr.bf16.mxu0 0
  %2112 = vmatpush1.bf16.msra.mxu0 0
  %2113 = vmatprep.mubr.bf16.mxu0 0
  %2114 = vmatmul.mubr.bf16.gmra.mrb[0].mxu0 %v2070
  %v2115 = vpop.f32.mrb[0].mxu0
  %v2116 = vadd.f32 0.0, %v2115
  %v2117 = vpop.f32.mrb[0].mxu0
  %v2118 = vpop.f32.mrb[0].mxu0
  %v2119 = vadd.f32 0.0, %v2118
  %v2120 = vpop.f32.mrb[0].mxu0
  %2121 = vmatprep.mubr.bf16.mxu0 0
  %2122 = vmatmul.mubr.bf16.gmra.mrb[0].mxu0 %v2073
  %v2123 = vpop.f32.mrb[0].mxu0
  %v2124 = vadd.f32 0.0, %v2123
  %v2125 = vpop.f32.mrb[0].mxu0
  %v2126 = vpop.f32.mrb[0].mxu0
  %v2127 = vadd.f32 0.0, %v2126
  %v2128 = vpop.f32.mrb[0].mxu0
  %2129 = vmatprep.mubr.bf16.mxu0 0
  %2130 = vmatmul.mubr.bf16.gmra.mrb[0].mxu0 %v2076
  %v2131 = vpop.f32.mrb[0].mxu0
  %v2132 = vadd.f32 0.0, %v2131
  %v2133 = vpop.f32.mrb[0].mxu0
  %v2134 = vpop.f32.mrb[0].mxu0
  %v2135 = vadd.f32 0.0, %v2134
  %v2136 = vpop.f32.mrb[0].mxu0
  %2137 = vmatprep.mubr.bf16.mxu0 0
  %2138 = vmatmul.mubr.bf16.gmra.mrb[0].mxu0 %v2079
  %v2139 = vpop.f32.mrb[0].mxu0
  %v2140 = vadd.f32 0.0, %v2139
  %v2141 = vpop.f32.mrb[0].mxu0
  %v2142 = vpop.f32.mrb[0].mxu0
  %v2143 = vadd.f32 0.0, %v2142
  %v2144 = vpop.f32.mrb[0].mxu0
  %2145 = vdwg.mxu0
  %v2146 = vmax.f32 %v2039, 0.0
  %v2147 = vmax.f32 %v2042, 0.0
  %v2148 = vmax.f32 %v2047, 0.0
  %v2149 = vmax.f32 %v2050, 0.0
  %v2150 = vmax.f32 %v2055, 0.0
  %v2151 = vmax.f32 %v2058, 0.0
  %v2152 = vmax.f32 %v2063, 0.0
  %v2153 = vmax.f32 %v2066, 0.0
  %v2154 = vmax.f32 %v2116, 0.0
  %v2155 = vmax.f32 %v2119, 0.0
  %v2156 = vmax.f32 %v2124, 0.0
  %v2157 = vmax.f32 %v2127, 0.0
  %v2158 = vmax.f32 %v2132, 0.0
  %v2159 = vmax.f32 %v2135, 0.0
  %v2160 = vmax.f32 %v2140, 0.0
  %v2161 = vmax.f32 %v2143, 0.0
  %v2162 = vpack.c.bf16 %v2147, %v2146
  %v2163 = vpack.c.bf16 %v2149, %v2148
  %v2164 = vpack.c.bf16 %v2151, %v2150
  %v2165 = vpack.c.bf16 %v2153, %v2152
  %v2166 = vpack.c.bf16 %v2155, %v2154
  %v2167 = vpack.c.bf16 %v2157, %v2156
  %v2168 = vpack.c.bf16 %v2159, %v2158
  %v2169 = vpack.c.bf16 %v2161, %v2160
  %v2170 = vld [vmem:[%s10] sm:$0xf]
  %s2171 = scalar_lea.vmem %s0, 64
  %v2172 = vld [vmem:[%s2171] sm:$0xff]
  %v2173 = vld [vmem:[%s2171 + $0x8] sm:$0xff]
  %v2174 = vld [vmem:[%s2171 + $0x10] sm:$0xff]
  %v2175 = vld [vmem:[%s2171 + $0x18] sm:$0xff]
  %v2176 = vld [vmem:[%s2171 + $0x20] sm:$0xff]
  %v2177 = vld [vmem:[%s2171 + $0x28] sm:$0xff]
  %v2178 = vld [vmem:[%s2171 + $0x30] sm:$0xff]
  %v2179 = vld [vmem:[%s2171 + $0x38] sm:$0xff]
  %v2180 = vld [vmem:[%s2171 + $0x100] sm:$0xff]
  %v2181 = vld [vmem:[%s2171 + $0x108] sm:$0xff]
  %v2182 = vld [vmem:[%s2171 + $0x110] sm:$0xff]
  %v2183 = vld [vmem:[%s2171 + $0x118] sm:$0xff]
  %v2184 = vld [vmem:[%s2171 + $0x120] sm:$0xff]
  %v2185 = vld [vmem:[%s2171 + $0x128] sm:$0xff]
  %v2186 = vld [vmem:[%s2171 + $0x130] sm:$0xff]
  %v2187 = vld [vmem:[%s2171 + $0x138] sm:$0xff]
  %v2188 = vadd.f32 %v2039, %v2172
  %v2189 = vadd.f32 %v2042, %v2173
  %v2190 = vadd.f32 %v2047, %v2174
  %v2191 = vadd.f32 %v2050, %v2175
  %v2192 = vadd.f32 %v2055, %v2176
  %v2193 = vadd.f32 %v2058, %v2177
  %v2194 = vadd.f32 %v2063, %v2178
  %v2195 = vadd.f32 %v2066, %v2179
  %v2196 = vadd.f32 %v2116, %v2180
  %v2197 = vadd.f32 %v2119, %v2181
  %v2198 = vadd.f32 %v2124, %v2182
  %v2199 = vadd.f32 %v2127, %v2183
  %v2200 = vadd.f32 %v2132, %v2184
  %v2201 = vadd.f32 %v2135, %v2185
  %v2202 = vadd.f32 %v2140, %v2186
  %v2203 = vadd.f32 %v2143, %v2187
  %v2204 = vpack.c.bf16 %v2189, %v2188
  %v2205 = vpack.c.bf16 %v2191, %v2190
  %v2206 = vpack.c.bf16 %v2193, %v2192
  %v2207 = vpack.c.bf16 %v2195, %v2194
  %v2208 = vpack.c.bf16 %v2197, %v2196
  %v2209 = vpack.c.bf16 %v2199, %v2198
  %v2210 = vpack.c.bf16 %v2201, %v2200
  %v2211 = vpack.c.bf16 %v2203, %v2202
  %s2212 = scalar_lea.vmem %s1, 4
  %v2213 = vld [vmem:[%s2212] sm:$0xf]
  %s2214 = scalar_lea.vmem %s4, 1
  %v2215 = vld [vmem:[%s2214] sm:$0x1]
  %v2217 = vlaneseq
  %v2218 = vshrl.u32 %v2217, 7
  %v2219 = vsub.s32 0, %v2218
  %v2220 = vrot.slane %v2215, %v2219
  %v2223 = vsel %vm74, %v2204, 0
  %v2226 = vsel %vm74, %v2205, 0
  %v2229 = vsel %vm74, %v2206, 0
  %v2232 = vsel %vm74, %v2207, 0
  %v2235 = vsel %vm74, %v2208, 0
  %v2238 = vsel %vm74, %v2209, 0
  %v2241 = vsel %vm74, %v2210, 0
  %v2244 = vsel %vm74, %v2211, 0
  %v2247 = vsel %vm99, %v2213, 0
  %2249 = vmatprep.subr.bf16.mxu0 0
  %2250 = vmatpush1.bf16.msra.mxu0 %v2247
  %2251 = vmatprep.subr.bf16.mxu0 0
  %2252 = vmatpush1.bf16.msra.mxu0 0
  %2253 = vmatprep.subr.bf16.mxu0 0
  %2254 = vmatpush1.bf16.msra.mxu0 0
  %2255 = vmatprep.subr.bf16.mxu0 0
  %2256 = vmatpush1.bf16.msra.mxu0 0
  %2257 = vmatprep.subr.bf16.mxu0 0
  %2258 = vmatpush1.bf16.msra.mxu0 0
  %2259 = vmatprep.subr.bf16.mxu0 0
  %2260 = vmatpush1.bf16.msra.mxu0 0
  %2261 = vmatprep.subr.bf16.mxu0 0
  %2262 = vmatpush1.bf16.msra.mxu0 0
  %2263 = vmatprep.subr.bf16.mxu0 0
  %2264 = vmatpush1.bf16.msra.mxu0 0
  %2265 = vmatprep.subr.bf16.mxu0 0
  %2266 = vmatpush1.bf16.msra.mxu0 0
  %2267 = vmatprep.subr.bf16.mxu0 0
  %2268 = vmatpush1.bf16.msra.mxu0 0
  %2269 = vmatprep.subr.bf16.mxu0 0
  %2270 = vmatpush1.bf16.msra.mxu0 0
  %2271 = vmatprep.subr.bf16.mxu0 0
  %2272 = vmatpush1.bf16.msra.mxu0 0
  %2273 = vmatprep.subr.bf16.mxu0 0
  %2274 = vmatpush1.bf16.msra.mxu0 0
  %2275 = vmatprep.subr.bf16.mxu0 0
  %2276 = vmatpush1.bf16.msra.mxu0 0
  %2277 = vmatprep.subr.bf16.mxu0 0
  %2278 = vmatpush1.bf16.msra.mxu0 0
  %2279 = vmatprep.subr.bf16.mxu0 0
  %2280 = vmatpush1.bf16.msra.mxu0 0
  %2281 = vmatprep.mubr.bf16.mxu0 0
  %2282 = vmatmul.mubr.bf16.gmra.mrb[0].mxu0 %v2223
  %v2283 = vpop.f32.mrb[0].mxu0
  %v2284 = vadd.f32 %v2220, %v2283
  %v2285 = vpop.f32.mrb[0].mxu0
  %v2286 = vpop.f32.mrb[0].mxu0
  %v2287 = vadd.f32 %v2220, %v2286
  %v2288 = vpop.f32.mrb[0].mxu0
  %2289 = vmatprep.mubr.bf16.mxu0 0
  %2290 = vmatmul.mubr.bf16.gmra.mrb[0].mxu0 %v2226
  %v2291 = vpop.f32.mrb[0].mxu0
  %v2292 = vadd.f32 %v2220, %v2291
  %v2293 = vpop.f32.mrb[0].mxu0
  %v2294 = vpop.f32.mrb[0].mxu0
  %v2295 = vadd.f32 %v2220, %v2294
  %v2296 = vpop.f32.mrb[0].mxu0
  %2297 = vmatprep.mubr.bf16.mxu0 0
  %2298 = vmatmul.mubr.bf16.gmra.mrb[0].mxu0 %v2229
  %v2299 = vpop.f32.mrb[0].mxu0
  %v2300 = vadd.f32 %v2220, %v2299
  %v2301 = vpop.f32.mrb[0].mxu0
  %v2302 = vpop.f32.mrb[0].mxu0
  %v2303 = vadd.f32 %v2220, %v2302
  %v2304 = vpop.f32.mrb[0].mxu0
  %2305 = vmatprep.mubr.bf16.mxu0 0
  %2306 = vmatmul.mubr.bf16.gmra.mrb[0].mxu0 %v2232
  %v2307 = vpop.f32.mrb[0].mxu0
  %v2308 = vadd.f32 %v2220, %v2307
  %v2309 = vpop.f32.mrb[0].mxu0
  %v2310 = vpop.f32.mrb[0].mxu0
  %v2311 = vadd.f32 %v2220, %v2310
  %v2312 = vpop.f32.mrb[0].mxu0
  %2313 = vmatprep.mubr.bf16.mxu0 0
  %2314 = vmatmul.mubr.bf16.gmra.mrb[0].mxu0 %v2235
  %v2315 = vpop.f32.mrb[0].mxu0
  %v2316 = vadd.f32 %v2220, %v2315
  %v2317 = vpop.f32.mrb[0].mxu0
  %v2318 = vpop.f32.mrb[0].mxu0
  %v2319 = vadd.f32 %v2220, %v2318
  %v2320 = vpop.f32.mrb[0].mxu0
  %2321 = vmatprep.mubr.bf16.mxu0 0
  %2322 = vmatmul.mubr.bf16.gmra.mrb[0].mxu0 %v2238
  %v2323 = vpop.f32.mrb[0].mxu0
  %v2324 = vadd.f32 %v2220, %v2323
  %v2325 = vpop.f32.mrb[0].mxu0
  %v2326 = vpop.f32.mrb[0].mxu0
  %v2327 = vadd.f32 %v2220, %v2326
  %v2328 = vpop.f32.mrb[0].mxu0
  %2329 = vmatprep.mubr.bf16.mxu0 0
  %2330 = vmatmul.mubr.bf16.gmra.mrb[0].mxu0 %v2241
  %v2331 = vpop.f32.mrb[0].mxu0
  %v2332 = vadd.f32 %v2220, %v2331
  %v2333 = vpop.f32.mrb[0].mxu0
  %v2334 = vpop.f32.mrb[0].mxu0
  %v2335 = vadd.f32 %v2220, %v2334
  %v2336 = vpop.f32.mrb[0].mxu0
  %2337 = vmatprep.mubr.bf16.mxu0 0
  %2338 = vmatmul.mubr.bf16.gmra.mrb[0].mxu0 %v2244
  %v2339 = vpop.f32.mrb[0].mxu0
  %v2340 = vadd.f32 %v2220, %v2339
  %v2341 = vpop.f32.mrb[0].mxu0
  %v2342 = vpop.f32.mrb[0].mxu0
  %v2343 = vadd.f32 %v2220, %v2342
  %v2344 = vpop.f32.mrb[0].mxu0
  %2345 = vdwg.mxu0
  %s2346 = scalar_lea.vmem %s2, 4
  %v2347 = vld [vmem:[%s2346] sm:$0xf]
  %s2348 = scalar_lea.vmem %s5, 1
  %v2349 = vld [vmem:[%s2348] sm:$0x1]
  %v2351 = vlaneseq
  %v2352 = vshrl.u32 %v2351, 7
  %v2353 = vsub.s32 0, %v2352
  %v2354 = vrot.slane %v2349, %v2353
  %v2357 = vsel %vm99, %v2347, 0
  %2359 = vmatprep.subr.bf16.mxu0 0
  %2360 = vmatpush1.bf16.msra.mxu0 %v2357
  %2361 = vmatprep.subr.bf16.mxu0 0
  %2362 = vmatpush1.bf16.msra.mxu0 0
  %2363 = vmatprep.subr.bf16.mxu0 0
  %2364 = vmatpush1.bf16.msra.mxu0 0
  %2365 = vmatprep.subr.bf16.mxu0 0
  %2366 = vmatpush1.bf16.msra.mxu0 0
  %2367 = vmatprep.subr.bf16.mxu0 0
  %2368 = vmatpush1.bf16.msra.mxu0 0
  %2369 = vmatprep.subr.bf16.mxu0 0
  %2370 = vmatpush1.bf16.msra.mxu0 0
  %2371 = vmatprep.subr.bf16.mxu0 0
  %2372 = vmatpush1.bf16.msra.mxu0 0
  %2373 = vmatprep.subr.bf16.mxu0 0
  %2374 = vmatpush1.bf16.msra.mxu0 0
  %2375 = vmatprep.subr.bf16.mxu0 0
  %2376 = vmatpush1.bf16.msra.mxu0 0
  %2377 = vmatprep.subr.bf16.mxu0 0
  %2378 = vmatpush1.bf16.msra.mxu0 0
  %2379 = vmatprep.subr.bf16.mxu0 0
  %2380 = vmatpush1.bf16.msra.mxu0 0
  %2381 = vmatprep.subr.bf16.mxu0 0
  %2382 = vmatpush1.bf16.msra.mxu0 0
  %2383 = vmatprep.subr.bf16.mxu0 0
  %2384 = vmatpush1.bf16.msra.mxu0 0
  %2385 = vmatprep.subr.bf16.mxu0 0
  %2386 = vmatpush1.bf16.msra.mxu0 0
  %2387 = vmatprep.subr.bf16.mxu0 0
  %2388 = vmatpush1.bf16.msra.mxu0 0
  %2389 = vmatprep.subr.bf16.mxu0 0
  %2390 = vmatpush1.bf16.msra.mxu0 0
  %2391 = vmatprep.mubr.bf16.mxu0 0
  %2392 = vmatmul.mubr.bf16.gmra.mrb[0].mxu0 %v2223
  %v2393 = vpop.f32.mrb[0].mxu0
  %v2394 = vadd.f32 %v2354, %v2393
  %v2395 = vpop.f32.mrb[0].mxu0
  %v2396 = vpop.f32.mrb[0].mxu0
  %v2397 = vadd.f32 %v2354, %v2396
  %v2398 = vpop.f32.mrb[0].mxu0
  %2399 = vmatprep.mubr.bf16.mxu0 0
  %2400 = vmatmul.mubr.bf16.gmra.mrb[0].mxu0 %v2226
  %v2401 = vpop.f32.mrb[0].mxu0
  %v2402 = vadd.f32 %v2354, %v2401
  %v2403 = vpop.f32.mrb[0].mxu0
  %v2404 = vpop.f32.mrb[0].mxu0
  %v2405 = vadd.f32 %v2354, %v2404
  %v2406 = vpop.f32.mrb[0].mxu0
  %2407 = vmatprep.mubr.bf16.mxu0 0
  %2408 = vmatmul.mubr.bf16.gmra.mrb[0].mxu0 %v2229
  %v2409 = vpop.f32.mrb[0].mxu0
  %v2410 = vadd.f32 %v2354, %v2409
  %v2411 = vpop.f32.mrb[0].mxu0
  %v2412 = vpop.f32.mrb[0].mxu0
  %v2413 = vadd.f32 %v2354, %v2412
  %v2414 = vpop.f32.mrb[0].mxu0
  %2415 = vmatprep.mubr.bf16.mxu0 0
  %2416 = vmatmul.mubr.bf16.gmra.mrb[0].mxu0 %v2232
  %v2417 = vpop.f32.mrb[0].mxu0
  %v2418 = vadd.f32 %v2354, %v2417
  %v2419 = vpop.f32.mrb[0].mxu0
  %v2420 = vpop.f32.mrb[0].mxu0
  %v2421 = vadd.f32 %v2354, %v2420
  %v2422 = vpop.f32.mrb[0].mxu0
  %2423 = vmatprep.mubr.bf16.mxu0 0
  %2424 = vmatmul.mubr.bf16.gmra.mrb[0].mxu0 %v2235
  %v2425 = vpop.f32.mrb[0].mxu0
  %v2426 = vadd.f32 %v2354, %v2425
  %v2427 = vpop.f32.mrb[0].mxu0
  %v2428 = vpop.f32.mrb[0].mxu0
  %v2429 = vadd.f32 %v2354, %v2428
  %v2430 = vpop.f32.mrb[0].mxu0
  %2431 = vmatprep.mubr.bf16.mxu0 0
  %2432 = vmatmul.mubr.bf16.gmra.mrb[0].mxu0 %v2238
  %v2433 = vpop.f32.mrb[0].mxu0
  %v2434 = vadd.f32 %v2354, %v2433
  %v2435 = vpop.f32.mrb[0].mxu0
  %v2436 = vpop.f32.mrb[0].mxu0
  %v2437 = vadd.f32 %v2354, %v2436
  %v2438 = vpop.f32.mrb[0].mxu0
  %2439 = vmatprep.mubr.bf16.mxu0 0
  %2440 = vmatmul.mubr.bf16.gmra.mrb[0].mxu0 %v2241
  %v2441 = vpop.f32.mrb[0].mxu0
  %v2442 = vadd.f32 %v2354, %v2441
  %v2443 = vpop.f32.mrb[0].mxu0
  %v2444 = vpop.f32.mrb[0].mxu0
  %v2445 = vadd.f32 %v2354, %v2444
  %v2446 = vpop.f32.mrb[0].mxu0
  %2447 = vmatprep.mubr.bf16.mxu0 0
  %2448 = vmatmul.mubr.bf16.gmra.mrb[0].mxu0 %v2244
  %v2449 = vpop.f32.mrb[0].mxu0
  %v2450 = vadd.f32 %v2354, %v2449
  %v2451 = vpop.f32.mrb[0].mxu0
  %v2452 = vpop.f32.mrb[0].mxu0
  %v2453 = vadd.f32 %v2354, %v2452
  %v2454 = vpop.f32.mrb[0].mxu0
  %2455 = vdwg.mxu0
  %s2456 = scalar_lea.vmem %s3, 4
  %v2457 = vld [vmem:[%s2456] sm:$0xf]
  %s2458 = scalar_lea.vmem %s6, 1
  %v2459 = vld [vmem:[%s2458] sm:$0x1]
  %v2461 = vlaneseq
  %v2462 = vshrl.u32 %v2461, 7
  %v2463 = vsub.s32 0, %v2462
  %v2464 = vrot.slane %v2459, %v2463
  %v2467 = vsel %vm99, %v2457, 0
  %2469 = vmatprep.subr.bf16.mxu0 0
  %2470 = vmatpush1.bf16.msra.mxu0 %v2467
  %2471 = vmatprep.subr.bf16.mxu0 0
  %2472 = vmatpush1.bf16.msra.mxu0 0
  %2473 = vmatprep.subr.bf16.mxu0 0
  %2474 = vmatpush1.bf16.msra.mxu0 0
  %2475 = vmatprep.subr.bf16.mxu0 0
  %2476 = vmatpush1.bf16.msra.mxu0 0
  %2477 = vmatprep.subr.bf16.mxu0 0
  %2478 = vmatpush1.bf16.msra.mxu0 0
  %2479 = vmatprep.subr.bf16.mxu0 0
  %2480 = vmatpush1.bf16.msra.mxu0 0
  %2481 = vmatprep.subr.bf16.mxu0 0
  %2482 = vmatpush1.bf16.msra.mxu0 0
  %2483 = vmatprep.subr.bf16.mxu0 0
  %2484 = vmatpush1.bf16.msra.mxu0 0
  %2485 = vmatprep.subr.bf16.mxu0 0
  %2486 = vmatpush1.bf16.msra.mxu0 0
  %2487 = vmatprep.subr.bf16.mxu0 0
  %2488 = vmatpush1.bf16.msra.mxu0 0
  %2489 = vmatprep.subr.bf16.mxu0 0
  %2490 = vmatpush1.bf16.msra.mxu0 0
  %2491 = vmatprep.subr.bf16.mxu0 0
  %2492 = vmatpush1.bf16.msra.mxu0 0
  %2493 = vmatprep.subr.bf16.mxu0 0
  %2494 = vmatpush1.bf16.msra.mxu0 0
  %2495 = vmatprep.subr.bf16.mxu0 0
  %2496 = vmatpush1.bf16.msra.mxu0 0
  %2497 = vmatprep.subr.bf16.mxu0 0
  %2498 = vmatpush1.bf16.msra.mxu0 0
  %2499 = vmatprep.subr.bf16.mxu0 0
  %2500 = vmatpush1.bf16.msra.mxu0 0
  %2501 = vmatprep.mubr.bf16.mxu0 0
  %2502 = vmatmul.mubr.bf16.gmra.mrb[0].mxu0 %v2223
  %v2503 = vpop.f32.mrb[0].mxu0
  %v2504 = vadd.f32 %v2464, %v2503
  %v2505 = vpop.f32.mrb[0].mxu0
  %v2506 = vpop.f32.mrb[0].mxu0
  %v2507 = vadd.f32 %v2464, %v2506
  %v2508 = vpop.f32.mrb[0].mxu0
  %2509 = vmatprep.mubr.bf16.mxu0 0
  %2510 = vmatmul.mubr.bf16.gmra.mrb[0].mxu0 %v2226
  %v2511 = vpop.f32.mrb[0].mxu0
  %v2512 = vadd.f32 %v2464, %v2511
  %v2513 = vpop.f32.mrb[0].mxu0
  %v2514 = vpop.f32.mrb[0].mxu0
  %v2515 = vadd.f32 %v2464, %v2514
  %v2516 = vpop.f32.mrb[0].mxu0
  %2517 = vmatprep.mubr.bf16.mxu0 0
  %2518 = vmatmul.mubr.bf16.gmra.mrb[0].mxu0 %v2229
  %v2519 = vpop.f32.mrb[0].mxu0
  %v2520 = vadd.f32 %v2464, %v2519
  %v2521 = vpop.f32.mrb[0].mxu0
  %v2522 = vpop.f32.mrb[0].mxu0
  %v2523 = vadd.f32 %v2464, %v2522
  %v2524 = vpop.f32.mrb[0].mxu0
  %2525 = vmatprep.mubr.bf16.mxu0 0
  %2526 = vmatmul.mubr.bf16.gmra.mrb[0].mxu0 %v2232
  %v2527 = vpop.f32.mrb[0].mxu0
  %v2528 = vadd.f32 %v2464, %v2527
  %v2529 = vpop.f32.mrb[0].mxu0
  %v2530 = vpop.f32.mrb[0].mxu0
  %v2531 = vadd.f32 %v2464, %v2530
  %v2532 = vpop.f32.mrb[0].mxu0
  %2533 = vmatprep.mubr.bf16.mxu0 0
  %2534 = vmatmul.mubr.bf16.gmra.mrb[0].mxu0 %v2235
  %v2535 = vpop.f32.mrb[0].mxu0
  %v2536 = vadd.f32 %v2464, %v2535
  %v2537 = vpop.f32.mrb[0].mxu0
  %v2538 = vpop.f32.mrb[0].mxu0
  %v2539 = vadd.f32 %v2464, %v2538
  %v2540 = vpop.f32.mrb[0].mxu0
  %2541 = vmatprep.mubr.bf16.mxu0 0
  %2542 = vmatmul.mubr.bf16.gmra.mrb[0].mxu0 %v2238
  %v2543 = vpop.f32.mrb[0].mxu0
  %v2544 = vadd.f32 %v2464, %v2543
  %v2545 = vpop.f32.mrb[0].mxu0
  %v2546 = vpop.f32.mrb[0].mxu0
  %v2547 = vadd.f32 %v2464, %v2546
  %v2548 = vpop.f32.mrb[0].mxu0
  %2549 = vmatprep.mubr.bf16.mxu0 0
  %2550 = vmatmul.mubr.bf16.gmra.mrb[0].mxu0 %v2241
  %v2551 = vpop.f32.mrb[0].mxu0
  %v2552 = vadd.f32 %v2464, %v2551
  %v2553 = vpop.f32.mrb[0].mxu0
  %v2554 = vpop.f32.mrb[0].mxu0
  %v2555 = vadd.f32 %v2464, %v2554
  %v2556 = vpop.f32.mrb[0].mxu0
  %2557 = vmatprep.mubr.bf16.mxu0 0
  %2558 = vmatmul.mubr.bf16.gmra.mrb[0].mxu0 %v2244
  %v2559 = vpop.f32.mrb[0].mxu0
  %v2560 = vadd.f32 %v2464, %v2559
  %v2561 = vpop.f32.mrb[0].mxu0
  %v2562 = vpop.f32.mrb[0].mxu0
  %v2563 = vadd.f32 %v2464, %v2562
  %v2564 = vpop.f32.mrb[0].mxu0
  %2565 = vdwg.mxu0
  %v2566 = vrot.slane %v2284, 6
  %v2567 = vrot.slane %v2287, 6
  %v2568 = vrot.slane %v2292, 6
  %v2569 = vrot.slane %v2295, 6
  %v2570 = vrot.slane %v2300, 6
  %v2571 = vrot.slane %v2303, 6
  %v2572 = vrot.slane %v2308, 6
  %v2573 = vrot.slane %v2311, 6
  %v2574 = vrot.slane %v2316, 6
  %v2575 = vrot.slane %v2319, 6
  %v2576 = vrot.slane %v2324, 6
  %v2577 = vrot.slane %v2327, 6
  %v2578 = vrot.slane %v2332, 6
  %v2579 = vrot.slane %v2335, 6
  %v2580 = vrot.slane %v2340, 6
  %v2581 = vrot.slane %v2343, 6
  %v2582 = vsel %vm434, %v2580, %v2581
  %v2583 = vsel %vm434, %v2579, %v2580
  %v2584 = vsel %vm434, %v2578, %v2579
  %v2585 = vsel %vm434, %v2577, %v2578
  %v2586 = vsel %vm434, %v2576, %v2577
  %v2587 = vsel %vm434, %v2575, %v2576
  %v2588 = vsel %vm434, %v2574, %v2575
  %v2589 = vsel %vm434, %v2573, %v2574
  %v2590 = vsel %vm434, %v2572, %v2573
  %v2591 = vsel %vm434, %v2571, %v2572
  %v2592 = vsel %vm434, %v2570, %v2571
  %v2593 = vsel %vm434, %v2569, %v2570
  %v2594 = vsel %vm434, %v2568, %v2569
  %v2595 = vsel %vm434, %v2567, %v2568
  %v2596 = vsel %vm434, %v2566, %v2567
  %v2597 = vsel %vm434, %v2581, %v2566
  %s2598 = scalar_lea.vmem %s7, 1600
  %v2599 = vld [vmem:[%s2598] sm:$0xff]
  %v2600 = vld [vmem:[%s2598 + $0x8] sm:$0xff]
  %v2601 = vld [vmem:[%s2598 + $0x10] sm:$0xff]
  %v2602 = vld [vmem:[%s2598 + $0x18] sm:$0xff]
  %v2603 = vld [vmem:[%s2598 + $0x20] sm:$0xff]
  %v2604 = vld [vmem:[%s2598 + $0x28] sm:$0xff]
  %v2605 = vld [vmem:[%s2598 + $0x30] sm:$0xff]
  %v2606 = vld [vmem:[%s2598 + $0x38] sm:$0xff]
  %v2607 = vmul.f32 %v2583, %v2599
  %v2608 = vmul.f32 %v2582, %v2600
  %v2609 = vmul.f32 %v2597, %v2601
  %v2610 = vmul.f32 %v2596, %v2602
  %v2611 = vmul.f32 %v2595, %v2603
  %v2612 = vmul.f32 %v2594, %v2604
  %v2613 = vmul.f32 %v2593, %v2605
  %v2614 = vmul.f32 %v2592, %v2606
  %v2615 = vmul.f32 %v2591, %v2599
  %v2616 = vmul.f32 %v2590, %v2600
  %v2617 = vmul.f32 %v2589, %v2601
  %v2618 = vmul.f32 %v2588, %v2602
  %v2619 = vmul.f32 %v2587, %v2603
  %v2620 = vmul.f32 %v2586, %v2604
  %v2621 = vmul.f32 %v2585, %v2605
  %v2622 = vmul.f32 %v2584, %v2606
  %v2623 = vadd.f32 %v2607, 0.0
  %v2624 = vadd.f32 %v2608, 0.0
  %v2625 = vadd.f32 %v2609, 0.0
  %v2626 = vadd.f32 %v2610, 0.0
  %v2627 = vadd.f32 %v2611, 0.0
  %v2628 = vadd.f32 %v2612, 0.0
  %v2629 = vadd.f32 %v2613, 0.0
  %v2630 = vadd.f32 %v2614, 0.0
  %v2631 = vadd.f32 %v2615, 0.0
  %v2632 = vadd.f32 %v2616, 0.0
  %v2633 = vadd.f32 %v2617, 0.0
  %v2634 = vadd.f32 %v2618, 0.0
  %v2635 = vadd.f32 %v2619, 0.0
  %v2636 = vadd.f32 %v2620, 0.0
  %v2637 = vadd.f32 %v2621, 0.0
  %v2638 = vadd.f32 %v2622, 0.0
  %v2639 = vrot.slane %v2284, 7
  %v2640 = vrot.slane %v2287, 7
  %v2641 = vrot.slane %v2292, 7
  %v2642 = vrot.slane %v2295, 7
  %v2643 = vrot.slane %v2300, 7
  %v2644 = vrot.slane %v2303, 7
  %v2645 = vrot.slane %v2308, 7
  %v2646 = vrot.slane %v2311, 7
  %v2647 = vrot.slane %v2316, 7
  %v2648 = vrot.slane %v2319, 7
  %v2649 = vrot.slane %v2324, 7
  %v2650 = vrot.slane %v2327, 7
  %v2651 = vrot.slane %v2332, 7
  %v2652 = vrot.slane %v2335, 7
  %v2653 = vrot.slane %v2340, 7
  %v2654 = vrot.slane %v2343, 7
  %v2655 = vsel %vm507, %v2653, %v2654
  %v2656 = vsel %vm507, %v2652, %v2653
  %v2657 = vsel %vm507, %v2651, %v2652
  %v2658 = vsel %vm507, %v2650, %v2651
  %v2659 = vsel %vm507, %v2649, %v2650
  %v2660 = vsel %vm507, %v2648, %v2649
  %v2661 = vsel %vm507, %v2647, %v2648
  %v2662 = vsel %vm507, %v2646, %v2647
  %v2663 = vsel %vm507, %v2645, %v2646
  %v2664 = vsel %vm507, %v2644, %v2645
  %v2665 = vsel %vm507, %v2643, %v2644
  %v2666 = vsel %vm507, %v2642, %v2643
  %v2667 = vsel %vm507, %v2641, %v2642
  %v2668 = vsel %vm507, %v2640, %v2641
  %v2669 = vsel %vm507, %v2639, %v2640
  %v2670 = vsel %vm507, %v2654, %v2639
  %s2671 = scalar_lea.vmem %s7, 1664
  %v2672 = vld [vmem:[%s2671] sm:$0xff]
  %v2673 = vld [vmem:[%s2671 + $0x8] sm:$0xff]
  %v2674 = vld [vmem:[%s2671 + $0x10] sm:$0xff]
  %v2675 = vld [vmem:[%s2671 + $0x18] sm:$0xff]
  %v2676 = vld [vmem:[%s2671 + $0x20] sm:$0xff]
  %v2677 = vld [vmem:[%s2671 + $0x28] sm:$0xff]
  %v2678 = vld [vmem:[%s2671 + $0x30] sm:$0xff]
  %v2679 = vld [vmem:[%s2671 + $0x38] sm:$0xff]
  %v2680 = vmul.f32 %v2656, %v2672
  %v2681 = vmul.f32 %v2655, %v2673
  %v2682 = vmul.f32 %v2670, %v2674
  %v2683 = vmul.f32 %v2669, %v2675
  %v2684 = vmul.f32 %v2668, %v2676
  %v2685 = vmul.f32 %v2667, %v2677
  %v2686 = vmul.f32 %v2666, %v2678
  %v2687 = vmul.f32 %v2665, %v2679
  %v2688 = vmul.f32 %v2664, %v2672
  %v2689 = vmul.f32 %v2663, %v2673
  %v2690 = vmul.f32 %v2662, %v2674
  %v2691 = vmul.f32 %v2661, %v2675
  %v2692 = vmul.f32 %v2660, %v2676
  %v2693 = vmul.f32 %v2659, %v2677
  %v2694 = vmul.f32 %v2658, %v2678
  %v2695 = vmul.f32 %v2657, %v2679
  %v2696 = vadd.f32 %v2623, %v2680
  %v2697 = vadd.f32 %v2624, %v2681
  %v2698 = vadd.f32 %v2625, %v2682
  %v2699 = vadd.f32 %v2626, %v2683
  %v2700 = vadd.f32 %v2627, %v2684
  %v2701 = vadd.f32 %v2628, %v2685
  %v2702 = vadd.f32 %v2629, %v2686
  %v2703 = vadd.f32 %v2630, %v2687
  %v2704 = vadd.f32 %v2631, %v2688
  %v2705 = vadd.f32 %v2632, %v2689
  %v2706 = vadd.f32 %v2633, %v2690
  %v2707 = vadd.f32 %v2634, %v2691
  %v2708 = vadd.f32 %v2635, %v2692
  %v2709 = vadd.f32 %v2636, %v2693
  %v2710 = vadd.f32 %v2637, %v2694
  %v2711 = vadd.f32 %v2638, %v2695
  %s2712 = scalar_lea.vmem %s7, 1728
  %v2713 = vld [vmem:[%s2712] sm:$0xff]
  %v2714 = vld [vmem:[%s2712 + $0x8] sm:$0xff]
  %v2715 = vld [vmem:[%s2712 + $0x10] sm:$0xff]
  %v2716 = vld [vmem:[%s2712 + $0x18] sm:$0xff]
  %v2717 = vld [vmem:[%s2712 + $0x20] sm:$0xff]
  %v2718 = vld [vmem:[%s2712 + $0x28] sm:$0xff]
  %v2719 = vld [vmem:[%s2712 + $0x30] sm:$0xff]
  %v2720 = vld [vmem:[%s2712 + $0x38] sm:$0xff]
  %v2721 = vmul.f32 %v2340, %v2713
  %v2722 = vmul.f32 %v2343, %v2714
  %v2723 = vmul.f32 %v2284, %v2715
  %v2724 = vmul.f32 %v2287, %v2716
  %v2725 = vmul.f32 %v2292, %v2717
  %v2726 = vmul.f32 %v2295, %v2718
  %v2727 = vmul.f32 %v2300, %v2719
  %v2728 = vmul.f32 %v2303, %v2720
  %v2729 = vmul.f32 %v2308, %v2713
  %v2730 = vmul.f32 %v2311, %v2714
  %v2731 = vmul.f32 %v2316, %v2715
  %v2732 = vmul.f32 %v2319, %v2716
  %v2733 = vmul.f32 %v2324, %v2717
  %v2734 = vmul.f32 %v2327, %v2718
  %v2735 = vmul.f32 %v2332, %v2719
  %v2736 = vmul.f32 %v2335, %v2720
  %v2737 = vadd.f32 %v2696, %v2721
  %v2738 = vadd.f32 %v2697, %v2722
  %v2739 = vadd.f32 %v2698, %v2723
  %v2740 = vadd.f32 %v2699, %v2724
  %v2741 = vadd.f32 %v2700, %v2725
  %v2742 = vadd.f32 %v2701, %v2726
  %v2743 = vadd.f32 %v2702, %v2727
  %v2744 = vadd.f32 %v2703, %v2728
  %v2745 = vadd.f32 %v2704, %v2729
  %v2746 = vadd.f32 %v2705, %v2730
  %v2747 = vadd.f32 %v2706, %v2731
  %v2748 = vadd.f32 %v2707, %v2732
  %v2749 = vadd.f32 %v2708, %v2733
  %v2750 = vadd.f32 %v2709, %v2734
  %v2751 = vadd.f32 %v2710, %v2735
  %v2752 = vadd.f32 %v2711, %v2736
  %v2753 = vrot.slane %v2284, 1
  %v2754 = vrot.slane %v2287, 1
  %v2755 = vrot.slane %v2292, 1
  %v2756 = vrot.slane %v2295, 1
  %v2757 = vrot.slane %v2300, 1
  %v2758 = vrot.slane %v2303, 1
  %v2759 = vrot.slane %v2308, 1
  %v2760 = vrot.slane %v2311, 1
  %v2761 = vrot.slane %v2316, 1
  %v2762 = vrot.slane %v2319, 1
  %v2763 = vrot.slane %v2324, 1
  %v2764 = vrot.slane %v2327, 1
  %v2765 = vrot.slane %v2332, 1
  %v2766 = vrot.slane %v2335, 1
  %v2767 = vrot.slane %v2340, 1
  %v2768 = vrot.slane %v2343, 1
  %v2769 = vsel %vm622, %v2767, %v2768
  %v2770 = vsel %vm622, %v2766, %v2767
  %v2771 = vsel %vm622, %v2765, %v2766
  %v2772 = vsel %vm622, %v2764, %v2765
  %v2773 = vsel %vm622, %v2763, %v2764
  %v2774 = vsel %vm622, %v2762, %v2763
  %v2775 = vsel %vm622, %v2761, %v2762
  %v2776 = vsel %vm622, %v2760, %v2761
  %v2777 = vsel %vm622, %v2759, %v2760
  %v2778 = vsel %vm622, %v2758, %v2759
  %v2779 = vsel %vm622, %v2757, %v2758
  %v2780 = vsel %vm622, %v2756, %v2757
  %v2781 = vsel %vm622, %v2755, %v2756
  %v2782 = vsel %vm622, %v2754, %v2755
  %v2783 = vsel %vm622, %v2753, %v2754
  %v2784 = vsel %vm622, %v2768, %v2753
  %s2785 = scalar_lea.vmem %s7, 1792
  %v2786 = vld [vmem:[%s2785] sm:$0xff]
  %v2787 = vld [vmem:[%s2785 + $0x8] sm:$0xff]
  %v2788 = vld [vmem:[%s2785 + $0x10] sm:$0xff]
  %v2789 = vld [vmem:[%s2785 + $0x18] sm:$0xff]
  %v2790 = vld [vmem:[%s2785 + $0x20] sm:$0xff]
  %v2791 = vld [vmem:[%s2785 + $0x28] sm:$0xff]
  %v2792 = vld [vmem:[%s2785 + $0x30] sm:$0xff]
  %v2793 = vld [vmem:[%s2785 + $0x38] sm:$0xff]
  %v2794 = vmul.f32 %v2769, %v2786
  %v2795 = vmul.f32 %v2784, %v2787
  %v2796 = vmul.f32 %v2783, %v2788
  %v2797 = vmul.f32 %v2782, %v2789
  %v2798 = vmul.f32 %v2781, %v2790
  %v2799 = vmul.f32 %v2780, %v2791
  %v2800 = vmul.f32 %v2779, %v2792
  %v2801 = vmul.f32 %v2778, %v2793
  %v2802 = vmul.f32 %v2777, %v2786
  %v2803 = vmul.f32 %v2776, %v2787
  %v2804 = vmul.f32 %v2775, %v2788
  %v2805 = vmul.f32 %v2774, %v2789
  %v2806 = vmul.f32 %v2773, %v2790
  %v2807 = vmul.f32 %v2772, %v2791
  %v2808 = vmul.f32 %v2771, %v2792
  %v2809 = vmul.f32 %v2770, %v2793
  %v2810 = vadd.f32 %v2737, %v2794
  %v2811 = vadd.f32 %v2738, %v2795
  %v2812 = vadd.f32 %v2739, %v2796
  %v2813 = vadd.f32 %v2740, %v2797
  %v2814 = vadd.f32 %v2741, %v2798
  %v2815 = vadd.f32 %v2742, %v2799
  %v2816 = vadd.f32 %v2743, %v2800
  %v2817 = vadd.f32 %v2744, %v2801
  %v2818 = vadd.f32 %v2745, %v2802
  %v2819 = vadd.f32 %v2746, %v2803
  %v2820 = vadd.f32 %v2747, %v2804
  %v2821 = vadd.f32 %v2748, %v2805
  %v2822 = vadd.f32 %v2749, %v2806
  %v2823 = vadd.f32 %v2750, %v2807
  %v2824 = vadd.f32 %v2751, %v2808
  %v2825 = vadd.f32 %v2752, %v2809
  %v2826 = vrot.slane %v2284, 2
  %v2827 = vrot.slane %v2287, 2
  %v2828 = vrot.slane %v2292, 2
  %v2829 = vrot.slane %v2295, 2
  %v2830 = vrot.slane %v2300, 2
  %v2831 = vrot.slane %v2303, 2
  %v2832 = vrot.slane %v2308, 2
  %v2833 = vrot.slane %v2311, 2
  %v2834 = vrot.slane %v2316, 2
  %v2835 = vrot.slane %v2319, 2
  %v2836 = vrot.slane %v2324, 2
  %v2837 = vrot.slane %v2327, 2
  %v2838 = vrot.slane %v2332, 2
  %v2839 = vrot.slane %v2335, 2
  %v2840 = vrot.slane %v2340, 2
  %v2841 = vrot.slane %v2343, 2
  %v2842 = vsel %vm696, %v2840, %v2841
  %v2843 = vsel %vm696, %v2839, %v2840
  %v2844 = vsel %vm696, %v2838, %v2839
  %v2845 = vsel %vm696, %v2837, %v2838
  %v2846 = vsel %vm696, %v2836, %v2837
  %v2847 = vsel %vm696, %v2835, %v2836
  %v2848 = vsel %vm696, %v2834, %v2835
  %v2849 = vsel %vm696, %v2833, %v2834
  %v2850 = vsel %vm696, %v2832, %v2833
  %v2851 = vsel %vm696, %v2831, %v2832
  %v2852 = vsel %vm696, %v2830, %v2831
  %v2853 = vsel %vm696, %v2829, %v2830
  %v2854 = vsel %vm696, %v2828, %v2829
  %v2855 = vsel %vm696, %v2827, %v2828
  %v2856 = vsel %vm696, %v2826, %v2827
  %v2857 = vsel %vm696, %v2841, %v2826
  %s2858 = scalar_lea.vmem %s7, 1856
  %v2859 = vld [vmem:[%s2858] sm:$0xff]
  %v2860 = vld [vmem:[%s2858 + $0x8] sm:$0xff]
  %v2861 = vld [vmem:[%s2858 + $0x10] sm:$0xff]
  %v2862 = vld [vmem:[%s2858 + $0x18] sm:$0xff]
  %v2863 = vld [vmem:[%s2858 + $0x20] sm:$0xff]
  %v2864 = vld [vmem:[%s2858 + $0x28] sm:$0xff]
  %v2865 = vld [vmem:[%s2858 + $0x30] sm:$0xff]
  %v2866 = vld [vmem:[%s2858 + $0x38] sm:$0xff]
  %v2867 = vmul.f32 %v2842, %v2859
  %v2868 = vmul.f32 %v2857, %v2860
  %v2869 = vmul.f32 %v2856, %v2861
  %v2870 = vmul.f32 %v2855, %v2862
  %v2871 = vmul.f32 %v2854, %v2863
  %v2872 = vmul.f32 %v2853, %v2864
  %v2873 = vmul.f32 %v2852, %v2865
  %v2874 = vmul.f32 %v2851, %v2866
  %v2875 = vmul.f32 %v2850, %v2859
  %v2876 = vmul.f32 %v2849, %v2860
  %v2877 = vmul.f32 %v2848, %v2861
  %v2878 = vmul.f32 %v2847, %v2862
  %v2879 = vmul.f32 %v2846, %v2863
  %v2880 = vmul.f32 %v2845, %v2864
  %v2881 = vmul.f32 %v2844, %v2865
  %v2882 = vmul.f32 %v2843, %v2866
  %v2883 = vadd.f32 %v2810, %v2867
  %v2884 = vadd.f32 %v2811, %v2868
  %v2885 = vadd.f32 %v2812, %v2869
  %v2886 = vadd.f32 %v2813, %v2870
  %v2887 = vadd.f32 %v2814, %v2871
  %v2888 = vadd.f32 %v2815, %v2872
  %v2889 = vadd.f32 %v2816, %v2873
  %v2890 = vadd.f32 %v2817, %v2874
  %v2891 = vadd.f32 %v2818, %v2875
  %v2892 = vadd.f32 %v2819, %v2876
  %v2893 = vadd.f32 %v2820, %v2877
  %v2894 = vadd.f32 %v2821, %v2878
  %v2895 = vadd.f32 %v2822, %v2879
  %v2896 = vadd.f32 %v2823, %v2880
  %v2897 = vadd.f32 %v2824, %v2881
  %v2898 = vadd.f32 %v2825, %v2882
  %s2899 = scalar_lea.vmem %s7, 1920
  %v2900 = vld [vmem:[%s2899] sm:$0xff]
  %v2901 = vld [vmem:[%s2899 + $0x8] sm:$0xff]
  %v2902 = vld [vmem:[%s2899 + $0x10] sm:$0xff]
  %v2903 = vld [vmem:[%s2899 + $0x18] sm:$0xff]
  %v2904 = vld [vmem:[%s2899 + $0x20] sm:$0xff]
  %v2905 = vld [vmem:[%s2899 + $0x28] sm:$0xff]
  %v2906 = vld [vmem:[%s2899 + $0x30] sm:$0xff]
  %v2907 = vld [vmem:[%s2899 + $0x38] sm:$0xff]
  %v2908 = vmul.f32 %v2582, %v2900
  %v2909 = vmul.f32 %v2597, %v2901
  %v2910 = vmul.f32 %v2596, %v2902
  %v2911 = vmul.f32 %v2595, %v2903
  %v2912 = vmul.f32 %v2594, %v2904
  %v2913 = vmul.f32 %v2593, %v2905
  %v2914 = vmul.f32 %v2592, %v2906
  %v2915 = vmul.f32 %v2591, %v2907
  %v2916 = vmul.f32 %v2590, %v2900
  %v2917 = vmul.f32 %v2589, %v2901
  %v2918 = vmul.f32 %v2588, %v2902
  %v2919 = vmul.f32 %v2587, %v2903
  %v2920 = vmul.f32 %v2586, %v2904
  %v2921 = vmul.f32 %v2585, %v2905
  %v2922 = vmul.f32 %v2584, %v2906
  %v2923 = vmul.f32 %v2583, %v2907
  %v2924 = vadd.f32 %v2883, %v2908
  %v2925 = vadd.f32 %v2884, %v2909
  %v2926 = vadd.f32 %v2885, %v2910
  %v2927 = vadd.f32 %v2886, %v2911
  %v2928 = vadd.f32 %v2887, %v2912
  %v2929 = vadd.f32 %v2888, %v2913
  %v2930 = vadd.f32 %v2889, %v2914
  %v2931 = vadd.f32 %v2890, %v2915
  %v2932 = vadd.f32 %v2891, %v2916
  %v2933 = vadd.f32 %v2892, %v2917
  %v2934 = vadd.f32 %v2893, %v2918
  %v2935 = vadd.f32 %v2894, %v2919
  %v2936 = vadd.f32 %v2895, %v2920
  %v2937 = vadd.f32 %v2896, %v2921
  %v2938 = vadd.f32 %v2897, %v2922
  %v2939 = vadd.f32 %v2898, %v2923
  %s2940 = scalar_lea.vmem %s7, 1984
  %v2941 = vld [vmem:[%s2940] sm:$0xff]
  %v2942 = vld [vmem:[%s2940 + $0x8] sm:$0xff]
  %v2943 = vld [vmem:[%s2940 + $0x10] sm:$0xff]
  %v2944 = vld [vmem:[%s2940 + $0x18] sm:$0xff]
  %v2945 = vld [vmem:[%s2940 + $0x20] sm:$0xff]
  %v2946 = vld [vmem:[%s2940 + $0x28] sm:$0xff]
  %v2947 = vld [vmem:[%s2940 + $0x30] sm:$0xff]
  %v2948 = vld [vmem:[%s2940 + $0x38] sm:$0xff]
  %v2949 = vmul.f32 %v2655, %v2941
  %v2950 = vmul.f32 %v2670, %v2942
  %v2951 = vmul.f32 %v2669, %v2943
  %v2952 = vmul.f32 %v2668, %v2944
  %v2953 = vmul.f32 %v2667, %v2945
  %v2954 = vmul.f32 %v2666, %v2946
  %v2955 = vmul.f32 %v2665, %v2947
  %v2956 = vmul.f32 %v2664, %v2948
  %v2957 = vmul.f32 %v2663, %v2941
  %v2958 = vmul.f32 %v2662, %v2942
  %v2959 = vmul.f32 %v2661, %v2943
  %v2960 = vmul.f32 %v2660, %v2944
  %v2961 = vmul.f32 %v2659, %v2945
  %v2962 = vmul.f32 %v2658, %v2946
  %v2963 = vmul.f32 %v2657, %v2947
  %v2964 = vmul.f32 %v2656, %v2948
  %v2965 = vadd.f32 %v2924, %v2949
  %v2966 = vadd.f32 %v2925, %v2950
  %v2967 = vadd.f32 %v2926, %v2951
  %v2968 = vadd.f32 %v2927, %v2952
  %v2969 = vadd.f32 %v2928, %v2953
  %v2970 = vadd.f32 %v2929, %v2954
  %v2971 = vadd.f32 %v2930, %v2955
  %v2972 = vadd.f32 %v2931, %v2956
  %v2973 = vadd.f32 %v2932, %v2957
  %v2974 = vadd.f32 %v2933, %v2958
  %v2975 = vadd.f32 %v2934, %v2959
  %v2976 = vadd.f32 %v2935, %v2960
  %v2977 = vadd.f32 %v2936, %v2961
  %v2978 = vadd.f32 %v2937, %v2962
  %v2979 = vadd.f32 %v2938, %v2963
  %v2980 = vadd.f32 %v2939, %v2964
  %s2981 = scalar_lea.vmem %s7, 2048
  %v2982 = vld [vmem:[%s2981] sm:$0xff]
  %v2983 = vld [vmem:[%s2981 + $0x8] sm:$0xff]
  %v2984 = vld [vmem:[%s2981 + $0x10] sm:$0xff]
  %v2985 = vld [vmem:[%s2981 + $0x18] sm:$0xff]
  %v2986 = vld [vmem:[%s2981 + $0x20] sm:$0xff]
  %v2987 = vld [vmem:[%s2981 + $0x28] sm:$0xff]
  %v2988 = vld [vmem:[%s2981 + $0x30] sm:$0xff]
  %v2989 = vld [vmem:[%s2981 + $0x38] sm:$0xff]
  %v2990 = vmul.f32 %v2343, %v2982
  %v2991 = vmul.f32 %v2284, %v2983
  %v2992 = vmul.f32 %v2287, %v2984
  %v2993 = vmul.f32 %v2292, %v2985
  %v2994 = vmul.f32 %v2295, %v2986
  %v2995 = vmul.f32 %v2300, %v2987
  %v2996 = vmul.f32 %v2303, %v2988
  %v2997 = vmul.f32 %v2308, %v2989
  %v2998 = vmul.f32 %v2311, %v2982
  %v2999 = vmul.f32 %v2316, %v2983
  %v3000 = vmul.f32 %v2319, %v2984
  %v3001 = vmul.f32 %v2324, %v2985
  %v3002 = vmul.f32 %v2327, %v2986
  %v3003 = vmul.f32 %v2332, %v2987
  %v3004 = vmul.f32 %v2335, %v2988
  %v3005 = vmul.f32 %v2340, %v2989
  %v3006 = vadd.f32 %v2965, %v2990
  %v3007 = vadd.f32 %v2966, %v2991
  %v3008 = vadd.f32 %v2967, %v2992
  %v3009 = vadd.f32 %v2968, %v2993
  %v3010 = vadd.f32 %v2969, %v2994
  %v3011 = vadd.f32 %v2970, %v2995
  %v3012 = vadd.f32 %v2971, %v2996
  %v3013 = vadd.f32 %v2972, %v2997
  %v3014 = vadd.f32 %v2973, %v2998
  %v3015 = vadd.f32 %v2974, %v2999
  %v3016 = vadd.f32 %v2975, %v3000
  %v3017 = vadd.f32 %v2976, %v3001
  %v3018 = vadd.f32 %v2977, %v3002
  %v3019 = vadd.f32 %v2978, %v3003
  %v3020 = vadd.f32 %v2979, %v3004
  %v3021 = vadd.f32 %v2980, %v3005
  %s3022 = scalar_lea.vmem %s7, 2112
  %v3023 = vld [vmem:[%s3022] sm:$0xff]
  %v3024 = vld [vmem:[%s3022 + $0x8] sm:$0xff]
  %v3025 = vld [vmem:[%s3022 + $0x10] sm:$0xff]
  %v3026 = vld [vmem:[%s3022 + $0x18] sm:$0xff]
  %v3027 = vld [vmem:[%s3022 + $0x20] sm:$0xff]
  %v3028 = vld [vmem:[%s3022 + $0x28] sm:$0xff]
  %v3029 = vld [vmem:[%s3022 + $0x30] sm:$0xff]
  %v3030 = vld [vmem:[%s3022 + $0x38] sm:$0xff]
  %v3031 = vmul.f32 %v2784, %v3023
  %v3032 = vmul.f32 %v2783, %v3024
  %v3033 = vmul.f32 %v2782, %v3025
  %v3034 = vmul.f32 %v2781, %v3026
  %v3035 = vmul.f32 %v2780, %v3027
  %v3036 = vmul.f32 %v2779, %v3028
  %v3037 = vmul.f32 %v2778, %v3029
  %v3038 = vmul.f32 %v2777, %v3030
  %v3039 = vmul.f32 %v2776, %v3023
  %v3040 = vmul.f32 %v2775, %v3024
  %v3041 = vmul.f32 %v2774, %v3025
  %v3042 = vmul.f32 %v2773, %v3026
  %v3043 = vmul.f32 %v2772, %v3027
  %v3044 = vmul.f32 %v2771, %v3028
  %v3045 = vmul.f32 %v2770, %v3029
  %v3046 = vmul.f32 %v2769, %v3030
  %v3047 = vadd.f32 %v3006, %v3031
  %v3048 = vadd.f32 %v3007, %v3032
  %v3049 = vadd.f32 %v3008, %v3033
  %v3050 = vadd.f32 %v3009, %v3034
  %v3051 = vadd.f32 %v3010, %v3035
  %v3052 = vadd.f32 %v3011, %v3036
  %v3053 = vadd.f32 %v3012, %v3037
  %v3054 = vadd.f32 %v3013, %v3038
  %v3055 = vadd.f32 %v3014, %v3039
  %v3056 = vadd.f32 %v3015, %v3040
  %v3057 = vadd.f32 %v3016, %v3041
  %v3058 = vadd.f32 %v3017, %v3042
  %v3059 = vadd.f32 %v3018, %v3043
  %v3060 = vadd.f32 %v3019, %v3044
  %v3061 = vadd.f32 %v3020, %v3045
  %v3062 = vadd.f32 %v3021, %v3046
  %s3063 = scalar_lea.vmem %s7, 2176
  %v3064 = vld [vmem:[%s3063] sm:$0xff]
  %v3065 = vld [vmem:[%s3063 + $0x8] sm:$0xff]
  %v3066 = vld [vmem:[%s3063 + $0x10] sm:$0xff]
  %v3067 = vld [vmem:[%s3063 + $0x18] sm:$0xff]
  %v3068 = vld [vmem:[%s3063 + $0x20] sm:$0xff]
  %v3069 = vld [vmem:[%s3063 + $0x28] sm:$0xff]
  %v3070 = vld [vmem:[%s3063 + $0x30] sm:$0xff]
  %v3071 = vld [vmem:[%s3063 + $0x38] sm:$0xff]
  %v3072 = vmul.f32 %v2857, %v3064
  %v3073 = vmul.f32 %v2856, %v3065
  %v3074 = vmul.f32 %v2855, %v3066
  %v3075 = vmul.f32 %v2854, %v3067
  %v3076 = vmul.f32 %v2853, %v3068
  %v3077 = vmul.f32 %v2852, %v3069
  %v3078 = vmul.f32 %v2851, %v3070
  %v3079 = vmul.f32 %v2850, %v3071
  %v3080 = vmul.f32 %v2849, %v3064
  %v3081 = vmul.f32 %v2848, %v3065
  %v3082 = vmul.f32 %v2847, %v3066
  %v3083 = vmul.f32 %v2846, %v3067
  %v3084 = vmul.f32 %v2845, %v3068
  %v3085 = vmul.f32 %v2844, %v3069
  %v3086 = vmul.f32 %v2843, %v3070
  %v3087 = vmul.f32 %v2842, %v3071
  %v3088 = vadd.f32 %v3047, %v3072
  %v3089 = vadd.f32 %v3048, %v3073
  %v3090 = vadd.f32 %v3049, %v3074
  %v3091 = vadd.f32 %v3050, %v3075
  %v3092 = vadd.f32 %v3051, %v3076
  %v3093 = vadd.f32 %v3052, %v3077
  %v3094 = vadd.f32 %v3053, %v3078
  %v3095 = vadd.f32 %v3054, %v3079
  %v3096 = vadd.f32 %v3055, %v3080
  %v3097 = vadd.f32 %v3056, %v3081
  %v3098 = vadd.f32 %v3057, %v3082
  %v3099 = vadd.f32 %v3058, %v3083
  %v3100 = vadd.f32 %v3059, %v3084
  %v3101 = vadd.f32 %v3060, %v3085
  %v3102 = vadd.f32 %v3061, %v3086
  %v3103 = vadd.f32 %v3062, %v3087
  %s3104 = scalar_lea.vmem %s7, 2240
  %v3105 = vld [vmem:[%s3104] sm:$0xff]
  %v3106 = vld [vmem:[%s3104 + $0x8] sm:$0xff]
  %v3107 = vld [vmem:[%s3104 + $0x10] sm:$0xff]
  %v3108 = vld [vmem:[%s3104 + $0x18] sm:$0xff]
  %v3109 = vld [vmem:[%s3104 + $0x20] sm:$0xff]
  %v3110 = vld [vmem:[%s3104 + $0x28] sm:$0xff]
  %v3111 = vld [vmem:[%s3104 + $0x30] sm:$0xff]
  %v3112 = vld [vmem:[%s3104 + $0x38] sm:$0xff]
  %v3113 = vmul.f32 %v2597, %v3105
  %v3114 = vmul.f32 %v2596, %v3106
  %v3115 = vmul.f32 %v2595, %v3107
  %v3116 = vmul.f32 %v2594, %v3108
  %v3117 = vmul.f32 %v2593, %v3109
  %v3118 = vmul.f32 %v2592, %v3110
  %v3119 = vmul.f32 %v2591, %v3111
  %v3120 = vmul.f32 %v2590, %v3112
  %v3121 = vmul.f32 %v2589, %v3105
  %v3122 = vmul.f32 %v2588, %v3106
  %v3123 = vmul.f32 %v2587, %v3107
  %v3124 = vmul.f32 %v2586, %v3108
  %v3125 = vmul.f32 %v2585, %v3109
  %v3126 = vmul.f32 %v2584, %v3110
  %v3127 = vmul.f32 %v2583, %v3111
  %v3128 = vmul.f32 %v2582, %v3112
  %v3129 = vadd.f32 %v3088, %v3113
  %v3130 = vadd.f32 %v3089, %v3114
  %v3131 = vadd.f32 %v3090, %v3115
  %v3132 = vadd.f32 %v3091, %v3116
  %v3133 = vadd.f32 %v3092, %v3117
  %v3134 = vadd.f32 %v3093, %v3118
  %v3135 = vadd.f32 %v3094, %v3119
  %v3136 = vadd.f32 %v3095, %v3120
  %v3137 = vadd.f32 %v3096, %v3121
  %v3138 = vadd.f32 %v3097, %v3122
  %v3139 = vadd.f32 %v3098, %v3123
  %v3140 = vadd.f32 %v3099, %v3124
  %v3141 = vadd.f32 %v3100, %v3125
  %v3142 = vadd.f32 %v3101, %v3126
  %v3143 = vadd.f32 %v3102, %v3127
  %v3144 = vadd.f32 %v3103, %v3128
  %s3145 = scalar_lea.vmem %s7, 2304
  %v3146 = vld [vmem:[%s3145] sm:$0xff]
  %v3147 = vld [vmem:[%s3145 + $0x8] sm:$0xff]
  %v3148 = vld [vmem:[%s3145 + $0x10] sm:$0xff]
  %v3149 = vld [vmem:[%s3145 + $0x18] sm:$0xff]
  %v3150 = vld [vmem:[%s3145 + $0x20] sm:$0xff]
  %v3151 = vld [vmem:[%s3145 + $0x28] sm:$0xff]
  %v3152 = vld [vmem:[%s3145 + $0x30] sm:$0xff]
  %v3153 = vld [vmem:[%s3145 + $0x38] sm:$0xff]
  %v3154 = vmul.f32 %v2670, %v3146
  %v3155 = vmul.f32 %v2669, %v3147
  %v3156 = vmul.f32 %v2668, %v3148
  %v3157 = vmul.f32 %v2667, %v3149
  %v3158 = vmul.f32 %v2666, %v3150
  %v3159 = vmul.f32 %v2665, %v3151
  %v3160 = vmul.f32 %v2664, %v3152
  %v3161 = vmul.f32 %v2663, %v3153
  %v3162 = vmul.f32 %v2662, %v3146
  %v3163 = vmul.f32 %v2661, %v3147
  %v3164 = vmul.f32 %v2660, %v3148
  %v3165 = vmul.f32 %v2659, %v3149
  %v3166 = vmul.f32 %v2658, %v3150
  %v3167 = vmul.f32 %v2657, %v3151
  %v3168 = vmul.f32 %v2656, %v3152
  %v3169 = vmul.f32 %v2655, %v3153
  %v3170 = vadd.f32 %v3129, %v3154
  %v3171 = vadd.f32 %v3130, %v3155
  %v3172 = vadd.f32 %v3131, %v3156
  %v3173 = vadd.f32 %v3132, %v3157
  %v3174 = vadd.f32 %v3133, %v3158
  %v3175 = vadd.f32 %v3134, %v3159
  %v3176 = vadd.f32 %v3135, %v3160
  %v3177 = vadd.f32 %v3136, %v3161
  %v3178 = vadd.f32 %v3137, %v3162
  %v3179 = vadd.f32 %v3138, %v3163
  %v3180 = vadd.f32 %v3139, %v3164
  %v3181 = vadd.f32 %v3140, %v3165
  %v3182 = vadd.f32 %v3141, %v3166
  %v3183 = vadd.f32 %v3142, %v3167
  %v3184 = vadd.f32 %v3143, %v3168
  %v3185 = vadd.f32 %v3144, %v3169
  %s3186 = scalar_lea.vmem %s7, 2368
  %v3187 = vld [vmem:[%s3186] sm:$0xff]
  %v3188 = vld [vmem:[%s3186 + $0x8] sm:$0xff]
  %v3189 = vld [vmem:[%s3186 + $0x10] sm:$0xff]
  %v3190 = vld [vmem:[%s3186 + $0x18] sm:$0xff]
  %v3191 = vld [vmem:[%s3186 + $0x20] sm:$0xff]
  %v3192 = vld [vmem:[%s3186 + $0x28] sm:$0xff]
  %v3193 = vld [vmem:[%s3186 + $0x30] sm:$0xff]
  %v3194 = vld [vmem:[%s3186 + $0x38] sm:$0xff]
  %v3195 = vmul.f32 %v2284, %v3187
  %v3196 = vmul.f32 %v2287, %v3188
  %v3197 = vmul.f32 %v2292, %v3189
  %v3198 = vmul.f32 %v2295, %v3190
  %v3199 = vmul.f32 %v2300, %v3191
  %v3200 = vmul.f32 %v2303, %v3192
  %v3201 = vmul.f32 %v2308, %v3193
  %v3202 = vmul.f32 %v2311, %v3194
  %v3203 = vmul.f32 %v2316, %v3187
  %v3204 = vmul.f32 %v2319, %v3188
  %v3205 = vmul.f32 %v2324, %v3189
  %v3206 = vmul.f32 %v2327, %v3190
  %v3207 = vmul.f32 %v2332, %v3191
  %v3208 = vmul.f32 %v2335, %v3192
  %v3209 = vmul.f32 %v2340, %v3193
  %v3210 = vmul.f32 %v2343, %v3194
  %v3211 = vadd.f32 %v3170, %v3195
  %v3212 = vadd.f32 %v3171, %v3196
  %v3213 = vadd.f32 %v3172, %v3197
  %v3214 = vadd.f32 %v3173, %v3198
  %v3215 = vadd.f32 %v3174, %v3199
  %v3216 = vadd.f32 %v3175, %v3200
  %v3217 = vadd.f32 %v3176, %v3201
  %v3218 = vadd.f32 %v3177, %v3202
  %v3219 = vadd.f32 %v3178, %v3203
  %v3220 = vadd.f32 %v3179, %v3204
  %v3221 = vadd.f32 %v3180, %v3205
  %v3222 = vadd.f32 %v3181, %v3206
  %v3223 = vadd.f32 %v3182, %v3207
  %v3224 = vadd.f32 %v3183, %v3208
  %v3225 = vadd.f32 %v3184, %v3209
  %v3226 = vadd.f32 %v3185, %v3210
  %s3227 = scalar_lea.vmem %s7, 2432
  %v3228 = vld [vmem:[%s3227] sm:$0xff]
  %v3229 = vld [vmem:[%s3227 + $0x8] sm:$0xff]
  %v3230 = vld [vmem:[%s3227 + $0x10] sm:$0xff]
  %v3231 = vld [vmem:[%s3227 + $0x18] sm:$0xff]
  %v3232 = vld [vmem:[%s3227 + $0x20] sm:$0xff]
  %v3233 = vld [vmem:[%s3227 + $0x28] sm:$0xff]
  %v3234 = vld [vmem:[%s3227 + $0x30] sm:$0xff]
  %v3235 = vld [vmem:[%s3227 + $0x38] sm:$0xff]
  %v3236 = vmul.f32 %v2783, %v3228
  %v3237 = vmul.f32 %v2782, %v3229
  %v3238 = vmul.f32 %v2781, %v3230
  %v3239 = vmul.f32 %v2780, %v3231
  %v3240 = vmul.f32 %v2779, %v3232
  %v3241 = vmul.f32 %v2778, %v3233
  %v3242 = vmul.f32 %v2777, %v3234
  %v3243 = vmul.f32 %v2776, %v3235
  %v3244 = vmul.f32 %v2775, %v3228
  %v3245 = vmul.f32 %v2774, %v3229
  %v3246 = vmul.f32 %v2773, %v3230
  %v3247 = vmul.f32 %v2772, %v3231
  %v3248 = vmul.f32 %v2771, %v3232
  %v3249 = vmul.f32 %v2770, %v3233
  %v3250 = vmul.f32 %v2769, %v3234
  %v3251 = vmul.f32 %v2784, %v3235
  %v3252 = vadd.f32 %v3211, %v3236
  %v3253 = vadd.f32 %v3212, %v3237
  %v3254 = vadd.f32 %v3213, %v3238
  %v3255 = vadd.f32 %v3214, %v3239
  %v3256 = vadd.f32 %v3215, %v3240
  %v3257 = vadd.f32 %v3216, %v3241
  %v3258 = vadd.f32 %v3217, %v3242
  %v3259 = vadd.f32 %v3218, %v3243
  %v3260 = vadd.f32 %v3219, %v3244
  %v3261 = vadd.f32 %v3220, %v3245
  %v3262 = vadd.f32 %v3221, %v3246
  %v3263 = vadd.f32 %v3222, %v3247
  %v3264 = vadd.f32 %v3223, %v3248
  %v3265 = vadd.f32 %v3224, %v3249
  %v3266 = vadd.f32 %v3225, %v3250
  %v3267 = vadd.f32 %v3226, %v3251
  %s3268 = scalar_lea.vmem %s7, 2496
  %v3269 = vld [vmem:[%s3268] sm:$0xff]
  %v3270 = vld [vmem:[%s3268 + $0x8] sm:$0xff]
  %v3271 = vld [vmem:[%s3268 + $0x10] sm:$0xff]
  %v3272 = vld [vmem:[%s3268 + $0x18] sm:$0xff]
  %v3273 = vld [vmem:[%s3268 + $0x20] sm:$0xff]
  %v3274 = vld [vmem:[%s3268 + $0x28] sm:$0xff]
  %v3275 = vld [vmem:[%s3268 + $0x30] sm:$0xff]
  %v3276 = vld [vmem:[%s3268 + $0x38] sm:$0xff]
  %v3277 = vmul.f32 %v2856, %v3269
  %v3278 = vmul.f32 %v2855, %v3270
  %v3279 = vmul.f32 %v2854, %v3271
  %v3280 = vmul.f32 %v2853, %v3272
  %v3281 = vmul.f32 %v2852, %v3273
  %v3282 = vmul.f32 %v2851, %v3274
  %v3283 = vmul.f32 %v2850, %v3275
  %v3284 = vmul.f32 %v2849, %v3276
  %v3285 = vmul.f32 %v2848, %v3269
  %v3286 = vmul.f32 %v2847, %v3270
  %v3287 = vmul.f32 %v2846, %v3271
  %v3288 = vmul.f32 %v2845, %v3272
  %v3289 = vmul.f32 %v2844, %v3273
  %v3290 = vmul.f32 %v2843, %v3274
  %v3291 = vmul.f32 %v2842, %v3275
  %v3292 = vmul.f32 %v2857, %v3276
  %v3293 = vadd.f32 %v3252, %v3277
  %v3294 = vadd.f32 %v3253, %v3278
  %v3295 = vadd.f32 %v3254, %v3279
  %v3296 = vadd.f32 %v3255, %v3280
  %v3297 = vadd.f32 %v3256, %v3281
  %v3298 = vadd.f32 %v3257, %v3282
  %v3299 = vadd.f32 %v3258, %v3283
  %v3300 = vadd.f32 %v3259, %v3284
  %v3301 = vadd.f32 %v3260, %v3285
  %v3302 = vadd.f32 %v3261, %v3286
  %v3303 = vadd.f32 %v3262, %v3287
  %v3304 = vadd.f32 %v3263, %v3288
  %v3305 = vadd.f32 %v3264, %v3289
  %v3306 = vadd.f32 %v3265, %v3290
  %v3307 = vadd.f32 %v3266, %v3291
  %v3308 = vadd.f32 %v3267, %v3292
  %s3309 = scalar_lea.vmem %s7, 2560
  %v3310 = vld [vmem:[%s3309] sm:$0xff]
  %v3311 = vld [vmem:[%s3309 + $0x8] sm:$0xff]
  %v3312 = vld [vmem:[%s3309 + $0x10] sm:$0xff]
  %v3313 = vld [vmem:[%s3309 + $0x18] sm:$0xff]
  %v3314 = vld [vmem:[%s3309 + $0x20] sm:$0xff]
  %v3315 = vld [vmem:[%s3309 + $0x28] sm:$0xff]
  %v3316 = vld [vmem:[%s3309 + $0x30] sm:$0xff]
  %v3317 = vld [vmem:[%s3309 + $0x38] sm:$0xff]
  %v3318 = vmul.f32 %v2596, %v3310
  %v3319 = vmul.f32 %v2595, %v3311
  %v3320 = vmul.f32 %v2594, %v3312
  %v3321 = vmul.f32 %v2593, %v3313
  %v3322 = vmul.f32 %v2592, %v3314
  %v3323 = vmul.f32 %v2591, %v3315
  %v3324 = vmul.f32 %v2590, %v3316
  %v3325 = vmul.f32 %v2589, %v3317
  %v3326 = vmul.f32 %v2588, %v3310
  %v3327 = vmul.f32 %v2587, %v3311
  %v3328 = vmul.f32 %v2586, %v3312
  %v3329 = vmul.f32 %v2585, %v3313
  %v3330 = vmul.f32 %v2584, %v3314
  %v3331 = vmul.f32 %v2583, %v3315
  %v3332 = vmul.f32 %v2582, %v3316
  %v3333 = vmul.f32 %v2597, %v3317
  %v3334 = vadd.f32 %v3293, %v3318
  %v3335 = vadd.f32 %v3294, %v3319
  %v3336 = vadd.f32 %v3295, %v3320
  %v3337 = vadd.f32 %v3296, %v3321
  %v3338 = vadd.f32 %v3297, %v3322
  %v3339 = vadd.f32 %v3298, %v3323
  %v3340 = vadd.f32 %v3299, %v3324
  %v3341 = vadd.f32 %v3300, %v3325
  %v3342 = vadd.f32 %v3301, %v3326
  %v3343 = vadd.f32 %v3302, %v3327
  %v3344 = vadd.f32 %v3303, %v3328
  %v3345 = vadd.f32 %v3304, %v3329
  %v3346 = vadd.f32 %v3305, %v3330
  %v3347 = vadd.f32 %v3306, %v3331
  %v3348 = vadd.f32 %v3307, %v3332
  %v3349 = vadd.f32 %v3308, %v3333
  %s3350 = scalar_lea.vmem %s7, 2624
  %v3351 = vld [vmem:[%s3350] sm:$0xff]
  %v3352 = vld [vmem:[%s3350 + $0x8] sm:$0xff]
  %v3353 = vld [vmem:[%s3350 + $0x10] sm:$0xff]
  %v3354 = vld [vmem:[%s3350 + $0x18] sm:$0xff]
  %v3355 = vld [vmem:[%s3350 + $0x20] sm:$0xff]
  %v3356 = vld [vmem:[%s3350 + $0x28] sm:$0xff]
  %v3357 = vld [vmem:[%s3350 + $0x30] sm:$0xff]
  %v3358 = vld [vmem:[%s3350 + $0x38] sm:$0xff]
  %v3359 = vmul.f32 %v2669, %v3351
  %v3360 = vmul.f32 %v2668, %v3352
  %v3361 = vmul.f32 %v2667, %v3353
  %v3362 = vmul.f32 %v2666, %v3354
  %v3363 = vmul.f32 %v2665, %v3355
  %v3364 = vmul.f32 %v2664, %v3356
  %v3365 = vmul.f32 %v2663, %v3357
  %v3366 = vmul.f32 %v2662, %v3358
  %v3367 = vmul.f32 %v2661, %v3351
  %v3368 = vmul.f32 %v2660, %v3352
  %v3369 = vmul.f32 %v2659, %v3353
  %v3370 = vmul.f32 %v2658, %v3354
  %v3371 = vmul.f32 %v2657, %v3355
  %v3372 = vmul.f32 %v2656, %v3356
  %v3373 = vmul.f32 %v2655, %v3357
  %v3374 = vmul.f32 %v2670, %v3358
  %v3375 = vadd.f32 %v3334, %v3359
  %v3376 = vadd.f32 %v3335, %v3360
  %v3377 = vadd.f32 %v3336, %v3361
  %v3378 = vadd.f32 %v3337, %v3362
  %v3379 = vadd.f32 %v3338, %v3363
  %v3380 = vadd.f32 %v3339, %v3364
  %v3381 = vadd.f32 %v3340, %v3365
  %v3382 = vadd.f32 %v3341, %v3366
  %v3383 = vadd.f32 %v3342, %v3367
  %v3384 = vadd.f32 %v3343, %v3368
  %v3385 = vadd.f32 %v3344, %v3369
  %v3386 = vadd.f32 %v3345, %v3370
  %v3387 = vadd.f32 %v3346, %v3371
  %v3388 = vadd.f32 %v3347, %v3372
  %v3389 = vadd.f32 %v3348, %v3373
  %v3390 = vadd.f32 %v3349, %v3374
  %s3391 = scalar_lea.vmem %s7, 2688
  %v3392 = vld [vmem:[%s3391] sm:$0xff]
  %v3393 = vld [vmem:[%s3391 + $0x8] sm:$0xff]
  %v3394 = vld [vmem:[%s3391 + $0x10] sm:$0xff]
  %v3395 = vld [vmem:[%s3391 + $0x18] sm:$0xff]
  %v3396 = vld [vmem:[%s3391 + $0x20] sm:$0xff]
  %v3397 = vld [vmem:[%s3391 + $0x28] sm:$0xff]
  %v3398 = vld [vmem:[%s3391 + $0x30] sm:$0xff]
  %v3399 = vld [vmem:[%s3391 + $0x38] sm:$0xff]
  %v3400 = vmul.f32 %v2287, %v3392
  %v3401 = vmul.f32 %v2292, %v3393
  %v3402 = vmul.f32 %v2295, %v3394
  %v3403 = vmul.f32 %v2300, %v3395
  %v3404 = vmul.f32 %v2303, %v3396
  %v3405 = vmul.f32 %v2308, %v3397
  %v3406 = vmul.f32 %v2311, %v3398
  %v3407 = vmul.f32 %v2316, %v3399
  %v3408 = vmul.f32 %v2319, %v3392
  %v3409 = vmul.f32 %v2324, %v3393
  %v3410 = vmul.f32 %v2327, %v3394
  %v3411 = vmul.f32 %v2332, %v3395
  %v3412 = vmul.f32 %v2335, %v3396
  %v3413 = vmul.f32 %v2340, %v3397
  %v3414 = vmul.f32 %v2343, %v3398
  %v3415 = vmul.f32 %v2284, %v3399
  %v3416 = vadd.f32 %v3375, %v3400
  %v3417 = vadd.f32 %v3376, %v3401
  %v3418 = vadd.f32 %v3377, %v3402
  %v3419 = vadd.f32 %v3378, %v3403
  %v3420 = vadd.f32 %v3379, %v3404
  %v3421 = vadd.f32 %v3380, %v3405
  %v3422 = vadd.f32 %v3381, %v3406
  %v3423 = vadd.f32 %v3382, %v3407
  %v3424 = vadd.f32 %v3383, %v3408
  %v3425 = vadd.f32 %v3384, %v3409
  %v3426 = vadd.f32 %v3385, %v3410
  %v3427 = vadd.f32 %v3386, %v3411
  %v3428 = vadd.f32 %v3387, %v3412
  %v3429 = vadd.f32 %v3388, %v3413
  %v3430 = vadd.f32 %v3389, %v3414
  %v3431 = vadd.f32 %v3390, %v3415
  %s3432 = scalar_lea.vmem %s7, 2752
  %v3433 = vld [vmem:[%s3432] sm:$0xff]
  %v3434 = vld [vmem:[%s3432 + $0x8] sm:$0xff]
  %v3435 = vld [vmem:[%s3432 + $0x10] sm:$0xff]
  %v3436 = vld [vmem:[%s3432 + $0x18] sm:$0xff]
  %v3437 = vld [vmem:[%s3432 + $0x20] sm:$0xff]
  %v3438 = vld [vmem:[%s3432 + $0x28] sm:$0xff]
  %v3439 = vld [vmem:[%s3432 + $0x30] sm:$0xff]
  %v3440 = vld [vmem:[%s3432 + $0x38] sm:$0xff]
  %v3441 = vmul.f32 %v2782, %v3433
  %v3442 = vmul.f32 %v2781, %v3434
  %v3443 = vmul.f32 %v2780, %v3435
  %v3444 = vmul.f32 %v2779, %v3436
  %v3445 = vmul.f32 %v2778, %v3437
  %v3446 = vmul.f32 %v2777, %v3438
  %v3447 = vmul.f32 %v2776, %v3439
  %v3448 = vmul.f32 %v2775, %v3440
  %v3449 = vmul.f32 %v2774, %v3433
  %v3450 = vmul.f32 %v2773, %v3434
  %v3451 = vmul.f32 %v2772, %v3435
  %v3452 = vmul.f32 %v2771, %v3436
  %v3453 = vmul.f32 %v2770, %v3437
  %v3454 = vmul.f32 %v2769, %v3438
  %v3455 = vmul.f32 %v2784, %v3439
  %v3456 = vmul.f32 %v2783, %v3440
  %v3457 = vadd.f32 %v3416, %v3441
  %v3458 = vadd.f32 %v3417, %v3442
  %v3459 = vadd.f32 %v3418, %v3443
  %v3460 = vadd.f32 %v3419, %v3444
  %v3461 = vadd.f32 %v3420, %v3445
  %v3462 = vadd.f32 %v3421, %v3446
  %v3463 = vadd.f32 %v3422, %v3447
  %v3464 = vadd.f32 %v3423, %v3448
  %v3465 = vadd.f32 %v3424, %v3449
  %v3466 = vadd.f32 %v3425, %v3450
  %v3467 = vadd.f32 %v3426, %v3451
  %v3468 = vadd.f32 %v3427, %v3452
  %v3469 = vadd.f32 %v3428, %v3453
  %v3470 = vadd.f32 %v3429, %v3454
  %v3471 = vadd.f32 %v3430, %v3455
  %v3472 = vadd.f32 %v3431, %v3456
  %s3473 = scalar_lea.vmem %s7, 2816
  %v3474 = vld [vmem:[%s3473] sm:$0xff]
  %v3475 = vld [vmem:[%s3473 + $0x8] sm:$0xff]
  %v3476 = vld [vmem:[%s3473 + $0x10] sm:$0xff]
  %v3477 = vld [vmem:[%s3473 + $0x18] sm:$0xff]
  %v3478 = vld [vmem:[%s3473 + $0x20] sm:$0xff]
  %v3479 = vld [vmem:[%s3473 + $0x28] sm:$0xff]
  %v3480 = vld [vmem:[%s3473 + $0x30] sm:$0xff]
  %v3481 = vld [vmem:[%s3473 + $0x38] sm:$0xff]
  %v3482 = vmul.f32 %v2855, %v3474
  %v3483 = vmul.f32 %v2854, %v3475
  %v3484 = vmul.f32 %v2853, %v3476
  %v3485 = vmul.f32 %v2852, %v3477
  %v3486 = vmul.f32 %v2851, %v3478
  %v3487 = vmul.f32 %v2850, %v3479
  %v3488 = vmul.f32 %v2849, %v3480
  %v3489 = vmul.f32 %v2848, %v3481
  %v3490 = vmul.f32 %v2847, %v3474
  %v3491 = vmul.f32 %v2846, %v3475
  %v3492 = vmul.f32 %v2845, %v3476
  %v3493 = vmul.f32 %v2844, %v3477
  %v3494 = vmul.f32 %v2843, %v3478
  %v3495 = vmul.f32 %v2842, %v3479
  %v3496 = vmul.f32 %v2857, %v3480
  %v3497 = vmul.f32 %v2856, %v3481
  %v3498 = vadd.f32 %v3457, %v3482
  %v3499 = vadd.f32 %v3458, %v3483
  %v3500 = vadd.f32 %v3459, %v3484
  %v3501 = vadd.f32 %v3460, %v3485
  %v3502 = vadd.f32 %v3461, %v3486
  %v3503 = vadd.f32 %v3462, %v3487
  %v3504 = vadd.f32 %v3463, %v3488
  %v3505 = vadd.f32 %v3464, %v3489
  %v3506 = vadd.f32 %v3465, %v3490
  %v3507 = vadd.f32 %v3466, %v3491
  %v3508 = vadd.f32 %v3467, %v3492
  %v3509 = vadd.f32 %v3468, %v3493
  %v3510 = vadd.f32 %v3469, %v3494
  %v3511 = vadd.f32 %v3470, %v3495
  %v3512 = vadd.f32 %v3471, %v3496
  %v3513 = vadd.f32 %v3472, %v3497
  %s3514 = scalar_lea.vmem %s7, 2880
  %v3515 = vld [vmem:[%s3514] sm:$0xff]
  %v3516 = vld [vmem:[%s3514 + $0x8] sm:$0xff]
  %v3517 = vld [vmem:[%s3514 + $0x10] sm:$0xff]
  %v3518 = vld [vmem:[%s3514 + $0x18] sm:$0xff]
  %v3519 = vld [vmem:[%s3514 + $0x20] sm:$0xff]
  %v3520 = vld [vmem:[%s3514 + $0x28] sm:$0xff]
  %v3521 = vld [vmem:[%s3514 + $0x30] sm:$0xff]
  %v3522 = vld [vmem:[%s3514 + $0x38] sm:$0xff]
  %v3523 = vmul.f32 %v2595, %v3515
  %v3524 = vmul.f32 %v2594, %v3516
  %v3525 = vmul.f32 %v2593, %v3517
  %v3526 = vmul.f32 %v2592, %v3518
  %v3527 = vmul.f32 %v2591, %v3519
  %v3528 = vmul.f32 %v2590, %v3520
  %v3529 = vmul.f32 %v2589, %v3521
  %v3530 = vmul.f32 %v2588, %v3522
  %v3531 = vmul.f32 %v2587, %v3515
  %v3532 = vmul.f32 %v2586, %v3516
  %v3533 = vmul.f32 %v2585, %v3517
  %v3534 = vmul.f32 %v2584, %v3518
  %v3535 = vmul.f32 %v2583, %v3519
  %v3536 = vmul.f32 %v2582, %v3520
  %v3537 = vmul.f32 %v2597, %v3521
  %v3538 = vmul.f32 %v2596, %v3522
  %v3539 = vadd.f32 %v3498, %v3523
  %v3540 = vadd.f32 %v3499, %v3524
  %v3541 = vadd.f32 %v3500, %v3525
  %v3542 = vadd.f32 %v3501, %v3526
  %v3543 = vadd.f32 %v3502, %v3527
  %v3544 = vadd.f32 %v3503, %v3528
  %v3545 = vadd.f32 %v3504, %v3529
  %v3546 = vadd.f32 %v3505, %v3530
  %v3547 = vadd.f32 %v3506, %v3531
  %v3548 = vadd.f32 %v3507, %v3532
  %v3549 = vadd.f32 %v3508, %v3533
  %v3550 = vadd.f32 %v3509, %v3534
  %v3551 = vadd.f32 %v3510, %v3535
  %v3552 = vadd.f32 %v3511, %v3536
  %v3553 = vadd.f32 %v3512, %v3537
  %v3554 = vadd.f32 %v3513, %v3538
  %s3555 = scalar_lea.vmem %s7, 2944
  %v3556 = vld [vmem:[%s3555] sm:$0xff]
  %v3557 = vld [vmem:[%s3555 + $0x8] sm:$0xff]
  %v3558 = vld [vmem:[%s3555 + $0x10] sm:$0xff]
  %v3559 = vld [vmem:[%s3555 + $0x18] sm:$0xff]
  %v3560 = vld [vmem:[%s3555 + $0x20] sm:$0xff]
  %v3561 = vld [vmem:[%s3555 + $0x28] sm:$0xff]
  %v3562 = vld [vmem:[%s3555 + $0x30] sm:$0xff]
  %v3563 = vld [vmem:[%s3555 + $0x38] sm:$0xff]
  %v3564 = vmul.f32 %v2668, %v3556
  %v3565 = vmul.f32 %v2667, %v3557
  %v3566 = vmul.f32 %v2666, %v3558
  %v3567 = vmul.f32 %v2665, %v3559
  %v3568 = vmul.f32 %v2664, %v3560
  %v3569 = vmul.f32 %v2663, %v3561
  %v3570 = vmul.f32 %v2662, %v3562
  %v3571 = vmul.f32 %v2661, %v3563
  %v3572 = vmul.f32 %v2660, %v3556
  %v3573 = vmul.f32 %v2659, %v3557
  %v3574 = vmul.f32 %v2658, %v3558
  %v3575 = vmul.f32 %v2657, %v3559
  %v3576 = vmul.f32 %v2656, %v3560
  %v3577 = vmul.f32 %v2655, %v3561
  %v3578 = vmul.f32 %v2670, %v3562
  %v3579 = vmul.f32 %v2669, %v3563
  %v3580 = vadd.f32 %v3539, %v3564
  %v3581 = vadd.f32 %v3540, %v3565
  %v3582 = vadd.f32 %v3541, %v3566
  %v3583 = vadd.f32 %v3542, %v3567
  %v3584 = vadd.f32 %v3543, %v3568
  %v3585 = vadd.f32 %v3544, %v3569
  %v3586 = vadd.f32 %v3545, %v3570
  %v3587 = vadd.f32 %v3546, %v3571
  %v3588 = vadd.f32 %v3547, %v3572
  %v3589 = vadd.f32 %v3548, %v3573
  %v3590 = vadd.f32 %v3549, %v3574
  %v3591 = vadd.f32 %v3550, %v3575
  %v3592 = vadd.f32 %v3551, %v3576
  %v3593 = vadd.f32 %v3552, %v3577
  %v3594 = vadd.f32 %v3553, %v3578
  %v3595 = vadd.f32 %v3554, %v3579
  %s3596 = scalar_lea.vmem %s7, 3008
  %v3597 = vld [vmem:[%s3596] sm:$0xff]
  %v3598 = vld [vmem:[%s3596 + $0x8] sm:$0xff]
  %v3599 = vld [vmem:[%s3596 + $0x10] sm:$0xff]
  %v3600 = vld [vmem:[%s3596 + $0x18] sm:$0xff]
  %v3601 = vld [vmem:[%s3596 + $0x20] sm:$0xff]
  %v3602 = vld [vmem:[%s3596 + $0x28] sm:$0xff]
  %v3603 = vld [vmem:[%s3596 + $0x30] sm:$0xff]
  %v3604 = vld [vmem:[%s3596 + $0x38] sm:$0xff]
  %v3605 = vmul.f32 %v2292, %v3597
  %v3606 = vmul.f32 %v2295, %v3598
  %v3607 = vmul.f32 %v2300, %v3599
  %v3608 = vmul.f32 %v2303, %v3600
  %v3609 = vmul.f32 %v2308, %v3601
  %v3610 = vmul.f32 %v2311, %v3602
  %v3611 = vmul.f32 %v2316, %v3603
  %v3612 = vmul.f32 %v2319, %v3604
  %v3613 = vmul.f32 %v2324, %v3597
  %v3614 = vmul.f32 %v2327, %v3598
  %v3615 = vmul.f32 %v2332, %v3599
  %v3616 = vmul.f32 %v2335, %v3600
  %v3617 = vmul.f32 %v2340, %v3601
  %v3618 = vmul.f32 %v2343, %v3602
  %v3619 = vmul.f32 %v2284, %v3603
  %v3620 = vmul.f32 %v2287, %v3604
  %v3621 = vadd.f32 %v3580, %v3605
  %v3622 = vadd.f32 %v3581, %v3606
  %v3623 = vadd.f32 %v3582, %v3607
  %v3624 = vadd.f32 %v3583, %v3608
  %v3625 = vadd.f32 %v3584, %v3609
  %v3626 = vadd.f32 %v3585, %v3610
  %v3627 = vadd.f32 %v3586, %v3611
  %v3628 = vadd.f32 %v3587, %v3612
  %v3629 = vadd.f32 %v3588, %v3613
  %v3630 = vadd.f32 %v3589, %v3614
  %v3631 = vadd.f32 %v3590, %v3615
  %v3632 = vadd.f32 %v3591, %v3616
  %v3633 = vadd.f32 %v3592, %v3617
  %v3634 = vadd.f32 %v3593, %v3618
  %v3635 = vadd.f32 %v3594, %v3619
  %v3636 = vadd.f32 %v3595, %v3620
  %s3637 = scalar_lea.vmem %s7, 3072
  %v3638 = vld [vmem:[%s3637] sm:$0xff]
  %v3639 = vld [vmem:[%s3637 + $0x8] sm:$0xff]
  %v3640 = vld [vmem:[%s3637 + $0x10] sm:$0xff]
  %v3641 = vld [vmem:[%s3637 + $0x18] sm:$0xff]
  %v3642 = vld [vmem:[%s3637 + $0x20] sm:$0xff]
  %v3643 = vld [vmem:[%s3637 + $0x28] sm:$0xff]
  %v3644 = vld [vmem:[%s3637 + $0x30] sm:$0xff]
  %v3645 = vld [vmem:[%s3637 + $0x38] sm:$0xff]
  %v3646 = vmul.f32 %v2781, %v3638
  %v3647 = vmul.f32 %v2780, %v3639
  %v3648 = vmul.f32 %v2779, %v3640
  %v3649 = vmul.f32 %v2778, %v3641
  %v3650 = vmul.f32 %v2777, %v3642
  %v3651 = vmul.f32 %v2776, %v3643
  %v3652 = vmul.f32 %v2775, %v3644
  %v3653 = vmul.f32 %v2774, %v3645
  %v3654 = vmul.f32 %v2773, %v3638
  %v3655 = vmul.f32 %v2772, %v3639
  %v3656 = vmul.f32 %v2771, %v3640
  %v3657 = vmul.f32 %v2770, %v3641
  %v3658 = vmul.f32 %v2769, %v3642
  %v3659 = vmul.f32 %v2784, %v3643
  %v3660 = vmul.f32 %v2783, %v3644
  %v3661 = vmul.f32 %v2782, %v3645
  %v3662 = vadd.f32 %v3621, %v3646
  %v3663 = vadd.f32 %v3622, %v3647
  %v3664 = vadd.f32 %v3623, %v3648
  %v3665 = vadd.f32 %v3624, %v3649
  %v3666 = vadd.f32 %v3625, %v3650
  %v3667 = vadd.f32 %v3626, %v3651
  %v3668 = vadd.f32 %v3627, %v3652
  %v3669 = vadd.f32 %v3628, %v3653
  %v3670 = vadd.f32 %v3629, %v3654
  %v3671 = vadd.f32 %v3630, %v3655
  %v3672 = vadd.f32 %v3631, %v3656
  %v3673 = vadd.f32 %v3632, %v3657
  %v3674 = vadd.f32 %v3633, %v3658
  %v3675 = vadd.f32 %v3634, %v3659
  %v3676 = vadd.f32 %v3635, %v3660
  %v3677 = vadd.f32 %v3636, %v3661
  %s3678 = scalar_lea.vmem %s7, 3136
  %v3679 = vld [vmem:[%s3678] sm:$0xff]
  %v3680 = vld [vmem:[%s3678 + $0x8] sm:$0xff]
  %v3681 = vld [vmem:[%s3678 + $0x10] sm:$0xff]
  %v3682 = vld [vmem:[%s3678 + $0x18] sm:$0xff]
  %v3683 = vld [vmem:[%s3678 + $0x20] sm:$0xff]
  %v3684 = vld [vmem:[%s3678 + $0x28] sm:$0xff]
  %v3685 = vld [vmem:[%s3678 + $0x30] sm:$0xff]
  %v3686 = vld [vmem:[%s3678 + $0x38] sm:$0xff]
  %v3687 = vmul.f32 %v2854, %v3679
  %v3688 = vmul.f32 %v2853, %v3680
  %v3689 = vmul.f32 %v2852, %v3681
  %v3690 = vmul.f32 %v2851, %v3682
  %v3691 = vmul.f32 %v2850, %v3683
  %v3692 = vmul.f32 %v2849, %v3684
  %v3693 = vmul.f32 %v2848, %v3685
  %v3694 = vmul.f32 %v2847, %v3686
  %v3695 = vmul.f32 %v2846, %v3679
  %v3696 = vmul.f32 %v2845, %v3680
  %v3697 = vmul.f32 %v2844, %v3681
  %v3698 = vmul.f32 %v2843, %v3682
  %v3699 = vmul.f32 %v2842, %v3683
  %v3700 = vmul.f32 %v2857, %v3684
  %v3701 = vmul.f32 %v2856, %v3685
  %v3702 = vmul.f32 %v2855, %v3686
  %v3703 = vadd.f32 %v3662, %v3687
  %v3704 = vadd.f32 %v3663, %v3688
  %v3705 = vadd.f32 %v3664, %v3689
  %v3706 = vadd.f32 %v3665, %v3690
  %v3707 = vadd.f32 %v3666, %v3691
  %v3708 = vadd.f32 %v3667, %v3692
  %v3709 = vadd.f32 %v3668, %v3693
  %v3710 = vadd.f32 %v3669, %v3694
  %v3711 = vadd.f32 %v3670, %v3695
  %v3712 = vadd.f32 %v3671, %v3696
  %v3713 = vadd.f32 %v3672, %v3697
  %v3714 = vadd.f32 %v3673, %v3698
  %v3715 = vadd.f32 %v3674, %v3699
  %v3716 = vadd.f32 %v3675, %v3700
  %v3717 = vadd.f32 %v3676, %v3701
  %v3718 = vadd.f32 %v3677, %v3702
  %s3719 = scalar_lea.vmem %s8, 1
  %v3720 = vld [vmem:[%s3719] sm:$0x1]
  %v3722 = vlaneseq
  %v3723 = vshrl.u32 %v3722, 7
  %v3724 = vsub.s32 0, %v3723
  %v3725 = vrot.slane %v3720, %v3724
  %v3727 = vadd.f32 %v3703, %v3725
  %v3728 = vadd.f32 %v3704, %v3725
  %v3729 = vadd.f32 %v3705, %v3725
  %v3730 = vadd.f32 %v3706, %v3725
  %v3731 = vadd.f32 %v3707, %v3725
  %v3732 = vadd.f32 %v3708, %v3725
  %v3733 = vadd.f32 %v3709, %v3725
  %v3734 = vadd.f32 %v3710, %v3725
  %v3735 = vadd.f32 %v3711, %v3725
  %v3736 = vadd.f32 %v3712, %v3725
  %v3737 = vadd.f32 %v3713, %v3725
  %v3738 = vadd.f32 %v3714, %v3725
  %v3739 = vadd.f32 %v3715, %v3725
  %v3740 = vadd.f32 %v3716, %v3725
  %v3741 = vadd.f32 %v3717, %v3725
  %v3742 = vadd.f32 %v3718, %v3725
  %v3743 = vpack.c.bf16 %v3728, %v3727
  %v3744 = vpack.c.bf16 %v3730, %v3729
  %v3745 = vpack.c.bf16 %v3732, %v3731
  %v3746 = vpack.c.bf16 %v3734, %v3733
  %v3747 = vpack.c.bf16 %v3736, %v3735
  %v3748 = vpack.c.bf16 %v3738, %v3737
  %v3749 = vpack.c.bf16 %v3740, %v3739
  %v3750 = vpack.c.bf16 %v3742, %v3741
  %v3751 = vpack.c.bf16 %v2397, %v2394
  %v3752 = vpack.c.bf16 %v2405, %v2402
  %v3753 = vpack.c.bf16 %v2413, %v2410
  %v3754 = vpack.c.bf16 %v2421, %v2418
  %v3755 = vpack.c.bf16 %v2429, %v2426
  %v3756 = vpack.c.bf16 %v2437, %v2434
  %v3757 = vpack.c.bf16 %v2445, %v2442
  %v3758 = vpack.c.bf16 %v2453, %v2450
  %v3759 = vpack.c.bf16 %v2507, %v2504
  %v3760 = vpack.c.bf16 %v2515, %v2512
  %v3761 = vpack.c.bf16 %v2523, %v2520
  %v3762 = vpack.c.bf16 %v2531, %v2528
  %v3763 = vpack.c.bf16 %v2539, %v2536
  %v3764 = vpack.c.bf16 %v2547, %v2544
  %v3765 = vpack.c.bf16 %v2555, %v2552
  %v3766 = vpack.c.bf16 %v2563, %v2560
  %s3767 = scalar_lea.vmem %s9, 64
  %v3768 = vld [vmem:[%s3767] sm:$0xff]
  %v3769 = vld [vmem:[%s3767 + $0x8] sm:$0xff]
  %v3770 = vld [vmem:[%s3767 + $0x10] sm:$0xff]
  %v3771 = vld [vmem:[%s3767 + $0x18] sm:$0xff]
  %v3772 = vld [vmem:[%s3767 + $0x20] sm:$0xff]
  %v3773 = vld [vmem:[%s3767 + $0x28] sm:$0xff]
  %v3774 = vld [vmem:[%s3767 + $0x30] sm:$0xff]
  %v3775 = vld [vmem:[%s3767 + $0x38] sm:$0xff]
  %v3777 = vsel %vm74, %v3743, 0
  %v3780 = vsel %vm74, %v3744, 0
  %v3783 = vsel %vm74, %v3745, 0
  %v3786 = vsel %vm74, %v3746, 0
  %v3789 = vsel %vm74, %v3751, 0
  %v3792 = vsel %vm74, %v3752, 0
  %v3795 = vsel %vm74, %v3753, 0
  %v3798 = vsel %vm74, %v3754, 0
  %3800 = vmatprep.subr.bf16.mxu0 0
  %3801 = vmatpush1.bf16.xpose.msra.mxu0 %v3789
  %3802 = vmatprep.subr.bf16.mxu0 0
  %3803 = vmatpush1.bf16.xpose.msra.mxu0 %v3792
  %3804 = vmatprep.subr.bf16.mxu0 0
  %3805 = vmatpush1.bf16.xpose.msra.mxu0 %v3795
  %3806 = vmatprep.subr.bf16.mxu0 0
  %3807 = vmatpush1.bf16.xpose.msra.mxu0 %v3798
  %3808 = vmatprep.subr.bf16.mxu0 0
  %3809 = vmatpush1.bf16.xpose.msra.mxu0 0
  %3810 = vmatprep.subr.bf16.mxu0 0
  %3811 = vmatpush1.bf16.xpose.msra.mxu0 0
  %3812 = vmatprep.subr.bf16.mxu0 0
  %3813 = vmatpush1.bf16.xpose.msra.mxu0 0
  %3814 = vmatprep.subr.bf16.mxu0 0
  %3815 = vmatpush1.bf16.xpose.msra.mxu0 0
  %3816 = vmatprep.subr.bf16.mxu0 0
  %3817 = vmatpush1.bf16.xpose.msra.mxu0 0
  %3818 = vmatprep.subr.bf16.mxu0 0
  %3819 = vmatpush1.bf16.xpose.msra.mxu0 0
  %3820 = vmatprep.subr.bf16.mxu0 0
  %3821 = vmatpush1.bf16.xpose.msra.mxu0 0
  %3822 = vmatprep.subr.bf16.mxu0 0
  %3823 = vmatpush1.bf16.xpose.msra.mxu0 0
  %3824 = vmatprep.subr.bf16.mxu0 0
  %3825 = vmatpush1.bf16.xpose.msra.mxu0 0
  %3826 = vmatprep.subr.bf16.mxu0 0
  %3827 = vmatpush1.bf16.xpose.msra.mxu0 0
  %3828 = vmatprep.subr.bf16.mxu0 0
  %3829 = vmatpush1.bf16.xpose.msra.mxu0 0
  %3830 = vmatprep.subr.bf16.mxu0 0
  %3831 = vmatpush1.bf16.xpose.msra.mxu0 0
  %3832 = vmatprep.mubr.bf16.mxu0 0
  %3833 = vmatmul.mubr.bf16.gmra.mrb[0].mxu0 %v3777
  %v3834 = vpop.f32.mrb[0].mxu0
  %v3835 = vadd.f32 %v3768, %v3834
  %v3836 = vpop.f32.mrb[0].mxu0
  %v3837 = vpop.f32.mrb[0].mxu0
  %v3838 = vadd.f32 %v3769, %v3837
  %v3839 = vpop.f32.mrb[0].mxu0
  %3840 = vmatprep.mubr.bf16.mxu0 0
  %3841 = vmatmul.mubr.bf16.gmra.mrb[0].mxu0 %v3780
  %v3842 = vpop.f32.mrb[0].mxu0
  %v3843 = vadd.f32 %v3770, %v3842
  %v3844 = vpop.f32.mrb[0].mxu0
  %v3845 = vpop.f32.mrb[0].mxu0
  %v3846 = vadd.f32 %v3771, %v3845
  %v3847 = vpop.f32.mrb[0].mxu0
  %3848 = vmatprep.mubr.bf16.mxu0 0
  %3849 = vmatmul.mubr.bf16.gmra.mrb[0].mxu0 %v3783
  %v3850 = vpop.f32.mrb[0].mxu0
  %v3851 = vadd.f32 %v3772, %v3850
  %v3852 = vpop.f32.mrb[0].mxu0
  %v3853 = vpop.f32.mrb[0].mxu0
  %v3854 = vadd.f32 %v3773, %v3853
  %v3855 = vpop.f32.mrb[0].mxu0
  %3856 = vmatprep.mubr.bf16.mxu0 0
  %3857 = vmatmul.mubr.bf16.gmra.mrb[0].mxu0 %v3786
  %v3858 = vpop.f32.mrb[0].mxu0
  %v3859 = vadd.f32 %v3774, %v3858
  %v3860 = vpop.f32.mrb[0].mxu0
  %v3861 = vpop.f32.mrb[0].mxu0
  %v3862 = vadd.f32 %v3775, %v3861
  %v3863 = vpop.f32.mrb[0].mxu0
  %3864 = vdwg.mxu0
  %v3866 = vsel %vm74, %v3747, 0
  %v3869 = vsel %vm74, %v3748, 0
  %v3872 = vsel %vm74, %v3749, 0
  %v3875 = vsel %vm74, %v3750, 0
  %v3878 = vsel %vm74, %v3755, 0
  %v3881 = vsel %vm74, %v3756, 0
  %v3884 = vsel %vm74, %v3757, 0
  %v3887 = vsel %vm74, %v3758, 0
  %3889 = vmatprep.subr.bf16.mxu0 0
  %3890 = vmatpush1.bf16.xpose.msra.mxu0 %v3878
  %3891 = vmatprep.subr.bf16.mxu0 0
  %3892 = vmatpush1.bf16.xpose.msra.mxu0 %v3881
  %3893 = vmatprep.subr.bf16.mxu0 0
  %3894 = vmatpush1.bf16.xpose.msra.mxu0 %v3884
  %3895 = vmatprep.subr.bf16.mxu0 0
  %3896 = vmatpush1.bf16.xpose.msra.mxu0 %v3887
  %3897 = vmatprep.subr.bf16.mxu0 0
  %3898 = vmatpush1.bf16.xpose.msra.mxu0 0
  %3899 = vmatprep.subr.bf16.mxu0 0
  %3900 = vmatpush1.bf16.xpose.msra.mxu0 0
  %3901 = vmatprep.subr.bf16.mxu0 0
  %3902 = vmatpush1.bf16.xpose.msra.mxu0 0
  %3903 = vmatprep.subr.bf16.mxu0 0
  %3904 = vmatpush1.bf16.xpose.msra.mxu0 0
  %3905 = vmatprep.subr.bf16.mxu0 0
  %3906 = vmatpush1.bf16.xpose.msra.mxu0 0
  %3907 = vmatprep.subr.bf16.mxu0 0
  %3908 = vmatpush1.bf16.xpose.msra.mxu0 0
  %3909 = vmatprep.subr.bf16.mxu0 0
  %3910 = vmatpush1.bf16.xpose.msra.mxu0 0
  %3911 = vmatprep.subr.bf16.mxu0 0
  %3912 = vmatpush1.bf16.xpose.msra.mxu0 0
  %3913 = vmatprep.subr.bf16.mxu0 0
  %3914 = vmatpush1.bf16.xpose.msra.mxu0 0
  %3915 = vmatprep.subr.bf16.mxu0 0
  %3916 = vmatpush1.bf16.xpose.msra.mxu0 0
  %3917 = vmatprep.subr.bf16.mxu0 0
  %3918 = vmatpush1.bf16.xpose.msra.mxu0 0
  %3919 = vmatprep.subr.bf16.mxu0 0
  %3920 = vmatpush1.bf16.xpose.msra.mxu0 0
  %3921 = vmatprep.mubr.bf16.mxu0 0
  %3922 = vmatmul.mubr.bf16.gmra.mrb[0].mxu0 %v3866
  %v3923 = vpop.f32.mrb[0].mxu0
  %v3924 = vadd.f32 %v3768, %v3923
  %v3925 = vpop.f32.mrb[0].mxu0
  %v3926 = vpop.f32.mrb[0].mxu0
  %v3927 = vadd.f32 %v3769, %v3926
  %v3928 = vpop.f32.mrb[0].mxu0
  %3929 = vmatprep.mubr.bf16.mxu0 0
  %3930 = vmatmul.mubr.bf16.gmra.mrb[0].mxu0 %v3869
  %v3931 = vpop.f32.mrb[0].mxu0
  %v3932 = vadd.f32 %v3770, %v3931
  %v3933 = vpop.f32.mrb[0].mxu0
  %v3934 = vpop.f32.mrb[0].mxu0
  %v3935 = vadd.f32 %v3771, %v3934
  %v3936 = vpop.f32.mrb[0].mxu0
  %3937 = vmatprep.mubr.bf16.mxu0 0
  %3938 = vmatmul.mubr.bf16.gmra.mrb[0].mxu0 %v3872
  %v3939 = vpop.f32.mrb[0].mxu0
  %v3940 = vadd.f32 %v3772, %v3939
  %v3941 = vpop.f32.mrb[0].mxu0
  %v3942 = vpop.f32.mrb[0].mxu0
  %v3943 = vadd.f32 %v3773, %v3942
  %v3944 = vpop.f32.mrb[0].mxu0
  %3945 = vmatprep.mubr.bf16.mxu0 0
  %3946 = vmatmul.mubr.bf16.gmra.mrb[0].mxu0 %v3875
  %v3947 = vpop.f32.mrb[0].mxu0
  %v3948 = vadd.f32 %v3774, %v3947
  %v3949 = vpop.f32.mrb[0].mxu0
  %v3950 = vpop.f32.mrb[0].mxu0
  %v3951 = vadd.f32 %v3775, %v3950
  %v3952 = vpop.f32.mrb[0].mxu0
  %3953 = vdwg.mxu0
  %v3954 = vsel %vm1807, %v3835, -inf
  %3955 = vmax.xlane.f32.xlu0 %v3954
  %v3956 = vpop.xlane.xlu0 %3955
  %v3957 = vsel %vm1807, %v3838, -inf
  %3958 = vmax.xlane.f32.xlu0 %v3957
  %v3959 = vpop.xlane.xlu0 %3958
  %v3960 = vsel %vm1807, %v3843, -inf
  %3961 = vmax.xlane.f32.xlu0 %v3960
  %v3962 = vpop.xlane.xlu0 %3961
  %v3963 = vsel %vm1807, %v3846, -inf
  %3964 = vmax.xlane.f32.xlu0 %v3963
  %v3965 = vpop.xlane.xlu0 %3964
  %v3966 = vsel %vm1807, %v3851, -inf
  %3967 = vmax.xlane.f32.xlu0 %v3966
  %v3968 = vpop.xlane.xlu0 %3967
  %v3969 = vsel %vm1807, %v3854, -inf
  %3970 = vmax.xlane.f32.xlu0 %v3969
  %v3971 = vpop.xlane.xlu0 %3970
  %v3972 = vsel %vm1807, %v3859, -inf
  %3973 = vmax.xlane.f32.xlu0 %v3972
  %v3974 = vpop.xlane.xlu0 %3973
  %v3975 = vsel %vm1807, %v3862, -inf
  %3976 = vmax.xlane.f32.xlu0 %v3975
  %v3977 = vpop.xlane.xlu0 %3976
  %v3978 = vsel %vm1807, %v3924, -inf
  %3979 = vmax.xlane.f32.xlu0 %v3978
  %v3980 = vpop.xlane.xlu0 %3979
  %v3981 = vsel %vm1807, %v3927, -inf
  %3982 = vmax.xlane.f32.xlu0 %v3981
  %v3983 = vpop.xlane.xlu0 %3982
  %v3984 = vsel %vm1807, %v3932, -inf
  %3985 = vmax.xlane.f32.xlu0 %v3984
  %v3986 = vpop.xlane.xlu0 %3985
  %v3987 = vsel %vm1807, %v3935, -inf
  %3988 = vmax.xlane.f32.xlu0 %v3987
  %v3989 = vpop.xlane.xlu0 %3988
  %v3990 = vsel %vm1807, %v3940, -inf
  %3991 = vmax.xlane.f32.xlu0 %v3990
  %v3992 = vpop.xlane.xlu0 %3991
  %v3993 = vsel %vm1807, %v3943, -inf
  %3994 = vmax.xlane.f32.xlu0 %v3993
  %v3995 = vpop.xlane.xlu0 %3994
  %v3996 = vsel %vm1807, %v3948, -inf
  %3997 = vmax.xlane.f32.xlu0 %v3996
  %v3998 = vpop.xlane.xlu0 %3997
  %v3999 = vsel %vm1807, %v3951, -inf
  %4000 = vmax.xlane.f32.xlu0 %v3999
  %v4001 = vpop.xlane.xlu0 %4000
  %v4002 = vsub.f32 %v3835, %v3956
  %v4003 = vsub.f32 %v3838, %v3959
  %v4004 = vsub.f32 %v3843, %v3962
  %v4005 = vsub.f32 %v3846, %v3965
  %v4006 = vsub.f32 %v3851, %v3968
  %v4007 = vsub.f32 %v3854, %v3971
  %v4008 = vsub.f32 %v3859, %v3974
  %v4009 = vsub.f32 %v3862, %v3977
  %v4010 = vsub.f32 %v3924, %v3980
  %v4011 = vsub.f32 %v3927, %v3983
  %v4012 = vsub.f32 %v3932, %v3986
  %v4013 = vsub.f32 %v3935, %v3989
  %v4014 = vsub.f32 %v3940, %v3992
  %v4015 = vsub.f32 %v3943, %v3995
  %v4016 = vsub.f32 %v3948, %v3998
  %v4017 = vsub.f32 %v3951, %v4001
  %v4018 = vmul.f32 %v4002, 1.442695
  %v4019 = vpow.pop %v4018
  %v4020 = vmul.f32 %v4003, 1.442695
  %v4021 = vpow.pop %v4020
  %v4022 = vmul.f32 %v4004, 1.442695
  %v4023 = vpow.pop %v4022
  %v4024 = vmul.f32 %v4005, 1.442695
  %v4025 = vpow.pop %v4024
  %v4026 = vmul.f32 %v4006, 1.442695
  %v4027 = vpow.pop %v4026
  %v4028 = vmul.f32 %v4007, 1.442695
  %v4029 = vpow.pop %v4028
  %v4030 = vmul.f32 %v4008, 1.442695
  %v4031 = vpow.pop %v4030
  %v4032 = vmul.f32 %v4009, 1.442695
  %v4033 = vpow.pop %v4032
  %v4034 = vmul.f32 %v4010, 1.442695
  %v4035 = vpow.pop %v4034
  %v4036 = vmul.f32 %v4011, 1.442695
  %v4037 = vpow.pop %v4036
  %v4038 = vmul.f32 %v4012, 1.442695
  %v4039 = vpow.pop %v4038
  %v4040 = vmul.f32 %v4013, 1.442695
  %v4041 = vpow.pop %v4040
  %v4042 = vmul.f32 %v4014, 1.442695
  %v4043 = vpow.pop %v4042
  %v4044 = vmul.f32 %v4015, 1.442695
  %v4045 = vpow.pop %v4044
  %v4046 = vmul.f32 %v4016, 1.442695
  %v4047 = vpow.pop %v4046
  %v4048 = vmul.f32 %v4017, 1.442695
  %v4049 = vpow.pop %v4048
  %v4050 = vsel %vm1807, %v4019, 0.0
  %4051 = vadd.xlane.f32.xlu0 %v4050
  %v4052 = vpop.xlane.xlu0 %4051
  %v4053 = vsel %vm1807, %v4021, 0.0
  %4054 = vadd.xlane.f32.xlu0 %v4053
  %v4055 = vpop.xlane.xlu0 %4054
  %v4056 = vsel %vm1807, %v4023, 0.0
  %4057 = vadd.xlane.f32.xlu0 %v4056
  %v4058 = vpop.xlane.xlu0 %4057
  %v4059 = vsel %vm1807, %v4025, 0.0
  %4060 = vadd.xlane.f32.xlu0 %v4059
  %v4061 = vpop.xlane.xlu0 %4060
  %v4062 = vsel %vm1807, %v4027, 0.0
  %4063 = vadd.xlane.f32.xlu0 %v4062
  %v4064 = vpop.xlane.xlu0 %4063
  %v4065 = vsel %vm1807, %v4029, 0.0
  %4066 = vadd.xlane.f32.xlu0 %v4065
  %v4067 = vpop.xlane.xlu0 %4066
  %v4068 = vsel %vm1807, %v4031, 0.0
  %4069 = vadd.xlane.f32.xlu0 %v4068
  %v4070 = vpop.xlane.xlu0 %4069
  %v4071 = vsel %vm1807, %v4033, 0.0
  %4072 = vadd.xlane.f32.xlu0 %v4071
  %v4073 = vpop.xlane.xlu0 %4072
  %v4074 = vsel %vm1807, %v4035, 0.0
  %4075 = vadd.xlane.f32.xlu0 %v4074
  %v4076 = vpop.xlane.xlu0 %4075
  %v4077 = vsel %vm1807, %v4037, 0.0
  %4078 = vadd.xlane.f32.xlu0 %v4077
  %v4079 = vpop.xlane.xlu0 %4078
  %v4080 = vsel %vm1807, %v4039, 0.0
  %4081 = vadd.xlane.f32.xlu0 %v4080
  %v4082 = vpop.xlane.xlu0 %4081
  %v4083 = vsel %vm1807, %v4041, 0.0
  %4084 = vadd.xlane.f32.xlu0 %v4083
  %v4085 = vpop.xlane.xlu0 %4084
  %v4086 = vsel %vm1807, %v4043, 0.0
  %4087 = vadd.xlane.f32.xlu0 %v4086
  %v4088 = vpop.xlane.xlu0 %4087
  %v4089 = vsel %vm1807, %v4045, 0.0
  %4090 = vadd.xlane.f32.xlu0 %v4089
  %v4091 = vpop.xlane.xlu0 %4090
  %v4092 = vsel %vm1807, %v4047, 0.0
  %4093 = vadd.xlane.f32.xlu0 %v4092
  %v4094 = vpop.xlane.xlu0 %4093
  %v4095 = vsel %vm1807, %v4049, 0.0
  %4096 = vadd.xlane.f32.xlu0 %v4095
  %v4097 = vpop.xlane.xlu0 %4096
  %v4098 = vrcp.pop %v4052
  %v4099 = vrcp.pop %v4055
  %v4100 = vrcp.pop %v4058
  %v4101 = vrcp.pop %v4061
  %v4102 = vrcp.pop %v4064
  %v4103 = vrcp.pop %v4067
  %v4104 = vrcp.pop %v4070
  %v4105 = vrcp.pop %v4073
  %v4106 = vrcp.pop %v4076
  %v4107 = vrcp.pop %v4079
  %v4108 = vrcp.pop %v4082
  %v4109 = vrcp.pop %v4085
  %v4110 = vrcp.pop %v4088
  %v4111 = vrcp.pop %v4091
  %v4112 = vrcp.pop %v4094
  %v4113 = vrcp.pop %v4097
  %v4114 = vmul.f32 %v4019, %v4098
  %v4115 = vmul.f32 %v4021, %v4099
  %v4116 = vmul.f32 %v4023, %v4100
  %v4117 = vmul.f32 %v4025, %v4101
  %v4118 = vmul.f32 %v4027, %v4102
  %v4119 = vmul.f32 %v4029, %v4103
  %v4120 = vmul.f32 %v4031, %v4104
  %v4121 = vmul.f32 %v4033, %v4105
  %v4122 = vmul.f32 %v4035, %v4106
  %v4123 = vmul.f32 %v4037, %v4107
  %v4124 = vmul.f32 %v4039, %v4108
  %v4125 = vmul.f32 %v4041, %v4109
  %v4126 = vmul.f32 %v4043, %v4110
  %v4127 = vmul.f32 %v4045, %v4111
  %v4128 = vmul.f32 %v4047, %v4112
  %v4129 = vmul.f32 %v4049, %v4113
  %v4130 = vpack.c.bf16 %v4115, %v4114
  %v4131 = vpack.c.bf16 %v4117, %v4116
  %v4132 = vpack.c.bf16 %v4119, %v4118
  %v4133 = vpack.c.bf16 %v4121, %v4120
  %v4134 = vpack.c.bf16 %v4123, %v4122
  %v4135 = vpack.c.bf16 %v4125, %v4124
  %v4136 = vpack.c.bf16 %v4127, %v4126
  %v4137 = vpack.c.bf16 %v4129, %v4128
  %v4139 = vsel %vm1807, %v4130, 0
  %v4142 = vsel %vm1807, %v4131, 0
  %v4145 = vsel %vm1807, %v4132, 0
  %v4148 = vsel %vm1807, %v4133, 0
  %4150 = vmatprep.subr.bf16.mxu0 0
  %4151 = vmatpush1.bf16.msra.mxu0 %v3759
  %4152 = vmatprep.subr.bf16.mxu0 0
  %4153 = vmatpush1.bf16.msra.mxu0 %v3760
  %4154 = vmatprep.subr.bf16.mxu0 0
  %4155 = vmatpush1.bf16.msra.mxu0 %v3761
  %4156 = vmatprep.subr.bf16.mxu0 0
  %4157 = vmatpush1.bf16.msra.mxu0 %v3762
  %4158 = vmatprep.subr.bf16.mxu0 0
  %4159 = vmatpush1.bf16.msra.mxu0 0
  %4160 = vmatprep.subr.bf16.mxu0 0
  %4161 = vmatpush1.bf16.msra.mxu0 0
  %4162 = vmatprep.subr.bf16.mxu0 0
  %4163 = vmatpush1.bf16.msra.mxu0 0
  %4164 = vmatprep.subr.bf16.mxu0 0
  %4165 = vmatpush1.bf16.msra.mxu0 0
  %4166 = vmatprep.subr.bf16.mxu0 0
  %4167 = vmatpush1.bf16.msra.mxu0 0
  %4168 = vmatprep.subr.bf16.mxu0 0
  %4169 = vmatpush1.bf16.msra.mxu0 0
  %4170 = vmatprep.subr.bf16.mxu0 0
  %4171 = vmatpush1.bf16.msra.mxu0 0
  %4172 = vmatprep.subr.bf16.mxu0 0
  %4173 = vmatpush1.bf16.msra.mxu0 0
  %4174 = vmatprep.subr.bf16.mxu0 0
  %4175 = vmatpush1.bf16.msra.mxu0 0
  %4176 = vmatprep.subr.bf16.mxu0 0
  %4177 = vmatpush1.bf16.msra.mxu0 0
  %4178 = vmatprep.subr.bf16.mxu0 0
  %4179 = vmatpush1.bf16.msra.mxu0 0
  %4180 = vmatprep.subr.bf16.mxu0 0
  %4181 = vmatpush1.bf16.msra.mxu0 0
  %4182 = vmatprep.mubr.bf16.mxu0 0
  %4183 = vmatmul.mubr.bf16.gmra.mrb[0].mxu0 %v4139
  %v4184 = vpop.f32.mrb[0].mxu0
  %v4185 = vadd.f32 0.0, %v4184
  %v4186 = vpop.f32.mrb[0].mxu0
  %v4187 = vpop.f32.mrb[0].mxu0
  %v4188 = vadd.f32 0.0, %v4187
  %v4189 = vpop.f32.mrb[0].mxu0
  %4190 = vmatprep.mubr.bf16.mxu0 0
  %4191 = vmatmul.mubr.bf16.gmra.mrb[0].mxu0 %v4142
  %v4192 = vpop.f32.mrb[0].mxu0
  %v4193 = vadd.f32 0.0, %v4192
  %v4194 = vpop.f32.mrb[0].mxu0
  %v4195 = vpop.f32.mrb[0].mxu0
  %v4196 = vadd.f32 0.0, %v4195
  %v4197 = vpop.f32.mrb[0].mxu0
  %4198 = vmatprep.mubr.bf16.mxu0 0
  %4199 = vmatmul.mubr.bf16.gmra.mrb[0].mxu0 %v4145
  %v4200 = vpop.f32.mrb[0].mxu0
  %v4201 = vadd.f32 0.0, %v4200
  %v4202 = vpop.f32.mrb[0].mxu0
  %v4203 = vpop.f32.mrb[0].mxu0
  %v4204 = vadd.f32 0.0, %v4203
  %v4205 = vpop.f32.mrb[0].mxu0
  %4206 = vmatprep.mubr.bf16.mxu0 0
  %4207 = vmatmul.mubr.bf16.gmra.mrb[0].mxu0 %v4148
  %v4208 = vpop.f32.mrb[0].mxu0
  %v4209 = vadd.f32 0.0, %v4208
  %v4210 = vpop.f32.mrb[0].mxu0
  %v4211 = vpop.f32.mrb[0].mxu0
  %v4212 = vadd.f32 0.0, %v4211
  %v4213 = vpop.f32.mrb[0].mxu0
  %4214 = vdwg.mxu0
  %v4216 = vsel %vm1807, %v4134, 0
  %v4219 = vsel %vm1807, %v4135, 0
  %v4222 = vsel %vm1807, %v4136, 0
  %v4225 = vsel %vm1807, %v4137, 0
  %4227 = vmatprep.subr.bf16.mxu0 0
  %4228 = vmatpush1.bf16.msra.mxu0 %v3763
  %4229 = vmatprep.subr.bf16.mxu0 0
  %4230 = vmatpush1.bf16.msra.mxu0 %v3764
  %4231 = vmatprep.subr.bf16.mxu0 0
  %4232 = vmatpush1.bf16.msra.mxu0 %v3765
  %4233 = vmatprep.subr.bf16.mxu0 0
  %4234 = vmatpush1.bf16.msra.mxu0 %v3766
  %4235 = vmatprep.subr.bf16.mxu0 0
  %4236 = vmatpush1.bf16.msra.mxu0 0
  %4237 = vmatprep.subr.bf16.mxu0 0
  %4238 = vmatpush1.bf16.msra.mxu0 0
  %4239 = vmatprep.subr.bf16.mxu0 0
  %4240 = vmatpush1.bf16.msra.mxu0 0
  %4241 = vmatprep.subr.bf16.mxu0 0
  %4242 = vmatpush1.bf16.msra.mxu0 0
  %4243 = vmatprep.subr.bf16.mxu0 0
  %4244 = vmatpush1.bf16.msra.mxu0 0
  %4245 = vmatprep.subr.bf16.mxu0 0
  %4246 = vmatpush1.bf16.msra.mxu0 0
  %4247 = vmatprep.subr.bf16.mxu0 0
  %4248 = vmatpush1.bf16.msra.mxu0 0
  %4249 = vmatprep.subr.bf16.mxu0 0
  %4250 = vmatpush1.bf16.msra.mxu0 0
  %4251 = vmatprep.subr.bf16.mxu0 0
  %4252 = vmatpush1.bf16.msra.mxu0 0
  %4253 = vmatprep.subr.bf16.mxu0 0
  %4254 = vmatpush1.bf16.msra.mxu0 0
  %4255 = vmatprep.subr.bf16.mxu0 0
  %4256 = vmatpush1.bf16.msra.mxu0 0
  %4257 = vmatprep.subr.bf16.mxu0 0
  %4258 = vmatpush1.bf16.msra.mxu0 0
  %4259 = vmatprep.mubr.bf16.mxu0 0
  %4260 = vmatmul.mubr.bf16.gmra.mrb[0].mxu0 %v4216
  %v4261 = vpop.f32.mrb[0].mxu0
  %v4262 = vadd.f32 0.0, %v4261
  %v4263 = vpop.f32.mrb[0].mxu0
  %v4264 = vpop.f32.mrb[0].mxu0
  %v4265 = vadd.f32 0.0, %v4264
  %v4266 = vpop.f32.mrb[0].mxu0
  %4267 = vmatprep.mubr.bf16.mxu0 0
  %4268 = vmatmul.mubr.bf16.gmra.mrb[0].mxu0 %v4219
  %v4269 = vpop.f32.mrb[0].mxu0
  %v4270 = vadd.f32 0.0, %v4269
  %v4271 = vpop.f32.mrb[0].mxu0
  %v4272 = vpop.f32.mrb[0].mxu0
  %v4273 = vadd.f32 0.0, %v4272
  %v4274 = vpop.f32.mrb[0].mxu0
  %4275 = vmatprep.mubr.bf16.mxu0 0
  %4276 = vmatmul.mubr.bf16.gmra.mrb[0].mxu0 %v4222
  %v4277 = vpop.f32.mrb[0].mxu0
  %v4278 = vadd.f32 0.0, %v4277
  %v4279 = vpop.f32.mrb[0].mxu0
  %v4280 = vpop.f32.mrb[0].mxu0
  %v4281 = vadd.f32 0.0, %v4280
  %v4282 = vpop.f32.mrb[0].mxu0
  %4283 = vmatprep.mubr.bf16.mxu0 0
  %4284 = vmatmul.mubr.bf16.gmra.mrb[0].mxu0 %v4225
  %v4285 = vpop.f32.mrb[0].mxu0
  %v4286 = vadd.f32 0.0, %v4285
  %v4287 = vpop.f32.mrb[0].mxu0
  %v4288 = vpop.f32.mrb[0].mxu0
  %v4289 = vadd.f32 0.0, %v4288
  %v4290 = vpop.f32.mrb[0].mxu0
  %4291 = vdwg.mxu0
  %v4292 = vmax.f32 %v4185, 0.0
  %v4293 = vmax.f32 %v4188, 0.0
  %v4294 = vmax.f32 %v4193, 0.0
  %v4295 = vmax.f32 %v4196, 0.0
  %v4296 = vmax.f32 %v4201, 0.0
  %v4297 = vmax.f32 %v4204, 0.0
  %v4298 = vmax.f32 %v4209, 0.0
  %v4299 = vmax.f32 %v4212, 0.0
  %v4300 = vmax.f32 %v4262, 0.0
  %v4301 = vmax.f32 %v4265, 0.0
  %v4302 = vmax.f32 %v4270, 0.0
  %v4303 = vmax.f32 %v4273, 0.0
  %v4304 = vmax.f32 %v4278, 0.0
  %v4305 = vmax.f32 %v4281, 0.0
  %v4306 = vmax.f32 %v4286, 0.0
  %v4307 = vmax.f32 %v4289, 0.0
  %v4308 = vpack.c.bf16 %v4293, %v4292
  %v4309 = vpack.c.bf16 %v4295, %v4294
  %v4310 = vpack.c.bf16 %v4297, %v4296
  %v4311 = vpack.c.bf16 %v4299, %v4298
  %v4312 = vpack.c.bf16 %v4301, %v4300
  %v4313 = vpack.c.bf16 %v4303, %v4302
  %v4314 = vpack.c.bf16 %v4305, %v4304
  %v4315 = vpack.c.bf16 %v4307, %v4306
  %s4316 = scalar_lea.vmem %s10, 4
  %v4317 = vld [vmem:[%s4316] sm:$0xf]
  %v4319 = vsel %vm74, %v4308, 0
  %v4322 = vsel %vm74, %v4309, 0
  %v4325 = vsel %vm74, %v4310, 0
  %v4328 = vsel %vm74, %v4311, 0
  %v4331 = vsel %vm74, %v4312, 0
  %v4334 = vsel %vm74, %v4313, 0
  %v4337 = vsel %vm74, %v4314, 0
  %v4340 = vsel %vm74, %v4315, 0
  %v4343 = vsel %vm99, %v4317, 0
  %4345 = vmatprep.subr.bf16.mxu0 0
  %4346 = vmatpush1.bf16.msra.mxu0 %v4343
  %4347 = vmatprep.subr.bf16.mxu0 0
  %4348 = vmatpush1.bf16.msra.mxu0 0
  %4349 = vmatprep.subr.bf16.mxu0 0
  %4350 = vmatpush1.bf16.msra.mxu0 0
  %4351 = vmatprep.subr.bf16.mxu0 0
  %4352 = vmatpush1.bf16.msra.mxu0 0
  %4353 = vmatprep.subr.bf16.mxu0 0
  %4354 = vmatpush1.bf16.msra.mxu0 0
  %4355 = vmatprep.subr.bf16.mxu0 0
  %4356 = vmatpush1.bf16.msra.mxu0 0
  %4357 = vmatprep.subr.bf16.mxu0 0
  %4358 = vmatpush1.bf16.msra.mxu0 0
  %4359 = vmatprep.subr.bf16.mxu0 0
  %4360 = vmatpush1.bf16.msra.mxu0 0
  %4361 = vmatprep.subr.bf16.mxu0 0
  %4362 = vmatpush1.bf16.msra.mxu0 0
  %4363 = vmatprep.subr.bf16.mxu0 0
  %4364 = vmatpush1.bf16.msra.mxu0 0
  %4365 = vmatprep.subr.bf16.mxu0 0
  %4366 = vmatpush1.bf16.msra.mxu0 0
  %4367 = vmatprep.subr.bf16.mxu0 0
  %4368 = vmatpush1.bf16.msra.mxu0 0
  %4369 = vmatprep.subr.bf16.mxu0 0
  %4370 = vmatpush1.bf16.msra.mxu0 0
  %4371 = vmatprep.subr.bf16.mxu0 0
  %4372 = vmatpush1.bf16.msra.mxu0 0
  %4373 = vmatprep.subr.bf16.mxu0 0
  %4374 = vmatpush1.bf16.msra.mxu0 0
  %4375 = vmatprep.subr.bf16.mxu0 0
  %4376 = vmatpush1.bf16.msra.mxu0 0
  %4377 = vmatprep.mubr.bf16.mxu0 0
  %4378 = vmatmul.mubr.bf16.gmra.mrb[0].mxu0 %v4319
  %v4379 = vpop.f32.mrb[0].mxu0
  %v4380 = vadd.f32 0.0, %v4379
  %v4381 = vpop.f32.mrb[0].mxu0
  %v4382 = vpop.f32.mrb[0].mxu0
  %v4383 = vadd.f32 0.0, %v4382
  %v4384 = vpop.f32.mrb[0].mxu0
  %4385 = vmatprep.mubr.bf16.mxu0 0
  %4386 = vmatmul.mubr.bf16.gmra.mrb[0].mxu0 %v4322
  %v4387 = vpop.f32.mrb[0].mxu0
  %v4388 = vadd.f32 0.0, %v4387
  %v4389 = vpop.f32.mrb[0].mxu0
  %v4390 = vpop.f32.mrb[0].mxu0
  %v4391 = vadd.f32 0.0, %v4390
  %v4392 = vpop.f32.mrb[0].mxu0
  %4393 = vmatprep.mubr.bf16.mxu0 0
  %4394 = vmatmul.mubr.bf16.gmra.mrb[0].mxu0 %v4325
  %v4395 = vpop.f32.mrb[0].mxu0
  %v4396 = vadd.f32 0.0, %v4395
  %v4397 = vpop.f32.mrb[0].mxu0
  %v4398 = vpop.f32.mrb[0].mxu0
  %v4399 = vadd.f32 0.0, %v4398
  %v4400 = vpop.f32.mrb[0].mxu0
  %4401 = vmatprep.mubr.bf16.mxu0 0
  %4402 = vmatmul.mubr.bf16.gmra.mrb[0].mxu0 %v4328
  %v4403 = vpop.f32.mrb[0].mxu0
  %v4404 = vadd.f32 0.0, %v4403
  %v4405 = vpop.f32.mrb[0].mxu0
  %v4406 = vpop.f32.mrb[0].mxu0
  %v4407 = vadd.f32 0.0, %v4406
  %v4408 = vpop.f32.mrb[0].mxu0
  %4409 = vmatprep.mubr.bf16.mxu0 0
  %4410 = vmatmul.mubr.bf16.gmra.mrb[0].mxu0 %v4331
  %v4411 = vpop.f32.mrb[0].mxu0
  %v4412 = vadd.f32 0.0, %v4411
  %v4413 = vpop.f32.mrb[0].mxu0
  %v4414 = vpop.f32.mrb[0].mxu0
  %v4415 = vadd.f32 0.0, %v4414
  %v4416 = vpop.f32.mrb[0].mxu0
  %4417 = vmatprep.mubr.bf16.mxu0 0
  %4418 = vmatmul.mubr.bf16.gmra.mrb[0].mxu0 %v4334
  %v4419 = vpop.f32.mrb[0].mxu0
  %v4420 = vadd.f32 0.0, %v4419
  %v4421 = vpop.f32.mrb[0].mxu0
  %v4422 = vpop.f32.mrb[0].mxu0
  %v4423 = vadd.f32 0.0, %v4422
  %v4424 = vpop.f32.mrb[0].mxu0
  %4425 = vmatprep.mubr.bf16.mxu0 0
  %4426 = vmatmul.mubr.bf16.gmra.mrb[0].mxu0 %v4337
  %v4427 = vpop.f32.mrb[0].mxu0
  %v4428 = vadd.f32 0.0, %v4427
  %v4429 = vpop.f32.mrb[0].mxu0
  %v4430 = vpop.f32.mrb[0].mxu0
  %v4431 = vadd.f32 0.0, %v4430
  %v4432 = vpop.f32.mrb[0].mxu0
  %4433 = vmatprep.mubr.bf16.mxu0 0
  %4434 = vmatmul.mubr.bf16.gmra.mrb[0].mxu0 %v4340
  %v4435 = vpop.f32.mrb[0].mxu0
  %v4436 = vadd.f32 0.0, %v4435
  %v4437 = vpop.f32.mrb[0].mxu0
  %v4438 = vpop.f32.mrb[0].mxu0
  %v4439 = vadd.f32 0.0, %v4438
  %v4440 = vpop.f32.mrb[0].mxu0
  %4441 = vdwg.mxu0
  %v4443 = vsel %vm74, %v2162, 0
  %v4446 = vsel %vm74, %v2163, 0
  %v4449 = vsel %vm74, %v2164, 0
  %v4452 = vsel %vm74, %v2165, 0
  %v4455 = vsel %vm74, %v2166, 0
  %v4458 = vsel %vm74, %v2167, 0
  %v4461 = vsel %vm74, %v2168, 0
  %v4464 = vsel %vm74, %v2169, 0
  %v4467 = vsel %vm99, %v2170, 0
  %4469 = vmatprep.subr.bf16.mxu0 0
  %4470 = vmatpush1.bf16.msra.mxu0 %v4467
  %4471 = vmatprep.subr.bf16.mxu0 0
  %4472 = vmatpush1.bf16.msra.mxu0 0
  %4473 = vmatprep.subr.bf16.mxu0 0
  %4474 = vmatpush1.bf16.msra.mxu0 0
  %4475 = vmatprep.subr.bf16.mxu0 0
  %4476 = vmatpush1.bf16.msra.mxu0 0
  %4477 = vmatprep.subr.bf16.mxu0 0
  %4478 = vmatpush1.bf16.msra.mxu0 0
  %4479 = vmatprep.subr.bf16.mxu0 0
  %4480 = vmatpush1.bf16.msra.mxu0 0
  %4481 = vmatprep.subr.bf16.mxu0 0
  %4482 = vmatpush1.bf16.msra.mxu0 0
  %4483 = vmatprep.subr.bf16.mxu0 0
  %4484 = vmatpush1.bf16.msra.mxu0 0
  %4485 = vmatprep.subr.bf16.mxu0 0
  %4486 = vmatpush1.bf16.msra.mxu0 0
  %4487 = vmatprep.subr.bf16.mxu0 0
  %4488 = vmatpush1.bf16.msra.mxu0 0
  %4489 = vmatprep.subr.bf16.mxu0 0
  %4490 = vmatpush1.bf16.msra.mxu0 0
  %4491 = vmatprep.subr.bf16.mxu0 0
  %4492 = vmatpush1.bf16.msra.mxu0 0
  %4493 = vmatprep.subr.bf16.mxu0 0
  %4494 = vmatpush1.bf16.msra.mxu0 0
  %4495 = vmatprep.subr.bf16.mxu0 0
  %4496 = vmatpush1.bf16.msra.mxu0 0
  %4497 = vmatprep.subr.bf16.mxu0 0
  %4498 = vmatpush1.bf16.msra.mxu0 0
  %4499 = vmatprep.subr.bf16.mxu0 0
  %4500 = vmatpush1.bf16.msra.mxu0 0
  %4501 = vmatprep.mubr.bf16.mxu0 0
  %4502 = vmatmul.mubr.bf16.gmra.mrb[0].mxu0 %v4443
  %v4503 = vpop.f32.mrb[0].mxu0
  %v4504 = vadd.f32 %v4380, %v4503
  %v4505 = vpop.f32.mrb[0].mxu0
  %v4506 = vpop.f32.mrb[0].mxu0
  %v4507 = vadd.f32 %v4383, %v4506
  %v4508 = vpop.f32.mrb[0].mxu0
  %4509 = vmatprep.mubr.bf16.mxu0 0
  %4510 = vmatmul.mubr.bf16.gmra.mrb[0].mxu0 %v4446
  %v4511 = vpop.f32.mrb[0].mxu0
  %v4512 = vadd.f32 %v4388, %v4511
  %v4513 = vpop.f32.mrb[0].mxu0
  %v4514 = vpop.f32.mrb[0].mxu0
  %v4515 = vadd.f32 %v4391, %v4514
  %v4516 = vpop.f32.mrb[0].mxu0
  %4517 = vmatprep.mubr.bf16.mxu0 0
  %4518 = vmatmul.mubr.bf16.gmra.mrb[0].mxu0 %v4449
  %v4519 = vpop.f32.mrb[0].mxu0
  %v4520 = vadd.f32 %v4396, %v4519
  %v4521 = vpop.f32.mrb[0].mxu0
  %v4522 = vpop.f32.mrb[0].mxu0
  %v4523 = vadd.f32 %v4399, %v4522
  %v4524 = vpop.f32.mrb[0].mxu0
  %4525 = vmatprep.mubr.bf16.mxu0 0
  %4526 = vmatmul.mubr.bf16.gmra.mrb[0].mxu0 %v4452
  %v4527 = vpop.f32.mrb[0].mxu0
  %v4528 = vadd.f32 %v4404, %v4527
  %v4529 = vpop.f32.mrb[0].mxu0
  %v4530 = vpop.f32.mrb[0].mxu0
  %v4531 = vadd.f32 %v4407, %v4530
  %v4532 = vpop.f32.mrb[0].mxu0
  %4533 = vmatprep.mubr.bf16.mxu0 0
  %4534 = vmatmul.mubr.bf16.gmra.mrb[0].mxu0 %v4455
  %v4535 = vpop.f32.mrb[0].mxu0
  %v4536 = vadd.f32 %v4412, %v4535
  %v4537 = vpop.f32.mrb[0].mxu0
  %v4538 = vpop.f32.mrb[0].mxu0
  %v4539 = vadd.f32 %v4415, %v4538
  %v4540 = vpop.f32.mrb[0].mxu0
  %4541 = vmatprep.mubr.bf16.mxu0 0
  %4542 = vmatmul.mubr.bf16.gmra.mrb[0].mxu0 %v4458
  %v4543 = vpop.f32.mrb[0].mxu0
  %v4544 = vadd.f32 %v4420, %v4543
  %v4545 = vpop.f32.mrb[0].mxu0
  %v4546 = vpop.f32.mrb[0].mxu0
  %v4547 = vadd.f32 %v4423, %v4546
  %v4548 = vpop.f32.mrb[0].mxu0
  %4549 = vmatprep.mubr.bf16.mxu0 0
  %4550 = vmatmul.mubr.bf16.gmra.mrb[0].mxu0 %v4461
  %v4551 = vpop.f32.mrb[0].mxu0
  %v4552 = vadd.f32 %v4428, %v4551
  %v4553 = vpop.f32.mrb[0].mxu0
  %v4554 = vpop.f32.mrb[0].mxu0
  %v4555 = vadd.f32 %v4431, %v4554
  %v4556 = vpop.f32.mrb[0].mxu0
  %4557 = vmatprep.mubr.bf16.mxu0 0
  %4558 = vmatmul.mubr.bf16.gmra.mrb[0].mxu0 %v4464
  %v4559 = vpop.f32.mrb[0].mxu0
  %v4560 = vadd.f32 %v4436, %v4559
  %v4561 = vpop.f32.mrb[0].mxu0
  %v4562 = vpop.f32.mrb[0].mxu0
  %v4563 = vadd.f32 %v4439, %v4562
  %v4564 = vpop.f32.mrb[0].mxu0
  %4565 = vdwg.mxu0
  %s4566 = scalar_lea.vmem %s0, 128
  %v4567 = vld [vmem:[%s4566] sm:$0xff]
  %v4568 = vld [vmem:[%s4566 + $0x8] sm:$0xff]
  %v4569 = vld [vmem:[%s4566 + $0x10] sm:$0xff]
  %v4570 = vld [vmem:[%s4566 + $0x18] sm:$0xff]
  %v4571 = vld [vmem:[%s4566 + $0x20] sm:$0xff]
  %v4572 = vld [vmem:[%s4566 + $0x28] sm:$0xff]
  %v4573 = vld [vmem:[%s4566 + $0x30] sm:$0xff]
  %v4574 = vld [vmem:[%s4566 + $0x38] sm:$0xff]
  %v4575 = vld [vmem:[%s4566 + $0x100] sm:$0xff]
  %v4576 = vld [vmem:[%s4566 + $0x108] sm:$0xff]
  %v4577 = vld [vmem:[%s4566 + $0x110] sm:$0xff]
  %v4578 = vld [vmem:[%s4566 + $0x118] sm:$0xff]
  %v4579 = vld [vmem:[%s4566 + $0x120] sm:$0xff]
  %v4580 = vld [vmem:[%s4566 + $0x128] sm:$0xff]
  %v4581 = vld [vmem:[%s4566 + $0x130] sm:$0xff]
  %v4582 = vld [vmem:[%s4566 + $0x138] sm:$0xff]
  %v4583 = vadd.f32 %v4185, %v4567
  %v4584 = vadd.f32 %v4188, %v4568
  %v4585 = vadd.f32 %v4193, %v4569
  %v4586 = vadd.f32 %v4196, %v4570
  %v4587 = vadd.f32 %v4201, %v4571
  %v4588 = vadd.f32 %v4204, %v4572
  %v4589 = vadd.f32 %v4209, %v4573
  %v4590 = vadd.f32 %v4212, %v4574
  %v4591 = vadd.f32 %v4262, %v4575
  %v4592 = vadd.f32 %v4265, %v4576
  %v4593 = vadd.f32 %v4270, %v4577
  %v4594 = vadd.f32 %v4273, %v4578
  %v4595 = vadd.f32 %v4278, %v4579
  %v4596 = vadd.f32 %v4281, %v4580
  %v4597 = vadd.f32 %v4286, %v4581
  %v4598 = vadd.f32 %v4289, %v4582
  %v4599 = vpack.c.bf16 %v4584, %v4583
  %v4600 = vpack.c.bf16 %v4586, %v4585
  %v4601 = vpack.c.bf16 %v4588, %v4587
  %v4602 = vpack.c.bf16 %v4590, %v4589
  %v4603 = vpack.c.bf16 %v4592, %v4591
  %v4604 = vpack.c.bf16 %v4594, %v4593
  %v4605 = vpack.c.bf16 %v4596, %v4595
  %v4606 = vpack.c.bf16 %v4598, %v4597
  %s4607 = scalar_lea.vmem %s1, 8
  %v4608 = vld [vmem:[%s4607] sm:$0xf]
  %s4609 = scalar_lea.vmem %s4, 2
  %v4610 = vld [vmem:[%s4609] sm:$0x1]
  %v4612 = vlaneseq
  %v4613 = vshrl.u32 %v4612, 7
  %v4614 = vsub.s32 0, %v4613
  %v4615 = vrot.slane %v4610, %v4614
  %v4618 = vsel %vm74, %v4599, 0
  %v4621 = vsel %vm74, %v4600, 0
  %v4624 = vsel %vm74, %v4601, 0
  %v4627 = vsel %vm74, %v4602, 0
  %v4630 = vsel %vm74, %v4603, 0
  %v4633 = vsel %vm74, %v4604, 0
  %v4636 = vsel %vm74, %v4605, 0
  %v4639 = vsel %vm74, %v4606, 0
  %v4642 = vsel %vm99, %v4608, 0
  %4644 = vmatprep.subr.bf16.mxu0 0
  %4645 = vmatpush1.bf16.msra.mxu0 %v4642
  %4646 = vmatprep.subr.bf16.mxu0 0
  %4647 = vmatpush1.bf16.msra.mxu0 0
  %4648 = vmatprep.subr.bf16.mxu0 0
  %4649 = vmatpush1.bf16.msra.mxu0 0
  %4650 = vmatprep.subr.bf16.mxu0 0
  %4651 = vmatpush1.bf16.msra.mxu0 0
  %4652 = vmatprep.subr.bf16.mxu0 0
  %4653 = vmatpush1.bf16.msra.mxu0 0
  %4654 = vmatprep.subr.bf16.mxu0 0
  %4655 = vmatpush1.bf16.msra.mxu0 0
  %4656 = vmatprep.subr.bf16.mxu0 0
  %4657 = vmatpush1.bf16.msra.mxu0 0
  %4658 = vmatprep.subr.bf16.mxu0 0
  %4659 = vmatpush1.bf16.msra.mxu0 0
  %4660 = vmatprep.subr.bf16.mxu0 0
  %4661 = vmatpush1.bf16.msra.mxu0 0
  %4662 = vmatprep.subr.bf16.mxu0 0
  %4663 = vmatpush1.bf16.msra.mxu0 0
  %4664 = vmatprep.subr.bf16.mxu0 0
  %4665 = vmatpush1.bf16.msra.mxu0 0
  %4666 = vmatprep.subr.bf16.mxu0 0
  %4667 = vmatpush1.bf16.msra.mxu0 0
  %4668 = vmatprep.subr.bf16.mxu0 0
  %4669 = vmatpush1.bf16.msra.mxu0 0
  %4670 = vmatprep.subr.bf16.mxu0 0
  %4671 = vmatpush1.bf16.msra.mxu0 0
  %4672 = vmatprep.subr.bf16.mxu0 0
  %4673 = vmatpush1.bf16.msra.mxu0 0
  %4674 = vmatprep.subr.bf16.mxu0 0
  %4675 = vmatpush1.bf16.msra.mxu0 0
  %4676 = vmatprep.mubr.bf16.mxu0 0
  %4677 = vmatmul.mubr.bf16.gmra.mrb[0].mxu0 %v4618
  %v4678 = vpop.f32.mrb[0].mxu0
  %v4679 = vadd.f32 %v4615, %v4678
  %v4680 = vpop.f32.mrb[0].mxu0
  %v4681 = vpop.f32.mrb[0].mxu0
  %v4682 = vadd.f32 %v4615, %v4681
  %v4683 = vpop.f32.mrb[0].mxu0
  %4684 = vmatprep.mubr.bf16.mxu0 0
  %4685 = vmatmul.mubr.bf16.gmra.mrb[0].mxu0 %v4621
  %v4686 = vpop.f32.mrb[0].mxu0
  %v4687 = vadd.f32 %v4615, %v4686
  %v4688 = vpop.f32.mrb[0].mxu0
  %v4689 = vpop.f32.mrb[0].mxu0
  %v4690 = vadd.f32 %v4615, %v4689
  %v4691 = vpop.f32.mrb[0].mxu0
  %4692 = vmatprep.mubr.bf16.mxu0 0
  %4693 = vmatmul.mubr.bf16.gmra.mrb[0].mxu0 %v4624
  %v4694 = vpop.f32.mrb[0].mxu0
  %v4695 = vadd.f32 %v4615, %v4694
  %v4696 = vpop.f32.mrb[0].mxu0
  %v4697 = vpop.f32.mrb[0].mxu0
  %v4698 = vadd.f32 %v4615, %v4697
  %v4699 = vpop.f32.mrb[0].mxu0
  %4700 = vmatprep.mubr.bf16.mxu0 0
  %4701 = vmatmul.mubr.bf16.gmra.mrb[0].mxu0 %v4627
  %v4702 = vpop.f32.mrb[0].mxu0
  %v4703 = vadd.f32 %v4615, %v4702
  %v4704 = vpop.f32.mrb[0].mxu0
  %v4705 = vpop.f32.mrb[0].mxu0
  %v4706 = vadd.f32 %v4615, %v4705
  %v4707 = vpop.f32.mrb[0].mxu0
  %4708 = vmatprep.mubr.bf16.mxu0 0
  %4709 = vmatmul.mubr.bf16.gmra.mrb[0].mxu0 %v4630
  %v4710 = vpop.f32.mrb[0].mxu0
  %v4711 = vadd.f32 %v4615, %v4710
  %v4712 = vpop.f32.mrb[0].mxu0
  %v4713 = vpop.f32.mrb[0].mxu0
  %v4714 = vadd.f32 %v4615, %v4713
  %v4715 = vpop.f32.mrb[0].mxu0
  %4716 = vmatprep.mubr.bf16.mxu0 0
  %4717 = vmatmul.mubr.bf16.gmra.mrb[0].mxu0 %v4633
  %v4718 = vpop.f32.mrb[0].mxu0
  %v4719 = vadd.f32 %v4615, %v4718
  %v4720 = vpop.f32.mrb[0].mxu0
  %v4721 = vpop.f32.mrb[0].mxu0
  %v4722 = vadd.f32 %v4615, %v4721
  %v4723 = vpop.f32.mrb[0].mxu0
  %4724 = vmatprep.mubr.bf16.mxu0 0
  %4725 = vmatmul.mubr.bf16.gmra.mrb[0].mxu0 %v4636
  %v4726 = vpop.f32.mrb[0].mxu0
  %v4727 = vadd.f32 %v4615, %v4726
  %v4728 = vpop.f32.mrb[0].mxu0
  %v4729 = vpop.f32.mrb[0].mxu0
  %v4730 = vadd.f32 %v4615, %v4729
  %v4731 = vpop.f32.mrb[0].mxu0
  %4732 = vmatprep.mubr.bf16.mxu0 0
  %4733 = vmatmul.mubr.bf16.gmra.mrb[0].mxu0 %v4639
  %v4734 = vpop.f32.mrb[0].mxu0
  %v4735 = vadd.f32 %v4615, %v4734
  %v4736 = vpop.f32.mrb[0].mxu0
  %v4737 = vpop.f32.mrb[0].mxu0
  %v4738 = vadd.f32 %v4615, %v4737
  %v4739 = vpop.f32.mrb[0].mxu0
  %4740 = vdwg.mxu0
  %s4741 = scalar_lea.vmem %s2, 8
  %v4742 = vld [vmem:[%s4741] sm:$0xf]
  %s4743 = scalar_lea.vmem %s5, 2
  %v4744 = vld [vmem:[%s4743] sm:$0x1]
  %v4746 = vlaneseq
  %v4747 = vshrl.u32 %v4746, 7
  %v4748 = vsub.s32 0, %v4747
  %v4749 = vrot.slane %v4744, %v4748
  %v4752 = vsel %vm99, %v4742, 0
  %4754 = vmatprep.subr.bf16.mxu0 0
  %4755 = vmatpush1.bf16.msra.mxu0 %v4752
  %4756 = vmatprep.subr.bf16.mxu0 0
  %4757 = vmatpush1.bf16.msra.mxu0 0
  %4758 = vmatprep.subr.bf16.mxu0 0
  %4759 = vmatpush1.bf16.msra.mxu0 0
  %4760 = vmatprep.subr.bf16.mxu0 0
  %4761 = vmatpush1.bf16.msra.mxu0 0
  %4762 = vmatprep.subr.bf16.mxu0 0
  %4763 = vmatpush1.bf16.msra.mxu0 0
  %4764 = vmatprep.subr.bf16.mxu0 0
  %4765 = vmatpush1.bf16.msra.mxu0 0
  %4766 = vmatprep.subr.bf16.mxu0 0
  %4767 = vmatpush1.bf16.msra.mxu0 0
  %4768 = vmatprep.subr.bf16.mxu0 0
  %4769 = vmatpush1.bf16.msra.mxu0 0
  %4770 = vmatprep.subr.bf16.mxu0 0
  %4771 = vmatpush1.bf16.msra.mxu0 0
  %4772 = vmatprep.subr.bf16.mxu0 0
  %4773 = vmatpush1.bf16.msra.mxu0 0
  %4774 = vmatprep.subr.bf16.mxu0 0
  %4775 = vmatpush1.bf16.msra.mxu0 0
  %4776 = vmatprep.subr.bf16.mxu0 0
  %4777 = vmatpush1.bf16.msra.mxu0 0
  %4778 = vmatprep.subr.bf16.mxu0 0
  %4779 = vmatpush1.bf16.msra.mxu0 0
  %4780 = vmatprep.subr.bf16.mxu0 0
  %4781 = vmatpush1.bf16.msra.mxu0 0
  %4782 = vmatprep.subr.bf16.mxu0 0
  %4783 = vmatpush1.bf16.msra.mxu0 0
  %4784 = vmatprep.subr.bf16.mxu0 0
  %4785 = vmatpush1.bf16.msra.mxu0 0
  %4786 = vmatprep.mubr.bf16.mxu0 0
  %4787 = vmatmul.mubr.bf16.gmra.mrb[0].mxu0 %v4618
  %v4788 = vpop.f32.mrb[0].mxu0
  %v4789 = vadd.f32 %v4749, %v4788
  %v4790 = vpop.f32.mrb[0].mxu0
  %v4791 = vpop.f32.mrb[0].mxu0
  %v4792 = vadd.f32 %v4749, %v4791
  %v4793 = vpop.f32.mrb[0].mxu0
  %4794 = vmatprep.mubr.bf16.mxu0 0
  %4795 = vmatmul.mubr.bf16.gmra.mrb[0].mxu0 %v4621
  %v4796 = vpop.f32.mrb[0].mxu0
  %v4797 = vadd.f32 %v4749, %v4796
  %v4798 = vpop.f32.mrb[0].mxu0
  %v4799 = vpop.f32.mrb[0].mxu0
  %v4800 = vadd.f32 %v4749, %v4799
  %v4801 = vpop.f32.mrb[0].mxu0
  %4802 = vmatprep.mubr.bf16.mxu0 0
  %4803 = vmatmul.mubr.bf16.gmra.mrb[0].mxu0 %v4624
  %v4804 = vpop.f32.mrb[0].mxu0
  %v4805 = vadd.f32 %v4749, %v4804
  %v4806 = vpop.f32.mrb[0].mxu0
  %v4807 = vpop.f32.mrb[0].mxu0
  %v4808 = vadd.f32 %v4749, %v4807
  %v4809 = vpop.f32.mrb[0].mxu0
  %4810 = vmatprep.mubr.bf16.mxu0 0
  %4811 = vmatmul.mubr.bf16.gmra.mrb[0].mxu0 %v4627
  %v4812 = vpop.f32.mrb[0].mxu0
  %v4813 = vadd.f32 %v4749, %v4812
  %v4814 = vpop.f32.mrb[0].mxu0
  %v4815 = vpop.f32.mrb[0].mxu0
  %v4816 = vadd.f32 %v4749, %v4815
  %v4817 = vpop.f32.mrb[0].mxu0
  %4818 = vmatprep.mubr.bf16.mxu0 0
  %4819 = vmatmul.mubr.bf16.gmra.mrb[0].mxu0 %v4630
  %v4820 = vpop.f32.mrb[0].mxu0
  %v4821 = vadd.f32 %v4749, %v4820
  %v4822 = vpop.f32.mrb[0].mxu0
  %v4823 = vpop.f32.mrb[0].mxu0
  %v4824 = vadd.f32 %v4749, %v4823
  %v4825 = vpop.f32.mrb[0].mxu0
  %4826 = vmatprep.mubr.bf16.mxu0 0
  %4827 = vmatmul.mubr.bf16.gmra.mrb[0].mxu0 %v4633
  %v4828 = vpop.f32.mrb[0].mxu0
  %v4829 = vadd.f32 %v4749, %v4828
  %v4830 = vpop.f32.mrb[0].mxu0
  %v4831 = vpop.f32.mrb[0].mxu0
  %v4832 = vadd.f32 %v4749, %v4831
  %v4833 = vpop.f32.mrb[0].mxu0
  %4834 = vmatprep.mubr.bf16.mxu0 0
  %4835 = vmatmul.mubr.bf16.gmra.mrb[0].mxu0 %v4636
  %v4836 = vpop.f32.mrb[0].mxu0
  %v4837 = vadd.f32 %v4749, %v4836
  %v4838 = vpop.f32.mrb[0].mxu0
  %v4839 = vpop.f32.mrb[0].mxu0
  %v4840 = vadd.f32 %v4749, %v4839
  %v4841 = vpop.f32.mrb[0].mxu0
  %4842 = vmatprep.mubr.bf16.mxu0 0
  %4843 = vmatmul.mubr.bf16.gmra.mrb[0].mxu0 %v4639
  %v4844 = vpop.f32.mrb[0].mxu0
  %v4845 = vadd.f32 %v4749, %v4844
  %v4846 = vpop.f32.mrb[0].mxu0
  %v4847 = vpop.f32.mrb[0].mxu0
  %v4848 = vadd.f32 %v4749, %v4847
  %v4849 = vpop.f32.mrb[0].mxu0
  %4850 = vdwg.mxu0
  %s4851 = scalar_lea.vmem %s3, 8
  %v4852 = vld [vmem:[%s4851] sm:$0xf]
  %s4853 = scalar_lea.vmem %s6, 2
  %v4854 = vld [vmem:[%s4853] sm:$0x1]
  %v4856 = vlaneseq
  %v4857 = vshrl.u32 %v4856, 7
  %v4858 = vsub.s32 0, %v4857
  %v4859 = vrot.slane %v4854, %v4858
  %v4862 = vsel %vm99, %v4852, 0
  %4864 = vmatprep.subr.bf16.mxu0 0
  %4865 = vmatpush1.bf16.msra.mxu0 %v4862
  %4866 = vmatprep.subr.bf16.mxu0 0
  %4867 = vmatpush1.bf16.msra.mxu0 0
  %4868 = vmatprep.subr.bf16.mxu0 0
  %4869 = vmatpush1.bf16.msra.mxu0 0
  %4870 = vmatprep.subr.bf16.mxu0 0
  %4871 = vmatpush1.bf16.msra.mxu0 0
  %4872 = vmatprep.subr.bf16.mxu0 0
  %4873 = vmatpush1.bf16.msra.mxu0 0
  %4874 = vmatprep.subr.bf16.mxu0 0
  %4875 = vmatpush1.bf16.msra.mxu0 0
  %4876 = vmatprep.subr.bf16.mxu0 0
  %4877 = vmatpush1.bf16.msra.mxu0 0
  %4878 = vmatprep.subr.bf16.mxu0 0
  %4879 = vmatpush1.bf16.msra.mxu0 0
  %4880 = vmatprep.subr.bf16.mxu0 0
  %4881 = vmatpush1.bf16.msra.mxu0 0
  %4882 = vmatprep.subr.bf16.mxu0 0
  %4883 = vmatpush1.bf16.msra.mxu0 0
  %4884 = vmatprep.subr.bf16.mxu0 0
  %4885 = vmatpush1.bf16.msra.mxu0 0
  %4886 = vmatprep.subr.bf16.mxu0 0
  %4887 = vmatpush1.bf16.msra.mxu0 0
  %4888 = vmatprep.subr.bf16.mxu0 0
  %4889 = vmatpush1.bf16.msra.mxu0 0
  %4890 = vmatprep.subr.bf16.mxu0 0
  %4891 = vmatpush1.bf16.msra.mxu0 0
  %4892 = vmatprep.subr.bf16.mxu0 0
  %4893 = vmatpush1.bf16.msra.mxu0 0
  %4894 = vmatprep.subr.bf16.mxu0 0
  %4895 = vmatpush1.bf16.msra.mxu0 0
  %4896 = vmatprep.mubr.bf16.mxu0 0
  %4897 = vmatmul.mubr.bf16.gmra.mrb[0].mxu0 %v4618
  %v4898 = vpop.f32.mrb[0].mxu0
  %v4899 = vadd.f32 %v4859, %v4898
  %v4900 = vpop.f32.mrb[0].mxu0
  %v4901 = vpop.f32.mrb[0].mxu0
  %v4902 = vadd.f32 %v4859, %v4901
  %v4903 = vpop.f32.mrb[0].mxu0
  %4904 = vmatprep.mubr.bf16.mxu0 0
  %4905 = vmatmul.mubr.bf16.gmra.mrb[0].mxu0 %v4621
  %v4906 = vpop.f32.mrb[0].mxu0
  %v4907 = vadd.f32 %v4859, %v4906
  %v4908 = vpop.f32.mrb[0].mxu0
  %v4909 = vpop.f32.mrb[0].mxu0
  %v4910 = vadd.f32 %v4859, %v4909
  %v4911 = vpop.f32.mrb[0].mxu0
  %4912 = vmatprep.mubr.bf16.mxu0 0
  %4913 = vmatmul.mubr.bf16.gmra.mrb[0].mxu0 %v4624
  %v4914 = vpop.f32.mrb[0].mxu0
  %v4915 = vadd.f32 %v4859, %v4914
  %v4916 = vpop.f32.mrb[0].mxu0
  %v4917 = vpop.f32.mrb[0].mxu0
  %v4918 = vadd.f32 %v4859, %v4917
  %v4919 = vpop.f32.mrb[0].mxu0
  %4920 = vmatprep.mubr.bf16.mxu0 0
  %4921 = vmatmul.mubr.bf16.gmra.mrb[0].mxu0 %v4627
  %v4922 = vpop.f32.mrb[0].mxu0
  %v4923 = vadd.f32 %v4859, %v4922
  %v4924 = vpop.f32.mrb[0].mxu0
  %v4925 = vpop.f32.mrb[0].mxu0
  %v4926 = vadd.f32 %v4859, %v4925
  %v4927 = vpop.f32.mrb[0].mxu0
  %4928 = vmatprep.mubr.bf16.mxu0 0
  %4929 = vmatmul.mubr.bf16.gmra.mrb[0].mxu0 %v4630
  %v4930 = vpop.f32.mrb[0].mxu0
  %v4931 = vadd.f32 %v4859, %v4930
  %v4932 = vpop.f32.mrb[0].mxu0
  %v4933 = vpop.f32.mrb[0].mxu0
  %v4934 = vadd.f32 %v4859, %v4933
  %v4935 = vpop.f32.mrb[0].mxu0
  %4936 = vmatprep.mubr.bf16.mxu0 0
  %4937 = vmatmul.mubr.bf16.gmra.mrb[0].mxu0 %v4633
  %v4938 = vpop.f32.mrb[0].mxu0
  %v4939 = vadd.f32 %v4859, %v4938
  %v4940 = vpop.f32.mrb[0].mxu0
  %v4941 = vpop.f32.mrb[0].mxu0
  %v4942 = vadd.f32 %v4859, %v4941
  %v4943 = vpop.f32.mrb[0].mxu0
  %4944 = vmatprep.mubr.bf16.mxu0 0
  %4945 = vmatmul.mubr.bf16.gmra.mrb[0].mxu0 %v4636
  %v4946 = vpop.f32.mrb[0].mxu0
  %v4947 = vadd.f32 %v4859, %v4946
  %v4948 = vpop.f32.mrb[0].mxu0
  %v4949 = vpop.f32.mrb[0].mxu0
  %v4950 = vadd.f32 %v4859, %v4949
  %v4951 = vpop.f32.mrb[0].mxu0
  %4952 = vmatprep.mubr.bf16.mxu0 0
  %4953 = vmatmul.mubr.bf16.gmra.mrb[0].mxu0 %v4639
  %v4954 = vpop.f32.mrb[0].mxu0
  %v4955 = vadd.f32 %v4859, %v4954
  %v4956 = vpop.f32.mrb[0].mxu0
  %v4957 = vpop.f32.mrb[0].mxu0
  %v4958 = vadd.f32 %v4859, %v4957
  %v4959 = vpop.f32.mrb[0].mxu0
  %4960 = vdwg.mxu0
  %v4961 = vrot.slane %v4679, 6
  %v4962 = vrot.slane %v4682, 6
  %v4963 = vrot.slane %v4687, 6
  %v4964 = vrot.slane %v4690, 6
  %v4965 = vrot.slane %v4695, 6
  %v4966 = vrot.slane %v4698, 6
  %v4967 = vrot.slane %v4703, 6
  %v4968 = vrot.slane %v4706, 6
  %v4969 = vrot.slane %v4711, 6
  %v4970 = vrot.slane %v4714, 6
  %v4971 = vrot.slane %v4719, 6
  %v4972 = vrot.slane %v4722, 6
  %v4973 = vrot.slane %v4727, 6
  %v4974 = vrot.slane %v4730, 6
  %v4975 = vrot.slane %v4735, 6
  %v4976 = vrot.slane %v4738, 6
  %v4977 = vsel %vm434, %v4975, %v4976
  %v4978 = vsel %vm434, %v4974, %v4975
  %v4979 = vsel %vm434, %v4973, %v4974
  %v4980 = vsel %vm434, %v4972, %v4973
  %v4981 = vsel %vm434, %v4971, %v4972
  %v4982 = vsel %vm434, %v4970, %v4971
  %v4983 = vsel %vm434, %v4969, %v4970
  %v4984 = vsel %vm434, %v4968, %v4969
  %v4985 = vsel %vm434, %v4967, %v4968
  %v4986 = vsel %vm434, %v4966, %v4967
  %v4987 = vsel %vm434, %v4965, %v4966
  %v4988 = vsel %vm434, %v4964, %v4965
  %v4989 = vsel %vm434, %v4963, %v4964
  %v4990 = vsel %vm434, %v4962, %v4963
  %v4991 = vsel %vm434, %v4961, %v4962
  %v4992 = vsel %vm434, %v4976, %v4961
  %s4993 = scalar_lea.vmem %s7, 3200
  %v4994 = vld [vmem:[%s4993] sm:$0xff]
  %v4995 = vld [vmem:[%s4993 + $0x8] sm:$0xff]
  %v4996 = vld [vmem:[%s4993 + $0x10] sm:$0xff]
  %v4997 = vld [vmem:[%s4993 + $0x18] sm:$0xff]
  %v4998 = vld [vmem:[%s4993 + $0x20] sm:$0xff]
  %v4999 = vld [vmem:[%s4993 + $0x28] sm:$0xff]
  %v5000 = vld [vmem:[%s4993 + $0x30] sm:$0xff]
  %v5001 = vld [vmem:[%s4993 + $0x38] sm:$0xff]
  %v5002 = vmul.f32 %v4978, %v4994
  %v5003 = vmul.f32 %v4977, %v4995
  %v5004 = vmul.f32 %v4992, %v4996
  %v5005 = vmul.f32 %v4991, %v4997
  %v5006 = vmul.f32 %v4990, %v4998
  %v5007 = vmul.f32 %v4989, %v4999
  %v5008 = vmul.f32 %v4988, %v5000
  %v5009 = vmul.f32 %v4987, %v5001
  %v5010 = vmul.f32 %v4986, %v4994
  %v5011 = vmul.f32 %v4985, %v4995
  %v5012 = vmul.f32 %v4984, %v4996
  %v5013 = vmul.f32 %v4983, %v4997
  %v5014 = vmul.f32 %v4982, %v4998
  %v5015 = vmul.f32 %v4981, %v4999
  %v5016 = vmul.f32 %v4980, %v5000
  %v5017 = vmul.f32 %v4979, %v5001
  %v5018 = vadd.f32 %v5002, 0.0
  %v5019 = vadd.f32 %v5003, 0.0
  %v5020 = vadd.f32 %v5004, 0.0
  %v5021 = vadd.f32 %v5005, 0.0
  %v5022 = vadd.f32 %v5006, 0.0
  %v5023 = vadd.f32 %v5007, 0.0
  %v5024 = vadd.f32 %v5008, 0.0
  %v5025 = vadd.f32 %v5009, 0.0
  %v5026 = vadd.f32 %v5010, 0.0
  %v5027 = vadd.f32 %v5011, 0.0
  %v5028 = vadd.f32 %v5012, 0.0
  %v5029 = vadd.f32 %v5013, 0.0
  %v5030 = vadd.f32 %v5014, 0.0
  %v5031 = vadd.f32 %v5015, 0.0
  %v5032 = vadd.f32 %v5016, 0.0
  %v5033 = vadd.f32 %v5017, 0.0
  %v5034 = vrot.slane %v4679, 7
  %v5035 = vrot.slane %v4682, 7
  %v5036 = vrot.slane %v4687, 7
  %v5037 = vrot.slane %v4690, 7
  %v5038 = vrot.slane %v4695, 7
  %v5039 = vrot.slane %v4698, 7
  %v5040 = vrot.slane %v4703, 7
  %v5041 = vrot.slane %v4706, 7
  %v5042 = vrot.slane %v4711, 7
  %v5043 = vrot.slane %v4714, 7
  %v5044 = vrot.slane %v4719, 7
  %v5045 = vrot.slane %v4722, 7
  %v5046 = vrot.slane %v4727, 7
  %v5047 = vrot.slane %v4730, 7
  %v5048 = vrot.slane %v4735, 7
  %v5049 = vrot.slane %v4738, 7
  %v5050 = vsel %vm507, %v5048, %v5049
  %v5051 = vsel %vm507, %v5047, %v5048
  %v5052 = vsel %vm507, %v5046, %v5047
  %v5053 = vsel %vm507, %v5045, %v5046
  %v5054 = vsel %vm507, %v5044, %v5045
  %v5055 = vsel %vm507, %v5043, %v5044
  %v5056 = vsel %vm507, %v5042, %v5043
  %v5057 = vsel %vm507, %v5041, %v5042
  %v5058 = vsel %vm507, %v5040, %v5041
  %v5059 = vsel %vm507, %v5039, %v5040
  %v5060 = vsel %vm507, %v5038, %v5039
  %v5061 = vsel %vm507, %v5037, %v5038
  %v5062 = vsel %vm507, %v5036, %v5037
  %v5063 = vsel %vm507, %v5035, %v5036
  %v5064 = vsel %vm507, %v5034, %v5035
  %v5065 = vsel %vm507, %v5049, %v5034
  %s5066 = scalar_lea.vmem %s7, 3264
  %v5067 = vld [vmem:[%s5066] sm:$0xff]
  %v5068 = vld [vmem:[%s5066 + $0x8] sm:$0xff]
  %v5069 = vld [vmem:[%s5066 + $0x10] sm:$0xff]
  %v5070 = vld [vmem:[%s5066 + $0x18] sm:$0xff]
  %v5071 = vld [vmem:[%s5066 + $0x20] sm:$0xff]
  %v5072 = vld [vmem:[%s5066 + $0x28] sm:$0xff]
  %v5073 = vld [vmem:[%s5066 + $0x30] sm:$0xff]
  %v5074 = vld [vmem:[%s5066 + $0x38] sm:$0xff]
  %v5075 = vmul.f32 %v5051, %v5067
  %v5076 = vmul.f32 %v5050, %v5068
  %v5077 = vmul.f32 %v5065, %v5069
  %v5078 = vmul.f32 %v5064, %v5070
  %v5079 = vmul.f32 %v5063, %v5071
  %v5080 = vmul.f32 %v5062, %v5072
  %v5081 = vmul.f32 %v5061, %v5073
  %v5082 = vmul.f32 %v5060, %v5074
  %v5083 = vmul.f32 %v5059, %v5067
  %v5084 = vmul.f32 %v5058, %v5068
  %v5085 = vmul.f32 %v5057, %v5069
  %v5086 = vmul.f32 %v5056, %v5070
  %v5087 = vmul.f32 %v5055, %v5071
  %v5088 = vmul.f32 %v5054, %v5072
  %v5089 = vmul.f32 %v5053, %v5073
  %v5090 = vmul.f32 %v5052, %v5074
  %v5091 = vadd.f32 %v5018, %v5075
  %v5092 = vadd.f32 %v5019, %v5076
  %v5093 = vadd.f32 %v5020, %v5077
  %v5094 = vadd.f32 %v5021, %v5078
  %v5095 = vadd.f32 %v5022, %v5079
  %v5096 = vadd.f32 %v5023, %v5080
  %v5097 = vadd.f32 %v5024, %v5081
  %v5098 = vadd.f32 %v5025, %v5082
  %v5099 = vadd.f32 %v5026, %v5083
  %v5100 = vadd.f32 %v5027, %v5084
  %v5101 = vadd.f32 %v5028, %v5085
  %v5102 = vadd.f32 %v5029, %v5086
  %v5103 = vadd.f32 %v5030, %v5087
  %v5104 = vadd.f32 %v5031, %v5088
  %v5105 = vadd.f32 %v5032, %v5089
  %v5106 = vadd.f32 %v5033, %v5090
  %s5107 = scalar_lea.vmem %s7, 3328
  %v5108 = vld [vmem:[%s5107] sm:$0xff]
  %v5109 = vld [vmem:[%s5107 + $0x8] sm:$0xff]
  %v5110 = vld [vmem:[%s5107 + $0x10] sm:$0xff]
  %v5111 = vld [vmem:[%s5107 + $0x18] sm:$0xff]
  %v5112 = vld [vmem:[%s5107 + $0x20] sm:$0xff]
  %v5113 = vld [vmem:[%s5107 + $0x28] sm:$0xff]
  %v5114 = vld [vmem:[%s5107 + $0x30] sm:$0xff]
  %v5115 = vld [vmem:[%s5107 + $0x38] sm:$0xff]
  %v5116 = vmul.f32 %v4735, %v5108
  %v5117 = vmul.f32 %v4738, %v5109
  %v5118 = vmul.f32 %v4679, %v5110
  %v5119 = vmul.f32 %v4682, %v5111
  %v5120 = vmul.f32 %v4687, %v5112
  %v5121 = vmul.f32 %v4690, %v5113
  %v5122 = vmul.f32 %v4695, %v5114
  %v5123 = vmul.f32 %v4698, %v5115
  %v5124 = vmul.f32 %v4703, %v5108
  %v5125 = vmul.f32 %v4706, %v5109
  %v5126 = vmul.f32 %v4711, %v5110
  %v5127 = vmul.f32 %v4714, %v5111
  %v5128 = vmul.f32 %v4719, %v5112
  %v5129 = vmul.f32 %v4722, %v5113
  %v5130 = vmul.f32 %v4727, %v5114
  %v5131 = vmul.f32 %v4730, %v5115
  %v5132 = vadd.f32 %v5091, %v5116
  %v5133 = vadd.f32 %v5092, %v5117
  %v5134 = vadd.f32 %v5093, %v5118
  %v5135 = vadd.f32 %v5094, %v5119
  %v5136 = vadd.f32 %v5095, %v5120
  %v5137 = vadd.f32 %v5096, %v5121
  %v5138 = vadd.f32 %v5097, %v5122
  %v5139 = vadd.f32 %v5098, %v5123
  %v5140 = vadd.f32 %v5099, %v5124
  %v5141 = vadd.f32 %v5100, %v5125
  %v5142 = vadd.f32 %v5101, %v5126
  %v5143 = vadd.f32 %v5102, %v5127
  %v5144 = vadd.f32 %v5103, %v5128
  %v5145 = vadd.f32 %v5104, %v5129
  %v5146 = vadd.f32 %v5105, %v5130
  %v5147 = vadd.f32 %v5106, %v5131
  %v5148 = vrot.slane %v4679, 1
  %v5149 = vrot.slane %v4682, 1
  %v5150 = vrot.slane %v4687, 1
  %v5151 = vrot.slane %v4690, 1
  %v5152 = vrot.slane %v4695, 1
  %v5153 = vrot.slane %v4698, 1
  %v5154 = vrot.slane %v4703, 1
  %v5155 = vrot.slane %v4706, 1
  %v5156 = vrot.slane %v4711, 1
  %v5157 = vrot.slane %v4714, 1
  %v5158 = vrot.slane %v4719, 1
  %v5159 = vrot.slane %v4722, 1
  %v5160 = vrot.slane %v4727, 1
  %v5161 = vrot.slane %v4730, 1
  %v5162 = vrot.slane %v4735, 1
  %v5163 = vrot.slane %v4738, 1
  %v5164 = vsel %vm622, %v5162, %v5163
  %v5165 = vsel %vm622, %v5161, %v5162
  %v5166 = vsel %vm622, %v5160, %v5161
  %v5167 = vsel %vm622, %v5159, %v5160
  %v5168 = vsel %vm622, %v5158, %v5159
  %v5169 = vsel %vm622, %v5157, %v5158
  %v5170 = vsel %vm622, %v5156, %v5157
  %v5171 = vsel %vm622, %v5155, %v5156
  %v5172 = vsel %vm622, %v5154, %v5155
  %v5173 = vsel %vm622, %v5153, %v5154
  %v5174 = vsel %vm622, %v5152, %v5153
  %v5175 = vsel %vm622, %v5151, %v5152
  %v5176 = vsel %vm622, %v5150, %v5151
  %v5177 = vsel %vm622, %v5149, %v5150
  %v5178 = vsel %vm622, %v5148, %v5149
  %v5179 = vsel %vm622, %v5163, %v5148
  %s5180 = scalar_lea.vmem %s7, 3392
  %v5181 = vld [vmem:[%s5180] sm:$0xff]
  %v5182 = vld [vmem:[%s5180 + $0x8] sm:$0xff]
  %v5183 = vld [vmem:[%s5180 + $0x10] sm:$0xff]
  %v5184 = vld [vmem:[%s5180 + $0x18] sm:$0xff]
  %v5185 = vld [vmem:[%s5180 + $0x20] sm:$0xff]
  %v5186 = vld [vmem:[%s5180 + $0x28] sm:$0xff]
  %v5187 = vld [vmem:[%s5180 + $0x30] sm:$0xff]
  %v5188 = vld [vmem:[%s5180 + $0x38] sm:$0xff]
  %v5189 = vmul.f32 %v5164, %v5181
  %v5190 = vmul.f32 %v5179, %v5182
  %v5191 = vmul.f32 %v5178, %v5183
  %v5192 = vmul.f32 %v5177, %v5184
  %v5193 = vmul.f32 %v5176, %v5185
  %v5194 = vmul.f32 %v5175, %v5186
  %v5195 = vmul.f32 %v5174, %v5187
  %v5196 = vmul.f32 %v5173, %v5188
  %v5197 = vmul.f32 %v5172, %v5181
  %v5198 = vmul.f32 %v5171, %v5182
  %v5199 = vmul.f32 %v5170, %v5183
  %v5200 = vmul.f32 %v5169, %v5184
  %v5201 = vmul.f32 %v5168, %v5185
  %v5202 = vmul.f32 %v5167, %v5186
  %v5203 = vmul.f32 %v5166, %v5187
  %v5204 = vmul.f32 %v5165, %v5188
  %v5205 = vadd.f32 %v5132, %v5189
  %v5206 = vadd.f32 %v5133, %v5190
  %v5207 = vadd.f32 %v5134, %v5191
  %v5208 = vadd.f32 %v5135, %v5192
  %v5209 = vadd.f32 %v5136, %v5193
  %v5210 = vadd.f32 %v5137, %v5194
  %v5211 = vadd.f32 %v5138, %v5195
  %v5212 = vadd.f32 %v5139, %v5196
  %v5213 = vadd.f32 %v5140, %v5197
  %v5214 = vadd.f32 %v5141, %v5198
  %v5215 = vadd.f32 %v5142, %v5199
  %v5216 = vadd.f32 %v5143, %v5200
  %v5217 = vadd.f32 %v5144, %v5201
  %v5218 = vadd.f32 %v5145, %v5202
  %v5219 = vadd.f32 %v5146, %v5203
  %v5220 = vadd.f32 %v5147, %v5204
  %v5221 = vrot.slane %v4679, 2
  %v5222 = vrot.slane %v4682, 2
  %v5223 = vrot.slane %v4687, 2
  %v5224 = vrot.slane %v4690, 2
  %v5225 = vrot.slane %v4695, 2
  %v5226 = vrot.slane %v4698, 2
  %v5227 = vrot.slane %v4703, 2
  %v5228 = vrot.slane %v4706, 2
  %v5229 = vrot.slane %v4711, 2
  %v5230 = vrot.slane %v4714, 2
  %v5231 = vrot.slane %v4719, 2
  %v5232 = vrot.slane %v4722, 2
  %v5233 = vrot.slane %v4727, 2
  %v5234 = vrot.slane %v4730, 2
  %v5235 = vrot.slane %v4735, 2
  %v5236 = vrot.slane %v4738, 2
  %v5237 = vsel %vm696, %v5235, %v5236
  %v5238 = vsel %vm696, %v5234, %v5235
  %v5239 = vsel %vm696, %v5233, %v5234
  %v5240 = vsel %vm696, %v5232, %v5233
  %v5241 = vsel %vm696, %v5231, %v5232
  %v5242 = vsel %vm696, %v5230, %v5231
  %v5243 = vsel %vm696, %v5229, %v5230
  %v5244 = vsel %vm696, %v5228, %v5229
  %v5245 = vsel %vm696, %v5227, %v5228
  %v5246 = vsel %vm696, %v5226, %v5227
  %v5247 = vsel %vm696, %v5225, %v5226
  %v5248 = vsel %vm696, %v5224, %v5225
  %v5249 = vsel %vm696, %v5223, %v5224
  %v5250 = vsel %vm696, %v5222, %v5223
  %v5251 = vsel %vm696, %v5221, %v5222
  %v5252 = vsel %vm696, %v5236, %v5221
  %s5253 = scalar_lea.vmem %s7, 3456
  %v5254 = vld [vmem:[%s5253] sm:$0xff]
  %v5255 = vld [vmem:[%s5253 + $0x8] sm:$0xff]
  %v5256 = vld [vmem:[%s5253 + $0x10] sm:$0xff]
  %v5257 = vld [vmem:[%s5253 + $0x18] sm:$0xff]
  %v5258 = vld [vmem:[%s5253 + $0x20] sm:$0xff]
  %v5259 = vld [vmem:[%s5253 + $0x28] sm:$0xff]
  %v5260 = vld [vmem:[%s5253 + $0x30] sm:$0xff]
  %v5261 = vld [vmem:[%s5253 + $0x38] sm:$0xff]
  %v5262 = vmul.f32 %v5237, %v5254
  %v5263 = vmul.f32 %v5252, %v5255
  %v5264 = vmul.f32 %v5251, %v5256
  %v5265 = vmul.f32 %v5250, %v5257
  %v5266 = vmul.f32 %v5249, %v5258
  %v5267 = vmul.f32 %v5248, %v5259
  %v5268 = vmul.f32 %v5247, %v5260
  %v5269 = vmul.f32 %v5246, %v5261
  %v5270 = vmul.f32 %v5245, %v5254
  %v5271 = vmul.f32 %v5244, %v5255
  %v5272 = vmul.f32 %v5243, %v5256
  %v5273 = vmul.f32 %v5242, %v5257
  %v5274 = vmul.f32 %v5241, %v5258
  %v5275 = vmul.f32 %v5240, %v5259
  %v5276 = vmul.f32 %v5239, %v5260
  %v5277 = vmul.f32 %v5238, %v5261
  %v5278 = vadd.f32 %v5205, %v5262
  %v5279 = vadd.f32 %v5206, %v5263
  %v5280 = vadd.f32 %v5207, %v5264
  %v5281 = vadd.f32 %v5208, %v5265
  %v5282 = vadd.f32 %v5209, %v5266
  %v5283 = vadd.f32 %v5210, %v5267
  %v5284 = vadd.f32 %v5211, %v5268
  %v5285 = vadd.f32 %v5212, %v5269
  %v5286 = vadd.f32 %v5213, %v5270
  %v5287 = vadd.f32 %v5214, %v5271
  %v5288 = vadd.f32 %v5215, %v5272
  %v5289 = vadd.f32 %v5216, %v5273
  %v5290 = vadd.f32 %v5217, %v5274
  %v5291 = vadd.f32 %v5218, %v5275
  %v5292 = vadd.f32 %v5219, %v5276
  %v5293 = vadd.f32 %v5220, %v5277
  %s5294 = scalar_lea.vmem %s7, 3520
  %v5295 = vld [vmem:[%s5294] sm:$0xff]
  %v5296 = vld [vmem:[%s5294 + $0x8] sm:$0xff]
  %v5297 = vld [vmem:[%s5294 + $0x10] sm:$0xff]
  %v5298 = vld [vmem:[%s5294 + $0x18] sm:$0xff]
  %v5299 = vld [vmem:[%s5294 + $0x20] sm:$0xff]
  %v5300 = vld [vmem:[%s5294 + $0x28] sm:$0xff]
  %v5301 = vld [vmem:[%s5294 + $0x30] sm:$0xff]
  %v5302 = vld [vmem:[%s5294 + $0x38] sm:$0xff]
  %v5303 = vmul.f32 %v4977, %v5295
  %v5304 = vmul.f32 %v4992, %v5296
  %v5305 = vmul.f32 %v4991, %v5297
  %v5306 = vmul.f32 %v4990, %v5298
  %v5307 = vmul.f32 %v4989, %v5299
  %v5308 = vmul.f32 %v4988, %v5300
  %v5309 = vmul.f32 %v4987, %v5301
  %v5310 = vmul.f32 %v4986, %v5302
  %v5311 = vmul.f32 %v4985, %v5295
  %v5312 = vmul.f32 %v4984, %v5296
  %v5313 = vmul.f32 %v4983, %v5297
  %v5314 = vmul.f32 %v4982, %v5298
  %v5315 = vmul.f32 %v4981, %v5299
  %v5316 = vmul.f32 %v4980, %v5300
  %v5317 = vmul.f32 %v4979, %v5301
  %v5318 = vmul.f32 %v4978, %v5302
  %v5319 = vadd.f32 %v5278, %v5303
  %v5320 = vadd.f32 %v5279, %v5304
  %v5321 = vadd.f32 %v5280, %v5305
  %v5322 = vadd.f32 %v5281, %v5306
  %v5323 = vadd.f32 %v5282, %v5307
  %v5324 = vadd.f32 %v5283, %v5308
  %v5325 = vadd.f32 %v5284, %v5309
  %v5326 = vadd.f32 %v5285, %v5310
  %v5327 = vadd.f32 %v5286, %v5311
  %v5328 = vadd.f32 %v5287, %v5312
  %v5329 = vadd.f32 %v5288, %v5313
  %v5330 = vadd.f32 %v5289, %v5314
  %v5331 = vadd.f32 %v5290, %v5315
  %v5332 = vadd.f32 %v5291, %v5316
  %v5333 = vadd.f32 %v5292, %v5317
  %v5334 = vadd.f32 %v5293, %v5318
  %s5335 = scalar_lea.vmem %s7, 3584
  %v5336 = vld [vmem:[%s5335] sm:$0xff]
  %v5337 = vld [vmem:[%s5335 + $0x8] sm:$0xff]
  %v5338 = vld [vmem:[%s5335 + $0x10] sm:$0xff]
  %v5339 = vld [vmem:[%s5335 + $0x18] sm:$0xff]
  %v5340 = vld [vmem:[%s5335 + $0x20] sm:$0xff]
  %v5341 = vld [vmem:[%s5335 + $0x28] sm:$0xff]
  %v5342 = vld [vmem:[%s5335 + $0x30] sm:$0xff]
  %v5343 = vld [vmem:[%s5335 + $0x38] sm:$0xff]
  %v5344 = vmul.f32 %v5050, %v5336
  %v5345 = vmul.f32 %v5065, %v5337
  %v5346 = vmul.f32 %v5064, %v5338
  %v5347 = vmul.f32 %v5063, %v5339
  %v5348 = vmul.f32 %v5062, %v5340
  %v5349 = vmul.f32 %v5061, %v5341
  %v5350 = vmul.f32 %v5060, %v5342
  %v5351 = vmul.f32 %v5059, %v5343
  %v5352 = vmul.f32 %v5058, %v5336
  %v5353 = vmul.f32 %v5057, %v5337
  %v5354 = vmul.f32 %v5056, %v5338
  %v5355 = vmul.f32 %v5055, %v5339
  %v5356 = vmul.f32 %v5054, %v5340
  %v5357 = vmul.f32 %v5053, %v5341
  %v5358 = vmul.f32 %v5052, %v5342
  %v5359 = vmul.f32 %v5051, %v5343
  %v5360 = vadd.f32 %v5319, %v5344
  %v5361 = vadd.f32 %v5320, %v5345
  %v5362 = vadd.f32 %v5321, %v5346
  %v5363 = vadd.f32 %v5322, %v5347
  %v5364 = vadd.f32 %v5323, %v5348
  %v5365 = vadd.f32 %v5324, %v5349
  %v5366 = vadd.f32 %v5325, %v5350
  %v5367 = vadd.f32 %v5326, %v5351
  %v5368 = vadd.f32 %v5327, %v5352
  %v5369 = vadd.f32 %v5328, %v5353
  %v5370 = vadd.f32 %v5329, %v5354
  %v5371 = vadd.f32 %v5330, %v5355
  %v5372 = vadd.f32 %v5331, %v5356
  %v5373 = vadd.f32 %v5332, %v5357
  %v5374 = vadd.f32 %v5333, %v5358
  %v5375 = vadd.f32 %v5334, %v5359
  %s5376 = scalar_lea.vmem %s7, 3648
  %v5377 = vld [vmem:[%s5376] sm:$0xff]
  %v5378 = vld [vmem:[%s5376 + $0x8] sm:$0xff]
  %v5379 = vld [vmem:[%s5376 + $0x10] sm:$0xff]
  %v5380 = vld [vmem:[%s5376 + $0x18] sm:$0xff]
  %v5381 = vld [vmem:[%s5376 + $0x20] sm:$0xff]
  %v5382 = vld [vmem:[%s5376 + $0x28] sm:$0xff]
  %v5383 = vld [vmem:[%s5376 + $0x30] sm:$0xff]
  %v5384 = vld [vmem:[%s5376 + $0x38] sm:$0xff]
  %v5385 = vmul.f32 %v4738, %v5377
  %v5386 = vmul.f32 %v4679, %v5378
  %v5387 = vmul.f32 %v4682, %v5379
  %v5388 = vmul.f32 %v4687, %v5380
  %v5389 = vmul.f32 %v4690, %v5381
  %v5390 = vmul.f32 %v4695, %v5382
  %v5391 = vmul.f32 %v4698, %v5383
  %v5392 = vmul.f32 %v4703, %v5384
  %v5393 = vmul.f32 %v4706, %v5377
  %v5394 = vmul.f32 %v4711, %v5378
  %v5395 = vmul.f32 %v4714, %v5379
  %v5396 = vmul.f32 %v4719, %v5380
  %v5397 = vmul.f32 %v4722, %v5381
  %v5398 = vmul.f32 %v4727, %v5382
  %v5399 = vmul.f32 %v4730, %v5383
  %v5400 = vmul.f32 %v4735, %v5384
  %v5401 = vadd.f32 %v5360, %v5385
  %v5402 = vadd.f32 %v5361, %v5386
  %v5403 = vadd.f32 %v5362, %v5387
  %v5404 = vadd.f32 %v5363, %v5388
  %v5405 = vadd.f32 %v5364, %v5389
  %v5406 = vadd.f32 %v5365, %v5390
  %v5407 = vadd.f32 %v5366, %v5391
  %v5408 = vadd.f32 %v5367, %v5392
  %v5409 = vadd.f32 %v5368, %v5393
  %v5410 = vadd.f32 %v5369, %v5394
  %v5411 = vadd.f32 %v5370, %v5395
  %v5412 = vadd.f32 %v5371, %v5396
  %v5413 = vadd.f32 %v5372, %v5397
  %v5414 = vadd.f32 %v5373, %v5398
  %v5415 = vadd.f32 %v5374, %v5399
  %v5416 = vadd.f32 %v5375, %v5400
  %s5417 = scalar_lea.vmem %s7, 3712
  %v5418 = vld [vmem:[%s5417] sm:$0xff]
  %v5419 = vld [vmem:[%s5417 + $0x8] sm:$0xff]
  %v5420 = vld [vmem:[%s5417 + $0x10] sm:$0xff]
  %v5421 = vld [vmem:[%s5417 + $0x18] sm:$0xff]
  %v5422 = vld [vmem:[%s5417 + $0x20] sm:$0xff]
  %v5423 = vld [vmem:[%s5417 + $0x28] sm:$0xff]
  %v5424 = vld [vmem:[%s5417 + $0x30] sm:$0xff]
  %v5425 = vld [vmem:[%s5417 + $0x38] sm:$0xff]
  %v5426 = vmul.f32 %v5179, %v5418
  %v5427 = vmul.f32 %v5178, %v5419
  %v5428 = vmul.f32 %v5177, %v5420
  %v5429 = vmul.f32 %v5176, %v5421
  %v5430 = vmul.f32 %v5175, %v5422
  %v5431 = vmul.f32 %v5174, %v5423
  %v5432 = vmul.f32 %v5173, %v5424
  %v5433 = vmul.f32 %v5172, %v5425
  %v5434 = vmul.f32 %v5171, %v5418
  %v5435 = vmul.f32 %v5170, %v5419
  %v5436 = vmul.f32 %v5169, %v5420
  %v5437 = vmul.f32 %v5168, %v5421
  %v5438 = vmul.f32 %v5167, %v5422
  %v5439 = vmul.f32 %v5166, %v5423
  %v5440 = vmul.f32 %v5165, %v5424
  %v5441 = vmul.f32 %v5164, %v5425
  %v5442 = vadd.f32 %v5401, %v5426
  %v5443 = vadd.f32 %v5402, %v5427
  %v5444 = vadd.f32 %v5403, %v5428
  %v5445 = vadd.f32 %v5404, %v5429
  %v5446 = vadd.f32 %v5405, %v5430
  %v5447 = vadd.f32 %v5406, %v5431
  %v5448 = vadd.f32 %v5407, %v5432
  %v5449 = vadd.f32 %v5408, %v5433
  %v5450 = vadd.f32 %v5409, %v5434
  %v5451 = vadd.f32 %v5410, %v5435
  %v5452 = vadd.f32 %v5411, %v5436
  %v5453 = vadd.f32 %v5412, %v5437
  %v5454 = vadd.f32 %v5413, %v5438
  %v5455 = vadd.f32 %v5414, %v5439
  %v5456 = vadd.f32 %v5415, %v5440
  %v5457 = vadd.f32 %v5416, %v5441
  %s5458 = scalar_lea.vmem %s7, 3776
  %v5459 = vld [vmem:[%s5458] sm:$0xff]
  %v5460 = vld [vmem:[%s5458 + $0x8] sm:$0xff]
  %v5461 = vld [vmem:[%s5458 + $0x10] sm:$0xff]
  %v5462 = vld [vmem:[%s5458 + $0x18] sm:$0xff]
  %v5463 = vld [vmem:[%s5458 + $0x20] sm:$0xff]
  %v5464 = vld [vmem:[%s5458 + $0x28] sm:$0xff]
  %v5465 = vld [vmem:[%s5458 + $0x30] sm:$0xff]
  %v5466 = vld [vmem:[%s5458 + $0x38] sm:$0xff]
  %v5467 = vmul.f32 %v5252, %v5459
  %v5468 = vmul.f32 %v5251, %v5460
  %v5469 = vmul.f32 %v5250, %v5461
  %v5470 = vmul.f32 %v5249, %v5462
  %v5471 = vmul.f32 %v5248, %v5463
  %v5472 = vmul.f32 %v5247, %v5464
  %v5473 = vmul.f32 %v5246, %v5465
  %v5474 = vmul.f32 %v5245, %v5466
  %v5475 = vmul.f32 %v5244, %v5459
  %v5476 = vmul.f32 %v5243, %v5460
  %v5477 = vmul.f32 %v5242, %v5461
  %v5478 = vmul.f32 %v5241, %v5462
  %v5479 = vmul.f32 %v5240, %v5463
  %v5480 = vmul.f32 %v5239, %v5464
  %v5481 = vmul.f32 %v5238, %v5465
  %v5482 = vmul.f32 %v5237, %v5466
  %v5483 = vadd.f32 %v5442, %v5467
  %v5484 = vadd.f32 %v5443, %v5468
  %v5485 = vadd.f32 %v5444, %v5469
  %v5486 = vadd.f32 %v5445, %v5470
  %v5487 = vadd.f32 %v5446, %v5471
  %v5488 = vadd.f32 %v5447, %v5472
  %v5489 = vadd.f32 %v5448, %v5473
  %v5490 = vadd.f32 %v5449, %v5474
  %v5491 = vadd.f32 %v5450, %v5475
  %v5492 = vadd.f32 %v5451, %v5476
  %v5493 = vadd.f32 %v5452, %v5477
  %v5494 = vadd.f32 %v5453, %v5478
  %v5495 = vadd.f32 %v5454, %v5479
  %v5496 = vadd.f32 %v5455, %v5480
  %v5497 = vadd.f32 %v5456, %v5481
  %v5498 = vadd.f32 %v5457, %v5482
  %s5499 = scalar_lea.vmem %s7, 3840
  %v5500 = vld [vmem:[%s5499] sm:$0xff]
  %v5501 = vld [vmem:[%s5499 + $0x8] sm:$0xff]
  %v5502 = vld [vmem:[%s5499 + $0x10] sm:$0xff]
  %v5503 = vld [vmem:[%s5499 + $0x18] sm:$0xff]
  %v5504 = vld [vmem:[%s5499 + $0x20] sm:$0xff]
  %v5505 = vld [vmem:[%s5499 + $0x28] sm:$0xff]
  %v5506 = vld [vmem:[%s5499 + $0x30] sm:$0xff]
  %v5507 = vld [vmem:[%s5499 + $0x38] sm:$0xff]
  %v5508 = vmul.f32 %v4992, %v5500
  %v5509 = vmul.f32 %v4991, %v5501
  %v5510 = vmul.f32 %v4990, %v5502
  %v5511 = vmul.f32 %v4989, %v5503
  %v5512 = vmul.f32 %v4988, %v5504
  %v5513 = vmul.f32 %v4987, %v5505
  %v5514 = vmul.f32 %v4986, %v5506
  %v5515 = vmul.f32 %v4985, %v5507
  %v5516 = vmul.f32 %v4984, %v5500
  %v5517 = vmul.f32 %v4983, %v5501
  %v5518 = vmul.f32 %v4982, %v5502
  %v5519 = vmul.f32 %v4981, %v5503
  %v5520 = vmul.f32 %v4980, %v5504
  %v5521 = vmul.f32 %v4979, %v5505
  %v5522 = vmul.f32 %v4978, %v5506
  %v5523 = vmul.f32 %v4977, %v5507
  %v5524 = vadd.f32 %v5483, %v5508
  %v5525 = vadd.f32 %v5484, %v5509
  %v5526 = vadd.f32 %v5485, %v5510
  %v5527 = vadd.f32 %v5486, %v5511
  %v5528 = vadd.f32 %v5487, %v5512
  %v5529 = vadd.f32 %v5488, %v5513
  %v5530 = vadd.f32 %v5489, %v5514
  %v5531 = vadd.f32 %v5490, %v5515
  %v5532 = vadd.f32 %v5491, %v5516
  %v5533 = vadd.f32 %v5492, %v5517
  %v5534 = vadd.f32 %v5493, %v5518
  %v5535 = vadd.f32 %v5494, %v5519
  %v5536 = vadd.f32 %v5495, %v5520
  %v5537 = vadd.f32 %v5496, %v5521
  %v5538 = vadd.f32 %v5497, %v5522
  %v5539 = vadd.f32 %v5498, %v5523
  %s5540 = scalar_lea.vmem %s7, 3904
  %v5541 = vld [vmem:[%s5540] sm:$0xff]
  %v5542 = vld [vmem:[%s5540 + $0x8] sm:$0xff]
  %v5543 = vld [vmem:[%s5540 + $0x10] sm:$0xff]
  %v5544 = vld [vmem:[%s5540 + $0x18] sm:$0xff]
  %v5545 = vld [vmem:[%s5540 + $0x20] sm:$0xff]
  %v5546 = vld [vmem:[%s5540 + $0x28] sm:$0xff]
  %v5547 = vld [vmem:[%s5540 + $0x30] sm:$0xff]
  %v5548 = vld [vmem:[%s5540 + $0x38] sm:$0xff]
  %v5549 = vmul.f32 %v5065, %v5541
  %v5550 = vmul.f32 %v5064, %v5542
  %v5551 = vmul.f32 %v5063, %v5543
  %v5552 = vmul.f32 %v5062, %v5544
  %v5553 = vmul.f32 %v5061, %v5545
  %v5554 = vmul.f32 %v5060, %v5546
  %v5555 = vmul.f32 %v5059, %v5547
  %v5556 = vmul.f32 %v5058, %v5548
  %v5557 = vmul.f32 %v5057, %v5541
  %v5558 = vmul.f32 %v5056, %v5542
  %v5559 = vmul.f32 %v5055, %v5543
  %v5560 = vmul.f32 %v5054, %v5544
  %v5561 = vmul.f32 %v5053, %v5545
  %v5562 = vmul.f32 %v5052, %v5546
  %v5563 = vmul.f32 %v5051, %v5547
  %v5564 = vmul.f32 %v5050, %v5548
  %v5565 = vadd.f32 %v5524, %v5549
  %v5566 = vadd.f32 %v5525, %v5550
  %v5567 = vadd.f32 %v5526, %v5551
  %v5568 = vadd.f32 %v5527, %v5552
  %v5569 = vadd.f32 %v5528, %v5553
  %v5570 = vadd.f32 %v5529, %v5554
  %v5571 = vadd.f32 %v5530, %v5555
  %v5572 = vadd.f32 %v5531, %v5556
  %v5573 = vadd.f32 %v5532, %v5557
  %v5574 = vadd.f32 %v5533, %v5558
  %v5575 = vadd.f32 %v5534, %v5559
  %v5576 = vadd.f32 %v5535, %v5560
  %v5577 = vadd.f32 %v5536, %v5561
  %v5578 = vadd.f32 %v5537, %v5562
  %v5579 = vadd.f32 %v5538, %v5563
  %v5580 = vadd.f32 %v5539, %v5564
  %s5581 = scalar_lea.vmem %s7, 3968
  %v5582 = vld [vmem:[%s5581] sm:$0xff]
  %v5583 = vld [vmem:[%s5581 + $0x8] sm:$0xff]
  %v5584 = vld [vmem:[%s5581 + $0x10] sm:$0xff]
  %v5585 = vld [vmem:[%s5581 + $0x18] sm:$0xff]
  %v5586 = vld [vmem:[%s5581 + $0x20] sm:$0xff]
  %v5587 = vld [vmem:[%s5581 + $0x28] sm:$0xff]
  %v5588 = vld [vmem:[%s5581 + $0x30] sm:$0xff]
  %v5589 = vld [vmem:[%s5581 + $0x38] sm:$0xff]
  %v5590 = vmul.f32 %v4679, %v5582
  %v5591 = vmul.f32 %v4682, %v5583
  %v5592 = vmul.f32 %v4687, %v5584
  %v5593 = vmul.f32 %v4690, %v5585
  %v5594 = vmul.f32 %v4695, %v5586
  %v5595 = vmul.f32 %v4698, %v5587
  %v5596 = vmul.f32 %v4703, %v5588
  %v5597 = vmul.f32 %v4706, %v5589
  %v5598 = vmul.f32 %v4711, %v5582
  %v5599 = vmul.f32 %v4714, %v5583
  %v5600 = vmul.f32 %v4719, %v5584
  %v5601 = vmul.f32 %v4722, %v5585
  %v5602 = vmul.f32 %v4727, %v5586
  %v5603 = vmul.f32 %v4730, %v5587
  %v5604 = vmul.f32 %v4735, %v5588
  %v5605 = vmul.f32 %v4738, %v5589
  %v5606 = vadd.f32 %v5565, %v5590
  %v5607 = vadd.f32 %v5566, %v5591
  %v5608 = vadd.f32 %v5567, %v5592
  %v5609 = vadd.f32 %v5568, %v5593
  %v5610 = vadd.f32 %v5569, %v5594
  %v5611 = vadd.f32 %v5570, %v5595
  %v5612 = vadd.f32 %v5571, %v5596
  %v5613 = vadd.f32 %v5572, %v5597
  %v5614 = vadd.f32 %v5573, %v5598
  %v5615 = vadd.f32 %v5574, %v5599
  %v5616 = vadd.f32 %v5575, %v5600
  %v5617 = vadd.f32 %v5576, %v5601
  %v5618 = vadd.f32 %v5577, %v5602
  %v5619 = vadd.f32 %v5578, %v5603
  %v5620 = vadd.f32 %v5579, %v5604
  %v5621 = vadd.f32 %v5580, %v5605
  %s5622 = scalar_lea.vmem %s7, 4032
  %v5623 = vld [vmem:[%s5622] sm:$0xff]
  %v5624 = vld [vmem:[%s5622 + $0x8] sm:$0xff]
  %v5625 = vld [vmem:[%s5622 + $0x10] sm:$0xff]
  %v5626 = vld [vmem:[%s5622 + $0x18] sm:$0xff]
  %v5627 = vld [vmem:[%s5622 + $0x20] sm:$0xff]
  %v5628 = vld [vmem:[%s5622 + $0x28] sm:$0xff]
  %v5629 = vld [vmem:[%s5622 + $0x30] sm:$0xff]
  %v5630 = vld [vmem:[%s5622 + $0x38] sm:$0xff]
  %v5631 = vmul.f32 %v5178, %v5623
  %v5632 = vmul.f32 %v5177, %v5624
  %v5633 = vmul.f32 %v5176, %v5625
  %v5634 = vmul.f32 %v5175, %v5626
  %v5635 = vmul.f32 %v5174, %v5627
  %v5636 = vmul.f32 %v5173, %v5628
  %v5637 = vmul.f32 %v5172, %v5629
  %v5638 = vmul.f32 %v5171, %v5630
  %v5639 = vmul.f32 %v5170, %v5623
  %v5640 = vmul.f32 %v5169, %v5624
  %v5641 = vmul.f32 %v5168, %v5625
  %v5642 = vmul.f32 %v5167, %v5626
  %v5643 = vmul.f32 %v5166, %v5627
  %v5644 = vmul.f32 %v5165, %v5628
  %v5645 = vmul.f32 %v5164, %v5629
  %v5646 = vmul.f32 %v5179, %v5630
  %v5647 = vadd.f32 %v5606, %v5631
  %v5648 = vadd.f32 %v5607, %v5632
  %v5649 = vadd.f32 %v5608, %v5633
  %v5650 = vadd.f32 %v5609, %v5634
  %v5651 = vadd.f32 %v5610, %v5635
  %v5652 = vadd.f32 %v5611, %v5636
  %v5653 = vadd.f32 %v5612, %v5637
  %v5654 = vadd.f32 %v5613, %v5638
  %v5655 = vadd.f32 %v5614, %v5639
  %v5656 = vadd.f32 %v5615, %v5640
  %v5657 = vadd.f32 %v5616, %v5641
  %v5658 = vadd.f32 %v5617, %v5642
  %v5659 = vadd.f32 %v5618, %v5643
  %v5660 = vadd.f32 %v5619, %v5644
  %v5661 = vadd.f32 %v5620, %v5645
  %v5662 = vadd.f32 %v5621, %v5646
  %s5663 = scalar_lea.vmem %s7, 4096
  %v5664 = vld [vmem:[%s5663] sm:$0xff]
  %v5665 = vld [vmem:[%s5663 + $0x8] sm:$0xff]
  %v5666 = vld [vmem:[%s5663 + $0x10] sm:$0xff]
  %v5667 = vld [vmem:[%s5663 + $0x18] sm:$0xff]
  %v5668 = vld [vmem:[%s5663 + $0x20] sm:$0xff]
  %v5669 = vld [vmem:[%s5663 + $0x28] sm:$0xff]
  %v5670 = vld [vmem:[%s5663 + $0x30] sm:$0xff]
  %v5671 = vld [vmem:[%s5663 + $0x38] sm:$0xff]
  %v5672 = vmul.f32 %v5251, %v5664
  %v5673 = vmul.f32 %v5250, %v5665
  %v5674 = vmul.f32 %v5249, %v5666
  %v5675 = vmul.f32 %v5248, %v5667
  %v5676 = vmul.f32 %v5247, %v5668
  %v5677 = vmul.f32 %v5246, %v5669
  %v5678 = vmul.f32 %v5245, %v5670
  %v5679 = vmul.f32 %v5244, %v5671
  %v5680 = vmul.f32 %v5243, %v5664
  %v5681 = vmul.f32 %v5242, %v5665
  %v5682 = vmul.f32 %v5241, %v5666
  %v5683 = vmul.f32 %v5240, %v5667
  %v5684 = vmul.f32 %v5239, %v5668
  %v5685 = vmul.f32 %v5238, %v5669
  %v5686 = vmul.f32 %v5237, %v5670
  %v5687 = vmul.f32 %v5252, %v5671
  %v5688 = vadd.f32 %v5647, %v5672
  %v5689 = vadd.f32 %v5648, %v5673
  %v5690 = vadd.f32 %v5649, %v5674
  %v5691 = vadd.f32 %v5650, %v5675
  %v5692 = vadd.f32 %v5651, %v5676
  %v5693 = vadd.f32 %v5652, %v5677
  %v5694 = vadd.f32 %v5653, %v5678
  %v5695 = vadd.f32 %v5654, %v5679
  %v5696 = vadd.f32 %v5655, %v5680
  %v5697 = vadd.f32 %v5656, %v5681
  %v5698 = vadd.f32 %v5657, %v5682
  %v5699 = vadd.f32 %v5658, %v5683
  %v5700 = vadd.f32 %v5659, %v5684
  %v5701 = vadd.f32 %v5660, %v5685
  %v5702 = vadd.f32 %v5661, %v5686
  %v5703 = vadd.f32 %v5662, %v5687
  %s5704 = scalar_lea.vmem %s7, 4160
  %v5705 = vld [vmem:[%s5704] sm:$0xff]
  %v5706 = vld [vmem:[%s5704 + $0x8] sm:$0xff]
  %v5707 = vld [vmem:[%s5704 + $0x10] sm:$0xff]
  %v5708 = vld [vmem:[%s5704 + $0x18] sm:$0xff]
  %v5709 = vld [vmem:[%s5704 + $0x20] sm:$0xff]
  %v5710 = vld [vmem:[%s5704 + $0x28] sm:$0xff]
  %v5711 = vld [vmem:[%s5704 + $0x30] sm:$0xff]
  %v5712 = vld [vmem:[%s5704 + $0x38] sm:$0xff]
  %v5713 = vmul.f32 %v4991, %v5705
  %v5714 = vmul.f32 %v4990, %v5706
  %v5715 = vmul.f32 %v4989, %v5707
  %v5716 = vmul.f32 %v4988, %v5708
  %v5717 = vmul.f32 %v4987, %v5709
  %v5718 = vmul.f32 %v4986, %v5710
  %v5719 = vmul.f32 %v4985, %v5711
  %v5720 = vmul.f32 %v4984, %v5712
  %v5721 = vmul.f32 %v4983, %v5705
  %v5722 = vmul.f32 %v4982, %v5706
  %v5723 = vmul.f32 %v4981, %v5707
  %v5724 = vmul.f32 %v4980, %v5708
  %v5725 = vmul.f32 %v4979, %v5709
  %v5726 = vmul.f32 %v4978, %v5710
  %v5727 = vmul.f32 %v4977, %v5711
  %v5728 = vmul.f32 %v4992, %v5712
  %v5729 = vadd.f32 %v5688, %v5713
  %v5730 = vadd.f32 %v5689, %v5714
  %v5731 = vadd.f32 %v5690, %v5715
  %v5732 = vadd.f32 %v5691, %v5716
  %v5733 = vadd.f32 %v5692, %v5717
  %v5734 = vadd.f32 %v5693, %v5718
  %v5735 = vadd.f32 %v5694, %v5719
  %v5736 = vadd.f32 %v5695, %v5720
  %v5737 = vadd.f32 %v5696, %v5721
  %v5738 = vadd.f32 %v5697, %v5722
  %v5739 = vadd.f32 %v5698, %v5723
  %v5740 = vadd.f32 %v5699, %v5724
  %v5741 = vadd.f32 %v5700, %v5725
  %v5742 = vadd.f32 %v5701, %v5726
  %v5743 = vadd.f32 %v5702, %v5727
  %v5744 = vadd.f32 %v5703, %v5728
  %s5745 = scalar_lea.vmem %s7, 4224
  %v5746 = vld [vmem:[%s5745] sm:$0xff]
  %v5747 = vld [vmem:[%s5745 + $0x8] sm:$0xff]
  %v5748 = vld [vmem:[%s5745 + $0x10] sm:$0xff]
  %v5749 = vld [vmem:[%s5745 + $0x18] sm:$0xff]
  %v5750 = vld [vmem:[%s5745 + $0x20] sm:$0xff]
  %v5751 = vld [vmem:[%s5745 + $0x28] sm:$0xff]
  %v5752 = vld [vmem:[%s5745 + $0x30] sm:$0xff]
  %v5753 = vld [vmem:[%s5745 + $0x38] sm:$0xff]
  %v5754 = vmul.f32 %v5064, %v5746
  %v5755 = vmul.f32 %v5063, %v5747
  %v5756 = vmul.f32 %v5062, %v5748
  %v5757 = vmul.f32 %v5061, %v5749
  %v5758 = vmul.f32 %v5060, %v5750
  %v5759 = vmul.f32 %v5059, %v5751
  %v5760 = vmul.f32 %v5058, %v5752
  %v5761 = vmul.f32 %v5057, %v5753
  %v5762 = vmul.f32 %v5056, %v5746
  %v5763 = vmul.f32 %v5055, %v5747
  %v5764 = vmul.f32 %v5054, %v5748
  %v5765 = vmul.f32 %v5053, %v5749
  %v5766 = vmul.f32 %v5052, %v5750
  %v5767 = vmul.f32 %v5051, %v5751
  %v5768 = vmul.f32 %v5050, %v5752
  %v5769 = vmul.f32 %v5065, %v5753
  %v5770 = vadd.f32 %v5729, %v5754
  %v5771 = vadd.f32 %v5730, %v5755
  %v5772 = vadd.f32 %v5731, %v5756
  %v5773 = vadd.f32 %v5732, %v5757
  %v5774 = vadd.f32 %v5733, %v5758
  %v5775 = vadd.f32 %v5734, %v5759
  %v5776 = vadd.f32 %v5735, %v5760
  %v5777 = vadd.f32 %v5736, %v5761
  %v5778 = vadd.f32 %v5737, %v5762
  %v5779 = vadd.f32 %v5738, %v5763
  %v5780 = vadd.f32 %v5739, %v5764
  %v5781 = vadd.f32 %v5740, %v5765
  %v5782 = vadd.f32 %v5741, %v5766
  %v5783 = vadd.f32 %v5742, %v5767
  %v5784 = vadd.f32 %v5743, %v5768
  %v5785 = vadd.f32 %v5744, %v5769
  %s5786 = scalar_lea.vmem %s7, 4288
  %v5787 = vld [vmem:[%s5786] sm:$0xff]
  %v5788 = vld [vmem:[%s5786 + $0x8] sm:$0xff]
  %v5789 = vld [vmem:[%s5786 + $0x10] sm:$0xff]
  %v5790 = vld [vmem:[%s5786 + $0x18] sm:$0xff]
  %v5791 = vld [vmem:[%s5786 + $0x20] sm:$0xff]
  %v5792 = vld [vmem:[%s5786 + $0x28] sm:$0xff]
  %v5793 = vld [vmem:[%s5786 + $0x30] sm:$0xff]
  %v5794 = vld [vmem:[%s5786 + $0x38] sm:$0xff]
  %v5795 = vmul.f32 %v4682, %v5787
  %v5796 = vmul.f32 %v4687, %v5788
  %v5797 = vmul.f32 %v4690, %v5789
  %v5798 = vmul.f32 %v4695, %v5790
  %v5799 = vmul.f32 %v4698, %v5791
  %v5800 = vmul.f32 %v4703, %v5792
  %v5801 = vmul.f32 %v4706, %v5793
  %v5802 = vmul.f32 %v4711, %v5794
  %v5803 = vmul.f32 %v4714, %v5787
  %v5804 = vmul.f32 %v4719, %v5788
  %v5805 = vmul.f32 %v4722, %v5789
  %v5806 = vmul.f32 %v4727, %v5790
  %v5807 = vmul.f32 %v4730, %v5791
  %v5808 = vmul.f32 %v4735, %v5792
  %v5809 = vmul.f32 %v4738, %v5793
  %v5810 = vmul.f32 %v4679, %v5794
  %v5811 = vadd.f32 %v5770, %v5795
  %v5812 = vadd.f32 %v5771, %v5796
  %v5813 = vadd.f32 %v5772, %v5797
  %v5814 = vadd.f32 %v5773, %v5798
  %v5815 = vadd.f32 %v5774, %v5799
  %v5816 = vadd.f32 %v5775, %v5800
  %v5817 = vadd.f32 %v5776, %v5801
  %v5818 = vadd.f32 %v5777, %v5802
  %v5819 = vadd.f32 %v5778, %v5803
  %v5820 = vadd.f32 %v5779, %v5804
  %v5821 = vadd.f32 %v5780, %v5805
  %v5822 = vadd.f32 %v5781, %v5806
  %v5823 = vadd.f32 %v5782, %v5807
  %v5824 = vadd.f32 %v5783, %v5808
  %v5825 = vadd.f32 %v5784, %v5809
  %v5826 = vadd.f32 %v5785, %v5810
  %s5827 = scalar_lea.vmem %s7, 4352
  %v5828 = vld [vmem:[%s5827] sm:$0xff]
  %v5829 = vld [vmem:[%s5827 + $0x8] sm:$0xff]
  %v5830 = vld [vmem:[%s5827 + $0x10] sm:$0xff]
  %v5831 = vld [vmem:[%s5827 + $0x18] sm:$0xff]
  %v5832 = vld [vmem:[%s5827 + $0x20] sm:$0xff]
  %v5833 = vld [vmem:[%s5827 + $0x28] sm:$0xff]
  %v5834 = vld [vmem:[%s5827 + $0x30] sm:$0xff]
  %v5835 = vld [vmem:[%s5827 + $0x38] sm:$0xff]
  %v5836 = vmul.f32 %v5177, %v5828
  %v5837 = vmul.f32 %v5176, %v5829
  %v5838 = vmul.f32 %v5175, %v5830
  %v5839 = vmul.f32 %v5174, %v5831
  %v5840 = vmul.f32 %v5173, %v5832
  %v5841 = vmul.f32 %v5172, %v5833
  %v5842 = vmul.f32 %v5171, %v5834
  %v5843 = vmul.f32 %v5170, %v5835
  %v5844 = vmul.f32 %v5169, %v5828
  %v5845 = vmul.f32 %v5168, %v5829
  %v5846 = vmul.f32 %v5167, %v5830
  %v5847 = vmul.f32 %v5166, %v5831
  %v5848 = vmul.f32 %v5165, %v5832
  %v5849 = vmul.f32 %v5164, %v5833
  %v5850 = vmul.f32 %v5179, %v5834
  %v5851 = vmul.f32 %v5178, %v5835
  %v5852 = vadd.f32 %v5811, %v5836
  %v5853 = vadd.f32 %v5812, %v5837
  %v5854 = vadd.f32 %v5813, %v5838
  %v5855 = vadd.f32 %v5814, %v5839
  %v5856 = vadd.f32 %v5815, %v5840
  %v5857 = vadd.f32 %v5816, %v5841
  %v5858 = vadd.f32 %v5817, %v5842
  %v5859 = vadd.f32 %v5818, %v5843
  %v5860 = vadd.f32 %v5819, %v5844
  %v5861 = vadd.f32 %v5820, %v5845
  %v5862 = vadd.f32 %v5821, %v5846
  %v5863 = vadd.f32 %v5822, %v5847
  %v5864 = vadd.f32 %v5823, %v5848
  %v5865 = vadd.f32 %v5824, %v5849
  %v5866 = vadd.f32 %v5825, %v5850
  %v5867 = vadd.f32 %v5826, %v5851
  %s5868 = scalar_lea.vmem %s7, 4416
  %v5869 = vld [vmem:[%s5868] sm:$0xff]
  %v5870 = vld [vmem:[%s5868 + $0x8] sm:$0xff]
  %v5871 = vld [vmem:[%s5868 + $0x10] sm:$0xff]
  %v5872 = vld [vmem:[%s5868 + $0x18] sm:$0xff]
  %v5873 = vld [vmem:[%s5868 + $0x20] sm:$0xff]
  %v5874 = vld [vmem:[%s5868 + $0x28] sm:$0xff]
  %v5875 = vld [vmem:[%s5868 + $0x30] sm:$0xff]
  %v5876 = vld [vmem:[%s5868 + $0x38] sm:$0xff]
  %v5877 = vmul.f32 %v5250, %v5869
  %v5878 = vmul.f32 %v5249, %v5870
  %v5879 = vmul.f32 %v5248, %v5871
  %v5880 = vmul.f32 %v5247, %v5872
  %v5881 = vmul.f32 %v5246, %v5873
  %v5882 = vmul.f32 %v5245, %v5874
  %v5883 = vmul.f32 %v5244, %v5875
  %v5884 = vmul.f32 %v5243, %v5876
  %v5885 = vmul.f32 %v5242, %v5869
  %v5886 = vmul.f32 %v5241, %v5870
  %v5887 = vmul.f32 %v5240, %v5871
  %v5888 = vmul.f32 %v5239, %v5872
  %v5889 = vmul.f32 %v5238, %v5873
  %v5890 = vmul.f32 %v5237, %v5874
  %v5891 = vmul.f32 %v5252, %v5875
  %v5892 = vmul.f32 %v5251, %v5876
  %v5893 = vadd.f32 %v5852, %v5877
  %v5894 = vadd.f32 %v5853, %v5878
  %v5895 = vadd.f32 %v5854, %v5879
  %v5896 = vadd.f32 %v5855, %v5880
  %v5897 = vadd.f32 %v5856, %v5881
  %v5898 = vadd.f32 %v5857, %v5882
  %v5899 = vadd.f32 %v5858, %v5883
  %v5900 = vadd.f32 %v5859, %v5884
  %v5901 = vadd.f32 %v5860, %v5885
  %v5902 = vadd.f32 %v5861, %v5886
  %v5903 = vadd.f32 %v5862, %v5887
  %v5904 = vadd.f32 %v5863, %v5888
  %v5905 = vadd.f32 %v5864, %v5889
  %v5906 = vadd.f32 %v5865, %v5890
  %v5907 = vadd.f32 %v5866, %v5891
  %v5908 = vadd.f32 %v5867, %v5892
  %s5909 = scalar_lea.vmem %s7, 4480
  %v5910 = vld [vmem:[%s5909] sm:$0xff]
  %v5911 = vld [vmem:[%s5909 + $0x8] sm:$0xff]
  %v5912 = vld [vmem:[%s5909 + $0x10] sm:$0xff]
  %v5913 = vld [vmem:[%s5909 + $0x18] sm:$0xff]
  %v5914 = vld [vmem:[%s5909 + $0x20] sm:$0xff]
  %v5915 = vld [vmem:[%s5909 + $0x28] sm:$0xff]
  %v5916 = vld [vmem:[%s5909 + $0x30] sm:$0xff]
  %v5917 = vld [vmem:[%s5909 + $0x38] sm:$0xff]
  %v5918 = vmul.f32 %v4990, %v5910
  %v5919 = vmul.f32 %v4989, %v5911
  %v5920 = vmul.f32 %v4988, %v5912
  %v5921 = vmul.f32 %v4987, %v5913
  %v5922 = vmul.f32 %v4986, %v5914
  %v5923 = vmul.f32 %v4985, %v5915
  %v5924 = vmul.f32 %v4984, %v5916
  %v5925 = vmul.f32 %v4983, %v5917
  %v5926 = vmul.f32 %v4982, %v5910
  %v5927 = vmul.f32 %v4981, %v5911
  %v5928 = vmul.f32 %v4980, %v5912
  %v5929 = vmul.f32 %v4979, %v5913
  %v5930 = vmul.f32 %v4978, %v5914
  %v5931 = vmul.f32 %v4977, %v5915
  %v5932 = vmul.f32 %v4992, %v5916
  %v5933 = vmul.f32 %v4991, %v5917
  %v5934 = vadd.f32 %v5893, %v5918
  %v5935 = vadd.f32 %v5894, %v5919
  %v5936 = vadd.f32 %v5895, %v5920
  %v5937 = vadd.f32 %v5896, %v5921
  %v5938 = vadd.f32 %v5897, %v5922
  %v5939 = vadd.f32 %v5898, %v5923
  %v5940 = vadd.f32 %v5899, %v5924
  %v5941 = vadd.f32 %v5900, %v5925
  %v5942 = vadd.f32 %v5901, %v5926
  %v5943 = vadd.f32 %v5902, %v5927
  %v5944 = vadd.f32 %v5903, %v5928
  %v5945 = vadd.f32 %v5904, %v5929
  %v5946 = vadd.f32 %v5905, %v5930
  %v5947 = vadd.f32 %v5906, %v5931
  %v5948 = vadd.f32 %v5907, %v5932
  %v5949 = vadd.f32 %v5908, %v5933
  %s5950 = scalar_lea.vmem %s7, 4544
  %v5951 = vld [vmem:[%s5950] sm:$0xff]
  %v5952 = vld [vmem:[%s5950 + $0x8] sm:$0xff]
  %v5953 = vld [vmem:[%s5950 + $0x10] sm:$0xff]
  %v5954 = vld [vmem:[%s5950 + $0x18] sm:$0xff]
  %v5955 = vld [vmem:[%s5950 + $0x20] sm:$0xff]
  %v5956 = vld [vmem:[%s5950 + $0x28] sm:$0xff]
  %v5957 = vld [vmem:[%s5950 + $0x30] sm:$0xff]
  %v5958 = vld [vmem:[%s5950 + $0x38] sm:$0xff]
  %v5959 = vmul.f32 %v5063, %v5951
  %v5960 = vmul.f32 %v5062, %v5952
  %v5961 = vmul.f32 %v5061, %v5953
  %v5962 = vmul.f32 %v5060, %v5954
  %v5963 = vmul.f32 %v5059, %v5955
  %v5964 = vmul.f32 %v5058, %v5956
  %v5965 = vmul.f32 %v5057, %v5957
  %v5966 = vmul.f32 %v5056, %v5958
  %v5967 = vmul.f32 %v5055, %v5951
  %v5968 = vmul.f32 %v5054, %v5952
  %v5969 = vmul.f32 %v5053, %v5953
  %v5970 = vmul.f32 %v5052, %v5954
  %v5971 = vmul.f32 %v5051, %v5955
  %v5972 = vmul.f32 %v5050, %v5956
  %v5973 = vmul.f32 %v5065, %v5957
  %v5974 = vmul.f32 %v5064, %v5958
  %v5975 = vadd.f32 %v5934, %v5959
  %v5976 = vadd.f32 %v5935, %v5960
  %v5977 = vadd.f32 %v5936, %v5961
  %v5978 = vadd.f32 %v5937, %v5962
  %v5979 = vadd.f32 %v5938, %v5963
  %v5980 = vadd.f32 %v5939, %v5964
  %v5981 = vadd.f32 %v5940, %v5965
  %v5982 = vadd.f32 %v5941, %v5966
  %v5983 = vadd.f32 %v5942, %v5967
  %v5984 = vadd.f32 %v5943, %v5968
  %v5985 = vadd.f32 %v5944, %v5969
  %v5986 = vadd.f32 %v5945, %v5970
  %v5987 = vadd.f32 %v5946, %v5971
  %v5988 = vadd.f32 %v5947, %v5972
  %v5989 = vadd.f32 %v5948, %v5973
  %v5990 = vadd.f32 %v5949, %v5974
  %s5991 = scalar_lea.vmem %s7, 4608
  %v5992 = vld [vmem:[%s5991] sm:$0xff]
  %v5993 = vld [vmem:[%s5991 + $0x8] sm:$0xff]
  %v5994 = vld [vmem:[%s5991 + $0x10] sm:$0xff]
  %v5995 = vld [vmem:[%s5991 + $0x18] sm:$0xff]
  %v5996 = vld [vmem:[%s5991 + $0x20] sm:$0xff]
  %v5997 = vld [vmem:[%s5991 + $0x28] sm:$0xff]
  %v5998 = vld [vmem:[%s5991 + $0x30] sm:$0xff]
  %v5999 = vld [vmem:[%s5991 + $0x38] sm:$0xff]
  %v6000 = vmul.f32 %v4687, %v5992
  %v6001 = vmul.f32 %v4690, %v5993
  %v6002 = vmul.f32 %v4695, %v5994
  %v6003 = vmul.f32 %v4698, %v5995
  %v6004 = vmul.f32 %v4703, %v5996
  %v6005 = vmul.f32 %v4706, %v5997
  %v6006 = vmul.f32 %v4711, %v5998
  %v6007 = vmul.f32 %v4714, %v5999
  %v6008 = vmul.f32 %v4719, %v5992
  %v6009 = vmul.f32 %v4722, %v5993
  %v6010 = vmul.f32 %v4727, %v5994
  %v6011 = vmul.f32 %v4730, %v5995
  %v6012 = vmul.f32 %v4735, %v5996
  %v6013 = vmul.f32 %v4738, %v5997
  %v6014 = vmul.f32 %v4679, %v5998
  %v6015 = vmul.f32 %v4682, %v5999
  %v6016 = vadd.f32 %v5975, %v6000
  %v6017 = vadd.f32 %v5976, %v6001
  %v6018 = vadd.f32 %v5977, %v6002
  %v6019 = vadd.f32 %v5978, %v6003
  %v6020 = vadd.f32 %v5979, %v6004
  %v6021 = vadd.f32 %v5980, %v6005
  %v6022 = vadd.f32 %v5981, %v6006
  %v6023 = vadd.f32 %v5982, %v6007
  %v6024 = vadd.f32 %v5983, %v6008
  %v6025 = vadd.f32 %v5984, %v6009
  %v6026 = vadd.f32 %v5985, %v6010
  %v6027 = vadd.f32 %v5986, %v6011
  %v6028 = vadd.f32 %v5987, %v6012
  %v6029 = vadd.f32 %v5988, %v6013
  %v6030 = vadd.f32 %v5989, %v6014
  %v6031 = vadd.f32 %v5990, %v6015
  %s6032 = scalar_lea.vmem %s7, 4672
  %v6033 = vld [vmem:[%s6032] sm:$0xff]
  %v6034 = vld [vmem:[%s6032 + $0x8] sm:$0xff]
  %v6035 = vld [vmem:[%s6032 + $0x10] sm:$0xff]
  %v6036 = vld [vmem:[%s6032 + $0x18] sm:$0xff]
  %v6037 = vld [vmem:[%s6032 + $0x20] sm:$0xff]
  %v6038 = vld [vmem:[%s6032 + $0x28] sm:$0xff]
  %v6039 = vld [vmem:[%s6032 + $0x30] sm:$0xff]
  %v6040 = vld [vmem:[%s6032 + $0x38] sm:$0xff]
  %v6041 = vmul.f32 %v5176, %v6033
  %v6042 = vmul.f32 %v5175, %v6034
  %v6043 = vmul.f32 %v5174, %v6035
  %v6044 = vmul.f32 %v5173, %v6036
  %v6045 = vmul.f32 %v5172, %v6037
  %v6046 = vmul.f32 %v5171, %v6038
  %v6047 = vmul.f32 %v5170, %v6039
  %v6048 = vmul.f32 %v5169, %v6040
  %v6049 = vmul.f32 %v5168, %v6033
  %v6050 = vmul.f32 %v5167, %v6034
  %v6051 = vmul.f32 %v5166, %v6035
  %v6052 = vmul.f32 %v5165, %v6036
  %v6053 = vmul.f32 %v5164, %v6037
  %v6054 = vmul.f32 %v5179, %v6038
  %v6055 = vmul.f32 %v5178, %v6039
  %v6056 = vmul.f32 %v5177, %v6040
  %v6057 = vadd.f32 %v6016, %v6041
  %v6058 = vadd.f32 %v6017, %v6042
  %v6059 = vadd.f32 %v6018, %v6043
  %v6060 = vadd.f32 %v6019, %v6044
  %v6061 = vadd.f32 %v6020, %v6045
  %v6062 = vadd.f32 %v6021, %v6046
  %v6063 = vadd.f32 %v6022, %v6047
  %v6064 = vadd.f32 %v6023, %v6048
  %v6065 = vadd.f32 %v6024, %v6049
  %v6066 = vadd.f32 %v6025, %v6050
  %v6067 = vadd.f32 %v6026, %v6051
  %v6068 = vadd.f32 %v6027, %v6052
  %v6069 = vadd.f32 %v6028, %v6053
  %v6070 = vadd.f32 %v6029, %v6054
  %v6071 = vadd.f32 %v6030, %v6055
  %v6072 = vadd.f32 %v6031, %v6056
  %s6073 = scalar_lea.vmem %s7, 4736
  %v6074 = vld [vmem:[%s6073] sm:$0xff]
  %v6075 = vld [vmem:[%s6073 + $0x8] sm:$0xff]
  %v6076 = vld [vmem:[%s6073 + $0x10] sm:$0xff]
  %v6077 = vld [vmem:[%s6073 + $0x18] sm:$0xff]
  %v6078 = vld [vmem:[%s6073 + $0x20] sm:$0xff]
  %v6079 = vld [vmem:[%s6073 + $0x28] sm:$0xff]
  %v6080 = vld [vmem:[%s6073 + $0x30] sm:$0xff]
  %v6081 = vld [vmem:[%s6073 + $0x38] sm:$0xff]
  %v6082 = vmul.f32 %v5249, %v6074
  %v6083 = vmul.f32 %v5248, %v6075
  %v6084 = vmul.f32 %v5247, %v6076
  %v6085 = vmul.f32 %v5246, %v6077
  %v6086 = vmul.f32 %v5245, %v6078
  %v6087 = vmul.f32 %v5244, %v6079
  %v6088 = vmul.f32 %v5243, %v6080
  %v6089 = vmul.f32 %v5242, %v6081
  %v6090 = vmul.f32 %v5241, %v6074
  %v6091 = vmul.f32 %v5240, %v6075
  %v6092 = vmul.f32 %v5239, %v6076
  %v6093 = vmul.f32 %v5238, %v6077
  %v6094 = vmul.f32 %v5237, %v6078
  %v6095 = vmul.f32 %v5252, %v6079
  %v6096 = vmul.f32 %v5251, %v6080
  %v6097 = vmul.f32 %v5250, %v6081
  %v6098 = vadd.f32 %v6057, %v6082
  %v6099 = vadd.f32 %v6058, %v6083
  %v6100 = vadd.f32 %v6059, %v6084
  %v6101 = vadd.f32 %v6060, %v6085
  %v6102 = vadd.f32 %v6061, %v6086
  %v6103 = vadd.f32 %v6062, %v6087
  %v6104 = vadd.f32 %v6063, %v6088
  %v6105 = vadd.f32 %v6064, %v6089
  %v6106 = vadd.f32 %v6065, %v6090
  %v6107 = vadd.f32 %v6066, %v6091
  %v6108 = vadd.f32 %v6067, %v6092
  %v6109 = vadd.f32 %v6068, %v6093
  %v6110 = vadd.f32 %v6069, %v6094
  %v6111 = vadd.f32 %v6070, %v6095
  %v6112 = vadd.f32 %v6071, %v6096
  %v6113 = vadd.f32 %v6072, %v6097
  %s6114 = scalar_lea.vmem %s8, 2
  %v6115 = vld [vmem:[%s6114] sm:$0x1]
  %v6117 = vlaneseq
  %v6118 = vshrl.u32 %v6117, 7
  %v6119 = vsub.s32 0, %v6118
  %v6120 = vrot.slane %v6115, %v6119
  %v6122 = vadd.f32 %v6098, %v6120
  %v6123 = vadd.f32 %v6099, %v6120
  %v6124 = vadd.f32 %v6100, %v6120
  %v6125 = vadd.f32 %v6101, %v6120
  %v6126 = vadd.f32 %v6102, %v6120
  %v6127 = vadd.f32 %v6103, %v6120
  %v6128 = vadd.f32 %v6104, %v6120
  %v6129 = vadd.f32 %v6105, %v6120
  %v6130 = vadd.f32 %v6106, %v6120
  %v6131 = vadd.f32 %v6107, %v6120
  %v6132 = vadd.f32 %v6108, %v6120
  %v6133 = vadd.f32 %v6109, %v6120
  %v6134 = vadd.f32 %v6110, %v6120
  %v6135 = vadd.f32 %v6111, %v6120
  %v6136 = vadd.f32 %v6112, %v6120
  %v6137 = vadd.f32 %v6113, %v6120
  %v6138 = vpack.c.bf16 %v6123, %v6122
  %v6139 = vpack.c.bf16 %v6125, %v6124
  %v6140 = vpack.c.bf16 %v6127, %v6126
  %v6141 = vpack.c.bf16 %v6129, %v6128
  %v6142 = vpack.c.bf16 %v6131, %v6130
  %v6143 = vpack.c.bf16 %v6133, %v6132
  %v6144 = vpack.c.bf16 %v6135, %v6134
  %v6145 = vpack.c.bf16 %v6137, %v6136
  %v6146 = vpack.c.bf16 %v4792, %v4789
  %v6147 = vpack.c.bf16 %v4800, %v4797
  %v6148 = vpack.c.bf16 %v4808, %v4805
  %v6149 = vpack.c.bf16 %v4816, %v4813
  %v6150 = vpack.c.bf16 %v4824, %v4821
  %v6151 = vpack.c.bf16 %v4832, %v4829
  %v6152 = vpack.c.bf16 %v4840, %v4837
  %v6153 = vpack.c.bf16 %v4848, %v4845
  %v6154 = vpack.c.bf16 %v4902, %v4899
  %v6155 = vpack.c.bf16 %v4910, %v4907
  %v6156 = vpack.c.bf16 %v4918, %v4915
  %v6157 = vpack.c.bf16 %v4926, %v4923
  %v6158 = vpack.c.bf16 %v4934, %v4931
  %v6159 = vpack.c.bf16 %v4942, %v4939
  %v6160 = vpack.c.bf16 %v4950, %v4947
  %v6161 = vpack.c.bf16 %v4958, %v4955
  %s6162 = scalar_lea.vmem %s9, 128
  %v6163 = vld [vmem:[%s6162] sm:$0xff]
  %v6164 = vld [vmem:[%s6162 + $0x8] sm:$0xff]
  %v6165 = vld [vmem:[%s6162 + $0x10] sm:$0xff]
  %v6166 = vld [vmem:[%s6162 + $0x18] sm:$0xff]
  %v6167 = vld [vmem:[%s6162 + $0x20] sm:$0xff]
  %v6168 = vld [vmem:[%s6162 + $0x28] sm:$0xff]
  %v6169 = vld [vmem:[%s6162 + $0x30] sm:$0xff]
  %v6170 = vld [vmem:[%s6162 + $0x38] sm:$0xff]
  %v6172 = vsel %vm74, %v6138, 0
  %v6175 = vsel %vm74, %v6139, 0
  %v6178 = vsel %vm74, %v6140, 0
  %v6181 = vsel %vm74, %v6141, 0
  %v6184 = vsel %vm74, %v6146, 0
  %v6187 = vsel %vm74, %v6147, 0
  %v6190 = vsel %vm74, %v6148, 0
  %v6193 = vsel %vm74, %v6149, 0
  %6195 = vmatprep.subr.bf16.mxu0 0
  %6196 = vmatpush1.bf16.xpose.msra.mxu0 %v6184
  %6197 = vmatprep.subr.bf16.mxu0 0
  %6198 = vmatpush1.bf16.xpose.msra.mxu0 %v6187
  %6199 = vmatprep.subr.bf16.mxu0 0
  %6200 = vmatpush1.bf16.xpose.msra.mxu0 %v6190
  %6201 = vmatprep.subr.bf16.mxu0 0
  %6202 = vmatpush1.bf16.xpose.msra.mxu0 %v6193
  %6203 = vmatprep.subr.bf16.mxu0 0
  %6204 = vmatpush1.bf16.xpose.msra.mxu0 0
  %6205 = vmatprep.subr.bf16.mxu0 0
  %6206 = vmatpush1.bf16.xpose.msra.mxu0 0
  %6207 = vmatprep.subr.bf16.mxu0 0
  %6208 = vmatpush1.bf16.xpose.msra.mxu0 0
  %6209 = vmatprep.subr.bf16.mxu0 0
  %6210 = vmatpush1.bf16.xpose.msra.mxu0 0
  %6211 = vmatprep.subr.bf16.mxu0 0
  %6212 = vmatpush1.bf16.xpose.msra.mxu0 0
  %6213 = vmatprep.subr.bf16.mxu0 0
  %6214 = vmatpush1.bf16.xpose.msra.mxu0 0
  %6215 = vmatprep.subr.bf16.mxu0 0
  %6216 = vmatpush1.bf16.xpose.msra.mxu0 0
  %6217 = vmatprep.subr.bf16.mxu0 0
  %6218 = vmatpush1.bf16.xpose.msra.mxu0 0
  %6219 = vmatprep.subr.bf16.mxu0 0
  %6220 = vmatpush1.bf16.xpose.msra.mxu0 0
  %6221 = vmatprep.subr.bf16.mxu0 0
  %6222 = vmatpush1.bf16.xpose.msra.mxu0 0
  %6223 = vmatprep.subr.bf16.mxu0 0
  %6224 = vmatpush1.bf16.xpose.msra.mxu0 0
  %6225 = vmatprep.subr.bf16.mxu0 0
  %6226 = vmatpush1.bf16.xpose.msra.mxu0 0
  %6227 = vmatprep.mubr.bf16.mxu0 0
  %6228 = vmatmul.mubr.bf16.gmra.mrb[0].mxu0 %v6172
  %v6229 = vpop.f32.mrb[0].mxu0
  %v6230 = vadd.f32 %v6163, %v6229
  %v6231 = vpop.f32.mrb[0].mxu0
  %v6232 = vpop.f32.mrb[0].mxu0
  %v6233 = vadd.f32 %v6164, %v6232
  %v6234 = vpop.f32.mrb[0].mxu0
  %6235 = vmatprep.mubr.bf16.mxu0 0
  %6236 = vmatmul.mubr.bf16.gmra.mrb[0].mxu0 %v6175
  %v6237 = vpop.f32.mrb[0].mxu0
  %v6238 = vadd.f32 %v6165, %v6237
  %v6239 = vpop.f32.mrb[0].mxu0
  %v6240 = vpop.f32.mrb[0].mxu0
  %v6241 = vadd.f32 %v6166, %v6240
  %v6242 = vpop.f32.mrb[0].mxu0
  %6243 = vmatprep.mubr.bf16.mxu0 0
  %6244 = vmatmul.mubr.bf16.gmra.mrb[0].mxu0 %v6178
  %v6245 = vpop.f32.mrb[0].mxu0
  %v6246 = vadd.f32 %v6167, %v6245
  %v6247 = vpop.f32.mrb[0].mxu0
  %v6248 = vpop.f32.mrb[0].mxu0
  %v6249 = vadd.f32 %v6168, %v6248
  %v6250 = vpop.f32.mrb[0].mxu0
  %6251 = vmatprep.mubr.bf16.mxu0 0
  %6252 = vmatmul.mubr.bf16.gmra.mrb[0].mxu0 %v6181
  %v6253 = vpop.f32.mrb[0].mxu0
  %v6254 = vadd.f32 %v6169, %v6253
  %v6255 = vpop.f32.mrb[0].mxu0
  %v6256 = vpop.f32.mrb[0].mxu0
  %v6257 = vadd.f32 %v6170, %v6256
  %v6258 = vpop.f32.mrb[0].mxu0
  %6259 = vdwg.mxu0
  %v6261 = vsel %vm74, %v6142, 0
  %v6264 = vsel %vm74, %v6143, 0
  %v6267 = vsel %vm74, %v6144, 0
  %v6270 = vsel %vm74, %v6145, 0
  %v6273 = vsel %vm74, %v6150, 0
  %v6276 = vsel %vm74, %v6151, 0
  %v6279 = vsel %vm74, %v6152, 0
  %v6282 = vsel %vm74, %v6153, 0
  %6284 = vmatprep.subr.bf16.mxu0 0
  %6285 = vmatpush1.bf16.xpose.msra.mxu0 %v6273
  %6286 = vmatprep.subr.bf16.mxu0 0
  %6287 = vmatpush1.bf16.xpose.msra.mxu0 %v6276
  %6288 = vmatprep.subr.bf16.mxu0 0
  %6289 = vmatpush1.bf16.xpose.msra.mxu0 %v6279
  %6290 = vmatprep.subr.bf16.mxu0 0
  %6291 = vmatpush1.bf16.xpose.msra.mxu0 %v6282
  %6292 = vmatprep.subr.bf16.mxu0 0
  %6293 = vmatpush1.bf16.xpose.msra.mxu0 0
  %6294 = vmatprep.subr.bf16.mxu0 0
  %6295 = vmatpush1.bf16.xpose.msra.mxu0 0
  %6296 = vmatprep.subr.bf16.mxu0 0
  %6297 = vmatpush1.bf16.xpose.msra.mxu0 0
  %6298 = vmatprep.subr.bf16.mxu0 0
  %6299 = vmatpush1.bf16.xpose.msra.mxu0 0
  %6300 = vmatprep.subr.bf16.mxu0 0
  %6301 = vmatpush1.bf16.xpose.msra.mxu0 0
  %6302 = vmatprep.subr.bf16.mxu0 0
  %6303 = vmatpush1.bf16.xpose.msra.mxu0 0
  %6304 = vmatprep.subr.bf16.mxu0 0
  %6305 = vmatpush1.bf16.xpose.msra.mxu0 0
  %6306 = vmatprep.subr.bf16.mxu0 0
  %6307 = vmatpush1.bf16.xpose.msra.mxu0 0
  %6308 = vmatprep.subr.bf16.mxu0 0
  %6309 = vmatpush1.bf16.xpose.msra.mxu0 0
  %6310 = vmatprep.subr.bf16.mxu0 0
  %6311 = vmatpush1.bf16.xpose.msra.mxu0 0
  %6312 = vmatprep.subr.bf16.mxu0 0
  %6313 = vmatpush1.bf16.xpose.msra.mxu0 0
  %6314 = vmatprep.subr.bf16.mxu0 0
  %6315 = vmatpush1.bf16.xpose.msra.mxu0 0
  %6316 = vmatprep.mubr.bf16.mxu0 0
  %6317 = vmatmul.mubr.bf16.gmra.mrb[0].mxu0 %v6261
  %v6318 = vpop.f32.mrb[0].mxu0
  %v6319 = vadd.f32 %v6163, %v6318
  %v6320 = vpop.f32.mrb[0].mxu0
  %v6321 = vpop.f32.mrb[0].mxu0
  %v6322 = vadd.f32 %v6164, %v6321
  %v6323 = vpop.f32.mrb[0].mxu0
  %6324 = vmatprep.mubr.bf16.mxu0 0
  %6325 = vmatmul.mubr.bf16.gmra.mrb[0].mxu0 %v6264
  %v6326 = vpop.f32.mrb[0].mxu0
  %v6327 = vadd.f32 %v6165, %v6326
  %v6328 = vpop.f32.mrb[0].mxu0
  %v6329 = vpop.f32.mrb[0].mxu0
  %v6330 = vadd.f32 %v6166, %v6329
  %v6331 = vpop.f32.mrb[0].mxu0
  %6332 = vmatprep.mubr.bf16.mxu0 0
  %6333 = vmatmul.mubr.bf16.gmra.mrb[0].mxu0 %v6267
  %v6334 = vpop.f32.mrb[0].mxu0
  %v6335 = vadd.f32 %v6167, %v6334
  %v6336 = vpop.f32.mrb[0].mxu0
  %v6337 = vpop.f32.mrb[0].mxu0
  %v6338 = vadd.f32 %v6168, %v6337
  %v6339 = vpop.f32.mrb[0].mxu0
  %6340 = vmatprep.mubr.bf16.mxu0 0
  %6341 = vmatmul.mubr.bf16.gmra.mrb[0].mxu0 %v6270
  %v6342 = vpop.f32.mrb[0].mxu0
  %v6343 = vadd.f32 %v6169, %v6342
  %v6344 = vpop.f32.mrb[0].mxu0
  %v6345 = vpop.f32.mrb[0].mxu0
  %v6346 = vadd.f32 %v6170, %v6345
  %v6347 = vpop.f32.mrb[0].mxu0
  %6348 = vdwg.mxu0
  %v6349 = vsel %vm1807, %v6230, -inf
  %6350 = vmax.xlane.f32.xlu0 %v6349
  %v6351 = vpop.xlane.xlu0 %6350
  %v6352 = vsel %vm1807, %v6233, -inf
  %6353 = vmax.xlane.f32.xlu0 %v6352
  %v6354 = vpop.xlane.xlu0 %6353
  %v6355 = vsel %vm1807, %v6238, -inf
  %6356 = vmax.xlane.f32.xlu0 %v6355
  %v6357 = vpop.xlane.xlu0 %6356
  %v6358 = vsel %vm1807, %v6241, -inf
  %6359 = vmax.xlane.f32.xlu0 %v6358
  %v6360 = vpop.xlane.xlu0 %6359
  %v6361 = vsel %vm1807, %v6246, -inf
  %6362 = vmax.xlane.f32.xlu0 %v6361
  %v6363 = vpop.xlane.xlu0 %6362
  %v6364 = vsel %vm1807, %v6249, -inf
  %6365 = vmax.xlane.f32.xlu0 %v6364
  %v6366 = vpop.xlane.xlu0 %6365
  %v6367 = vsel %vm1807, %v6254, -inf
  %6368 = vmax.xlane.f32.xlu0 %v6367
  %v6369 = vpop.xlane.xlu0 %6368
  %v6370 = vsel %vm1807, %v6257, -inf
  %6371 = vmax.xlane.f32.xlu0 %v6370
  %v6372 = vpop.xlane.xlu0 %6371
  %v6373 = vsel %vm1807, %v6319, -inf
  %6374 = vmax.xlane.f32.xlu0 %v6373
  %v6375 = vpop.xlane.xlu0 %6374
  %v6376 = vsel %vm1807, %v6322, -inf
  %6377 = vmax.xlane.f32.xlu0 %v6376
  %v6378 = vpop.xlane.xlu0 %6377
  %v6379 = vsel %vm1807, %v6327, -inf
  %6380 = vmax.xlane.f32.xlu0 %v6379
  %v6381 = vpop.xlane.xlu0 %6380
  %v6382 = vsel %vm1807, %v6330, -inf
  %6383 = vmax.xlane.f32.xlu0 %v6382
  %v6384 = vpop.xlane.xlu0 %6383
  %v6385 = vsel %vm1807, %v6335, -inf
  %6386 = vmax.xlane.f32.xlu0 %v6385
  %v6387 = vpop.xlane.xlu0 %6386
  %v6388 = vsel %vm1807, %v6338, -inf
  %6389 = vmax.xlane.f32.xlu0 %v6388
  %v6390 = vpop.xlane.xlu0 %6389
  %v6391 = vsel %vm1807, %v6343, -inf
  %6392 = vmax.xlane.f32.xlu0 %v6391
  %v6393 = vpop.xlane.xlu0 %6392
  %v6394 = vsel %vm1807, %v6346, -inf
  %6395 = vmax.xlane.f32.xlu0 %v6394
  %v6396 = vpop.xlane.xlu0 %6395
  %v6397 = vsub.f32 %v6230, %v6351
  %v6398 = vsub.f32 %v6233, %v6354
  %v6399 = vsub.f32 %v6238, %v6357
  %v6400 = vsub.f32 %v6241, %v6360
  %v6401 = vsub.f32 %v6246, %v6363
  %v6402 = vsub.f32 %v6249, %v6366
  %v6403 = vsub.f32 %v6254, %v6369
  %v6404 = vsub.f32 %v6257, %v6372
  %v6405 = vsub.f32 %v6319, %v6375
  %v6406 = vsub.f32 %v6322, %v6378
  %v6407 = vsub.f32 %v6327, %v6381
  %v6408 = vsub.f32 %v6330, %v6384
  %v6409 = vsub.f32 %v6335, %v6387
  %v6410 = vsub.f32 %v6338, %v6390
  %v6411 = vsub.f32 %v6343, %v6393
  %v6412 = vsub.f32 %v6346, %v6396
  %v6413 = vmul.f32 %v6397, 1.442695
  %v6414 = vpow.pop %v6413
  %v6415 = vmul.f32 %v6398, 1.442695
  %v6416 = vpow.pop %v6415
  %v6417 = vmul.f32 %v6399, 1.442695
  %v6418 = vpow.pop %v6417
  %v6419 = vmul.f32 %v6400, 1.442695
  %v6420 = vpow.pop %v6419
  %v6421 = vmul.f32 %v6401, 1.442695
  %v6422 = vpow.pop %v6421
  %v6423 = vmul.f32 %v6402, 1.442695
  %v6424 = vpow.pop %v6423
  %v6425 = vmul.f32 %v6403, 1.442695
  %v6426 = vpow.pop %v6425
  %v6427 = vmul.f32 %v6404, 1.442695
  %v6428 = vpow.pop %v6427
  %v6429 = vmul.f32 %v6405, 1.442695
  %v6430 = vpow.pop %v6429
  %v6431 = vmul.f32 %v6406, 1.442695
  %v6432 = vpow.pop %v6431
  %v6433 = vmul.f32 %v6407, 1.442695
  %v6434 = vpow.pop %v6433
  %v6435 = vmul.f32 %v6408, 1.442695
  %v6436 = vpow.pop %v6435
  %v6437 = vmul.f32 %v6409, 1.442695
  %v6438 = vpow.pop %v6437
  %v6439 = vmul.f32 %v6410, 1.442695
  %v6440 = vpow.pop %v6439
  %v6441 = vmul.f32 %v6411, 1.442695
  %v6442 = vpow.pop %v6441
  %v6443 = vmul.f32 %v6412, 1.442695
  %v6444 = vpow.pop %v6443
  %v6445 = vsel %vm1807, %v6414, 0.0
  %6446 = vadd.xlane.f32.xlu0 %v6445
  %v6447 = vpop.xlane.xlu0 %6446
  %v6448 = vsel %vm1807, %v6416, 0.0
  %6449 = vadd.xlane.f32.xlu0 %v6448
  %v6450 = vpop.xlane.xlu0 %6449
  %v6451 = vsel %vm1807, %v6418, 0.0
  %6452 = vadd.xlane.f32.xlu0 %v6451
  %v6453 = vpop.xlane.xlu0 %6452
  %v6454 = vsel %vm1807, %v6420, 0.0
  %6455 = vadd.xlane.f32.xlu0 %v6454
  %v6456 = vpop.xlane.xlu0 %6455
  %v6457 = vsel %vm1807, %v6422, 0.0
  %6458 = vadd.xlane.f32.xlu0 %v6457
  %v6459 = vpop.xlane.xlu0 %6458
  %v6460 = vsel %vm1807, %v6424, 0.0
  %6461 = vadd.xlane.f32.xlu0 %v6460
  %v6462 = vpop.xlane.xlu0 %6461
  %v6463 = vsel %vm1807, %v6426, 0.0
  %6464 = vadd.xlane.f32.xlu0 %v6463
  %v6465 = vpop.xlane.xlu0 %6464
  %v6466 = vsel %vm1807, %v6428, 0.0
  %6467 = vadd.xlane.f32.xlu0 %v6466
  %v6468 = vpop.xlane.xlu0 %6467
  %v6469 = vsel %vm1807, %v6430, 0.0
  %6470 = vadd.xlane.f32.xlu0 %v6469
  %v6471 = vpop.xlane.xlu0 %6470
  %v6472 = vsel %vm1807, %v6432, 0.0
  %6473 = vadd.xlane.f32.xlu0 %v6472
  %v6474 = vpop.xlane.xlu0 %6473
  %v6475 = vsel %vm1807, %v6434, 0.0
  %6476 = vadd.xlane.f32.xlu0 %v6475
  %v6477 = vpop.xlane.xlu0 %6476
  %v6478 = vsel %vm1807, %v6436, 0.0
  %6479 = vadd.xlane.f32.xlu0 %v6478
  %v6480 = vpop.xlane.xlu0 %6479
  %v6481 = vsel %vm1807, %v6438, 0.0
  %6482 = vadd.xlane.f32.xlu0 %v6481
  %v6483 = vpop.xlane.xlu0 %6482
  %v6484 = vsel %vm1807, %v6440, 0.0
  %6485 = vadd.xlane.f32.xlu0 %v6484
  %v6486 = vpop.xlane.xlu0 %6485
  %v6487 = vsel %vm1807, %v6442, 0.0
  %6488 = vadd.xlane.f32.xlu0 %v6487
  %v6489 = vpop.xlane.xlu0 %6488
  %v6490 = vsel %vm1807, %v6444, 0.0
  %6491 = vadd.xlane.f32.xlu0 %v6490
  %v6492 = vpop.xlane.xlu0 %6491
  %v6493 = vrcp.pop %v6447
  %v6494 = vrcp.pop %v6450
  %v6495 = vrcp.pop %v6453
  %v6496 = vrcp.pop %v6456
  %v6497 = vrcp.pop %v6459
  %v6498 = vrcp.pop %v6462
  %v6499 = vrcp.pop %v6465
  %v6500 = vrcp.pop %v6468
  %v6501 = vrcp.pop %v6471
  %v6502 = vrcp.pop %v6474
  %v6503 = vrcp.pop %v6477
  %v6504 = vrcp.pop %v6480
  %v6505 = vrcp.pop %v6483
  %v6506 = vrcp.pop %v6486
  %v6507 = vrcp.pop %v6489
  %v6508 = vrcp.pop %v6492
  %v6509 = vmul.f32 %v6414, %v6493
  %v6510 = vmul.f32 %v6416, %v6494
  %v6511 = vmul.f32 %v6418, %v6495
  %v6512 = vmul.f32 %v6420, %v6496
  %v6513 = vmul.f32 %v6422, %v6497
  %v6514 = vmul.f32 %v6424, %v6498
  %v6515 = vmul.f32 %v6426, %v6499
  %v6516 = vmul.f32 %v6428, %v6500
  %v6517 = vmul.f32 %v6430, %v6501
  %v6518 = vmul.f32 %v6432, %v6502
  %v6519 = vmul.f32 %v6434, %v6503
  %v6520 = vmul.f32 %v6436, %v6504
  %v6521 = vmul.f32 %v6438, %v6505
  %v6522 = vmul.f32 %v6440, %v6506
  %v6523 = vmul.f32 %v6442, %v6507
  %v6524 = vmul.f32 %v6444, %v6508
  %v6525 = vpack.c.bf16 %v6510, %v6509
  %v6526 = vpack.c.bf16 %v6512, %v6511
  %v6527 = vpack.c.bf16 %v6514, %v6513
  %v6528 = vpack.c.bf16 %v6516, %v6515
  %v6529 = vpack.c.bf16 %v6518, %v6517
  %v6530 = vpack.c.bf16 %v6520, %v6519
  %v6531 = vpack.c.bf16 %v6522, %v6521
  %v6532 = vpack.c.bf16 %v6524, %v6523
  %v6534 = vsel %vm1807, %v6525, 0
  %v6537 = vsel %vm1807, %v6526, 0
  %v6540 = vsel %vm1807, %v6527, 0
  %v6543 = vsel %vm1807, %v6528, 0
  %6545 = vmatprep.subr.bf16.mxu0 0
  %6546 = vmatpush1.bf16.msra.mxu0 %v6154
  %6547 = vmatprep.subr.bf16.mxu0 0
  %6548 = vmatpush1.bf16.msra.mxu0 %v6155
  %6549 = vmatprep.subr.bf16.mxu0 0
  %6550 = vmatpush1.bf16.msra.mxu0 %v6156
  %6551 = vmatprep.subr.bf16.mxu0 0
  %6552 = vmatpush1.bf16.msra.mxu0 %v6157
  %6553 = vmatprep.subr.bf16.mxu0 0
  %6554 = vmatpush1.bf16.msra.mxu0 0
  %6555 = vmatprep.subr.bf16.mxu0 0
  %6556 = vmatpush1.bf16.msra.mxu0 0
  %6557 = vmatprep.subr.bf16.mxu0 0
  %6558 = vmatpush1.bf16.msra.mxu0 0
  %6559 = vmatprep.subr.bf16.mxu0 0
  %6560 = vmatpush1.bf16.msra.mxu0 0
  %6561 = vmatprep.subr.bf16.mxu0 0
  %6562 = vmatpush1.bf16.msra.mxu0 0
  %6563 = vmatprep.subr.bf16.mxu0 0
  %6564 = vmatpush1.bf16.msra.mxu0 0
  %6565 = vmatprep.subr.bf16.mxu0 0
  %6566 = vmatpush1.bf16.msra.mxu0 0
  %6567 = vmatprep.subr.bf16.mxu0 0
  %6568 = vmatpush1.bf16.msra.mxu0 0
  %6569 = vmatprep.subr.bf16.mxu0 0
  %6570 = vmatpush1.bf16.msra.mxu0 0
  %6571 = vmatprep.subr.bf16.mxu0 0
  %6572 = vmatpush1.bf16.msra.mxu0 0
  %6573 = vmatprep.subr.bf16.mxu0 0
  %6574 = vmatpush1.bf16.msra.mxu0 0
  %6575 = vmatprep.subr.bf16.mxu0 0
  %6576 = vmatpush1.bf16.msra.mxu0 0
  %6577 = vmatprep.mubr.bf16.mxu0 0
  %6578 = vmatmul.mubr.bf16.gmra.mrb[0].mxu0 %v6534
  %v6579 = vpop.f32.mrb[0].mxu0
  %v6580 = vadd.f32 0.0, %v6579
  %v6581 = vpop.f32.mrb[0].mxu0
  %v6582 = vpop.f32.mrb[0].mxu0
  %v6583 = vadd.f32 0.0, %v6582
  %v6584 = vpop.f32.mrb[0].mxu0
  %6585 = vmatprep.mubr.bf16.mxu0 0
  %6586 = vmatmul.mubr.bf16.gmra.mrb[0].mxu0 %v6537
  %v6587 = vpop.f32.mrb[0].mxu0
  %v6588 = vadd.f32 0.0, %v6587
  %v6589 = vpop.f32.mrb[0].mxu0
  %v6590 = vpop.f32.mrb[0].mxu0
  %v6591 = vadd.f32 0.0, %v6590
  %v6592 = vpop.f32.mrb[0].mxu0
  %6593 = vmatprep.mubr.bf16.mxu0 0
  %6594 = vmatmul.mubr.bf16.gmra.mrb[0].mxu0 %v6540
  %v6595 = vpop.f32.mrb[0].mxu0
  %v6596 = vadd.f32 0.0, %v6595
  %v6597 = vpop.f32.mrb[0].mxu0
  %v6598 = vpop.f32.mrb[0].mxu0
  %v6599 = vadd.f32 0.0, %v6598
  %v6600 = vpop.f32.mrb[0].mxu0
  %6601 = vmatprep.mubr.bf16.mxu0 0
  %6602 = vmatmul.mubr.bf16.gmra.mrb[0].mxu0 %v6543
  %v6603 = vpop.f32.mrb[0].mxu0
  %v6604 = vadd.f32 0.0, %v6603
  %v6605 = vpop.f32.mrb[0].mxu0
  %v6606 = vpop.f32.mrb[0].mxu0
  %v6607 = vadd.f32 0.0, %v6606
  %v6608 = vpop.f32.mrb[0].mxu0
  %6609 = vdwg.mxu0
  %v6611 = vsel %vm1807, %v6529, 0
  %v6614 = vsel %vm1807, %v6530, 0
  %v6617 = vsel %vm1807, %v6531, 0
  %v6620 = vsel %vm1807, %v6532, 0
  %6622 = vmatprep.subr.bf16.mxu0 0
  %6623 = vmatpush1.bf16.msra.mxu0 %v6158
  %6624 = vmatprep.subr.bf16.mxu0 0
  %6625 = vmatpush1.bf16.msra.mxu0 %v6159
  %6626 = vmatprep.subr.bf16.mxu0 0
  %6627 = vmatpush1.bf16.msra.mxu0 %v6160
  %6628 = vmatprep.subr.bf16.mxu0 0
  %6629 = vmatpush1.bf16.msra.mxu0 %v6161
  %6630 = vmatprep.subr.bf16.mxu0 0
  %6631 = vmatpush1.bf16.msra.mxu0 0
  %6632 = vmatprep.subr.bf16.mxu0 0
  %6633 = vmatpush1.bf16.msra.mxu0 0
  %6634 = vmatprep.subr.bf16.mxu0 0
  %6635 = vmatpush1.bf16.msra.mxu0 0
  %6636 = vmatprep.subr.bf16.mxu0 0
  %6637 = vmatpush1.bf16.msra.mxu0 0
  %6638 = vmatprep.subr.bf16.mxu0 0
  %6639 = vmatpush1.bf16.msra.mxu0 0
  %6640 = vmatprep.subr.bf16.mxu0 0
  %6641 = vmatpush1.bf16.msra.mxu0 0
  %6642 = vmatprep.subr.bf16.mxu0 0
  %6643 = vmatpush1.bf16.msra.mxu0 0
  %6644 = vmatprep.subr.bf16.mxu0 0
  %6645 = vmatpush1.bf16.msra.mxu0 0
  %6646 = vmatprep.subr.bf16.mxu0 0
  %6647 = vmatpush1.bf16.msra.mxu0 0
  %6648 = vmatprep.subr.bf16.mxu0 0
  %6649 = vmatpush1.bf16.msra.mxu0 0
  %6650 = vmatprep.subr.bf16.mxu0 0
  %6651 = vmatpush1.bf16.msra.mxu0 0
  %6652 = vmatprep.subr.bf16.mxu0 0
  %6653 = vmatpush1.bf16.msra.mxu0 0
  %6654 = vmatprep.mubr.bf16.mxu0 0
  %6655 = vmatmul.mubr.bf16.gmra.mrb[0].mxu0 %v6611
  %v6656 = vpop.f32.mrb[0].mxu0
  %v6657 = vadd.f32 0.0, %v6656
  %v6658 = vpop.f32.mrb[0].mxu0
  %v6659 = vpop.f32.mrb[0].mxu0
  %v6660 = vadd.f32 0.0, %v6659
  %v6661 = vpop.f32.mrb[0].mxu0
  %6662 = vmatprep.mubr.bf16.mxu0 0
  %6663 = vmatmul.mubr.bf16.gmra.mrb[0].mxu0 %v6614
  %v6664 = vpop.f32.mrb[0].mxu0
  %v6665 = vadd.f32 0.0, %v6664
  %v6666 = vpop.f32.mrb[0].mxu0
  %v6667 = vpop.f32.mrb[0].mxu0
  %v6668 = vadd.f32 0.0, %v6667
  %v6669 = vpop.f32.mrb[0].mxu0
  %6670 = vmatprep.mubr.bf16.mxu0 0
  %6671 = vmatmul.mubr.bf16.gmra.mrb[0].mxu0 %v6617
  %v6672 = vpop.f32.mrb[0].mxu0
  %v6673 = vadd.f32 0.0, %v6672
  %v6674 = vpop.f32.mrb[0].mxu0
  %v6675 = vpop.f32.mrb[0].mxu0
  %v6676 = vadd.f32 0.0, %v6675
  %v6677 = vpop.f32.mrb[0].mxu0
  %6678 = vmatprep.mubr.bf16.mxu0 0
  %6679 = vmatmul.mubr.bf16.gmra.mrb[0].mxu0 %v6620
  %v6680 = vpop.f32.mrb[0].mxu0
  %v6681 = vadd.f32 0.0, %v6680
  %v6682 = vpop.f32.mrb[0].mxu0
  %v6683 = vpop.f32.mrb[0].mxu0
  %v6684 = vadd.f32 0.0, %v6683
  %v6685 = vpop.f32.mrb[0].mxu0
  %6686 = vdwg.mxu0
  %v6687 = vmax.f32 %v6580, 0.0
  %v6688 = vmax.f32 %v6583, 0.0
  %v6689 = vmax.f32 %v6588, 0.0
  %v6690 = vmax.f32 %v6591, 0.0
  %v6691 = vmax.f32 %v6596, 0.0
  %v6692 = vmax.f32 %v6599, 0.0
  %v6693 = vmax.f32 %v6604, 0.0
  %v6694 = vmax.f32 %v6607, 0.0
  %v6695 = vmax.f32 %v6657, 0.0
  %v6696 = vmax.f32 %v6660, 0.0
  %v6697 = vmax.f32 %v6665, 0.0
  %v6698 = vmax.f32 %v6668, 0.0
  %v6699 = vmax.f32 %v6673, 0.0
  %v6700 = vmax.f32 %v6676, 0.0
  %v6701 = vmax.f32 %v6681, 0.0
  %v6702 = vmax.f32 %v6684, 0.0
  %v6703 = vpack.c.bf16 %v6688, %v6687
  %v6704 = vpack.c.bf16 %v6690, %v6689
  %v6705 = vpack.c.bf16 %v6692, %v6691
  %v6706 = vpack.c.bf16 %v6694, %v6693
  %v6707 = vpack.c.bf16 %v6696, %v6695
  %v6708 = vpack.c.bf16 %v6698, %v6697
  %v6709 = vpack.c.bf16 %v6700, %v6699
  %v6710 = vpack.c.bf16 %v6702, %v6701
  %s6711 = scalar_lea.vmem %s10, 8
  %v6712 = vld [vmem:[%s6711] sm:$0xf]
  %v6714 = vsel %vm74, %v6703, 0
  %v6717 = vsel %vm74, %v6704, 0
  %v6720 = vsel %vm74, %v6705, 0
  %v6723 = vsel %vm74, %v6706, 0
  %v6726 = vsel %vm74, %v6707, 0
  %v6729 = vsel %vm74, %v6708, 0
  %v6732 = vsel %vm74, %v6709, 0
  %v6735 = vsel %vm74, %v6710, 0
  %v6738 = vsel %vm99, %v6712, 0
  %6740 = vmatprep.subr.bf16.mxu0 0
  %6741 = vmatpush1.bf16.msra.mxu0 %v6738
  %6742 = vmatprep.subr.bf16.mxu0 0
  %6743 = vmatpush1.bf16.msra.mxu0 0
  %6744 = vmatprep.subr.bf16.mxu0 0
  %6745 = vmatpush1.bf16.msra.mxu0 0
  %6746 = vmatprep.subr.bf16.mxu0 0
  %6747 = vmatpush1.bf16.msra.mxu0 0
  %6748 = vmatprep.subr.bf16.mxu0 0
  %6749 = vmatpush1.bf16.msra.mxu0 0
  %6750 = vmatprep.subr.bf16.mxu0 0
  %6751 = vmatpush1.bf16.msra.mxu0 0
  %6752 = vmatprep.subr.bf16.mxu0 0
  %6753 = vmatpush1.bf16.msra.mxu0 0
  %6754 = vmatprep.subr.bf16.mxu0 0
  %6755 = vmatpush1.bf16.msra.mxu0 0
  %6756 = vmatprep.subr.bf16.mxu0 0
  %6757 = vmatpush1.bf16.msra.mxu0 0
  %6758 = vmatprep.subr.bf16.mxu0 0
  %6759 = vmatpush1.bf16.msra.mxu0 0
  %6760 = vmatprep.subr.bf16.mxu0 0
  %6761 = vmatpush1.bf16.msra.mxu0 0
  %6762 = vmatprep.subr.bf16.mxu0 0
  %6763 = vmatpush1.bf16.msra.mxu0 0
  %6764 = vmatprep.subr.bf16.mxu0 0
  %6765 = vmatpush1.bf16.msra.mxu0 0
  %6766 = vmatprep.subr.bf16.mxu0 0
  %6767 = vmatpush1.bf16.msra.mxu0 0
  %6768 = vmatprep.subr.bf16.mxu0 0
  %6769 = vmatpush1.bf16.msra.mxu0 0
  %6770 = vmatprep.subr.bf16.mxu0 0
  %6771 = vmatpush1.bf16.msra.mxu0 0
  %6772 = vmatprep.mubr.bf16.mxu0 0
  %6773 = vmatmul.mubr.bf16.gmra.mrb[0].mxu0 %v6714
  %v6774 = vpop.f32.mrb[0].mxu0
  %v6775 = vadd.f32 0.0, %v6774
  %v6776 = vpop.f32.mrb[0].mxu0
  %v6777 = vpop.f32.mrb[0].mxu0
  %v6778 = vadd.f32 0.0, %v6777
  %v6779 = vpop.f32.mrb[0].mxu0
  %6780 = vmatprep.mubr.bf16.mxu0 0
  %6781 = vmatmul.mubr.bf16.gmra.mrb[0].mxu0 %v6717
  %v6782 = vpop.f32.mrb[0].mxu0
  %v6783 = vadd.f32 0.0, %v6782
  %v6784 = vpop.f32.mrb[0].mxu0
  %v6785 = vpop.f32.mrb[0].mxu0
  %v6786 = vadd.f32 0.0, %v6785
  %v6787 = vpop.f32.mrb[0].mxu0
  %6788 = vmatprep.mubr.bf16.mxu0 0
  %6789 = vmatmul.mubr.bf16.gmra.mrb[0].mxu0 %v6720
  %v6790 = vpop.f32.mrb[0].mxu0
  %v6791 = vadd.f32 0.0, %v6790
  %v6792 = vpop.f32.mrb[0].mxu0
  %v6793 = vpop.f32.mrb[0].mxu0
  %v6794 = vadd.f32 0.0, %v6793
  %v6795 = vpop.f32.mrb[0].mxu0
  %6796 = vmatprep.mubr.bf16.mxu0 0
  %6797 = vmatmul.mubr.bf16.gmra.mrb[0].mxu0 %v6723
  %v6798 = vpop.f32.mrb[0].mxu0
  %v6799 = vadd.f32 0.0, %v6798
  %v6800 = vpop.f32.mrb[0].mxu0
  %v6801 = vpop.f32.mrb[0].mxu0
  %v6802 = vadd.f32 0.0, %v6801
  %v6803 = vpop.f32.mrb[0].mxu0
  %6804 = vmatprep.mubr.bf16.mxu0 0
  %6805 = vmatmul.mubr.bf16.gmra.mrb[0].mxu0 %v6726
  %v6806 = vpop.f32.mrb[0].mxu0
  %v6807 = vadd.f32 0.0, %v6806
  %v6808 = vpop.f32.mrb[0].mxu0
  %v6809 = vpop.f32.mrb[0].mxu0
  %v6810 = vadd.f32 0.0, %v6809
  %v6811 = vpop.f32.mrb[0].mxu0
  %6812 = vmatprep.mubr.bf16.mxu0 0
  %6813 = vmatmul.mubr.bf16.gmra.mrb[0].mxu0 %v6729
  %v6814 = vpop.f32.mrb[0].mxu0
  %v6815 = vadd.f32 0.0, %v6814
  %v6816 = vpop.f32.mrb[0].mxu0
  %v6817 = vpop.f32.mrb[0].mxu0
  %v6818 = vadd.f32 0.0, %v6817
  %v6819 = vpop.f32.mrb[0].mxu0
  %6820 = vmatprep.mubr.bf16.mxu0 0
  %6821 = vmatmul.mubr.bf16.gmra.mrb[0].mxu0 %v6732
  %v6822 = vpop.f32.mrb[0].mxu0
  %v6823 = vadd.f32 0.0, %v6822
  %v6824 = vpop.f32.mrb[0].mxu0
  %v6825 = vpop.f32.mrb[0].mxu0
  %v6826 = vadd.f32 0.0, %v6825
  %v6827 = vpop.f32.mrb[0].mxu0
  %6828 = vmatprep.mubr.bf16.mxu0 0
  %6829 = vmatmul.mubr.bf16.gmra.mrb[0].mxu0 %v6735
  %v6830 = vpop.f32.mrb[0].mxu0
  %v6831 = vadd.f32 0.0, %v6830
  %v6832 = vpop.f32.mrb[0].mxu0
  %v6833 = vpop.f32.mrb[0].mxu0
  %v6834 = vadd.f32 0.0, %v6833
  %v6835 = vpop.f32.mrb[0].mxu0
  %6836 = vdwg.mxu0
  %v6837 = vadd.f32 %v4504, %v6775
  %v6838 = vadd.f32 %v4507, %v6778
  %v6839 = vadd.f32 %v4512, %v6783
  %v6840 = vadd.f32 %v4515, %v6786
  %v6841 = vadd.f32 %v4520, %v6791
  %v6842 = vadd.f32 %v4523, %v6794
  %v6843 = vadd.f32 %v4528, %v6799
  %v6844 = vadd.f32 %v4531, %v6802
  %v6845 = vadd.f32 %v4536, %v6807
  %v6846 = vadd.f32 %v4539, %v6810
  %v6847 = vadd.f32 %v4544, %v6815
  %v6848 = vadd.f32 %v4547, %v6818
  %v6849 = vadd.f32 %v4552, %v6823
  %v6850 = vadd.f32 %v4555, %v6826
  %v6851 = vadd.f32 %v4560, %v6831
  %v6852 = vadd.f32 %v4563, %v6834
  %s6853 = scalar_lea.vmem %s0, 192
  %v6854 = vld [vmem:[%s6853] sm:$0xff]
  %v6855 = vld [vmem:[%s6853 + $0x8] sm:$0xff]
  %v6856 = vld [vmem:[%s6853 + $0x10] sm:$0xff]
  %v6857 = vld [vmem:[%s6853 + $0x18] sm:$0xff]
  %v6858 = vld [vmem:[%s6853 + $0x20] sm:$0xff]
  %v6859 = vld [vmem:[%s6853 + $0x28] sm:$0xff]
  %v6860 = vld [vmem:[%s6853 + $0x30] sm:$0xff]
  %v6861 = vld [vmem:[%s6853 + $0x38] sm:$0xff]
  %v6862 = vld [vmem:[%s6853 + $0x100] sm:$0xff]
  %v6863 = vld [vmem:[%s6853 + $0x108] sm:$0xff]
  %v6864 = vld [vmem:[%s6853 + $0x110] sm:$0xff]
  %v6865 = vld [vmem:[%s6853 + $0x118] sm:$0xff]
  %v6866 = vld [vmem:[%s6853 + $0x120] sm:$0xff]
  %v6867 = vld [vmem:[%s6853 + $0x128] sm:$0xff]
  %v6868 = vld [vmem:[%s6853 + $0x130] sm:$0xff]
  %v6869 = vld [vmem:[%s6853 + $0x138] sm:$0xff]
  %v6870 = vadd.f32 %v6580, %v6854
  %v6871 = vadd.f32 %v6583, %v6855
  %v6872 = vadd.f32 %v6588, %v6856
  %v6873 = vadd.f32 %v6591, %v6857
  %v6874 = vadd.f32 %v6596, %v6858
  %v6875 = vadd.f32 %v6599, %v6859
  %v6876 = vadd.f32 %v6604, %v6860
  %v6877 = vadd.f32 %v6607, %v6861
  %v6878 = vadd.f32 %v6657, %v6862
  %v6879 = vadd.f32 %v6660, %v6863
  %v6880 = vadd.f32 %v6665, %v6864
  %v6881 = vadd.f32 %v6668, %v6865
  %v6882 = vadd.f32 %v6673, %v6866
  %v6883 = vadd.f32 %v6676, %v6867
  %v6884 = vadd.f32 %v6681, %v6868
  %v6885 = vadd.f32 %v6684, %v6869
  %v6886 = vpack.c.bf16 %v6871, %v6870
  %v6887 = vpack.c.bf16 %v6873, %v6872
  %v6888 = vpack.c.bf16 %v6875, %v6874
  %v6889 = vpack.c.bf16 %v6877, %v6876
  %v6890 = vpack.c.bf16 %v6879, %v6878
  %v6891 = vpack.c.bf16 %v6881, %v6880
  %v6892 = vpack.c.bf16 %v6883, %v6882
  %v6893 = vpack.c.bf16 %v6885, %v6884
  %s6894 = scalar_lea.vmem %s1, 12
  %v6895 = vld [vmem:[%s6894] sm:$0xf]
  %s6896 = scalar_lea.vmem %s4, 3
  %v6897 = vld [vmem:[%s6896] sm:$0x1]
  %v6899 = vlaneseq
  %v6900 = vshrl.u32 %v6899, 7
  %v6901 = vsub.s32 0, %v6900
  %v6902 = vrot.slane %v6897, %v6901
  %v6905 = vsel %vm74, %v6886, 0
  %v6908 = vsel %vm74, %v6887, 0
  %v6911 = vsel %vm74, %v6888, 0
  %v6914 = vsel %vm74, %v6889, 0
  %v6917 = vsel %vm74, %v6890, 0
  %v6920 = vsel %vm74, %v6891, 0
  %v6923 = vsel %vm74, %v6892, 0
  %v6926 = vsel %vm74, %v6893, 0
  %v6929 = vsel %vm99, %v6895, 0
  %6931 = vmatprep.subr.bf16.mxu0 0
  %6932 = vmatpush1.bf16.msra.mxu0 %v6929
  %6933 = vmatprep.subr.bf16.mxu0 0
  %6934 = vmatpush1.bf16.msra.mxu0 0
  %6935 = vmatprep.subr.bf16.mxu0 0
  %6936 = vmatpush1.bf16.msra.mxu0 0
  %6937 = vmatprep.subr.bf16.mxu0 0
  %6938 = vmatpush1.bf16.msra.mxu0 0
  %6939 = vmatprep.subr.bf16.mxu0 0
  %6940 = vmatpush1.bf16.msra.mxu0 0
  %6941 = vmatprep.subr.bf16.mxu0 0
  %6942 = vmatpush1.bf16.msra.mxu0 0
  %6943 = vmatprep.subr.bf16.mxu0 0
  %6944 = vmatpush1.bf16.msra.mxu0 0
  %6945 = vmatprep.subr.bf16.mxu0 0
  %6946 = vmatpush1.bf16.msra.mxu0 0
  %6947 = vmatprep.subr.bf16.mxu0 0
  %6948 = vmatpush1.bf16.msra.mxu0 0
  %6949 = vmatprep.subr.bf16.mxu0 0
  %6950 = vmatpush1.bf16.msra.mxu0 0
  %6951 = vmatprep.subr.bf16.mxu0 0
  %6952 = vmatpush1.bf16.msra.mxu0 0
  %6953 = vmatprep.subr.bf16.mxu0 0
  %6954 = vmatpush1.bf16.msra.mxu0 0
  %6955 = vmatprep.subr.bf16.mxu0 0
  %6956 = vmatpush1.bf16.msra.mxu0 0
  %6957 = vmatprep.subr.bf16.mxu0 0
  %6958 = vmatpush1.bf16.msra.mxu0 0
  %6959 = vmatprep.subr.bf16.mxu0 0
  %6960 = vmatpush1.bf16.msra.mxu0 0
  %6961 = vmatprep.subr.bf16.mxu0 0
  %6962 = vmatpush1.bf16.msra.mxu0 0
  %6963 = vmatprep.mubr.bf16.mxu0 0
  %6964 = vmatmul.mubr.bf16.gmra.mrb[0].mxu0 %v6905
  %v6965 = vpop.f32.mrb[0].mxu0
  %v6966 = vadd.f32 %v6902, %v6965
  %v6967 = vpop.f32.mrb[0].mxu0
  %v6968 = vpop.f32.mrb[0].mxu0
  %v6969 = vadd.f32 %v6902, %v6968
  %v6970 = vpop.f32.mrb[0].mxu0
  %6971 = vmatprep.mubr.bf16.mxu0 0
  %6972 = vmatmul.mubr.bf16.gmra.mrb[0].mxu0 %v6908
  %v6973 = vpop.f32.mrb[0].mxu0
  %v6974 = vadd.f32 %v6902, %v6973
  %v6975 = vpop.f32.mrb[0].mxu0
  %v6976 = vpop.f32.mrb[0].mxu0
  %v6977 = vadd.f32 %v6902, %v6976
  %v6978 = vpop.f32.mrb[0].mxu0
  %6979 = vmatprep.mubr.bf16.mxu0 0
  %6980 = vmatmul.mubr.bf16.gmra.mrb[0].mxu0 %v6911
  %v6981 = vpop.f32.mrb[0].mxu0
  %v6982 = vadd.f32 %v6902, %v6981
  %v6983 = vpop.f32.mrb[0].mxu0
  %v6984 = vpop.f32.mrb[0].mxu0
  %v6985 = vadd.f32 %v6902, %v6984
  %v6986 = vpop.f32.mrb[0].mxu0
  %6987 = vmatprep.mubr.bf16.mxu0 0
  %6988 = vmatmul.mubr.bf16.gmra.mrb[0].mxu0 %v6914
  %v6989 = vpop.f32.mrb[0].mxu0
  %v6990 = vadd.f32 %v6902, %v6989
  %v6991 = vpop.f32.mrb[0].mxu0
  %v6992 = vpop.f32.mrb[0].mxu0
  %v6993 = vadd.f32 %v6902, %v6992
  %v6994 = vpop.f32.mrb[0].mxu0
  %6995 = vmatprep.mubr.bf16.mxu0 0
  %6996 = vmatmul.mubr.bf16.gmra.mrb[0].mxu0 %v6917
  %v6997 = vpop.f32.mrb[0].mxu0
  %v6998 = vadd.f32 %v6902, %v6997
  %v6999 = vpop.f32.mrb[0].mxu0
  %v7000 = vpop.f32.mrb[0].mxu0
  %v7001 = vadd.f32 %v6902, %v7000
  %v7002 = vpop.f32.mrb[0].mxu0
  %7003 = vmatprep.mubr.bf16.mxu0 0
  %7004 = vmatmul.mubr.bf16.gmra.mrb[0].mxu0 %v6920
  %v7005 = vpop.f32.mrb[0].mxu0
  %v7006 = vadd.f32 %v6902, %v7005
  %v7007 = vpop.f32.mrb[0].mxu0
  %v7008 = vpop.f32.mrb[0].mxu0
  %v7009 = vadd.f32 %v6902, %v7008
  %v7010 = vpop.f32.mrb[0].mxu0
  %7011 = vmatprep.mubr.bf16.mxu0 0
  %7012 = vmatmul.mubr.bf16.gmra.mrb[0].mxu0 %v6923
  %v7013 = vpop.f32.mrb[0].mxu0
  %v7014 = vadd.f32 %v6902, %v7013
  %v7015 = vpop.f32.mrb[0].mxu0
  %v7016 = vpop.f32.mrb[0].mxu0
  %v7017 = vadd.f32 %v6902, %v7016
  %v7018 = vpop.f32.mrb[0].mxu0
  %7019 = vmatprep.mubr.bf16.mxu0 0
  %7020 = vmatmul.mubr.bf16.gmra.mrb[0].mxu0 %v6926
  %v7021 = vpop.f32.mrb[0].mxu0
  %v7022 = vadd.f32 %v6902, %v7021
  %v7023 = vpop.f32.mrb[0].mxu0
  %v7024 = vpop.f32.mrb[0].mxu0
  %v7025 = vadd.f32 %v6902, %v7024
  %v7026 = vpop.f32.mrb[0].mxu0
  %7027 = vdwg.mxu0
  %s7028 = scalar_lea.vmem %s2, 12
  %v7029 = vld [vmem:[%s7028] sm:$0xf]
  %s7030 = scalar_lea.vmem %s5, 3
  %v7031 = vld [vmem:[%s7030] sm:$0x1]
  %v7033 = vlaneseq
  %v7034 = vshrl.u32 %v7033, 7
  %v7035 = vsub.s32 0, %v7034
  %v7036 = vrot.slane %v7031, %v7035
  %v7039 = vsel %vm99, %v7029, 0
  %7041 = vmatprep.subr.bf16.mxu0 0
  %7042 = vmatpush1.bf16.msra.mxu0 %v7039
  %7043 = vmatprep.subr.bf16.mxu0 0
  %7044 = vmatpush1.bf16.msra.mxu0 0
  %7045 = vmatprep.subr.bf16.mxu0 0
  %7046 = vmatpush1.bf16.msra.mxu0 0
  %7047 = vmatprep.subr.bf16.mxu0 0
  %7048 = vmatpush1.bf16.msra.mxu0 0
  %7049 = vmatprep.subr.bf16.mxu0 0
  %7050 = vmatpush1.bf16.msra.mxu0 0
  %7051 = vmatprep.subr.bf16.mxu0 0
  %7052 = vmatpush1.bf16.msra.mxu0 0
  %7053 = vmatprep.subr.bf16.mxu0 0
  %7054 = vmatpush1.bf16.msra.mxu0 0
  %7055 = vmatprep.subr.bf16.mxu0 0
  %7056 = vmatpush1.bf16.msra.mxu0 0
  %7057 = vmatprep.subr.bf16.mxu0 0
  %7058 = vmatpush1.bf16.msra.mxu0 0
  %7059 = vmatprep.subr.bf16.mxu0 0
  %7060 = vmatpush1.bf16.msra.mxu0 0
  %7061 = vmatprep.subr.bf16.mxu0 0
  %7062 = vmatpush1.bf16.msra.mxu0 0
  %7063 = vmatprep.subr.bf16.mxu0 0
  %7064 = vmatpush1.bf16.msra.mxu0 0
  %7065 = vmatprep.subr.bf16.mxu0 0
  %7066 = vmatpush1.bf16.msra.mxu0 0
  %7067 = vmatprep.subr.bf16.mxu0 0
  %7068 = vmatpush1.bf16.msra.mxu0 0
  %7069 = vmatprep.subr.bf16.mxu0 0
  %7070 = vmatpush1.bf16.msra.mxu0 0
  %7071 = vmatprep.subr.bf16.mxu0 0
  %7072 = vmatpush1.bf16.msra.mxu0 0
  %7073 = vmatprep.mubr.bf16.mxu0 0
  %7074 = vmatmul.mubr.bf16.gmra.mrb[0].mxu0 %v6905
  %v7075 = vpop.f32.mrb[0].mxu0
  %v7076 = vadd.f32 %v7036, %v7075
  %v7077 = vpop.f32.mrb[0].mxu0
  %v7078 = vpop.f32.mrb[0].mxu0
  %v7079 = vadd.f32 %v7036, %v7078
  %v7080 = vpop.f32.mrb[0].mxu0
  %7081 = vmatprep.mubr.bf16.mxu0 0
  %7082 = vmatmul.mubr.bf16.gmra.mrb[0].mxu0 %v6908
  %v7083 = vpop.f32.mrb[0].mxu0
  %v7084 = vadd.f32 %v7036, %v7083
  %v7085 = vpop.f32.mrb[0].mxu0
  %v7086 = vpop.f32.mrb[0].mxu0
  %v7087 = vadd.f32 %v7036, %v7086
  %v7088 = vpop.f32.mrb[0].mxu0
  %7089 = vmatprep.mubr.bf16.mxu0 0
  %7090 = vmatmul.mubr.bf16.gmra.mrb[0].mxu0 %v6911
  %v7091 = vpop.f32.mrb[0].mxu0
  %v7092 = vadd.f32 %v7036, %v7091
  %v7093 = vpop.f32.mrb[0].mxu0
  %v7094 = vpop.f32.mrb[0].mxu0
  %v7095 = vadd.f32 %v7036, %v7094
  %v7096 = vpop.f32.mrb[0].mxu0
  %7097 = vmatprep.mubr.bf16.mxu0 0
  %7098 = vmatmul.mubr.bf16.gmra.mrb[0].mxu0 %v6914
  %v7099 = vpop.f32.mrb[0].mxu0
  %v7100 = vadd.f32 %v7036, %v7099
  %v7101 = vpop.f32.mrb[0].mxu0
  %v7102 = vpop.f32.mrb[0].mxu0
  %v7103 = vadd.f32 %v7036, %v7102
  %v7104 = vpop.f32.mrb[0].mxu0
  %7105 = vmatprep.mubr.bf16.mxu0 0
  %7106 = vmatmul.mubr.bf16.gmra.mrb[0].mxu0 %v6917
  %v7107 = vpop.f32.mrb[0].mxu0
  %v7108 = vadd.f32 %v7036, %v7107
  %v7109 = vpop.f32.mrb[0].mxu0
  %v7110 = vpop.f32.mrb[0].mxu0
  %v7111 = vadd.f32 %v7036, %v7110
  %v7112 = vpop.f32.mrb[0].mxu0
  %7113 = vmatprep.mubr.bf16.mxu0 0
  %7114 = vmatmul.mubr.bf16.gmra.mrb[0].mxu0 %v6920
  %v7115 = vpop.f32.mrb[0].mxu0
  %v7116 = vadd.f32 %v7036, %v7115
  %v7117 = vpop.f32.mrb[0].mxu0
  %v7118 = vpop.f32.mrb[0].mxu0
  %v7119 = vadd.f32 %v7036, %v7118
  %v7120 = vpop.f32.mrb[0].mxu0
  %7121 = vmatprep.mubr.bf16.mxu0 0
  %7122 = vmatmul.mubr.bf16.gmra.mrb[0].mxu0 %v6923
  %v7123 = vpop.f32.mrb[0].mxu0
  %v7124 = vadd.f32 %v7036, %v7123
  %v7125 = vpop.f32.mrb[0].mxu0
  %v7126 = vpop.f32.mrb[0].mxu0
  %v7127 = vadd.f32 %v7036, %v7126
  %v7128 = vpop.f32.mrb[0].mxu0
  %7129 = vmatprep.mubr.bf16.mxu0 0
  %7130 = vmatmul.mubr.bf16.gmra.mrb[0].mxu0 %v6926
  %v7131 = vpop.f32.mrb[0].mxu0
  %v7132 = vadd.f32 %v7036, %v7131
  %v7133 = vpop.f32.mrb[0].mxu0
  %v7134 = vpop.f32.mrb[0].mxu0
  %v7135 = vadd.f32 %v7036, %v7134
  %v7136 = vpop.f32.mrb[0].mxu0
  %7137 = vdwg.mxu0
  %s7138 = scalar_lea.vmem %s3, 12
  %v7139 = vld [vmem:[%s7138] sm:$0xf]
  %s7140 = scalar_lea.vmem %s6, 3
  %v7141 = vld [vmem:[%s7140] sm:$0x1]
  %v7143 = vlaneseq
  %v7144 = vshrl.u32 %v7143, 7
  %v7145 = vsub.s32 0, %v7144
  %v7146 = vrot.slane %v7141, %v7145
  %v7149 = vsel %vm99, %v7139, 0
  %7151 = vmatprep.subr.bf16.mxu0 0
  %7152 = vmatpush1.bf16.msra.mxu0 %v7149
  %7153 = vmatprep.subr.bf16.mxu0 0
  %7154 = vmatpush1.bf16.msra.mxu0 0
  %7155 = vmatprep.subr.bf16.mxu0 0
  %7156 = vmatpush1.bf16.msra.mxu0 0
  %7157 = vmatprep.subr.bf16.mxu0 0
  %7158 = vmatpush1.bf16.msra.mxu0 0
  %7159 = vmatprep.subr.bf16.mxu0 0
  %7160 = vmatpush1.bf16.msra.mxu0 0
  %7161 = vmatprep.subr.bf16.mxu0 0
  %7162 = vmatpush1.bf16.msra.mxu0 0
  %7163 = vmatprep.subr.bf16.mxu0 0
  %7164 = vmatpush1.bf16.msra.mxu0 0
  %7165 = vmatprep.subr.bf16.mxu0 0
  %7166 = vmatpush1.bf16.msra.mxu0 0
  %7167 = vmatprep.subr.bf16.mxu0 0
  %7168 = vmatpush1.bf16.msra.mxu0 0
  %7169 = vmatprep.subr.bf16.mxu0 0
  %7170 = vmatpush1.bf16.msra.mxu0 0
  %7171 = vmatprep.subr.bf16.mxu0 0
  %7172 = vmatpush1.bf16.msra.mxu0 0
  %7173 = vmatprep.subr.bf16.mxu0 0
  %7174 = vmatpush1.bf16.msra.mxu0 0
  %7175 = vmatprep.subr.bf16.mxu0 0
  %7176 = vmatpush1.bf16.msra.mxu0 0
  %7177 = vmatprep.subr.bf16.mxu0 0
  %7178 = vmatpush1.bf16.msra.mxu0 0
  %7179 = vmatprep.subr.bf16.mxu0 0
  %7180 = vmatpush1.bf16.msra.mxu0 0
  %7181 = vmatprep.subr.bf16.mxu0 0
  %7182 = vmatpush1.bf16.msra.mxu0 0
  %7183 = vmatprep.mubr.bf16.mxu0 0
  %7184 = vmatmul.mubr.bf16.gmra.mrb[0].mxu0 %v6905
  %v7185 = vpop.f32.mrb[0].mxu0
  %v7186 = vadd.f32 %v7146, %v7185
  %v7187 = vpop.f32.mrb[0].mxu0
  %v7188 = vpop.f32.mrb[0].mxu0
  %v7189 = vadd.f32 %v7146, %v7188
  %v7190 = vpop.f32.mrb[0].mxu0
  %7191 = vmatprep.mubr.bf16.mxu0 0
  %7192 = vmatmul.mubr.bf16.gmra.mrb[0].mxu0 %v6908
  %v7193 = vpop.f32.mrb[0].mxu0
  %v7194 = vadd.f32 %v7146, %v7193
  %v7195 = vpop.f32.mrb[0].mxu0
  %v7196 = vpop.f32.mrb[0].mxu0
  %v7197 = vadd.f32 %v7146, %v7196
  %v7198 = vpop.f32.mrb[0].mxu0
  %7199 = vmatprep.mubr.bf16.mxu0 0
  %7200 = vmatmul.mubr.bf16.gmra.mrb[0].mxu0 %v6911
  %v7201 = vpop.f32.mrb[0].mxu0
  %v7202 = vadd.f32 %v7146, %v7201
  %v7203 = vpop.f32.mrb[0].mxu0
  %v7204 = vpop.f32.mrb[0].mxu0
  %v7205 = vadd.f32 %v7146, %v7204
  %v7206 = vpop.f32.mrb[0].mxu0
  %7207 = vmatprep.mubr.bf16.mxu0 0
  %7208 = vmatmul.mubr.bf16.gmra.mrb[0].mxu0 %v6914
  %v7209 = vpop.f32.mrb[0].mxu0
  %v7210 = vadd.f32 %v7146, %v7209
  %v7211 = vpop.f32.mrb[0].mxu0
  %v7212 = vpop.f32.mrb[0].mxu0
  %v7213 = vadd.f32 %v7146, %v7212
  %v7214 = vpop.f32.mrb[0].mxu0
  %7215 = vmatprep.mubr.bf16.mxu0 0
  %7216 = vmatmul.mubr.bf16.gmra.mrb[0].mxu0 %v6917
  %v7217 = vpop.f32.mrb[0].mxu0
  %v7218 = vadd.f32 %v7146, %v7217
  %v7219 = vpop.f32.mrb[0].mxu0
  %v7220 = vpop.f32.mrb[0].mxu0
  %v7221 = vadd.f32 %v7146, %v7220
  %v7222 = vpop.f32.mrb[0].mxu0
  %7223 = vmatprep.mubr.bf16.mxu0 0
  %7224 = vmatmul.mubr.bf16.gmra.mrb[0].mxu0 %v6920
  %v7225 = vpop.f32.mrb[0].mxu0
  %v7226 = vadd.f32 %v7146, %v7225
  %v7227 = vpop.f32.mrb[0].mxu0
  %v7228 = vpop.f32.mrb[0].mxu0
  %v7229 = vadd.f32 %v7146, %v7228
  %v7230 = vpop.f32.mrb[0].mxu0
  %7231 = vmatprep.mubr.bf16.mxu0 0
  %7232 = vmatmul.mubr.bf16.gmra.mrb[0].mxu0 %v6923
  %v7233 = vpop.f32.mrb[0].mxu0
  %v7234 = vadd.f32 %v7146, %v7233
  %v7235 = vpop.f32.mrb[0].mxu0
  %v7236 = vpop.f32.mrb[0].mxu0
  %v7237 = vadd.f32 %v7146, %v7236
  %v7238 = vpop.f32.mrb[0].mxu0
  %7239 = vmatprep.mubr.bf16.mxu0 0
  %7240 = vmatmul.mubr.bf16.gmra.mrb[0].mxu0 %v6926
  %v7241 = vpop.f32.mrb[0].mxu0
  %v7242 = vadd.f32 %v7146, %v7241
  %v7243 = vpop.f32.mrb[0].mxu0
  %v7244 = vpop.f32.mrb[0].mxu0
  %v7245 = vadd.f32 %v7146, %v7244
  %v7246 = vpop.f32.mrb[0].mxu0
  %7247 = vdwg.mxu0
  %v7248 = vrot.slane %v6966, 6
  %v7249 = vrot.slane %v6969, 6
  %v7250 = vrot.slane %v6974, 6
  %v7251 = vrot.slane %v6977, 6
  %v7252 = vrot.slane %v6982, 6
  %v7253 = vrot.slane %v6985, 6
  %v7254 = vrot.slane %v6990, 6
  %v7255 = vrot.slane %v6993, 6
  %v7256 = vrot.slane %v6998, 6
  %v7257 = vrot.slane %v7001, 6
  %v7258 = vrot.slane %v7006, 6
  %v7259 = vrot.slane %v7009, 6
  %v7260 = vrot.slane %v7014, 6
  %v7261 = vrot.slane %v7017, 6
  %v7262 = vrot.slane %v7022, 6
  %v7263 = vrot.slane %v7025, 6
  %v7264 = vsel %vm434, %v7262, %v7263
  %v7265 = vsel %vm434, %v7261, %v7262
  %v7266 = vsel %vm434, %v7260, %v7261
  %v7267 = vsel %vm434, %v7259, %v7260
  %v7268 = vsel %vm434, %v7258, %v7259
  %v7269 = vsel %vm434, %v7257, %v7258
  %v7270 = vsel %vm434, %v7256, %v7257
  %v7271 = vsel %vm434, %v7255, %v7256
  %v7272 = vsel %vm434, %v7254, %v7255
  %v7273 = vsel %vm434, %v7253, %v7254
  %v7274 = vsel %vm434, %v7252, %v7253
  %v7275 = vsel %vm434, %v7251, %v7252
  %v7276 = vsel %vm434, %v7250, %v7251
  %v7277 = vsel %vm434, %v7249, %v7250
  %v7278 = vsel %vm434, %v7248, %v7249
  %v7279 = vsel %vm434, %v7263, %v7248
  %s7280 = scalar_lea.vmem %s7, 4800
  %v7281 = vld [vmem:[%s7280] sm:$0xff]
  %v7282 = vld [vmem:[%s7280 + $0x8] sm:$0xff]
  %v7283 = vld [vmem:[%s7280 + $0x10] sm:$0xff]
  %v7284 = vld [vmem:[%s7280 + $0x18] sm:$0xff]
  %v7285 = vld [vmem:[%s7280 + $0x20] sm:$0xff]
  %v7286 = vld [vmem:[%s7280 + $0x28] sm:$0xff]
  %v7287 = vld [vmem:[%s7280 + $0x30] sm:$0xff]
  %v7288 = vld [vmem:[%s7280 + $0x38] sm:$0xff]
  %v7289 = vmul.f32 %v7265, %v7281
  %v7290 = vmul.f32 %v7264, %v7282
  %v7291 = vmul.f32 %v7279, %v7283
  %v7292 = vmul.f32 %v7278, %v7284
  %v7293 = vmul.f32 %v7277, %v7285
  %v7294 = vmul.f32 %v7276, %v7286
  %v7295 = vmul.f32 %v7275, %v7287
  %v7296 = vmul.f32 %v7274, %v7288
  %v7297 = vmul.f32 %v7273, %v7281
  %v7298 = vmul.f32 %v7272, %v7282
  %v7299 = vmul.f32 %v7271, %v7283
  %v7300 = vmul.f32 %v7270, %v7284
  %v7301 = vmul.f32 %v7269, %v7285
  %v7302 = vmul.f32 %v7268, %v7286
  %v7303 = vmul.f32 %v7267, %v7287
  %v7304 = vmul.f32 %v7266, %v7288
  %v7305 = vadd.f32 %v7289, 0.0
  %v7306 = vadd.f32 %v7290, 0.0
  %v7307 = vadd.f32 %v7291, 0.0
  %v7308 = vadd.f32 %v7292, 0.0
  %v7309 = vadd.f32 %v7293, 0.0
  %v7310 = vadd.f32 %v7294, 0.0
  %v7311 = vadd.f32 %v7295, 0.0
  %v7312 = vadd.f32 %v7296, 0.0
  %v7313 = vadd.f32 %v7297, 0.0
  %v7314 = vadd.f32 %v7298, 0.0
  %v7315 = vadd.f32 %v7299, 0.0
  %v7316 = vadd.f32 %v7300, 0.0
  %v7317 = vadd.f32 %v7301, 0.0
  %v7318 = vadd.f32 %v7302, 0.0
  %v7319 = vadd.f32 %v7303, 0.0
  %v7320 = vadd.f32 %v7304, 0.0
  %v7321 = vrot.slane %v6966, 7
  %v7322 = vrot.slane %v6969, 7
  %v7323 = vrot.slane %v6974, 7
  %v7324 = vrot.slane %v6977, 7
  %v7325 = vrot.slane %v6982, 7
  %v7326 = vrot.slane %v6985, 7
  %v7327 = vrot.slane %v6990, 7
  %v7328 = vrot.slane %v6993, 7
  %v7329 = vrot.slane %v6998, 7
  %v7330 = vrot.slane %v7001, 7
  %v7331 = vrot.slane %v7006, 7
  %v7332 = vrot.slane %v7009, 7
  %v7333 = vrot.slane %v7014, 7
  %v7334 = vrot.slane %v7017, 7
  %v7335 = vrot.slane %v7022, 7
  %v7336 = vrot.slane %v7025, 7
  %v7337 = vsel %vm507, %v7335, %v7336
  %v7338 = vsel %vm507, %v7334, %v7335
  %v7339 = vsel %vm507, %v7333, %v7334
  %v7340 = vsel %vm507, %v7332, %v7333
  %v7341 = vsel %vm507, %v7331, %v7332
  %v7342 = vsel %vm507, %v7330, %v7331
  %v7343 = vsel %vm507, %v7329, %v7330
  %v7344 = vsel %vm507, %v7328, %v7329
  %v7345 = vsel %vm507, %v7327, %v7328
  %v7346 = vsel %vm507, %v7326, %v7327
  %v7347 = vsel %vm507, %v7325, %v7326
  %v7348 = vsel %vm507, %v7324, %v7325
  %v7349 = vsel %vm507, %v7323, %v7324
  %v7350 = vsel %vm507, %v7322, %v7323
  %v7351 = vsel %vm507, %v7321, %v7322
  %v7352 = vsel %vm507, %v7336, %v7321
  %s7353 = scalar_lea.vmem %s7, 4864
  %v7354 = vld [vmem:[%s7353] sm:$0xff]
  %v7355 = vld [vmem:[%s7353 + $0x8] sm:$0xff]
  %v7356 = vld [vmem:[%s7353 + $0x10] sm:$0xff]
  %v7357 = vld [vmem:[%s7353 + $0x18] sm:$0xff]
  %v7358 = vld [vmem:[%s7353 + $0x20] sm:$0xff]
  %v7359 = vld [vmem:[%s7353 + $0x28] sm:$0xff]
  %v7360 = vld [vmem:[%s7353 + $0x30] sm:$0xff]
  %v7361 = vld [vmem:[%s7353 + $0x38] sm:$0xff]
  %v7362 = vmul.f32 %v7338, %v7354
  %v7363 = vmul.f32 %v7337, %v7355
  %v7364 = vmul.f32 %v7352, %v7356
  %v7365 = vmul.f32 %v7351, %v7357
  %v7366 = vmul.f32 %v7350, %v7358
  %v7367 = vmul.f32 %v7349, %v7359
  %v7368 = vmul.f32 %v7348, %v7360
  %v7369 = vmul.f32 %v7347, %v7361
  %v7370 = vmul.f32 %v7346, %v7354
  %v7371 = vmul.f32 %v7345, %v7355
  %v7372 = vmul.f32 %v7344, %v7356
  %v7373 = vmul.f32 %v7343, %v7357
  %v7374 = vmul.f32 %v7342, %v7358
  %v7375 = vmul.f32 %v7341, %v7359
  %v7376 = vmul.f32 %v7340, %v7360
  %v7377 = vmul.f32 %v7339, %v7361
  %v7378 = vadd.f32 %v7305, %v7362
  %v7379 = vadd.f32 %v7306, %v7363
  %v7380 = vadd.f32 %v7307, %v7364
  %v7381 = vadd.f32 %v7308, %v7365
  %v7382 = vadd.f32 %v7309, %v7366
  %v7383 = vadd.f32 %v7310, %v7367
  %v7384 = vadd.f32 %v7311, %v7368
  %v7385 = vadd.f32 %v7312, %v7369
  %v7386 = vadd.f32 %v7313, %v7370
  %v7387 = vadd.f32 %v7314, %v7371
  %v7388 = vadd.f32 %v7315, %v7372
  %v7389 = vadd.f32 %v7316, %v7373
  %v7390 = vadd.f32 %v7317, %v7374
  %v7391 = vadd.f32 %v7318, %v7375
  %v7392 = vadd.f32 %v7319, %v7376
  %v7393 = vadd.f32 %v7320, %v7377
  %s7394 = scalar_lea.vmem %s7, 4928
  %v7395 = vld [vmem:[%s7394] sm:$0xff]
  %v7396 = vld [vmem:[%s7394 + $0x8] sm:$0xff]
  %v7397 = vld [vmem:[%s7394 + $0x10] sm:$0xff]
  %v7398 = vld [vmem:[%s7394 + $0x18] sm:$0xff]
  %v7399 = vld [vmem:[%s7394 + $0x20] sm:$0xff]
  %v7400 = vld [vmem:[%s7394 + $0x28] sm:$0xff]
  %v7401 = vld [vmem:[%s7394 + $0x30] sm:$0xff]
  %v7402 = vld [vmem:[%s7394 + $0x38] sm:$0xff]
  %v7403 = vmul.f32 %v7022, %v7395
  %v7404 = vmul.f32 %v7025, %v7396
  %v7405 = vmul.f32 %v6966, %v7397
  %v7406 = vmul.f32 %v6969, %v7398
  %v7407 = vmul.f32 %v6974, %v7399
  %v7408 = vmul.f32 %v6977, %v7400
  %v7409 = vmul.f32 %v6982, %v7401
  %v7410 = vmul.f32 %v6985, %v7402
  %v7411 = vmul.f32 %v6990, %v7395
  %v7412 = vmul.f32 %v6993, %v7396
  %v7413 = vmul.f32 %v6998, %v7397
  %v7414 = vmul.f32 %v7001, %v7398
  %v7415 = vmul.f32 %v7006, %v7399
  %v7416 = vmul.f32 %v7009, %v7400
  %v7417 = vmul.f32 %v7014, %v7401
  %v7418 = vmul.f32 %v7017, %v7402
  %v7419 = vadd.f32 %v7378, %v7403
  %v7420 = vadd.f32 %v7379, %v7404
  %v7421 = vadd.f32 %v7380, %v7405
  %v7422 = vadd.f32 %v7381, %v7406
  %v7423 = vadd.f32 %v7382, %v7407
  %v7424 = vadd.f32 %v7383, %v7408
  %v7425 = vadd.f32 %v7384, %v7409
  %v7426 = vadd.f32 %v7385, %v7410
  %v7427 = vadd.f32 %v7386, %v7411
  %v7428 = vadd.f32 %v7387, %v7412
  %v7429 = vadd.f32 %v7388, %v7413
  %v7430 = vadd.f32 %v7389, %v7414
  %v7431 = vadd.f32 %v7390, %v7415
  %v7432 = vadd.f32 %v7391, %v7416
  %v7433 = vadd.f32 %v7392, %v7417
  %v7434 = vadd.f32 %v7393, %v7418
  %v7435 = vrot.slane %v6966, 1
  %v7436 = vrot.slane %v6969, 1
  %v7437 = vrot.slane %v6974, 1
  %v7438 = vrot.slane %v6977, 1
  %v7439 = vrot.slane %v6982, 1
  %v7440 = vrot.slane %v6985, 1
  %v7441 = vrot.slane %v6990, 1
  %v7442 = vrot.slane %v6993, 1
  %v7443 = vrot.slane %v6998, 1
  %v7444 = vrot.slane %v7001, 1
  %v7445 = vrot.slane %v7006, 1
  %v7446 = vrot.slane %v7009, 1
  %v7447 = vrot.slane %v7014, 1
  %v7448 = vrot.slane %v7017, 1
  %v7449 = vrot.slane %v7022, 1
  %v7450 = vrot.slane %v7025, 1
  %v7451 = vsel %vm622, %v7449, %v7450
  %v7452 = vsel %vm622, %v7448, %v7449
  %v7453 = vsel %vm622, %v7447, %v7448
  %v7454 = vsel %vm622, %v7446, %v7447
  %v7455 = vsel %vm622, %v7445, %v7446
  %v7456 = vsel %vm622, %v7444, %v7445
  %v7457 = vsel %vm622, %v7443, %v7444
  %v7458 = vsel %vm622, %v7442, %v7443
  %v7459 = vsel %vm622, %v7441, %v7442
  %v7460 = vsel %vm622, %v7440, %v7441
  %v7461 = vsel %vm622, %v7439, %v7440
  %v7462 = vsel %vm622, %v7438, %v7439
  %v7463 = vsel %vm622, %v7437, %v7438
  %v7464 = vsel %vm622, %v7436, %v7437
  %v7465 = vsel %vm622, %v7435, %v7436
  %v7466 = vsel %vm622, %v7450, %v7435
  %s7467 = scalar_lea.vmem %s7, 4992
  %v7468 = vld [vmem:[%s7467] sm:$0xff]
  %v7469 = vld [vmem:[%s7467 + $0x8] sm:$0xff]
  %v7470 = vld [vmem:[%s7467 + $0x10] sm:$0xff]
  %v7471 = vld [vmem:[%s7467 + $0x18] sm:$0xff]
  %v7472 = vld [vmem:[%s7467 + $0x20] sm:$0xff]
  %v7473 = vld [vmem:[%s7467 + $0x28] sm:$0xff]
  %v7474 = vld [vmem:[%s7467 + $0x30] sm:$0xff]
  %v7475 = vld [vmem:[%s7467 + $0x38] sm:$0xff]
  %v7476 = vmul.f32 %v7451, %v7468
  %v7477 = vmul.f32 %v7466, %v7469
  %v7478 = vmul.f32 %v7465, %v7470
  %v7479 = vmul.f32 %v7464, %v7471
  %v7480 = vmul.f32 %v7463, %v7472
  %v7481 = vmul.f32 %v7462, %v7473
  %v7482 = vmul.f32 %v7461, %v7474
  %v7483 = vmul.f32 %v7460, %v7475
  %v7484 = vmul.f32 %v7459, %v7468
  %v7485 = vmul.f32 %v7458, %v7469
  %v7486 = vmul.f32 %v7457, %v7470
  %v7487 = vmul.f32 %v7456, %v7471
  %v7488 = vmul.f32 %v7455, %v7472
  %v7489 = vmul.f32 %v7454, %v7473
  %v7490 = vmul.f32 %v7453, %v7474
  %v7491 = vmul.f32 %v7452, %v7475
  %v7492 = vadd.f32 %v7419, %v7476
  %v7493 = vadd.f32 %v7420, %v7477
  %v7494 = vadd.f32 %v7421, %v7478
  %v7495 = vadd.f32 %v7422, %v7479
  %v7496 = vadd.f32 %v7423, %v7480
  %v7497 = vadd.f32 %v7424, %v7481
  %v7498 = vadd.f32 %v7425, %v7482
  %v7499 = vadd.f32 %v7426, %v7483
  %v7500 = vadd.f32 %v7427, %v7484
  %v7501 = vadd.f32 %v7428, %v7485
  %v7502 = vadd.f32 %v7429, %v7486
  %v7503 = vadd.f32 %v7430, %v7487
  %v7504 = vadd.f32 %v7431, %v7488
  %v7505 = vadd.f32 %v7432, %v7489
  %v7506 = vadd.f32 %v7433, %v7490
  %v7507 = vadd.f32 %v7434, %v7491
  %v7508 = vrot.slane %v6966, 2
  %v7509 = vrot.slane %v6969, 2
  %v7510 = vrot.slane %v6974, 2
  %v7511 = vrot.slane %v6977, 2
  %v7512 = vrot.slane %v6982, 2
  %v7513 = vrot.slane %v6985, 2
  %v7514 = vrot.slane %v6990, 2
  %v7515 = vrot.slane %v6993, 2
  %v7516 = vrot.slane %v6998, 2
  %v7517 = vrot.slane %v7001, 2
  %v7518 = vrot.slane %v7006, 2
  %v7519 = vrot.slane %v7009, 2
  %v7520 = vrot.slane %v7014, 2
  %v7521 = vrot.slane %v7017, 2
  %v7522 = vrot.slane %v7022, 2
  %v7523 = vrot.slane %v7025, 2
  %v7524 = vsel %vm696, %v7522, %v7523
  %v7525 = vsel %vm696, %v7521, %v7522
  %v7526 = vsel %vm696, %v7520, %v7521
  %v7527 = vsel %vm696, %v7519, %v7520
  %v7528 = vsel %vm696, %v7518, %v7519
  %v7529 = vsel %vm696, %v7517, %v7518
  %v7530 = vsel %vm696, %v7516, %v7517
  %v7531 = vsel %vm696, %v7515, %v7516
  %v7532 = vsel %vm696, %v7514, %v7515
  %v7533 = vsel %vm696, %v7513, %v7514
  %v7534 = vsel %vm696, %v7512, %v7513
  %v7535 = vsel %vm696, %v7511, %v7512
  %v7536 = vsel %vm696, %v7510, %v7511
  %v7537 = vsel %vm696, %v7509, %v7510
  %v7538 = vsel %vm696, %v7508, %v7509
  %v7539 = vsel %vm696, %v7523, %v7508
  %s7540 = scalar_lea.vmem %s7, 5056
  %v7541 = vld [vmem:[%s7540] sm:$0xff]
  %v7542 = vld [vmem:[%s7540 + $0x8] sm:$0xff]
  %v7543 = vld [vmem:[%s7540 + $0x10] sm:$0xff]
  %v7544 = vld [vmem:[%s7540 + $0x18] sm:$0xff]
  %v7545 = vld [vmem:[%s7540 + $0x20] sm:$0xff]
  %v7546 = vld [vmem:[%s7540 + $0x28] sm:$0xff]
  %v7547 = vld [vmem:[%s7540 + $0x30] sm:$0xff]
  %v7548 = vld [vmem:[%s7540 + $0x38] sm:$0xff]
  %v7549 = vmul.f32 %v7524, %v7541
  %v7550 = vmul.f32 %v7539, %v7542
  %v7551 = vmul.f32 %v7538, %v7543
  %v7552 = vmul.f32 %v7537, %v7544
  %v7553 = vmul.f32 %v7536, %v7545
  %v7554 = vmul.f32 %v7535, %v7546
  %v7555 = vmul.f32 %v7534, %v7547
  %v7556 = vmul.f32 %v7533, %v7548
  %v7557 = vmul.f32 %v7532, %v7541
  %v7558 = vmul.f32 %v7531, %v7542
  %v7559 = vmul.f32 %v7530, %v7543
  %v7560 = vmul.f32 %v7529, %v7544
  %v7561 = vmul.f32 %v7528, %v7545
  %v7562 = vmul.f32 %v7527, %v7546
  %v7563 = vmul.f32 %v7526, %v7547
  %v7564 = vmul.f32 %v7525, %v7548
  %v7565 = vadd.f32 %v7492, %v7549
  %v7566 = vadd.f32 %v7493, %v7550
  %v7567 = vadd.f32 %v7494, %v7551
  %v7568 = vadd.f32 %v7495, %v7552
  %v7569 = vadd.f32 %v7496, %v7553
  %v7570 = vadd.f32 %v7497, %v7554
  %v7571 = vadd.f32 %v7498, %v7555
  %v7572 = vadd.f32 %v7499, %v7556
  %v7573 = vadd.f32 %v7500, %v7557
  %v7574 = vadd.f32 %v7501, %v7558
  %v7575 = vadd.f32 %v7502, %v7559
  %v7576 = vadd.f32 %v7503, %v7560
  %v7577 = vadd.f32 %v7504, %v7561
  %v7578 = vadd.f32 %v7505, %v7562
  %v7579 = vadd.f32 %v7506, %v7563
  %v7580 = vadd.f32 %v7507, %v7564
  %s7581 = scalar_lea.vmem %s7, 5120
  %v7582 = vld [vmem:[%s7581] sm:$0xff]
  %v7583 = vld [vmem:[%s7581 + $0x8] sm:$0xff]
  %v7584 = vld [vmem:[%s7581 + $0x10] sm:$0xff]
  %v7585 = vld [vmem:[%s7581 + $0x18] sm:$0xff]
  %v7586 = vld [vmem:[%s7581 + $0x20] sm:$0xff]
  %v7587 = vld [vmem:[%s7581 + $0x28] sm:$0xff]
  %v7588 = vld [vmem:[%s7581 + $0x30] sm:$0xff]
  %v7589 = vld [vmem:[%s7581 + $0x38] sm:$0xff]
  %v7590 = vmul.f32 %v7264, %v7582
  %v7591 = vmul.f32 %v7279, %v7583
  %v7592 = vmul.f32 %v7278, %v7584
  %v7593 = vmul.f32 %v7277, %v7585
  %v7594 = vmul.f32 %v7276, %v7586
  %v7595 = vmul.f32 %v7275, %v7587
  %v7596 = vmul.f32 %v7274, %v7588
  %v7597 = vmul.f32 %v7273, %v7589
  %v7598 = vmul.f32 %v7272, %v7582
  %v7599 = vmul.f32 %v7271, %v7583
  %v7600 = vmul.f32 %v7270, %v7584
  %v7601 = vmul.f32 %v7269, %v7585
  %v7602 = vmul.f32 %v7268, %v7586
  %v7603 = vmul.f32 %v7267, %v7587
  %v7604 = vmul.f32 %v7266, %v7588
  %v7605 = vmul.f32 %v7265, %v7589
  %v7606 = vadd.f32 %v7565, %v7590
  %v7607 = vadd.f32 %v7566, %v7591
  %v7608 = vadd.f32 %v7567, %v7592
  %v7609 = vadd.f32 %v7568, %v7593
  %v7610 = vadd.f32 %v7569, %v7594
  %v7611 = vadd.f32 %v7570, %v7595
  %v7612 = vadd.f32 %v7571, %v7596
  %v7613 = vadd.f32 %v7572, %v7597
  %v7614 = vadd.f32 %v7573, %v7598
  %v7615 = vadd.f32 %v7574, %v7599
  %v7616 = vadd.f32 %v7575, %v7600
  %v7617 = vadd.f32 %v7576, %v7601
  %v7618 = vadd.f32 %v7577, %v7602
  %v7619 = vadd.f32 %v7578, %v7603
  %v7620 = vadd.f32 %v7579, %v7604
  %v7621 = vadd.f32 %v7580, %v7605
  %s7622 = scalar_lea.vmem %s7, 5184
  %v7623 = vld [vmem:[%s7622] sm:$0xff]
  %v7624 = vld [vmem:[%s7622 + $0x8] sm:$0xff]
  %v7625 = vld [vmem:[%s7622 + $0x10] sm:$0xff]
  %v7626 = vld [vmem:[%s7622 + $0x18] sm:$0xff]
  %v7627 = vld [vmem:[%s7622 + $0x20] sm:$0xff]
  %v7628 = vld [vmem:[%s7622 + $0x28] sm:$0xff]
  %v7629 = vld [vmem:[%s7622 + $0x30] sm:$0xff]
  %v7630 = vld [vmem:[%s7622 + $0x38] sm:$0xff]
  %v7631 = vmul.f32 %v7337, %v7623
  %v7632 = vmul.f32 %v7352, %v7624
  %v7633 = vmul.f32 %v7351, %v7625
  %v7634 = vmul.f32 %v7350, %v7626
  %v7635 = vmul.f32 %v7349, %v7627
  %v7636 = vmul.f32 %v7348, %v7628
  %v7637 = vmul.f32 %v7347, %v7629
  %v7638 = vmul.f32 %v7346, %v7630
  %v7639 = vmul.f32 %v7345, %v7623
  %v7640 = vmul.f32 %v7344, %v7624
  %v7641 = vmul.f32 %v7343, %v7625
  %v7642 = vmul.f32 %v7342, %v7626
  %v7643 = vmul.f32 %v7341, %v7627
  %v7644 = vmul.f32 %v7340, %v7628
  %v7645 = vmul.f32 %v7339, %v7629
  %v7646 = vmul.f32 %v7338, %v7630
  %v7647 = vadd.f32 %v7606, %v7631
  %v7648 = vadd.f32 %v7607, %v7632
  %v7649 = vadd.f32 %v7608, %v7633
  %v7650 = vadd.f32 %v7609, %v7634
  %v7651 = vadd.f32 %v7610, %v7635
  %v7652 = vadd.f32 %v7611, %v7636
  %v7653 = vadd.f32 %v7612, %v7637
  %v7654 = vadd.f32 %v7613, %v7638
  %v7655 = vadd.f32 %v7614, %v7639
  %v7656 = vadd.f32 %v7615, %v7640
  %v7657 = vadd.f32 %v7616, %v7641
  %v7658 = vadd.f32 %v7617, %v7642
  %v7659 = vadd.f32 %v7618, %v7643
  %v7660 = vadd.f32 %v7619, %v7644
  %v7661 = vadd.f32 %v7620, %v7645
  %v7662 = vadd.f32 %v7621, %v7646
  %s7663 = scalar_lea.vmem %s7, 5248
  %v7664 = vld [vmem:[%s7663] sm:$0xff]
  %v7665 = vld [vmem:[%s7663 + $0x8] sm:$0xff]
  %v7666 = vld [vmem:[%s7663 + $0x10] sm:$0xff]
  %v7667 = vld [vmem:[%s7663 + $0x18] sm:$0xff]
  %v7668 = vld [vmem:[%s7663 + $0x20] sm:$0xff]
  %v7669 = vld [vmem:[%s7663 + $0x28] sm:$0xff]
  %v7670 = vld [vmem:[%s7663 + $0x30] sm:$0xff]
  %v7671 = vld [vmem:[%s7663 + $0x38] sm:$0xff]
  %v7672 = vmul.f32 %v7025, %v7664
  %v7673 = vmul.f32 %v6966, %v7665
  %v7674 = vmul.f32 %v6969, %v7666
  %v7675 = vmul.f32 %v6974, %v7667
  %v7676 = vmul.f32 %v6977, %v7668
  %v7677 = vmul.f32 %v6982, %v7669
  %v7678 = vmul.f32 %v6985, %v7670
  %v7679 = vmul.f32 %v6990, %v7671
  %v7680 = vmul.f32 %v6993, %v7664
  %v7681 = vmul.f32 %v6998, %v7665
  %v7682 = vmul.f32 %v7001, %v7666
  %v7683 = vmul.f32 %v7006, %v7667
  %v7684 = vmul.f32 %v7009, %v7668
  %v7685 = vmul.f32 %v7014, %v7669
  %v7686 = vmul.f32 %v7017, %v7670
  %v7687 = vmul.f32 %v7022, %v7671
  %v7688 = vadd.f32 %v7647, %v7672
  %v7689 = vadd.f32 %v7648, %v7673
  %v7690 = vadd.f32 %v7649, %v7674
  %v7691 = vadd.f32 %v7650, %v7675
  %v7692 = vadd.f32 %v7651, %v7676
  %v7693 = vadd.f32 %v7652, %v7677
  %v7694 = vadd.f32 %v7653, %v7678
  %v7695 = vadd.f32 %v7654, %v7679
  %v7696 = vadd.f32 %v7655, %v7680
  %v7697 = vadd.f32 %v7656, %v7681
  %v7698 = vadd.f32 %v7657, %v7682
  %v7699 = vadd.f32 %v7658, %v7683
  %v7700 = vadd.f32 %v7659, %v7684
  %v7701 = vadd.f32 %v7660, %v7685
  %v7702 = vadd.f32 %v7661, %v7686
  %v7703 = vadd.f32 %v7662, %v7687
  %s7704 = scalar_lea.vmem %s7, 5312
  %v7705 = vld [vmem:[%s7704] sm:$0xff]
  %v7706 = vld [vmem:[%s7704 + $0x8] sm:$0xff]
  %v7707 = vld [vmem:[%s7704 + $0x10] sm:$0xff]
  %v7708 = vld [vmem:[%s7704 + $0x18] sm:$0xff]
  %v7709 = vld [vmem:[%s7704 + $0x20] sm:$0xff]
  %v7710 = vld [vmem:[%s7704 + $0x28] sm:$0xff]
  %v7711 = vld [vmem:[%s7704 + $0x30] sm:$0xff]
  %v7712 = vld [vmem:[%s7704 + $0x38] sm:$0xff]
  %v7713 = vmul.f32 %v7466, %v7705
  %v7714 = vmul.f32 %v7465, %v7706
  %v7715 = vmul.f32 %v7464, %v7707
  %v7716 = vmul.f32 %v7463, %v7708
  %v7717 = vmul.f32 %v7462, %v7709
  %v7718 = vmul.f32 %v7461, %v7710
  %v7719 = vmul.f32 %v7460, %v7711
  %v7720 = vmul.f32 %v7459, %v7712
  %v7721 = vmul.f32 %v7458, %v7705
  %v7722 = vmul.f32 %v7457, %v7706
  %v7723 = vmul.f32 %v7456, %v7707
  %v7724 = vmul.f32 %v7455, %v7708
  %v7725 = vmul.f32 %v7454, %v7709
  %v7726 = vmul.f32 %v7453, %v7710
  %v7727 = vmul.f32 %v7452, %v7711
  %v7728 = vmul.f32 %v7451, %v7712
  %v7729 = vadd.f32 %v7688, %v7713
  %v7730 = vadd.f32 %v7689, %v7714
  %v7731 = vadd.f32 %v7690, %v7715
  %v7732 = vadd.f32 %v7691, %v7716
  %v7733 = vadd.f32 %v7692, %v7717
  %v7734 = vadd.f32 %v7693, %v7718
  %v7735 = vadd.f32 %v7694, %v7719
  %v7736 = vadd.f32 %v7695, %v7720
  %v7737 = vadd.f32 %v7696, %v7721
  %v7738 = vadd.f32 %v7697, %v7722
  %v7739 = vadd.f32 %v7698, %v7723
  %v7740 = vadd.f32 %v7699, %v7724
  %v7741 = vadd.f32 %v7700, %v7725
  %v7742 = vadd.f32 %v7701, %v7726
  %v7743 = vadd.f32 %v7702, %v7727
  %v7744 = vadd.f32 %v7703, %v7728
  %s7745 = scalar_lea.vmem %s7, 5376
  %v7746 = vld [vmem:[%s7745] sm:$0xff]
  %v7747 = vld [vmem:[%s7745 + $0x8] sm:$0xff]
  %v7748 = vld [vmem:[%s7745 + $0x10] sm:$0xff]
  %v7749 = vld [vmem:[%s7745 + $0x18] sm:$0xff]
  %v7750 = vld [vmem:[%s7745 + $0x20] sm:$0xff]
  %v7751 = vld [vmem:[%s7745 + $0x28] sm:$0xff]
  %v7752 = vld [vmem:[%s7745 + $0x30] sm:$0xff]
  %v7753 = vld [vmem:[%s7745 + $0x38] sm:$0xff]
  %v7754 = vmul.f32 %v7539, %v7746
  %v7755 = vmul.f32 %v7538, %v7747
  %v7756 = vmul.f32 %v7537, %v7748
  %v7757 = vmul.f32 %v7536, %v7749
  %v7758 = vmul.f32 %v7535, %v7750
  %v7759 = vmul.f32 %v7534, %v7751
  %v7760 = vmul.f32 %v7533, %v7752
  %v7761 = vmul.f32 %v7532, %v7753
  %v7762 = vmul.f32 %v7531, %v7746
  %v7763 = vmul.f32 %v7530, %v7747
  %v7764 = vmul.f32 %v7529, %v7748
  %v7765 = vmul.f32 %v7528, %v7749
  %v7766 = vmul.f32 %v7527, %v7750
  %v7767 = vmul.f32 %v7526, %v7751
  %v7768 = vmul.f32 %v7525, %v7752
  %v7769 = vmul.f32 %v7524, %v7753
  %v7770 = vadd.f32 %v7729, %v7754
  %v7771 = vadd.f32 %v7730, %v7755
  %v7772 = vadd.f32 %v7731, %v7756
  %v7773 = vadd.f32 %v7732, %v7757
  %v7774 = vadd.f32 %v7733, %v7758
  %v7775 = vadd.f32 %v7734, %v7759
  %v7776 = vadd.f32 %v7735, %v7760
  %v7777 = vadd.f32 %v7736, %v7761
  %v7778 = vadd.f32 %v7737, %v7762
  %v7779 = vadd.f32 %v7738, %v7763
  %v7780 = vadd.f32 %v7739, %v7764
  %v7781 = vadd.f32 %v7740, %v7765
  %v7782 = vadd.f32 %v7741, %v7766
  %v7783 = vadd.f32 %v7742, %v7767
  %v7784 = vadd.f32 %v7743, %v7768
  %v7785 = vadd.f32 %v7744, %v7769
  %s7786 = scalar_lea.vmem %s7, 5440
  %v7787 = vld [vmem:[%s7786] sm:$0xff]
  %v7788 = vld [vmem:[%s7786 + $0x8] sm:$0xff]
  %v7789 = vld [vmem:[%s7786 + $0x10] sm:$0xff]
  %v7790 = vld [vmem:[%s7786 + $0x18] sm:$0xff]
  %v7791 = vld [vmem:[%s7786 + $0x20] sm:$0xff]
  %v7792 = vld [vmem:[%s7786 + $0x28] sm:$0xff]
  %v7793 = vld [vmem:[%s7786 + $0x30] sm:$0xff]
  %v7794 = vld [vmem:[%s7786 + $0x38] sm:$0xff]
  %v7795 = vmul.f32 %v7279, %v7787
  %v7796 = vmul.f32 %v7278, %v7788
  %v7797 = vmul.f32 %v7277, %v7789
  %v7798 = vmul.f32 %v7276, %v7790
  %v7799 = vmul.f32 %v7275, %v7791
  %v7800 = vmul.f32 %v7274, %v7792
  %v7801 = vmul.f32 %v7273, %v7793
  %v7802 = vmul.f32 %v7272, %v7794
  %v7803 = vmul.f32 %v7271, %v7787
  %v7804 = vmul.f32 %v7270, %v7788
  %v7805 = vmul.f32 %v7269, %v7789
  %v7806 = vmul.f32 %v7268, %v7790
  %v7807 = vmul.f32 %v7267, %v7791
  %v7808 = vmul.f32 %v7266, %v7792
  %v7809 = vmul.f32 %v7265, %v7793
  %v7810 = vmul.f32 %v7264, %v7794
  %v7811 = vadd.f32 %v7770, %v7795
  %v7812 = vadd.f32 %v7771, %v7796
  %v7813 = vadd.f32 %v7772, %v7797
  %v7814 = vadd.f32 %v7773, %v7798
  %v7815 = vadd.f32 %v7774, %v7799
  %v7816 = vadd.f32 %v7775, %v7800
  %v7817 = vadd.f32 %v7776, %v7801
  %v7818 = vadd.f32 %v7777, %v7802
  %v7819 = vadd.f32 %v7778, %v7803
  %v7820 = vadd.f32 %v7779, %v7804
  %v7821 = vadd.f32 %v7780, %v7805
  %v7822 = vadd.f32 %v7781, %v7806
  %v7823 = vadd.f32 %v7782, %v7807
  %v7824 = vadd.f32 %v7783, %v7808
  %v7825 = vadd.f32 %v7784, %v7809
  %v7826 = vadd.f32 %v7785, %v7810
  %s7827 = scalar_lea.vmem %s7, 5504
  %v7828 = vld [vmem:[%s7827] sm:$0xff]
  %v7829 = vld [vmem:[%s7827 + $0x8] sm:$0xff]
  %v7830 = vld [vmem:[%s7827 + $0x10] sm:$0xff]
  %v7831 = vld [vmem:[%s7827 + $0x18] sm:$0xff]
  %v7832 = vld [vmem:[%s7827 + $0x20] sm:$0xff]
  %v7833 = vld [vmem:[%s7827 + $0x28] sm:$0xff]
  %v7834 = vld [vmem:[%s7827 + $0x30] sm:$0xff]
  %v7835 = vld [vmem:[%s7827 + $0x38] sm:$0xff]
  %v7836 = vmul.f32 %v7352, %v7828
  %v7837 = vmul.f32 %v7351, %v7829
  %v7838 = vmul.f32 %v7350, %v7830
  %v7839 = vmul.f32 %v7349, %v7831
  %v7840 = vmul.f32 %v7348, %v7832
  %v7841 = vmul.f32 %v7347, %v7833
  %v7842 = vmul.f32 %v7346, %v7834
  %v7843 = vmul.f32 %v7345, %v7835
  %v7844 = vmul.f32 %v7344, %v7828
  %v7845 = vmul.f32 %v7343, %v7829
  %v7846 = vmul.f32 %v7342, %v7830
  %v7847 = vmul.f32 %v7341, %v7831
  %v7848 = vmul.f32 %v7340, %v7832
  %v7849 = vmul.f32 %v7339, %v7833
  %v7850 = vmul.f32 %v7338, %v7834
  %v7851 = vmul.f32 %v7337, %v7835
  %v7852 = vadd.f32 %v7811, %v7836
  %v7853 = vadd.f32 %v7812, %v7837
  %v7854 = vadd.f32 %v7813, %v7838
  %v7855 = vadd.f32 %v7814, %v7839
  %v7856 = vadd.f32 %v7815, %v7840
  %v7857 = vadd.f32 %v7816, %v7841
  %v7858 = vadd.f32 %v7817, %v7842
  %v7859 = vadd.f32 %v7818, %v7843
  %v7860 = vadd.f32 %v7819, %v7844
  %v7861 = vadd.f32 %v7820, %v7845
  %v7862 = vadd.f32 %v7821, %v7846
  %v7863 = vadd.f32 %v7822, %v7847
  %v7864 = vadd.f32 %v7823, %v7848
  %v7865 = vadd.f32 %v7824, %v7849
  %v7866 = vadd.f32 %v7825, %v7850
  %v7867 = vadd.f32 %v7826, %v7851
  %s7868 = scalar_lea.vmem %s7, 5568
  %v7869 = vld [vmem:[%s7868] sm:$0xff]
  %v7870 = vld [vmem:[%s7868 + $0x8] sm:$0xff]
  %v7871 = vld [vmem:[%s7868 + $0x10] sm:$0xff]
  %v7872 = vld [vmem:[%s7868 + $0x18] sm:$0xff]
  %v7873 = vld [vmem:[%s7868 + $0x20] sm:$0xff]
  %v7874 = vld [vmem:[%s7868 + $0x28] sm:$0xff]
  %v7875 = vld [vmem:[%s7868 + $0x30] sm:$0xff]
  %v7876 = vld [vmem:[%s7868 + $0x38] sm:$0xff]
  %v7877 = vmul.f32 %v6966, %v7869
  %v7878 = vmul.f32 %v6969, %v7870
  %v7879 = vmul.f32 %v6974, %v7871
  %v7880 = vmul.f32 %v6977, %v7872
  %v7881 = vmul.f32 %v6982, %v7873
  %v7882 = vmul.f32 %v6985, %v7874
  %v7883 = vmul.f32 %v6990, %v7875
  %v7884 = vmul.f32 %v6993, %v7876
  %v7885 = vmul.f32 %v6998, %v7869
  %v7886 = vmul.f32 %v7001, %v7870
  %v7887 = vmul.f32 %v7006, %v7871
  %v7888 = vmul.f32 %v7009, %v7872
  %v7889 = vmul.f32 %v7014, %v7873
  %v7890 = vmul.f32 %v7017, %v7874
  %v7891 = vmul.f32 %v7022, %v7875
  %v7892 = vmul.f32 %v7025, %v7876
  %v7893 = vadd.f32 %v7852, %v7877
  %v7894 = vadd.f32 %v7853, %v7878
  %v7895 = vadd.f32 %v7854, %v7879
  %v7896 = vadd.f32 %v7855, %v7880
  %v7897 = vadd.f32 %v7856, %v7881
  %v7898 = vadd.f32 %v7857, %v7882
  %v7899 = vadd.f32 %v7858, %v7883
  %v7900 = vadd.f32 %v7859, %v7884
  %v7901 = vadd.f32 %v7860, %v7885
  %v7902 = vadd.f32 %v7861, %v7886
  %v7903 = vadd.f32 %v7862, %v7887
  %v7904 = vadd.f32 %v7863, %v7888
  %v7905 = vadd.f32 %v7864, %v7889
  %v7906 = vadd.f32 %v7865, %v7890
  %v7907 = vadd.f32 %v7866, %v7891
  %v7908 = vadd.f32 %v7867, %v7892
  %s7909 = scalar_lea.vmem %s7, 5632
  %v7910 = vld [vmem:[%s7909] sm:$0xff]
  %v7911 = vld [vmem:[%s7909 + $0x8] sm:$0xff]
  %v7912 = vld [vmem:[%s7909 + $0x10] sm:$0xff]
  %v7913 = vld [vmem:[%s7909 + $0x18] sm:$0xff]
  %v7914 = vld [vmem:[%s7909 + $0x20] sm:$0xff]
  %v7915 = vld [vmem:[%s7909 + $0x28] sm:$0xff]
  %v7916 = vld [vmem:[%s7909 + $0x30] sm:$0xff]
  %v7917 = vld [vmem:[%s7909 + $0x38] sm:$0xff]
  %v7918 = vmul.f32 %v7465, %v7910
  %v7919 = vmul.f32 %v7464, %v7911
  %v7920 = vmul.f32 %v7463, %v7912
  %v7921 = vmul.f32 %v7462, %v7913
  %v7922 = vmul.f32 %v7461, %v7914
  %v7923 = vmul.f32 %v7460, %v7915
  %v7924 = vmul.f32 %v7459, %v7916
  %v7925 = vmul.f32 %v7458, %v7917
  %v7926 = vmul.f32 %v7457, %v7910
  %v7927 = vmul.f32 %v7456, %v7911
  %v7928 = vmul.f32 %v7455, %v7912
  %v7929 = vmul.f32 %v7454, %v7913
  %v7930 = vmul.f32 %v7453, %v7914
  %v7931 = vmul.f32 %v7452, %v7915
  %v7932 = vmul.f32 %v7451, %v7916
  %v7933 = vmul.f32 %v7466, %v7917
  %v7934 = vadd.f32 %v7893, %v7918
  %v7935 = vadd.f32 %v7894, %v7919
  %v7936 = vadd.f32 %v7895, %v7920
  %v7937 = vadd.f32 %v7896, %v7921
  %v7938 = vadd.f32 %v7897, %v7922
  %v7939 = vadd.f32 %v7898, %v7923
  %v7940 = vadd.f32 %v7899, %v7924
  %v7941 = vadd.f32 %v7900, %v7925
  %v7942 = vadd.f32 %v7901, %v7926
  %v7943 = vadd.f32 %v7902, %v7927
  %v7944 = vadd.f32 %v7903, %v7928
  %v7945 = vadd.f32 %v7904, %v7929
  %v7946 = vadd.f32 %v7905, %v7930
  %v7947 = vadd.f32 %v7906, %v7931
  %v7948 = vadd.f32 %v7907, %v7932
  %v7949 = vadd.f32 %v7908, %v7933
  %s7950 = scalar_lea.vmem %s7, 5696
  %v7951 = vld [vmem:[%s7950] sm:$0xff]
  %v7952 = vld [vmem:[%s7950 + $0x8] sm:$0xff]
  %v7953 = vld [vmem:[%s7950 + $0x10] sm:$0xff]
  %v7954 = vld [vmem:[%s7950 + $0x18] sm:$0xff]
  %v7955 = vld [vmem:[%s7950 + $0x20] sm:$0xff]
  %v7956 = vld [vmem:[%s7950 + $0x28] sm:$0xff]
  %v7957 = vld [vmem:[%s7950 + $0x30] sm:$0xff]
  %v7958 = vld [vmem:[%s7950 + $0x38] sm:$0xff]
  %v7959 = vmul.f32 %v7538, %v7951
  %v7960 = vmul.f32 %v7537, %v7952
  %v7961 = vmul.f32 %v7536, %v7953
  %v7962 = vmul.f32 %v7535, %v7954
  %v7963 = vmul.f32 %v7534, %v7955
  %v7964 = vmul.f32 %v7533, %v7956
  %v7965 = vmul.f32 %v7532, %v7957
  %v7966 = vmul.f32 %v7531, %v7958
  %v7967 = vmul.f32 %v7530, %v7951
  %v7968 = vmul.f32 %v7529, %v7952
  %v7969 = vmul.f32 %v7528, %v7953
  %v7970 = vmul.f32 %v7527, %v7954
  %v7971 = vmul.f32 %v7526, %v7955
  %v7972 = vmul.f32 %v7525, %v7956
  %v7973 = vmul.f32 %v7524, %v7957
  %v7974 = vmul.f32 %v7539, %v7958
  %v7975 = vadd.f32 %v7934, %v7959
  %v7976 = vadd.f32 %v7935, %v7960
  %v7977 = vadd.f32 %v7936, %v7961
  %v7978 = vadd.f32 %v7937, %v7962
  %v7979 = vadd.f32 %v7938, %v7963
  %v7980 = vadd.f32 %v7939, %v7964
  %v7981 = vadd.f32 %v7940, %v7965
  %v7982 = vadd.f32 %v7941, %v7966
  %v7983 = vadd.f32 %v7942, %v7967
  %v7984 = vadd.f32 %v7943, %v7968
  %v7985 = vadd.f32 %v7944, %v7969
  %v7986 = vadd.f32 %v7945, %v7970
  %v7987 = vadd.f32 %v7946, %v7971
  %v7988 = vadd.f32 %v7947, %v7972
  %v7989 = vadd.f32 %v7948, %v7973
  %v7990 = vadd.f32 %v7949, %v7974
  %s7991 = scalar_lea.vmem %s7, 5760
  %v7992 = vld [vmem:[%s7991] sm:$0xff]
  %v7993 = vld [vmem:[%s7991 + $0x8] sm:$0xff]
  %v7994 = vld [vmem:[%s7991 + $0x10] sm:$0xff]
  %v7995 = vld [vmem:[%s7991 + $0x18] sm:$0xff]
  %v7996 = vld [vmem:[%s7991 + $0x20] sm:$0xff]
  %v7997 = vld [vmem:[%s7991 + $0x28] sm:$0xff]
  %v7998 = vld [vmem:[%s7991 + $0x30] sm:$0xff]
  %v7999 = vld [vmem:[%s7991 + $0x38] sm:$0xff]
  %v8000 = vmul.f32 %v7278, %v7992
  %v8001 = vmul.f32 %v7277, %v7993
  %v8002 = vmul.f32 %v7276, %v7994
  %v8003 = vmul.f32 %v7275, %v7995
  %v8004 = vmul.f32 %v7274, %v7996
  %v8005 = vmul.f32 %v7273, %v7997
  %v8006 = vmul.f32 %v7272, %v7998
  %v8007 = vmul.f32 %v7271, %v7999
  %v8008 = vmul.f32 %v7270, %v7992
  %v8009 = vmul.f32 %v7269, %v7993
  %v8010 = vmul.f32 %v7268, %v7994
  %v8011 = vmul.f32 %v7267, %v7995
  %v8012 = vmul.f32 %v7266, %v7996
  %v8013 = vmul.f32 %v7265, %v7997
  %v8014 = vmul.f32 %v7264, %v7998
  %v8015 = vmul.f32 %v7279, %v7999
  %v8016 = vadd.f32 %v7975, %v8000
  %v8017 = vadd.f32 %v7976, %v8001
  %v8018 = vadd.f32 %v7977, %v8002
  %v8019 = vadd.f32 %v7978, %v8003
  %v8020 = vadd.f32 %v7979, %v8004
  %v8021 = vadd.f32 %v7980, %v8005
  %v8022 = vadd.f32 %v7981, %v8006
  %v8023 = vadd.f32 %v7982, %v8007
  %v8024 = vadd.f32 %v7983, %v8008
  %v8025 = vadd.f32 %v7984, %v8009
  %v8026 = vadd.f32 %v7985, %v8010
  %v8027 = vadd.f32 %v7986, %v8011
  %v8028 = vadd.f32 %v7987, %v8012
  %v8029 = vadd.f32 %v7988, %v8013
  %v8030 = vadd.f32 %v7989, %v8014
  %v8031 = vadd.f32 %v7990, %v8015
  %s8032 = scalar_lea.vmem %s7, 5824
  %v8033 = vld [vmem:[%s8032] sm:$0xff]
  %v8034 = vld [vmem:[%s8032 + $0x8] sm:$0xff]
  %v8035 = vld [vmem:[%s8032 + $0x10] sm:$0xff]
  %v8036 = vld [vmem:[%s8032 + $0x18] sm:$0xff]
  %v8037 = vld [vmem:[%s8032 + $0x20] sm:$0xff]
  %v8038 = vld [vmem:[%s8032 + $0x28] sm:$0xff]
  %v8039 = vld [vmem:[%s8032 + $0x30] sm:$0xff]
  %v8040 = vld [vmem:[%s8032 + $0x38] sm:$0xff]
  %v8041 = vmul.f32 %v7351, %v8033
  %v8042 = vmul.f32 %v7350, %v8034
  %v8043 = vmul.f32 %v7349, %v8035
  %v8044 = vmul.f32 %v7348, %v8036
  %v8045 = vmul.f32 %v7347, %v8037
  %v8046 = vmul.f32 %v7346, %v8038
  %v8047 = vmul.f32 %v7345, %v8039
  %v8048 = vmul.f32 %v7344, %v8040
  %v8049 = vmul.f32 %v7343, %v8033
  %v8050 = vmul.f32 %v7342, %v8034
  %v8051 = vmul.f32 %v7341, %v8035
  %v8052 = vmul.f32 %v7340, %v8036
  %v8053 = vmul.f32 %v7339, %v8037
  %v8054 = vmul.f32 %v7338, %v8038
  %v8055 = vmul.f32 %v7337, %v8039
  %v8056 = vmul.f32 %v7352, %v8040
  %v8057 = vadd.f32 %v8016, %v8041
  %v8058 = vadd.f32 %v8017, %v8042
  %v8059 = vadd.f32 %v8018, %v8043
  %v8060 = vadd.f32 %v8019, %v8044
  %v8061 = vadd.f32 %v8020, %v8045
  %v8062 = vadd.f32 %v8021, %v8046
  %v8063 = vadd.f32 %v8022, %v8047
  %v8064 = vadd.f32 %v8023, %v8048
  %v8065 = vadd.f32 %v8024, %v8049
  %v8066 = vadd.f32 %v8025, %v8050
  %v8067 = vadd.f32 %v8026, %v8051
  %v8068 = vadd.f32 %v8027, %v8052
  %v8069 = vadd.f32 %v8028, %v8053
  %v8070 = vadd.f32 %v8029, %v8054
  %v8071 = vadd.f32 %v8030, %v8055
  %v8072 = vadd.f32 %v8031, %v8056
  %s8073 = scalar_lea.vmem %s7, 5888
  %v8074 = vld [vmem:[%s8073] sm:$0xff]
  %v8075 = vld [vmem:[%s8073 + $0x8] sm:$0xff]
  %v8076 = vld [vmem:[%s8073 + $0x10] sm:$0xff]
  %v8077 = vld [vmem:[%s8073 + $0x18] sm:$0xff]
  %v8078 = vld [vmem:[%s8073 + $0x20] sm:$0xff]
  %v8079 = vld [vmem:[%s8073 + $0x28] sm:$0xff]
  %v8080 = vld [vmem:[%s8073 + $0x30] sm:$0xff]
  %v8081 = vld [vmem:[%s8073 + $0x38] sm:$0xff]
  %v8082 = vmul.f32 %v6969, %v8074
  %v8083 = vmul.f32 %v6974, %v8075
  %v8084 = vmul.f32 %v6977, %v8076
  %v8085 = vmul.f32 %v6982, %v8077
  %v8086 = vmul.f32 %v6985, %v8078
  %v8087 = vmul.f32 %v6990, %v8079
  %v8088 = vmul.f32 %v6993, %v8080
  %v8089 = vmul.f32 %v6998, %v8081
  %v8090 = vmul.f32 %v7001, %v8074
  %v8091 = vmul.f32 %v7006, %v8075
  %v8092 = vmul.f32 %v7009, %v8076
  %v8093 = vmul.f32 %v7014, %v8077
  %v8094 = vmul.f32 %v7017, %v8078
  %v8095 = vmul.f32 %v7022, %v8079
  %v8096 = vmul.f32 %v7025, %v8080
  %v8097 = vmul.f32 %v6966, %v8081
  %v8098 = vadd.f32 %v8057, %v8082
  %v8099 = vadd.f32 %v8058, %v8083
  %v8100 = vadd.f32 %v8059, %v8084
  %v8101 = vadd.f32 %v8060, %v8085
  %v8102 = vadd.f32 %v8061, %v8086
  %v8103 = vadd.f32 %v8062, %v8087
  %v8104 = vadd.f32 %v8063, %v8088
  %v8105 = vadd.f32 %v8064, %v8089
  %v8106 = vadd.f32 %v8065, %v8090
  %v8107 = vadd.f32 %v8066, %v8091
  %v8108 = vadd.f32 %v8067, %v8092
  %v8109 = vadd.f32 %v8068, %v8093
  %v8110 = vadd.f32 %v8069, %v8094
  %v8111 = vadd.f32 %v8070, %v8095
  %v8112 = vadd.f32 %v8071, %v8096
  %v8113 = vadd.f32 %v8072, %v8097
  %s8114 = scalar_lea.vmem %s7, 5952
  %v8115 = vld [vmem:[%s8114] sm:$0xff]
  %v8116 = vld [vmem:[%s8114 + $0x8] sm:$0xff]
  %v8117 = vld [vmem:[%s8114 + $0x10] sm:$0xff]
  %v8118 = vld [vmem:[%s8114 + $0x18] sm:$0xff]
  %v8119 = vld [vmem:[%s8114 + $0x20] sm:$0xff]
  %v8120 = vld [vmem:[%s8114 + $0x28] sm:$0xff]
  %v8121 = vld [vmem:[%s8114 + $0x30] sm:$0xff]
  %v8122 = vld [vmem:[%s8114 + $0x38] sm:$0xff]
  %v8123 = vmul.f32 %v7464, %v8115
  %v8124 = vmul.f32 %v7463, %v8116
  %v8125 = vmul.f32 %v7462, %v8117
  %v8126 = vmul.f32 %v7461, %v8118
  %v8127 = vmul.f32 %v7460, %v8119
  %v8128 = vmul.f32 %v7459, %v8120
  %v8129 = vmul.f32 %v7458, %v8121
  %v8130 = vmul.f32 %v7457, %v8122
  %v8131 = vmul.f32 %v7456, %v8115
  %v8132 = vmul.f32 %v7455, %v8116
  %v8133 = vmul.f32 %v7454, %v8117
  %v8134 = vmul.f32 %v7453, %v8118
  %v8135 = vmul.f32 %v7452, %v8119
  %v8136 = vmul.f32 %v7451, %v8120
  %v8137 = vmul.f32 %v7466, %v8121
  %v8138 = vmul.f32 %v7465, %v8122
  %v8139 = vadd.f32 %v8098, %v8123
  %v8140 = vadd.f32 %v8099, %v8124
  %v8141 = vadd.f32 %v8100, %v8125
  %v8142 = vadd.f32 %v8101, %v8126
  %v8143 = vadd.f32 %v8102, %v8127
  %v8144 = vadd.f32 %v8103, %v8128
  %v8145 = vadd.f32 %v8104, %v8129
  %v8146 = vadd.f32 %v8105, %v8130
  %v8147 = vadd.f32 %v8106, %v8131
  %v8148 = vadd.f32 %v8107, %v8132
  %v8149 = vadd.f32 %v8108, %v8133
  %v8150 = vadd.f32 %v8109, %v8134
  %v8151 = vadd.f32 %v8110, %v8135
  %v8152 = vadd.f32 %v8111, %v8136
  %v8153 = vadd.f32 %v8112, %v8137
  %v8154 = vadd.f32 %v8113, %v8138
  %s8155 = scalar_lea.vmem %s7, 6016
  %v8156 = vld [vmem:[%s8155] sm:$0xff]
  %v8157 = vld [vmem:[%s8155 + $0x8] sm:$0xff]
  %v8158 = vld [vmem:[%s8155 + $0x10] sm:$0xff]
  %v8159 = vld [vmem:[%s8155 + $0x18] sm:$0xff]
  %v8160 = vld [vmem:[%s8155 + $0x20] sm:$0xff]
  %v8161 = vld [vmem:[%s8155 + $0x28] sm:$0xff]
  %v8162 = vld [vmem:[%s8155 + $0x30] sm:$0xff]
  %v8163 = vld [vmem:[%s8155 + $0x38] sm:$0xff]
  %v8164 = vmul.f32 %v7537, %v8156
  %v8165 = vmul.f32 %v7536, %v8157
  %v8166 = vmul.f32 %v7535, %v8158
  %v8167 = vmul.f32 %v7534, %v8159
  %v8168 = vmul.f32 %v7533, %v8160
  %v8169 = vmul.f32 %v7532, %v8161
  %v8170 = vmul.f32 %v7531, %v8162
  %v8171 = vmul.f32 %v7530, %v8163
  %v8172 = vmul.f32 %v7529, %v8156
  %v8173 = vmul.f32 %v7528, %v8157
  %v8174 = vmul.f32 %v7527, %v8158
  %v8175 = vmul.f32 %v7526, %v8159
  %v8176 = vmul.f32 %v7525, %v8160
  %v8177 = vmul.f32 %v7524, %v8161
  %v8178 = vmul.f32 %v7539, %v8162
  %v8179 = vmul.f32 %v7538, %v8163
  %v8180 = vadd.f32 %v8139, %v8164
  %v8181 = vadd.f32 %v8140, %v8165
  %v8182 = vadd.f32 %v8141, %v8166
  %v8183 = vadd.f32 %v8142, %v8167
  %v8184 = vadd.f32 %v8143, %v8168
  %v8185 = vadd.f32 %v8144, %v8169
  %v8186 = vadd.f32 %v8145, %v8170
  %v8187 = vadd.f32 %v8146, %v8171
  %v8188 = vadd.f32 %v8147, %v8172
  %v8189 = vadd.f32 %v8148, %v8173
  %v8190 = vadd.f32 %v8149, %v8174
  %v8191 = vadd.f32 %v8150, %v8175
  %v8192 = vadd.f32 %v8151, %v8176
  %v8193 = vadd.f32 %v8152, %v8177
  %v8194 = vadd.f32 %v8153, %v8178
  %v8195 = vadd.f32 %v8154, %v8179
  %s8196 = scalar_lea.vmem %s7, 6080
  %v8197 = vld [vmem:[%s8196] sm:$0xff]
  %v8198 = vld [vmem:[%s8196 + $0x8] sm:$0xff]
  %v8199 = vld [vmem:[%s8196 + $0x10] sm:$0xff]
  %v8200 = vld [vmem:[%s8196 + $0x18] sm:$0xff]
  %v8201 = vld [vmem:[%s8196 + $0x20] sm:$0xff]
  %v8202 = vld [vmem:[%s8196 + $0x28] sm:$0xff]
  %v8203 = vld [vmem:[%s8196 + $0x30] sm:$0xff]
  %v8204 = vld [vmem:[%s8196 + $0x38] sm:$0xff]
  %v8205 = vmul.f32 %v7277, %v8197
  %v8206 = vmul.f32 %v7276, %v8198
  %v8207 = vmul.f32 %v7275, %v8199
  %v8208 = vmul.f32 %v7274, %v8200
  %v8209 = vmul.f32 %v7273, %v8201
  %v8210 = vmul.f32 %v7272, %v8202
  %v8211 = vmul.f32 %v7271, %v8203
  %v8212 = vmul.f32 %v7270, %v8204
  %v8213 = vmul.f32 %v7269, %v8197
  %v8214 = vmul.f32 %v7268, %v8198
  %v8215 = vmul.f32 %v7267, %v8199
  %v8216 = vmul.f32 %v7266, %v8200
  %v8217 = vmul.f32 %v7265, %v8201
  %v8218 = vmul.f32 %v7264, %v8202
  %v8219 = vmul.f32 %v7279, %v8203
  %v8220 = vmul.f32 %v7278, %v8204
  %v8221 = vadd.f32 %v8180, %v8205
  %v8222 = vadd.f32 %v8181, %v8206
  %v8223 = vadd.f32 %v8182, %v8207
  %v8224 = vadd.f32 %v8183, %v8208
  %v8225 = vadd.f32 %v8184, %v8209
  %v8226 = vadd.f32 %v8185, %v8210
  %v8227 = vadd.f32 %v8186, %v8211
  %v8228 = vadd.f32 %v8187, %v8212
  %v8229 = vadd.f32 %v8188, %v8213
  %v8230 = vadd.f32 %v8189, %v8214
  %v8231 = vadd.f32 %v8190, %v8215
  %v8232 = vadd.f32 %v8191, %v8216
  %v8233 = vadd.f32 %v8192, %v8217
  %v8234 = vadd.f32 %v8193, %v8218
  %v8235 = vadd.f32 %v8194, %v8219
  %v8236 = vadd.f32 %v8195, %v8220
  %s8237 = scalar_lea.vmem %s7, 6144
  %v8238 = vld [vmem:[%s8237] sm:$0xff]
  %v8239 = vld [vmem:[%s8237 + $0x8] sm:$0xff]
  %v8240 = vld [vmem:[%s8237 + $0x10] sm:$0xff]
  %v8241 = vld [vmem:[%s8237 + $0x18] sm:$0xff]
  %v8242 = vld [vmem:[%s8237 + $0x20] sm:$0xff]
  %v8243 = vld [vmem:[%s8237 + $0x28] sm:$0xff]
  %v8244 = vld [vmem:[%s8237 + $0x30] sm:$0xff]
  %v8245 = vld [vmem:[%s8237 + $0x38] sm:$0xff]
  %v8246 = vmul.f32 %v7350, %v8238
  %v8247 = vmul.f32 %v7349, %v8239
  %v8248 = vmul.f32 %v7348, %v8240
  %v8249 = vmul.f32 %v7347, %v8241
  %v8250 = vmul.f32 %v7346, %v8242
  %v8251 = vmul.f32 %v7345, %v8243
  %v8252 = vmul.f32 %v7344, %v8244
  %v8253 = vmul.f32 %v7343, %v8245
  %v8254 = vmul.f32 %v7342, %v8238
  %v8255 = vmul.f32 %v7341, %v8239
  %v8256 = vmul.f32 %v7340, %v8240
  %v8257 = vmul.f32 %v7339, %v8241
  %v8258 = vmul.f32 %v7338, %v8242
  %v8259 = vmul.f32 %v7337, %v8243
  %v8260 = vmul.f32 %v7352, %v8244
  %v8261 = vmul.f32 %v7351, %v8245
  %v8262 = vadd.f32 %v8221, %v8246
  %v8263 = vadd.f32 %v8222, %v8247
  %v8264 = vadd.f32 %v8223, %v8248
  %v8265 = vadd.f32 %v8224, %v8249
  %v8266 = vadd.f32 %v8225, %v8250
  %v8267 = vadd.f32 %v8226, %v8251
  %v8268 = vadd.f32 %v8227, %v8252
  %v8269 = vadd.f32 %v8228, %v8253
  %v8270 = vadd.f32 %v8229, %v8254
  %v8271 = vadd.f32 %v8230, %v8255
  %v8272 = vadd.f32 %v8231, %v8256
  %v8273 = vadd.f32 %v8232, %v8257
  %v8274 = vadd.f32 %v8233, %v8258
  %v8275 = vadd.f32 %v8234, %v8259
  %v8276 = vadd.f32 %v8235, %v8260
  %v8277 = vadd.f32 %v8236, %v8261
  %s8278 = scalar_lea.vmem %s7, 6208
  %v8279 = vld [vmem:[%s8278] sm:$0xff]
  %v8280 = vld [vmem:[%s8278 + $0x8] sm:$0xff]
  %v8281 = vld [vmem:[%s8278 + $0x10] sm:$0xff]
  %v8282 = vld [vmem:[%s8278 + $0x18] sm:$0xff]
  %v8283 = vld [vmem:[%s8278 + $0x20] sm:$0xff]
  %v8284 = vld [vmem:[%s8278 + $0x28] sm:$0xff]
  %v8285 = vld [vmem:[%s8278 + $0x30] sm:$0xff]
  %v8286 = vld [vmem:[%s8278 + $0x38] sm:$0xff]
  %v8287 = vmul.f32 %v6974, %v8279
  %v8288 = vmul.f32 %v6977, %v8280
  %v8289 = vmul.f32 %v6982, %v8281
  %v8290 = vmul.f32 %v6985, %v8282
  %v8291 = vmul.f32 %v6990, %v8283
  %v8292 = vmul.f32 %v6993, %v8284
  %v8293 = vmul.f32 %v6998, %v8285
  %v8294 = vmul.f32 %v7001, %v8286
  %v8295 = vmul.f32 %v7006, %v8279
  %v8296 = vmul.f32 %v7009, %v8280
  %v8297 = vmul.f32 %v7014, %v8281
  %v8298 = vmul.f32 %v7017, %v8282
  %v8299 = vmul.f32 %v7022, %v8283
  %v8300 = vmul.f32 %v7025, %v8284
  %v8301 = vmul.f32 %v6966, %v8285
  %v8302 = vmul.f32 %v6969, %v8286
  %v8303 = vadd.f32 %v8262, %v8287
  %v8304 = vadd.f32 %v8263, %v8288
  %v8305 = vadd.f32 %v8264, %v8289
  %v8306 = vadd.f32 %v8265, %v8290
  %v8307 = vadd.f32 %v8266, %v8291
  %v8308 = vadd.f32 %v8267, %v8292
  %v8309 = vadd.f32 %v8268, %v8293
  %v8310 = vadd.f32 %v8269, %v8294
  %v8311 = vadd.f32 %v8270, %v8295
  %v8312 = vadd.f32 %v8271, %v8296
  %v8313 = vadd.f32 %v8272, %v8297
  %v8314 = vadd.f32 %v8273, %v8298
  %v8315 = vadd.f32 %v8274, %v8299
  %v8316 = vadd.f32 %v8275, %v8300
  %v8317 = vadd.f32 %v8276, %v8301
  %v8318 = vadd.f32 %v8277, %v8302
  %s8319 = scalar_lea.vmem %s7, 6272
  %v8320 = vld [vmem:[%s8319] sm:$0xff]
  %v8321 = vld [vmem:[%s8319 + $0x8] sm:$0xff]
  %v8322 = vld [vmem:[%s8319 + $0x10] sm:$0xff]
  %v8323 = vld [vmem:[%s8319 + $0x18] sm:$0xff]
  %v8324 = vld [vmem:[%s8319 + $0x20] sm:$0xff]
  %v8325 = vld [vmem:[%s8319 + $0x28] sm:$0xff]
  %v8326 = vld [vmem:[%s8319 + $0x30] sm:$0xff]
  %v8327 = vld [vmem:[%s8319 + $0x38] sm:$0xff]
  %v8328 = vmul.f32 %v7463, %v8320
  %v8329 = vmul.f32 %v7462, %v8321
  %v8330 = vmul.f32 %v7461, %v8322
  %v8331 = vmul.f32 %v7460, %v8323
  %v8332 = vmul.f32 %v7459, %v8324
  %v8333 = vmul.f32 %v7458, %v8325
  %v8334 = vmul.f32 %v7457, %v8326
  %v8335 = vmul.f32 %v7456, %v8327
  %v8336 = vmul.f32 %v7455, %v8320
  %v8337 = vmul.f32 %v7454, %v8321
  %v8338 = vmul.f32 %v7453, %v8322
  %v8339 = vmul.f32 %v7452, %v8323
  %v8340 = vmul.f32 %v7451, %v8324
  %v8341 = vmul.f32 %v7466, %v8325
  %v8342 = vmul.f32 %v7465, %v8326
  %v8343 = vmul.f32 %v7464, %v8327
  %v8344 = vadd.f32 %v8303, %v8328
  %v8345 = vadd.f32 %v8304, %v8329
  %v8346 = vadd.f32 %v8305, %v8330
  %v8347 = vadd.f32 %v8306, %v8331
  %v8348 = vadd.f32 %v8307, %v8332
  %v8349 = vadd.f32 %v8308, %v8333
  %v8350 = vadd.f32 %v8309, %v8334
  %v8351 = vadd.f32 %v8310, %v8335
  %v8352 = vadd.f32 %v8311, %v8336
  %v8353 = vadd.f32 %v8312, %v8337
  %v8354 = vadd.f32 %v8313, %v8338
  %v8355 = vadd.f32 %v8314, %v8339
  %v8356 = vadd.f32 %v8315, %v8340
  %v8357 = vadd.f32 %v8316, %v8341
  %v8358 = vadd.f32 %v8317, %v8342
  %v8359 = vadd.f32 %v8318, %v8343
  %s8360 = scalar_lea.vmem %s7, 6336
  %v8361 = vld [vmem:[%s8360] sm:$0xff]
  %v8362 = vld [vmem:[%s8360 + $0x8] sm:$0xff]
  %v8363 = vld [vmem:[%s8360 + $0x10] sm:$0xff]
  %v8364 = vld [vmem:[%s8360 + $0x18] sm:$0xff]
  %v8365 = vld [vmem:[%s8360 + $0x20] sm:$0xff]
  %v8366 = vld [vmem:[%s8360 + $0x28] sm:$0xff]
  %v8367 = vld [vmem:[%s8360 + $0x30] sm:$0xff]
  %v8368 = vld [vmem:[%s8360 + $0x38] sm:$0xff]
  %v8369 = vmul.f32 %v7536, %v8361
  %v8370 = vmul.f32 %v7535, %v8362
  %v8371 = vmul.f32 %v7534, %v8363
  %v8372 = vmul.f32 %v7533, %v8364
  %v8373 = vmul.f32 %v7532, %v8365
  %v8374 = vmul.f32 %v7531, %v8366
  %v8375 = vmul.f32 %v7530, %v8367
  %v8376 = vmul.f32 %v7529, %v8368
  %v8377 = vmul.f32 %v7528, %v8361
  %v8378 = vmul.f32 %v7527, %v8362
  %v8379 = vmul.f32 %v7526, %v8363
  %v8380 = vmul.f32 %v7525, %v8364
  %v8381 = vmul.f32 %v7524, %v8365
  %v8382 = vmul.f32 %v7539, %v8366
  %v8383 = vmul.f32 %v7538, %v8367
  %v8384 = vmul.f32 %v7537, %v8368
  %v8385 = vadd.f32 %v8344, %v8369
  %v8386 = vadd.f32 %v8345, %v8370
  %v8387 = vadd.f32 %v8346, %v8371
  %v8388 = vadd.f32 %v8347, %v8372
  %v8389 = vadd.f32 %v8348, %v8373
  %v8390 = vadd.f32 %v8349, %v8374
  %v8391 = vadd.f32 %v8350, %v8375
  %v8392 = vadd.f32 %v8351, %v8376
  %v8393 = vadd.f32 %v8352, %v8377
  %v8394 = vadd.f32 %v8353, %v8378
  %v8395 = vadd.f32 %v8354, %v8379
  %v8396 = vadd.f32 %v8355, %v8380
  %v8397 = vadd.f32 %v8356, %v8381
  %v8398 = vadd.f32 %v8357, %v8382
  %v8399 = vadd.f32 %v8358, %v8383
  %v8400 = vadd.f32 %v8359, %v8384
  %s8401 = scalar_lea.vmem %s8, 3
  %v8402 = vld [vmem:[%s8401] sm:$0x1]
  %v8404 = vlaneseq
  %v8405 = vshrl.u32 %v8404, 7
  %v8406 = vsub.s32 0, %v8405
  %v8407 = vrot.slane %v8402, %v8406
  %v8409 = vadd.f32 %v8385, %v8407
  %v8410 = vadd.f32 %v8386, %v8407
  %v8411 = vadd.f32 %v8387, %v8407
  %v8412 = vadd.f32 %v8388, %v8407
  %v8413 = vadd.f32 %v8389, %v8407
  %v8414 = vadd.f32 %v8390, %v8407
  %v8415 = vadd.f32 %v8391, %v8407
  %v8416 = vadd.f32 %v8392, %v8407
  %v8417 = vadd.f32 %v8393, %v8407
  %v8418 = vadd.f32 %v8394, %v8407
  %v8419 = vadd.f32 %v8395, %v8407
  %v8420 = vadd.f32 %v8396, %v8407
  %v8421 = vadd.f32 %v8397, %v8407
  %v8422 = vadd.f32 %v8398, %v8407
  %v8423 = vadd.f32 %v8399, %v8407
  %v8424 = vadd.f32 %v8400, %v8407
  %v8425 = vpack.c.bf16 %v8410, %v8409
  %v8426 = vpack.c.bf16 %v8412, %v8411
  %v8427 = vpack.c.bf16 %v8414, %v8413
  %v8428 = vpack.c.bf16 %v8416, %v8415
  %v8429 = vpack.c.bf16 %v8418, %v8417
  %v8430 = vpack.c.bf16 %v8420, %v8419
  %v8431 = vpack.c.bf16 %v8422, %v8421
  %v8432 = vpack.c.bf16 %v8424, %v8423
  %v8433 = vpack.c.bf16 %v7079, %v7076
  %v8434 = vpack.c.bf16 %v7087, %v7084
  %v8435 = vpack.c.bf16 %v7095, %v7092
  %v8436 = vpack.c.bf16 %v7103, %v7100
  %v8437 = vpack.c.bf16 %v7111, %v7108
  %v8438 = vpack.c.bf16 %v7119, %v7116
  %v8439 = vpack.c.bf16 %v7127, %v7124
  %v8440 = vpack.c.bf16 %v7135, %v7132
  %v8441 = vpack.c.bf16 %v7189, %v7186
  %v8442 = vpack.c.bf16 %v7197, %v7194
  %v8443 = vpack.c.bf16 %v7205, %v7202
  %v8444 = vpack.c.bf16 %v7213, %v7210
  %v8445 = vpack.c.bf16 %v7221, %v7218
  %v8446 = vpack.c.bf16 %v7229, %v7226
  %v8447 = vpack.c.bf16 %v7237, %v7234
  %v8448 = vpack.c.bf16 %v7245, %v7242
  %s8449 = scalar_lea.vmem %s9, 192
  %v8450 = vld [vmem:[%s8449] sm:$0xff]
  %v8451 = vld [vmem:[%s8449 + $0x8] sm:$0xff]
  %v8452 = vld [vmem:[%s8449 + $0x10] sm:$0xff]
  %v8453 = vld [vmem:[%s8449 + $0x18] sm:$0xff]
  %v8454 = vld [vmem:[%s8449 + $0x20] sm:$0xff]
  %v8455 = vld [vmem:[%s8449 + $0x28] sm:$0xff]
  %v8456 = vld [vmem:[%s8449 + $0x30] sm:$0xff]
  %v8457 = vld [vmem:[%s8449 + $0x38] sm:$0xff]
  %v8459 = vsel %vm74, %v8425, 0
  %v8462 = vsel %vm74, %v8426, 0
  %v8465 = vsel %vm74, %v8427, 0
  %v8468 = vsel %vm74, %v8428, 0
  %v8471 = vsel %vm74, %v8433, 0
  %v8474 = vsel %vm74, %v8434, 0
  %v8477 = vsel %vm74, %v8435, 0
  %v8480 = vsel %vm74, %v8436, 0
  %8482 = vmatprep.subr.bf16.mxu0 0
  %8483 = vmatpush1.bf16.xpose.msra.mxu0 %v8471
  %8484 = vmatprep.subr.bf16.mxu0 0
  %8485 = vmatpush1.bf16.xpose.msra.mxu0 %v8474
  %8486 = vmatprep.subr.bf16.mxu0 0
  %8487 = vmatpush1.bf16.xpose.msra.mxu0 %v8477
  %8488 = vmatprep.subr.bf16.mxu0 0
  %8489 = vmatpush1.bf16.xpose.msra.mxu0 %v8480
  %8490 = vmatprep.subr.bf16.mxu0 0
  %8491 = vmatpush1.bf16.xpose.msra.mxu0 0
  %8492 = vmatprep.subr.bf16.mxu0 0
  %8493 = vmatpush1.bf16.xpose.msra.mxu0 0
  %8494 = vmatprep.subr.bf16.mxu0 0
  %8495 = vmatpush1.bf16.xpose.msra.mxu0 0
  %8496 = vmatprep.subr.bf16.mxu0 0
  %8497 = vmatpush1.bf16.xpose.msra.mxu0 0
  %8498 = vmatprep.subr.bf16.mxu0 0
  %8499 = vmatpush1.bf16.xpose.msra.mxu0 0
  %8500 = vmatprep.subr.bf16.mxu0 0
  %8501 = vmatpush1.bf16.xpose.msra.mxu0 0
  %8502 = vmatprep.subr.bf16.mxu0 0
  %8503 = vmatpush1.bf16.xpose.msra.mxu0 0
  %8504 = vmatprep.subr.bf16.mxu0 0
  %8505 = vmatpush1.bf16.xpose.msra.mxu0 0
  %8506 = vmatprep.subr.bf16.mxu0 0
  %8507 = vmatpush1.bf16.xpose.msra.mxu0 0
  %8508 = vmatprep.subr.bf16.mxu0 0
  %8509 = vmatpush1.bf16.xpose.msra.mxu0 0
  %8510 = vmatprep.subr.bf16.mxu0 0
  %8511 = vmatpush1.bf16.xpose.msra.mxu0 0
  %8512 = vmatprep.subr.bf16.mxu0 0
  %8513 = vmatpush1.bf16.xpose.msra.mxu0 0
  %8514 = vmatprep.mubr.bf16.mxu0 0
  %8515 = vmatmul.mubr.bf16.gmra.mrb[0].mxu0 %v8459
  %v8516 = vpop.f32.mrb[0].mxu0
  %v8517 = vadd.f32 %v8450, %v8516
  %v8518 = vpop.f32.mrb[0].mxu0
  %v8519 = vpop.f32.mrb[0].mxu0
  %v8520 = vadd.f32 %v8451, %v8519
  %v8521 = vpop.f32.mrb[0].mxu0
  %8522 = vmatprep.mubr.bf16.mxu0 0
  %8523 = vmatmul.mubr.bf16.gmra.mrb[0].mxu0 %v8462
  %v8524 = vpop.f32.mrb[0].mxu0
  %v8525 = vadd.f32 %v8452, %v8524
  %v8526 = vpop.f32.mrb[0].mxu0
  %v8527 = vpop.f32.mrb[0].mxu0
  %v8528 = vadd.f32 %v8453, %v8527
  %v8529 = vpop.f32.mrb[0].mxu0
  %8530 = vmatprep.mubr.bf16.mxu0 0
  %8531 = vmatmul.mubr.bf16.gmra.mrb[0].mxu0 %v8465
  %v8532 = vpop.f32.mrb[0].mxu0
  %v8533 = vadd.f32 %v8454, %v8532
  %v8534 = vpop.f32.mrb[0].mxu0
  %v8535 = vpop.f32.mrb[0].mxu0
  %v8536 = vadd.f32 %v8455, %v8535
  %v8537 = vpop.f32.mrb[0].mxu0
  %8538 = vmatprep.mubr.bf16.mxu0 0
  %8539 = vmatmul.mubr.bf16.gmra.mrb[0].mxu0 %v8468
  %v8540 = vpop.f32.mrb[0].mxu0
  %v8541 = vadd.f32 %v8456, %v8540
  %v8542 = vpop.f32.mrb[0].mxu0
  %v8543 = vpop.f32.mrb[0].mxu0
  %v8544 = vadd.f32 %v8457, %v8543
  %v8545 = vpop.f32.mrb[0].mxu0
  %8546 = vdwg.mxu0
  %v8548 = vsel %vm74, %v8429, 0
  %v8551 = vsel %vm74, %v8430, 0
  %v8554 = vsel %vm74, %v8431, 0
  %v8557 = vsel %vm74, %v8432, 0
  %v8560 = vsel %vm74, %v8437, 0
  %v8563 = vsel %vm74, %v8438, 0
  %v8566 = vsel %vm74, %v8439, 0
  %v8569 = vsel %vm74, %v8440, 0
  %8571 = vmatprep.subr.bf16.mxu0 0
  %8572 = vmatpush1.bf16.xpose.msra.mxu0 %v8560
  %8573 = vmatprep.subr.bf16.mxu0 0
  %8574 = vmatpush1.bf16.xpose.msra.mxu0 %v8563
  %8575 = vmatprep.subr.bf16.mxu0 0
  %8576 = vmatpush1.bf16.xpose.msra.mxu0 %v8566
  %8577 = vmatprep.subr.bf16.mxu0 0
  %8578 = vmatpush1.bf16.xpose.msra.mxu0 %v8569
  %8579 = vmatprep.subr.bf16.mxu0 0
  %8580 = vmatpush1.bf16.xpose.msra.mxu0 0
  %8581 = vmatprep.subr.bf16.mxu0 0
  %8582 = vmatpush1.bf16.xpose.msra.mxu0 0
  %8583 = vmatprep.subr.bf16.mxu0 0
  %8584 = vmatpush1.bf16.xpose.msra.mxu0 0
  %8585 = vmatprep.subr.bf16.mxu0 0
  %8586 = vmatpush1.bf16.xpose.msra.mxu0 0
  %8587 = vmatprep.subr.bf16.mxu0 0
  %8588 = vmatpush1.bf16.xpose.msra.mxu0 0
  %8589 = vmatprep.subr.bf16.mxu0 0
  %8590 = vmatpush1.bf16.xpose.msra.mxu0 0
  %8591 = vmatprep.subr.bf16.mxu0 0
  %8592 = vmatpush1.bf16.xpose.msra.mxu0 0
  %8593 = vmatprep.subr.bf16.mxu0 0
  %8594 = vmatpush1.bf16.xpose.msra.mxu0 0
  %8595 = vmatprep.subr.bf16.mxu0 0
  %8596 = vmatpush1.bf16.xpose.msra.mxu0 0
  %8597 = vmatprep.subr.bf16.mxu0 0
  %8598 = vmatpush1.bf16.xpose.msra.mxu0 0
  %8599 = vmatprep.subr.bf16.mxu0 0
  %8600 = vmatpush1.bf16.xpose.msra.mxu0 0
  %8601 = vmatprep.subr.bf16.mxu0 0
  %8602 = vmatpush1.bf16.xpose.msra.mxu0 0
  %8603 = vmatprep.mubr.bf16.mxu0 0
  %8604 = vmatmul.mubr.bf16.gmra.mrb[0].mxu0 %v8548
  %v8605 = vpop.f32.mrb[0].mxu0
  %v8606 = vadd.f32 %v8450, %v8605
  %v8607 = vpop.f32.mrb[0].mxu0
  %v8608 = vpop.f32.mrb[0].mxu0
  %v8609 = vadd.f32 %v8451, %v8608
  %v8610 = vpop.f32.mrb[0].mxu0
  %8611 = vmatprep.mubr.bf16.mxu0 0
  %8612 = vmatmul.mubr.bf16.gmra.mrb[0].mxu0 %v8551
  %v8613 = vpop.f32.mrb[0].mxu0
  %v8614 = vadd.f32 %v8452, %v8613
  %v8615 = vpop.f32.mrb[0].mxu0
  %v8616 = vpop.f32.mrb[0].mxu0
  %v8617 = vadd.f32 %v8453, %v8616
  %v8618 = vpop.f32.mrb[0].mxu0
  %8619 = vmatprep.mubr.bf16.mxu0 0
  %8620 = vmatmul.mubr.bf16.gmra.mrb[0].mxu0 %v8554
  %v8621 = vpop.f32.mrb[0].mxu0
  %v8622 = vadd.f32 %v8454, %v8621
  %v8623 = vpop.f32.mrb[0].mxu0
  %v8624 = vpop.f32.mrb[0].mxu0
  %v8625 = vadd.f32 %v8455, %v8624
  %v8626 = vpop.f32.mrb[0].mxu0
  %8627 = vmatprep.mubr.bf16.mxu0 0
  %8628 = vmatmul.mubr.bf16.gmra.mrb[0].mxu0 %v8557
  %v8629 = vpop.f32.mrb[0].mxu0
  %v8630 = vadd.f32 %v8456, %v8629
  %v8631 = vpop.f32.mrb[0].mxu0
  %v8632 = vpop.f32.mrb[0].mxu0
  %v8633 = vadd.f32 %v8457, %v8632
  %v8634 = vpop.f32.mrb[0].mxu0
  %8635 = vdwg.mxu0
  %v8636 = vsel %vm1807, %v8517, -inf
  %8637 = vmax.xlane.f32.xlu0 %v8636
  %v8638 = vpop.xlane.xlu0 %8637
  %v8639 = vsel %vm1807, %v8520, -inf
  %8640 = vmax.xlane.f32.xlu0 %v8639
  %v8641 = vpop.xlane.xlu0 %8640
  %v8642 = vsel %vm1807, %v8525, -inf
  %8643 = vmax.xlane.f32.xlu0 %v8642
  %v8644 = vpop.xlane.xlu0 %8643
  %v8645 = vsel %vm1807, %v8528, -inf
  %8646 = vmax.xlane.f32.xlu0 %v8645
  %v8647 = vpop.xlane.xlu0 %8646
  %v8648 = vsel %vm1807, %v8533, -inf
  %8649 = vmax.xlane.f32.xlu0 %v8648
  %v8650 = vpop.xlane.xlu0 %8649
  %v8651 = vsel %vm1807, %v8536, -inf
  %8652 = vmax.xlane.f32.xlu0 %v8651
  %v8653 = vpop.xlane.xlu0 %8652
  %v8654 = vsel %vm1807, %v8541, -inf
  %8655 = vmax.xlane.f32.xlu0 %v8654
  %v8656 = vpop.xlane.xlu0 %8655
  %v8657 = vsel %vm1807, %v8544, -inf
  %8658 = vmax.xlane.f32.xlu0 %v8657
  %v8659 = vpop.xlane.xlu0 %8658
  %v8660 = vsel %vm1807, %v8606, -inf
  %8661 = vmax.xlane.f32.xlu0 %v8660
  %v8662 = vpop.xlane.xlu0 %8661
  %v8663 = vsel %vm1807, %v8609, -inf
  %8664 = vmax.xlane.f32.xlu0 %v8663
  %v8665 = vpop.xlane.xlu0 %8664
  %v8666 = vsel %vm1807, %v8614, -inf
  %8667 = vmax.xlane.f32.xlu0 %v8666
  %v8668 = vpop.xlane.xlu0 %8667
  %v8669 = vsel %vm1807, %v8617, -inf
  %8670 = vmax.xlane.f32.xlu0 %v8669
  %v8671 = vpop.xlane.xlu0 %8670
  %v8672 = vsel %vm1807, %v8622, -inf
  %8673 = vmax.xlane.f32.xlu0 %v8672
  %v8674 = vpop.xlane.xlu0 %8673
  %v8675 = vsel %vm1807, %v8625, -inf
  %8676 = vmax.xlane.f32.xlu0 %v8675
  %v8677 = vpop.xlane.xlu0 %8676
  %v8678 = vsel %vm1807, %v8630, -inf
  %8679 = vmax.xlane.f32.xlu0 %v8678
  %v8680 = vpop.xlane.xlu0 %8679
  %v8681 = vsel %vm1807, %v8633, -inf
  %8682 = vmax.xlane.f32.xlu0 %v8681
  %v8683 = vpop.xlane.xlu0 %8682
  %v8684 = vsub.f32 %v8517, %v8638
  %v8685 = vsub.f32 %v8520, %v8641
  %v8686 = vsub.f32 %v8525, %v8644
  %v8687 = vsub.f32 %v8528, %v8647
  %v8688 = vsub.f32 %v8533, %v8650
  %v8689 = vsub.f32 %v8536, %v8653
  %v8690 = vsub.f32 %v8541, %v8656
  %v8691 = vsub.f32 %v8544, %v8659
  %v8692 = vsub.f32 %v8606, %v8662
  %v8693 = vsub.f32 %v8609, %v8665
  %v8694 = vsub.f32 %v8614, %v8668
  %v8695 = vsub.f32 %v8617, %v8671
  %v8696 = vsub.f32 %v8622, %v8674
  %v8697 = vsub.f32 %v8625, %v8677
  %v8698 = vsub.f32 %v8630, %v8680
  %v8699 = vsub.f32 %v8633, %v8683
  %v8700 = vmul.f32 %v8684, 1.442695
  %v8701 = vpow.pop %v8700
  %v8702 = vmul.f32 %v8685, 1.442695
  %v8703 = vpow.pop %v8702
  %v8704 = vmul.f32 %v8686, 1.442695
  %v8705 = vpow.pop %v8704
  %v8706 = vmul.f32 %v8687, 1.442695
  %v8707 = vpow.pop %v8706
  %v8708 = vmul.f32 %v8688, 1.442695
  %v8709 = vpow.pop %v8708
  %v8710 = vmul.f32 %v8689, 1.442695
  %v8711 = vpow.pop %v8710
  %v8712 = vmul.f32 %v8690, 1.442695
  %v8713 = vpow.pop %v8712
  %v8714 = vmul.f32 %v8691, 1.442695
  %v8715 = vpow.pop %v8714
  %v8716 = vmul.f32 %v8692, 1.442695
  %v8717 = vpow.pop %v8716
  %v8718 = vmul.f32 %v8693, 1.442695
  %v8719 = vpow.pop %v8718
  %v8720 = vmul.f32 %v8694, 1.442695
  %v8721 = vpow.pop %v8720
  %v8722 = vmul.f32 %v8695, 1.442695
  %v8723 = vpow.pop %v8722
  %v8724 = vmul.f32 %v8696, 1.442695
  %v8725 = vpow.pop %v8724
  %v8726 = vmul.f32 %v8697, 1.442695
  %v8727 = vpow.pop %v8726
  %v8728 = vmul.f32 %v8698, 1.442695
  %v8729 = vpow.pop %v8728
  %v8730 = vmul.f32 %v8699, 1.442695
  %v8731 = vpow.pop %v8730
  %v8732 = vsel %vm1807, %v8701, 0.0
  %8733 = vadd.xlane.f32.xlu0 %v8732
  %v8734 = vpop.xlane.xlu0 %8733
  %v8735 = vsel %vm1807, %v8703, 0.0
  %8736 = vadd.xlane.f32.xlu0 %v8735
  %v8737 = vpop.xlane.xlu0 %8736
  %v8738 = vsel %vm1807, %v8705, 0.0
  %8739 = vadd.xlane.f32.xlu0 %v8738
  %v8740 = vpop.xlane.xlu0 %8739
  %v8741 = vsel %vm1807, %v8707, 0.0
  %8742 = vadd.xlane.f32.xlu0 %v8741
  %v8743 = vpop.xlane.xlu0 %8742
  %v8744 = vsel %vm1807, %v8709, 0.0
  %8745 = vadd.xlane.f32.xlu0 %v8744
  %v8746 = vpop.xlane.xlu0 %8745
  %v8747 = vsel %vm1807, %v8711, 0.0
  %8748 = vadd.xlane.f32.xlu0 %v8747
  %v8749 = vpop.xlane.xlu0 %8748
  %v8750 = vsel %vm1807, %v8713, 0.0
  %8751 = vadd.xlane.f32.xlu0 %v8750
  %v8752 = vpop.xlane.xlu0 %8751
  %v8753 = vsel %vm1807, %v8715, 0.0
  %8754 = vadd.xlane.f32.xlu0 %v8753
  %v8755 = vpop.xlane.xlu0 %8754
  %v8756 = vsel %vm1807, %v8717, 0.0
  %8757 = vadd.xlane.f32.xlu0 %v8756
  %v8758 = vpop.xlane.xlu0 %8757
  %v8759 = vsel %vm1807, %v8719, 0.0
  %8760 = vadd.xlane.f32.xlu0 %v8759
  %v8761 = vpop.xlane.xlu0 %8760
  %v8762 = vsel %vm1807, %v8721, 0.0
  %8763 = vadd.xlane.f32.xlu0 %v8762
  %v8764 = vpop.xlane.xlu0 %8763
  %v8765 = vsel %vm1807, %v8723, 0.0
  %8766 = vadd.xlane.f32.xlu0 %v8765
  %v8767 = vpop.xlane.xlu0 %8766
  %v8768 = vsel %vm1807, %v8725, 0.0
  %8769 = vadd.xlane.f32.xlu0 %v8768
  %v8770 = vpop.xlane.xlu0 %8769
  %v8771 = vsel %vm1807, %v8727, 0.0
  %8772 = vadd.xlane.f32.xlu0 %v8771
  %v8773 = vpop.xlane.xlu0 %8772
  %v8774 = vsel %vm1807, %v8729, 0.0
  %8775 = vadd.xlane.f32.xlu0 %v8774
  %v8776 = vpop.xlane.xlu0 %8775
  %v8777 = vsel %vm1807, %v8731, 0.0
  %8778 = vadd.xlane.f32.xlu0 %v8777
  %v8779 = vpop.xlane.xlu0 %8778
  %v8780 = vrcp.pop %v8734
  %v8781 = vrcp.pop %v8737
  %v8782 = vrcp.pop %v8740
  %v8783 = vrcp.pop %v8743
  %v8784 = vrcp.pop %v8746
  %v8785 = vrcp.pop %v8749
  %v8786 = vrcp.pop %v8752
  %v8787 = vrcp.pop %v8755
  %v8788 = vrcp.pop %v8758
  %v8789 = vrcp.pop %v8761
  %v8790 = vrcp.pop %v8764
  %v8791 = vrcp.pop %v8767
  %v8792 = vrcp.pop %v8770
  %v8793 = vrcp.pop %v8773
  %v8794 = vrcp.pop %v8776
  %v8795 = vrcp.pop %v8779
  %v8796 = vmul.f32 %v8701, %v8780
  %v8797 = vmul.f32 %v8703, %v8781
  %v8798 = vmul.f32 %v8705, %v8782
  %v8799 = vmul.f32 %v8707, %v8783
  %v8800 = vmul.f32 %v8709, %v8784
  %v8801 = vmul.f32 %v8711, %v8785
  %v8802 = vmul.f32 %v8713, %v8786
  %v8803 = vmul.f32 %v8715, %v8787
  %v8804 = vmul.f32 %v8717, %v8788
  %v8805 = vmul.f32 %v8719, %v8789
  %v8806 = vmul.f32 %v8721, %v8790
  %v8807 = vmul.f32 %v8723, %v8791
  %v8808 = vmul.f32 %v8725, %v8792
  %v8809 = vmul.f32 %v8727, %v8793
  %v8810 = vmul.f32 %v8729, %v8794
  %v8811 = vmul.f32 %v8731, %v8795
  %v8812 = vpack.c.bf16 %v8797, %v8796
  %v8813 = vpack.c.bf16 %v8799, %v8798
  %v8814 = vpack.c.bf16 %v8801, %v8800
  %v8815 = vpack.c.bf16 %v8803, %v8802
  %v8816 = vpack.c.bf16 %v8805, %v8804
  %v8817 = vpack.c.bf16 %v8807, %v8806
  %v8818 = vpack.c.bf16 %v8809, %v8808
  %v8819 = vpack.c.bf16 %v8811, %v8810
  %v8821 = vsel %vm1807, %v8812, 0
  %v8824 = vsel %vm1807, %v8813, 0
  %v8827 = vsel %vm1807, %v8814, 0
  %v8830 = vsel %vm1807, %v8815, 0
  %8832 = vmatprep.subr.bf16.mxu0 0
  %8833 = vmatpush1.bf16.msra.mxu0 %v8441
  %8834 = vmatprep.subr.bf16.mxu0 0
  %8835 = vmatpush1.bf16.msra.mxu0 %v8442
  %8836 = vmatprep.subr.bf16.mxu0 0
  %8837 = vmatpush1.bf16.msra.mxu0 %v8443
  %8838 = vmatprep.subr.bf16.mxu0 0
  %8839 = vmatpush1.bf16.msra.mxu0 %v8444
  %8840 = vmatprep.subr.bf16.mxu0 0
  %8841 = vmatpush1.bf16.msra.mxu0 0
  %8842 = vmatprep.subr.bf16.mxu0 0
  %8843 = vmatpush1.bf16.msra.mxu0 0
  %8844 = vmatprep.subr.bf16.mxu0 0
  %8845 = vmatpush1.bf16.msra.mxu0 0
  %8846 = vmatprep.subr.bf16.mxu0 0
  %8847 = vmatpush1.bf16.msra.mxu0 0
  %8848 = vmatprep.subr.bf16.mxu0 0
  %8849 = vmatpush1.bf16.msra.mxu0 0
  %8850 = vmatprep.subr.bf16.mxu0 0
  %8851 = vmatpush1.bf16.msra.mxu0 0
  %8852 = vmatprep.subr.bf16.mxu0 0
  %8853 = vmatpush1.bf16.msra.mxu0 0
  %8854 = vmatprep.subr.bf16.mxu0 0
  %8855 = vmatpush1.bf16.msra.mxu0 0
  %8856 = vmatprep.subr.bf16.mxu0 0
  %8857 = vmatpush1.bf16.msra.mxu0 0
  %8858 = vmatprep.subr.bf16.mxu0 0
  %8859 = vmatpush1.bf16.msra.mxu0 0
  %8860 = vmatprep.subr.bf16.mxu0 0
  %8861 = vmatpush1.bf16.msra.mxu0 0
  %8862 = vmatprep.subr.bf16.mxu0 0
  %8863 = vmatpush1.bf16.msra.mxu0 0
  %8864 = vmatprep.mubr.bf16.mxu0 0
  %8865 = vmatmul.mubr.bf16.gmra.mrb[0].mxu0 %v8821
  %v8866 = vpop.f32.mrb[0].mxu0
  %v8867 = vadd.f32 0.0, %v8866
  %v8868 = vpop.f32.mrb[0].mxu0
  %v8869 = vpop.f32.mrb[0].mxu0
  %v8870 = vadd.f32 0.0, %v8869
  %v8871 = vpop.f32.mrb[0].mxu0
  %8872 = vmatprep.mubr.bf16.mxu0 0
  %8873 = vmatmul.mubr.bf16.gmra.mrb[0].mxu0 %v8824
  %v8874 = vpop.f32.mrb[0].mxu0
  %v8875 = vadd.f32 0.0, %v8874
  %v8876 = vpop.f32.mrb[0].mxu0
  %v8877 = vpop.f32.mrb[0].mxu0
  %v8878 = vadd.f32 0.0, %v8877
  %v8879 = vpop.f32.mrb[0].mxu0
  %8880 = vmatprep.mubr.bf16.mxu0 0
  %8881 = vmatmul.mubr.bf16.gmra.mrb[0].mxu0 %v8827
  %v8882 = vpop.f32.mrb[0].mxu0
  %v8883 = vadd.f32 0.0, %v8882
  %v8884 = vpop.f32.mrb[0].mxu0
  %v8885 = vpop.f32.mrb[0].mxu0
  %v8886 = vadd.f32 0.0, %v8885
  %v8887 = vpop.f32.mrb[0].mxu0
  %8888 = vmatprep.mubr.bf16.mxu0 0
  %8889 = vmatmul.mubr.bf16.gmra.mrb[0].mxu0 %v8830
  %v8890 = vpop.f32.mrb[0].mxu0
  %v8891 = vadd.f32 0.0, %v8890
  %v8892 = vpop.f32.mrb[0].mxu0
  %v8893 = vpop.f32.mrb[0].mxu0
  %v8894 = vadd.f32 0.0, %v8893
  %v8895 = vpop.f32.mrb[0].mxu0
  %8896 = vdwg.mxu0
  %v8898 = vsel %vm1807, %v8816, 0
  %v8901 = vsel %vm1807, %v8817, 0
  %v8904 = vsel %vm1807, %v8818, 0
  %v8907 = vsel %vm1807, %v8819, 0
  %8909 = vmatprep.subr.bf16.mxu0 0
  %8910 = vmatpush1.bf16.msra.mxu0 %v8445
  %8911 = vmatprep.subr.bf16.mxu0 0
  %8912 = vmatpush1.bf16.msra.mxu0 %v8446
  %8913 = vmatprep.subr.bf16.mxu0 0
  %8914 = vmatpush1.bf16.msra.mxu0 %v8447
  %8915 = vmatprep.subr.bf16.mxu0 0
  %8916 = vmatpush1.bf16.msra.mxu0 %v8448
  %8917 = vmatprep.subr.bf16.mxu0 0
  %8918 = vmatpush1.bf16.msra.mxu0 0
  %8919 = vmatprep.subr.bf16.mxu0 0
  %8920 = vmatpush1.bf16.msra.mxu0 0
  %8921 = vmatprep.subr.bf16.mxu0 0
  %8922 = vmatpush1.bf16.msra.mxu0 0
  %8923 = vmatprep.subr.bf16.mxu0 0
  %8924 = vmatpush1.bf16.msra.mxu0 0
  %8925 = vmatprep.subr.bf16.mxu0 0
  %8926 = vmatpush1.bf16.msra.mxu0 0
  %8927 = vmatprep.subr.bf16.mxu0 0
  %8928 = vmatpush1.bf16.msra.mxu0 0
  %8929 = vmatprep.subr.bf16.mxu0 0
  %8930 = vmatpush1.bf16.msra.mxu0 0
  %8931 = vmatprep.subr.bf16.mxu0 0
  %8932 = vmatpush1.bf16.msra.mxu0 0
  %8933 = vmatprep.subr.bf16.mxu0 0
  %8934 = vmatpush1.bf16.msra.mxu0 0
  %8935 = vmatprep.subr.bf16.mxu0 0
  %8936 = vmatpush1.bf16.msra.mxu0 0
  %8937 = vmatprep.subr.bf16.mxu0 0
  %8938 = vmatpush1.bf16.msra.mxu0 0
  %8939 = vmatprep.subr.bf16.mxu0 0
  %8940 = vmatpush1.bf16.msra.mxu0 0
  %8941 = vmatprep.mubr.bf16.mxu0 0
  %8942 = vmatmul.mubr.bf16.gmra.mrb[0].mxu0 %v8898
  %v8943 = vpop.f32.mrb[0].mxu0
  %v8944 = vadd.f32 0.0, %v8943
  %v8945 = vpop.f32.mrb[0].mxu0
  %v8946 = vpop.f32.mrb[0].mxu0
  %v8947 = vadd.f32 0.0, %v8946
  %v8948 = vpop.f32.mrb[0].mxu0
  %8949 = vmatprep.mubr.bf16.mxu0 0
  %8950 = vmatmul.mubr.bf16.gmra.mrb[0].mxu0 %v8901
  %v8951 = vpop.f32.mrb[0].mxu0
  %v8952 = vadd.f32 0.0, %v8951
  %v8953 = vpop.f32.mrb[0].mxu0
  %v8954 = vpop.f32.mrb[0].mxu0
  %v8955 = vadd.f32 0.0, %v8954
  %v8956 = vpop.f32.mrb[0].mxu0
  %8957 = vmatprep.mubr.bf16.mxu0 0
  %8958 = vmatmul.mubr.bf16.gmra.mrb[0].mxu0 %v8904
  %v8959 = vpop.f32.mrb[0].mxu0
  %v8960 = vadd.f32 0.0, %v8959
  %v8961 = vpop.f32.mrb[0].mxu0
  %v8962 = vpop.f32.mrb[0].mxu0
  %v8963 = vadd.f32 0.0, %v8962
  %v8964 = vpop.f32.mrb[0].mxu0
  %8965 = vmatprep.mubr.bf16.mxu0 0
  %8966 = vmatmul.mubr.bf16.gmra.mrb[0].mxu0 %v8907
  %v8967 = vpop.f32.mrb[0].mxu0
  %v8968 = vadd.f32 0.0, %v8967
  %v8969 = vpop.f32.mrb[0].mxu0
  %v8970 = vpop.f32.mrb[0].mxu0
  %v8971 = vadd.f32 0.0, %v8970
  %v8972 = vpop.f32.mrb[0].mxu0
  %8973 = vdwg.mxu0
  %v8974 = vmax.f32 %v8867, 0.0
  %v8975 = vmax.f32 %v8870, 0.0
  %v8976 = vmax.f32 %v8875, 0.0
  %v8977 = vmax.f32 %v8878, 0.0
  %v8978 = vmax.f32 %v8883, 0.0
  %v8979 = vmax.f32 %v8886, 0.0
  %v8980 = vmax.f32 %v8891, 0.0
  %v8981 = vmax.f32 %v8894, 0.0
  %v8982 = vmax.f32 %v8944, 0.0
  %v8983 = vmax.f32 %v8947, 0.0
  %v8984 = vmax.f32 %v8952, 0.0
  %v8985 = vmax.f32 %v8955, 0.0
  %v8986 = vmax.f32 %v8960, 0.0
  %v8987 = vmax.f32 %v8963, 0.0
  %v8988 = vmax.f32 %v8968, 0.0
  %v8989 = vmax.f32 %v8971, 0.0
  %v8990 = vpack.c.bf16 %v8975, %v8974
  %v8991 = vpack.c.bf16 %v8977, %v8976
  %v8992 = vpack.c.bf16 %v8979, %v8978
  %v8993 = vpack.c.bf16 %v8981, %v8980
  %v8994 = vpack.c.bf16 %v8983, %v8982
  %v8995 = vpack.c.bf16 %v8985, %v8984
  %v8996 = vpack.c.bf16 %v8987, %v8986
  %v8997 = vpack.c.bf16 %v8989, %v8988
  %s8998 = scalar_lea.vmem %s10, 12
  %v8999 = vld [vmem:[%s8998] sm:$0xf]
  %v9001 = vsel %vm74, %v8990, 0
  %v9004 = vsel %vm74, %v8991, 0
  %v9007 = vsel %vm74, %v8992, 0
  %v9010 = vsel %vm74, %v8993, 0
  %v9013 = vsel %vm74, %v8994, 0
  %v9016 = vsel %vm74, %v8995, 0
  %v9019 = vsel %vm74, %v8996, 0
  %v9022 = vsel %vm74, %v8997, 0
  %v9025 = vsel %vm99, %v8999, 0
  %9027 = vmatprep.subr.bf16.mxu0 0
  %9028 = vmatpush1.bf16.msra.mxu0 %v9025
  %9029 = vmatprep.subr.bf16.mxu0 0
  %9030 = vmatpush1.bf16.msra.mxu0 0
  %9031 = vmatprep.subr.bf16.mxu0 0
  %9032 = vmatpush1.bf16.msra.mxu0 0
  %9033 = vmatprep.subr.bf16.mxu0 0
  %9034 = vmatpush1.bf16.msra.mxu0 0
  %9035 = vmatprep.subr.bf16.mxu0 0
  %9036 = vmatpush1.bf16.msra.mxu0 0
  %9037 = vmatprep.subr.bf16.mxu0 0
  %9038 = vmatpush1.bf16.msra.mxu0 0
  %9039 = vmatprep.subr.bf16.mxu0 0
  %9040 = vmatpush1.bf16.msra.mxu0 0
  %9041 = vmatprep.subr.bf16.mxu0 0
  %9042 = vmatpush1.bf16.msra.mxu0 0
  %9043 = vmatprep.subr.bf16.mxu0 0
  %9044 = vmatpush1.bf16.msra.mxu0 0
  %9045 = vmatprep.subr.bf16.mxu0 0
  %9046 = vmatpush1.bf16.msra.mxu0 0
  %9047 = vmatprep.subr.bf16.mxu0 0
  %9048 = vmatpush1.bf16.msra.mxu0 0
  %9049 = vmatprep.subr.bf16.mxu0 0
  %9050 = vmatpush1.bf16.msra.mxu0 0
  %9051 = vmatprep.subr.bf16.mxu0 0
  %9052 = vmatpush1.bf16.msra.mxu0 0
  %9053 = vmatprep.subr.bf16.mxu0 0
  %9054 = vmatpush1.bf16.msra.mxu0 0
  %9055 = vmatprep.subr.bf16.mxu0 0
  %9056 = vmatpush1.bf16.msra.mxu0 0
  %9057 = vmatprep.subr.bf16.mxu0 0
  %9058 = vmatpush1.bf16.msra.mxu0 0
  %9059 = vmatprep.mubr.bf16.mxu0 0
  %9060 = vmatmul.mubr.bf16.gmra.mrb[0].mxu0 %v9001
  %v9061 = vpop.f32.mrb[0].mxu0
  %v9062 = vadd.f32 0.0, %v9061
  %v9063 = vpop.f32.mrb[0].mxu0
  %v9064 = vpop.f32.mrb[0].mxu0
  %v9065 = vadd.f32 0.0, %v9064
  %v9066 = vpop.f32.mrb[0].mxu0
  %9067 = vmatprep.mubr.bf16.mxu0 0
  %9068 = vmatmul.mubr.bf16.gmra.mrb[0].mxu0 %v9004
  %v9069 = vpop.f32.mrb[0].mxu0
  %v9070 = vadd.f32 0.0, %v9069
  %v9071 = vpop.f32.mrb[0].mxu0
  %v9072 = vpop.f32.mrb[0].mxu0
  %v9073 = vadd.f32 0.0, %v9072
  %v9074 = vpop.f32.mrb[0].mxu0
  %9075 = vmatprep.mubr.bf16.mxu0 0
  %9076 = vmatmul.mubr.bf16.gmra.mrb[0].mxu0 %v9007
  %v9077 = vpop.f32.mrb[0].mxu0
  %v9078 = vadd.f32 0.0, %v9077
  %v9079 = vpop.f32.mrb[0].mxu0
  %v9080 = vpop.f32.mrb[0].mxu0
  %v9081 = vadd.f32 0.0, %v9080
  %v9082 = vpop.f32.mrb[0].mxu0
  %9083 = vmatprep.mubr.bf16.mxu0 0
  %9084 = vmatmul.mubr.bf16.gmra.mrb[0].mxu0 %v9010
  %v9085 = vpop.f32.mrb[0].mxu0
  %v9086 = vadd.f32 0.0, %v9085
  %v9087 = vpop.f32.mrb[0].mxu0
  %v9088 = vpop.f32.mrb[0].mxu0
  %v9089 = vadd.f32 0.0, %v9088
  %v9090 = vpop.f32.mrb[0].mxu0
  %9091 = vmatprep.mubr.bf16.mxu0 0
  %9092 = vmatmul.mubr.bf16.gmra.mrb[0].mxu0 %v9013
  %v9093 = vpop.f32.mrb[0].mxu0
  %v9094 = vadd.f32 0.0, %v9093
  %v9095 = vpop.f32.mrb[0].mxu0
  %v9096 = vpop.f32.mrb[0].mxu0
  %v9097 = vadd.f32 0.0, %v9096
  %v9098 = vpop.f32.mrb[0].mxu0
  %9099 = vmatprep.mubr.bf16.mxu0 0
  %9100 = vmatmul.mubr.bf16.gmra.mrb[0].mxu0 %v9016
  %v9101 = vpop.f32.mrb[0].mxu0
  %v9102 = vadd.f32 0.0, %v9101
  %v9103 = vpop.f32.mrb[0].mxu0
  %v9104 = vpop.f32.mrb[0].mxu0
  %v9105 = vadd.f32 0.0, %v9104
  %v9106 = vpop.f32.mrb[0].mxu0
  %9107 = vmatprep.mubr.bf16.mxu0 0
  %9108 = vmatmul.mubr.bf16.gmra.mrb[0].mxu0 %v9019
  %v9109 = vpop.f32.mrb[0].mxu0
  %v9110 = vadd.f32 0.0, %v9109
  %v9111 = vpop.f32.mrb[0].mxu0
  %v9112 = vpop.f32.mrb[0].mxu0
  %v9113 = vadd.f32 0.0, %v9112
  %v9114 = vpop.f32.mrb[0].mxu0
  %9115 = vmatprep.mubr.bf16.mxu0 0
  %9116 = vmatmul.mubr.bf16.gmra.mrb[0].mxu0 %v9022
  %v9117 = vpop.f32.mrb[0].mxu0
  %v9118 = vadd.f32 0.0, %v9117
  %v9119 = vpop.f32.mrb[0].mxu0
  %v9120 = vpop.f32.mrb[0].mxu0
  %v9121 = vadd.f32 0.0, %v9120
  %v9122 = vpop.f32.mrb[0].mxu0
  %9123 = vdwg.mxu0
  %v9124 = vadd.f32 %v6837, %v9062
  %v9125 = vadd.f32 %v6838, %v9065
  %v9126 = vadd.f32 %v6839, %v9070
  %v9127 = vadd.f32 %v6840, %v9073
  %v9128 = vadd.f32 %v6841, %v9078
  %v9129 = vadd.f32 %v6842, %v9081
  %v9130 = vadd.f32 %v6843, %v9086
  %v9131 = vadd.f32 %v6844, %v9089
  %v9132 = vadd.f32 %v6845, %v9094
  %v9133 = vadd.f32 %v6846, %v9097
  %v9134 = vadd.f32 %v6847, %v9102
  %v9135 = vadd.f32 %v6848, %v9105
  %v9136 = vadd.f32 %v6849, %v9110
  %v9137 = vadd.f32 %v6850, %v9113
  %v9138 = vadd.f32 %v6851, %v9118
  %v9139 = vadd.f32 %v6852, %v9121
  %v9140 = vld [vmem:[%s11] sm:$0x1]
  %v9142 = vlaneseq
  %v9143 = vshrl.u32 %v9142, 7
  %v9144 = vsub.s32 0, %v9143
  %v9145 = vrot.slane %v9140, %v9144
  %v9147 = vadd.f32 %v9124, %v9145
  %v9148 = vadd.f32 %v9125, %v9145
  %v9149 = vadd.f32 %v9126, %v9145
  %v9150 = vadd.f32 %v9127, %v9145
  %v9151 = vadd.f32 %v9128, %v9145
  %v9152 = vadd.f32 %v9129, %v9145
  %v9153 = vadd.f32 %v9130, %v9145
  %v9154 = vadd.f32 %v9131, %v9145
  %v9155 = vadd.f32 %v9132, %v9145
  %v9156 = vadd.f32 %v9133, %v9145
  %v9157 = vadd.f32 %v9134, %v9145
  %v9158 = vadd.f32 %v9135, %v9145
  %v9159 = vadd.f32 %v9136, %v9145
  %v9160 = vadd.f32 %v9137, %v9145
  %v9161 = vadd.f32 %v9138, %v9145
  %v9162 = vadd.f32 %v9139, %v9145
  %vm9163 = vcmask 261120
  %9164 = vst.msk [vmem:[%s12] sm:$0xff] %vm9163, %v9147
  %9165 = vst.msk [vmem:[%s12 + $0x8] sm:$0xff] %vm9163, %v9148
  %9166 = vst.msk [vmem:[%s12 + $0x10] sm:$0xff] %vm9163, %v9149
  %9167 = vst.msk [vmem:[%s12 + $0x18] sm:$0xff] %vm9163, %v9150
  %9168 = vst.msk [vmem:[%s12 + $0x20] sm:$0xff] %vm9163, %v9151
  %9169 = vst.msk [vmem:[%s12 + $0x28] sm:$0xff] %vm9163, %v9152
  %9170 = vst.msk [vmem:[%s12 + $0x30] sm:$0xff] %vm9163, %v9153
  %9171 = vst.msk [vmem:[%s12 + $0x38] sm:$0xff] %vm9163, %v9154
  %9172 = vst.msk [vmem:[%s12 + $0x40] sm:$0xff] %vm9163, %v9155
  %9173 = vst.msk [vmem:[%s12 + $0x48] sm:$0xff] %vm9163, %v9156
  %9174 = vst.msk [vmem:[%s12 + $0x50] sm:$0xff] %vm9163, %v9157
  %9175 = vst.msk [vmem:[%s12 + $0x58] sm:$0xff] %vm9163, %v9158
  %9176 = vst.msk [vmem:[%s12 + $0x60] sm:$0xff] %vm9163, %v9159
  %9177 = vst.msk [vmem:[%s12 + $0x68] sm:$0xff] %vm9163, %v9160
  %9178 = vst.msk [vmem:[%s12 + $0x70] sm:$0xff] %vm9163, %v9161
  %9179 = vst.msk [vmem:[%s12 + $0x78] sm:$0xff] %vm9163, %v9162
  // Predicated region
  $region50: #{tpu_custom_call.1} parent=0 // pred_check
    _
  $region51: #{tpu_custom_call.1} parent=0 // pred_check_branch
    %9181 = sbr.rel (0) target = $region53
  $region52: #{tpu_custom_call.1} parent=0 // pred_region
    _
  $region53: #{tpu_custom_call.1} parent=0 // pred_fallthru
    _
  // Predicated region
  $region54: #{tpu_custom_call.1} parent=0 // pred_check
    _
  $region55: #{tpu_custom_call.1} parent=0 // pred_check_branch
    %9183 = sbr.rel (0) target = $region57
  $region56: #{tpu_custom_call.1} parent=0 // pred_region
    _
  $region57: #{tpu_custom_call.1} parent=0 // pred_fallthru
    _

</llo_original>
